<compile_context>
chip_gen: v7x
topology: tpu7x:2x2x1
jax: 0.10.0
libtpu: 0.0.40
codegen_flags: <defaults>
</compile_context>

<pallas_src>
import functools

import numpy as np
import jax
import jax.numpy as jnp
from jax.experimental import pallas as pl
from jax.experimental.pallas import tpu as pltpu

D_MODEL = 32
NHEAD = 4
DIM_FF = 64
EPS = 1e-5          # torch.nn.LayerNorm default eps
NEG_INF = -1e30     # additive mask value for "different batch element"


# ----------------------------------------------------------------------------
# Fused decoder-layer kernel (single invocation, everything resident in VMEM)
# ----------------------------------------------------------------------------
def _decoder_layer_kernel(x_ref, mem_ref, masks_ref,
                          w96_ref, w32_ref, w64_ref,
                          b96_ref, b32_ref, b64_ref,
                          out_ref, *, nhead):
    n, d = x_ref.shape                       # (T*A*S, D)   = (64, 32)
    nk = mem_ref.shape[0]                    # M*A*S        = 128
    ff = w64_ref.shape[1]                    # dim_feedforward
    hd = d // nhead                          # head dim

    x0 = x_ref[...]                          # canonical (t, a, s) row order
    mem = mem_ref[...]                       # canonical (m, a, s) row order

    # Packed group masks: rows [0:n] temporal, [n:2n] cross, [2n:3n] spatial, [3n:4n] memory.
    # All slices are sublane-aligned rows at lane offset 0.
    mask_t = masks_ref[0:n, 0:n]
    mask_c = masks_ref[n:2 * n, 0:n]
    mask_s = masks_ref[2 * n:3 * n, 0:n]
    mask_m = masks_ref[3 * n:4 * n, 0:nk]

    def layer_norm(x, g, b):
        mu = jnp.mean(x, axis=-1, keepdims=True)
        xc = x - mu
        var = jnp.mean(xc * xc, axis=-1, keepdims=True)
        return xc * jax.lax.rsqrt(var + EPS) * g + b

    def sdpa(q, k, v, head_masks):
        """Per-head SDPA (1/sqrt(hd) pre-folded into q); per-head contexts are concatenated
        so the out-projection runs as ONE wide matmul after the loop."""
        ctx = []
        for h, m in enumerate(head_masks):           # static loop (12 for self, 4 for cross)
            sl = slice(h * hd, (h + 1) * hd)
            s = jax.lax.dot_general(q[:, sl], k[:, sl], (((1,), (1,)), ((), ())),
                                    preferred_element_type=jnp.float32) + m
            s = s - jnp.max(s, axis=-1, keepdims=True)
            p = jnp.exp(s)
            p = p * (1.0 / jnp.sum(p, axis=-1, keepdims=True))   # exact softmax
            ctx.append(jnp.dot(p, v[:, sl], preferred_element_type=jnp.float32))
        return jnp.concatenate(ctx, axis=-1)

    # ------------- self attention: temporal + cross + spatial paths, batched -------------
    q_all = jnp.dot(x0, w96_ref[0:d, :], preferred_element_type=jnp.float32) + b96_ref[0:1, :]
    k_all = jnp.dot(x0, w96_ref[d:2 * d, :], preferred_element_type=jnp.float32) + b96_ref[1:2, :]
    v_all = jnp.dot(x0, w96_ref[2 * d:3 * d, :], preferred_element_type=jnp.float32) + b96_ref[2:3, :]

    ctx = sdpa(q_all, k_all, v_all,
               [mask_t] * nhead + [mask_c] * nhead + [mask_s] * nhead)            # (n, 3d)
    attn = jnp.dot(ctx, w96_ref[3 * d:6 * d, :],
                   preferred_element_type=jnp.float32) + b96_ref[3:4, :]          # block-diag out-proj
    info = jnp.tanh(jnp.dot(attn, w96_ref[6 * d:9 * d, :],
                            preferred_element_type=jnp.float32) + b96_ref[4:5, :])
    gate = jax.nn.sigmoid(jnp.dot(attn, w96_ref[9 * d:12 * d, :],
                                  preferred_element_type=jnp.float32) + b96_ref[5:6, :])
    # t_out + c_out + s_out as one constant [I; I; I] matmul (MXU, no lane slices/adds)
    path_sum = jnp.dot(info * gate, w32_ref[0:3 * d, :], preferred_element_type=jnp.float32)

    x1 = layer_norm(x0 + path_sum, b32_ref[7:8, :], b32_ref[8:9, :])

    # ------------- decoder cross attention (q_len != k_len, cross_range=2 -> temporal only)
    qx = jnp.dot(x1, w32_ref[3 * d:4 * d, :], preferred_element_type=jnp.float32) + b32_ref[0:1, :]
    kx = jnp.dot(mem, w32_ref[4 * d:5 * d, :], preferred_element_type=jnp.float32) + b32_ref[1:2, :]
    vx = jnp.dot(mem, w32_ref[5 * d:6 * d, :], preferred_element_type=jnp.float32) + b32_ref[2:3, :]
    ctx_x = sdpa(qx, kx, vx, [mask_m] * nhead)                                    # (n, d)
    attn_x = jnp.dot(ctx_x, w32_ref[6 * d:7 * d, :],
                     preferred_element_type=jnp.float32) + b32_ref[3:4, :]
    info_x = jnp.tanh(jnp.dot(attn_x, w32_ref[7 * d:8 * d, :],
                              preferred_element_type=jnp.float32) + b32_ref[4:5, :])
    gate_x = jax.nn.sigmoid(jnp.dot(attn_x, w32_ref[8 * d:9 * d, :],
                                    preferred_element_type=jnp.float32) + b32_ref[5:6, :])
    x2 = layer_norm(x1 + info_x * gate_x, b32_ref[9:10, :], b32_ref[10:11, :])

    # ------------- feed-forward -------------
    hidden = jnp.maximum(
        jnp.dot(x2, w64_ref[...], preferred_element_type=jnp.float32) + b64_ref[...], 0.0)
    ffo = jnp.dot(hidden, w32_ref[9 * d:9 * d + ff, :],
                  preferred_element_type=jnp.float32) + b32_ref[6:7, :]
    x3 = layer_norm(x2 + ffo, b32_ref[11:12, :], b32_ref[12:13, :])

    out_ref[...] = x3.astype(out_ref.dtype)


# ----------------------------------------------------------------------------
# Group masks: encode the three path batchings + memory batching, packed as ONE array
# ----------------------------------------------------------------------------
@functools.lru_cache(maxsize=None)
def _packed_masks(T, M, A, S):
    n, nk = T * A * S, M * A * S
    w = max(n, nk)
    r = np.arange(n)
    t, a, s = r // (A * S), (r // S) % A, r % S
    rk = np.arange(nk)
    ka, ks = (rk // S) % A, rk % S

    def msk(same):
        return np.where(same, 0.0, NEG_INF).astype(np.float32)

    def pad(m):                                   # pad key dim to common width w
        out = np.full((n, w), NEG_INF, np.float32)
        out[:, :m.shape[1]] = m
        return out

    m_t = msk((a[:, None] == a[None, :]) & (s[:, None] == s[None, :]))    # temporal: same (a,s)
    m_c = msk(s[:, None] == s[None, :])                                   # cross:    same s
    m_s = msk((t[:, None] == t[None, :]) & (s[:, None] == s[None, :]))    # spatial:  same (t,s)
    m_m = msk((a[:, None] == ka[None, :]) & (s[:, None] == ks[None, :]))  # dec-cross: same (a,s)
    return jnp.asarray(np.concatenate([pad(m_t), pad(m_c), pad(m_s), pad(m_m)], axis=0))


# ----------------------------------------------------------------------------
# TransformerDecoderLayer forward (one pallas_call, grid-less, all VMEM resident)
# ----------------------------------------------------------------------------
def transformer_decoder_layer(tgt, memory, packed_params, nhead=NHEAD):
    T, A, S, D = tgt.shape
    M = memory.shape[0]
    n, nk = T * A * S, M * A * S
    masks = _packed_masks(T, M, A, S)

    vmem = pl.BlockSpec(memory_space=pltpu.MemorySpace.VMEM)
    out = pl.pallas_call(
        functools.partial(_decoder_layer_kernel, nhead=nhead),
        out_shape=jax.ShapeDtypeStruct((n, D), jnp.float32),
        in_specs=[vmem] * 9,
        out_specs=vmem,
    )(tgt.reshape(n, D), memory.reshape(nk, D), masks, *packed_params)

    # need_weights=False -> attention weights are None
    return out.reshape(T, A, S, D), None, None


# ----------------------------------------------------------------------------
# Parameter init (natural layout) and host-side packing
# ----------------------------------------------------------------------------
def _init_linear(key, d_in, d_out, scale=0.1):
    kw, kb = jax.random.split(key)
    return (scale * jax.random.normal(kw, (d_in, d_out), jnp.float32),
            scale * jax.random.normal(kb, (d_out,), jnp.float32))


def _init_attn_path(key, d):
    names = ("wq", "wk", "wv", "wo", "wi", "wg")
    return {nm: _init_linear(k, d, d) for nm, k in zip(names, jax.random.split(key, 6))}


def init_params(key, d=D_MODEL, ff=DIM_FF):
    ks = jax.random.split(key, 6)
    ones, zeros = jnp.ones((d,), jnp.float32), jnp.zeros((d,), jnp.float32)
    return {
        "self_t": _init_attn_path(ks[0], d),
        "self_c": _init_attn_path(ks[1], d),
        "self_s": _init_attn_path(ks[2], d),
        "cross_t": _init_attn_path(ks[3], d),
        "ffn1": _init_linear(ks[4], d, ff),
        "ffn2": _init_linear(ks[5], ff, d),
        "norm1": (ones, zeros), "norm2": (ones, zeros), "norm3": (ones, zeros),
    }


def _block_diag(mats):
    nb = len(mats)
    rows = [jnp.concatenate([m if j == i else jnp.zeros_like(m) for j in range(nb)], axis=1)
            for i, m in enumerate(mats)]
    return jnp.concatenate(rows, axis=0)


def pack_params(p, d=D_MODEL, nhead=NHEAD, ff=DIM_FF):
    """Host-side packing: fold 1/sqrt(head_dim) into Q, build block-diagonal path weights,
    and stack everything into 6 contiguous arrays with sublane-aligned row offsets."""
    scale = 1.0 / float(d // nhead) ** 0.5
    paths = (p["self_t"], p["self_c"], p["self_s"])

    w_q = jnp.concatenate([pp["wq"][0] * scale for pp in paths], axis=1)   # (d, 3d)
    w_k = jnp.concatenate([pp["wk"][0] for pp in paths], axis=1)
    w_v = jnp.concatenate([pp["wv"][0] for pp in paths], axis=1)
    w_o = _block_diag([pp["wo"][0] for pp in paths])                       # (3d, 3d)
    w_i = _block_diag([pp["wi"][0] for pp in paths])
    w_g = _block_diag([pp["wg"][0] for pp in paths])
    w96 = jnp.concatenate([w_q, w_k, w_v, w_o, w_i, w_g], axis=0)          # (12d, 3d)

    b96 = jnp.zeros((8, 3 * d), jnp.float32)
    b96 = b96.at[0].set(jnp.concatenate([pp["wq"][1] * scale for pp in paths]))
    b96 = b96.at[1].set(jnp.concatenate([pp["wk"][1] for pp in paths]))
    b96 = b96.at[2].set(jnp.concatenate([pp["wv"][1] for pp in paths]))
    b96 = b96.at[3].set(jnp.concatenate([pp["wo"][1] for pp in paths]))
    b96 = b96.at[4].set(jnp.concatenate([pp["wi"][1] for pp in paths]))
    b96 = b96.at[5].set(jnp.concatenate([pp["wg"][1] for pp in paths]))

    x = p["cross_t"]
    sum3 = jnp.concatenate([jnp.eye(d, dtype=jnp.float32)] * 3, axis=0)    # (3d, d): [I;I;I]
    w32 = jnp.concatenate(
        [sum3, x["wq"][0] * scale, x["wk"][0], x["wv"][0],
         x["wo"][0], x["wi"][0], x["wg"][0], p["ffn2"][0]], axis=0)        # (9d+ff, d)

    b32_rows = [x["wq"][1] * scale, x["wk"][1], x["wv"][1], x["wo"][1], x["wi"][1],
                x["wg"][1], p["ffn2"][1],
                p["norm1"][0], p["norm1"][1], p["norm2"][0], p["norm2"][1],
                p["norm3"][0], p["norm3"][1]]
    b32 = jnp.zeros((16, d), jnp.float32)
    for i, row in enumerate(b32_rows):
        b32 = b32.at[i].set(row)

    w64 = p["ffn1"][0]                      # (d, ff)
    b64 = p["ffn1"][1].reshape(1, ff)       # (1, ff)
    return (w96, w32, w64, b96, b32, b64)


if __name__ == "__main__":
    key = jax.random.PRNGKey(0)
    k_tgt, k_mem, k_par = jax.random.split(key, 3)

    T, M, A, S = 8, 16, 2, 4   # tgt_len, memory_len, num_agent, sample_num
    tgt = jax.random.normal(k_tgt, (T, A, S, D_MODEL), jnp.float32)
    memory = jax.random.normal(k_mem, (M, A, S, D_MODEL), jnp.float32)
    packed = pack_params(init_params(k_par))

    out, _, _ = transformer_decoder_layer(tgt, memory, packed)
    out = jax.block_until_ready(out)

    assert out.shape == (T, A, S, D_MODEL)
    assert bool(jnp.all(jnp.isfinite(out)))
    print("KERNEL_OK")
</pallas_src>

<mosaic_0001>
module attributes {stable_mosaic.version = 11 : i64} {
  func.func @_decoder_layer_kernel(%arg0: memref<64x32xf32, #tpu.memory_space<vmem>>, %arg1: memref<128x32xf32, #tpu.memory_space<vmem>>, %arg2: memref<256x128xf32, #tpu.memory_space<vmem>>, %arg3: memref<384x96xf32, #tpu.memory_space<vmem>>, %arg4: memref<352x32xf32, #tpu.memory_space<vmem>>, %arg5: memref<32x64xf32, #tpu.memory_space<vmem>>, %arg6: memref<8x96xf32, #tpu.memory_space<vmem>>, %arg7: memref<16x32xf32, #tpu.memory_space<vmem>>, %arg8: memref<1x64xf32, #tpu.memory_space<vmem>>, %arg9: memref<64x32xf32, #tpu.memory_space<vmem>>) attributes {dimension_semantics = [], scalar_prefetch = 0 : i64, scratch_operands = 0 : i64, tpu.core_type = #tpu.core_type<tc>} {
    %c0 = arith.constant 0 : index
    %c0_0 = arith.constant 0 : index
    %0 = vector.load %arg0[%c0, %c0_0] : memref<64x32xf32, #tpu.memory_space<vmem>>, vector<64x32xf32>
    %c0_1 = arith.constant 0 : index
    %c0_2 = arith.constant 0 : index
    %1 = vector.load %arg1[%c0_1, %c0_2] : memref<128x32xf32, #tpu.memory_space<vmem>>, vector<128x32xf32>
    %c0_3 = arith.constant 0 : index
    %c0_4 = arith.constant 0 : index
    %2 = vector.load %arg2[%c0_3, %c0_4] : memref<256x128xf32, #tpu.memory_space<vmem>>, vector<64x64xf32>
    %c64 = arith.constant 64 : index
    %c0_5 = arith.constant 0 : index
    %3 = vector.load %arg2[%c64, %c0_5] : memref<256x128xf32, #tpu.memory_space<vmem>>, vector<64x64xf32>
    %c128 = arith.constant 128 : index
    %c0_6 = arith.constant 0 : index
    %4 = vector.load %arg2[%c128, %c0_6] : memref<256x128xf32, #tpu.memory_space<vmem>>, vector<64x64xf32>
    %c192 = arith.constant 192 : index
    %c0_7 = arith.constant 0 : index
    %5 = vector.load %arg2[%c192, %c0_7] : memref<256x128xf32, #tpu.memory_space<vmem>>, vector<64x128xf32>
    %c0_8 = arith.constant 0 : index
    %c0_9 = arith.constant 0 : index
    %6 = vector.load %arg3[%c0_8, %c0_9] : memref<384x96xf32, #tpu.memory_space<vmem>>, vector<32x96xf32>
    %cst = arith.constant dense<0.000000e+00> : vector<64x96xf32>
    %7 = tpu.matmul %0, %6, %cst {dimension_numbers = #tpu.dot_dimension_numbers<[1], [0], [0], [1], [0, 0, 1, 1], [], []>} : vector<64x32xf32>, vector<32x96xf32>, vector<64x96xf32> -> vector<64x96xf32>
    %c0_10 = arith.constant 0 : index
    %c0_11 = arith.constant 0 : index
    %8 = vector.load %arg6[%c0_10, %c0_11] : memref<8x96xf32, #tpu.memory_space<vmem>>, vector<1x96xf32>
    %9 = vector.broadcast %8 : vector<1x96xf32> to vector<64x96xf32>
    %10 = arith.addf %7, %9 : vector<64x96xf32>
    %c32 = arith.constant 32 : index
    %c0_12 = arith.constant 0 : index
    %11 = vector.load %arg3[%c32, %c0_12] : memref<384x96xf32, #tpu.memory_space<vmem>>, vector<32x96xf32>
    %cst_13 = arith.constant dense<0.000000e+00> : vector<64x96xf32>
    %12 = tpu.matmul %0, %11, %cst_13 {dimension_numbers = #tpu.dot_dimension_numbers<[1], [0], [0], [1], [0, 0, 1, 1], [], []>} : vector<64x32xf32>, vector<32x96xf32>, vector<64x96xf32> -> vector<64x96xf32>
    %c1 = arith.constant 1 : index
    %c0_14 = arith.constant 0 : index
    %13 = vector.load %arg6[%c1, %c0_14] : memref<8x96xf32, #tpu.memory_space<vmem>>, vector<1x96xf32>
    %14 = vector.broadcast %13 : vector<1x96xf32> to vector<64x96xf32>
    %15 = arith.addf %12, %14 : vector<64x96xf32>
    %c64_15 = arith.constant 64 : index
    %c0_16 = arith.constant 0 : index
    %16 = vector.load %arg3[%c64_15, %c0_16] : memref<384x96xf32, #tpu.memory_space<vmem>>, vector<32x96xf32>
    %cst_17 = arith.constant dense<0.000000e+00> : vector<64x96xf32>
    %17 = tpu.matmul %0, %16, %cst_17 {dimension_numbers = #tpu.dot_dimension_numbers<[1], [0], [0], [1], [0, 0, 1, 1], [], []>} : vector<64x32xf32>, vector<32x96xf32>, vector<64x96xf32> -> vector<64x96xf32>
    %c2 = arith.constant 2 : index
    %c0_18 = arith.constant 0 : index
    %18 = vector.load %arg6[%c2, %c0_18] : memref<8x96xf32, #tpu.memory_space<vmem>>, vector<1x96xf32>
    %19 = vector.broadcast %18 : vector<1x96xf32> to vector<64x96xf32>
    %20 = arith.addf %17, %19 : vector<64x96xf32>
    %21 = vector.extract_strided_slice %10 {offsets = [0, 0], sizes = [64, 8], strides = [1, 1]} : vector<64x96xf32> to vector<64x8xf32>
    %22 = vector.extract_strided_slice %15 {offsets = [0, 0], sizes = [64, 8], strides = [1, 1]} : vector<64x96xf32> to vector<64x8xf32>
    %cst_19 = arith.constant dense<0.000000e+00> : vector<64x64xf32>
    %23 = tpu.matmul %21, %22, %cst_19 {dimension_numbers = #tpu.dot_dimension_numbers<[1], [1], [0], [0], [0, 0, 1, 0], [], []>} : vector<64x8xf32>, vector<64x8xf32>, vector<64x64xf32> -> vector<64x64xf32>
    %24 = arith.addf %23, %2 : vector<64x64xf32>
    %cst_20 = arith.constant dense<0xFF800000> : vector<64xf32>
    %25 = vector.multi_reduction <maximumf>, %24, %cst_20 [1] : vector<64x64xf32> to vector<64xf32>
    %26 = vector.shape_cast %25 : vector<64xf32> to vector<64x1xf32>
    %27 = vector.broadcast %26 : vector<64x1xf32> to vector<64x64xf32>
    %28 = arith.subf %24, %27 : vector<64x64xf32>
    %29 = math.exp %28 : vector<64x64xf32>
    %cst_21 = arith.constant dense<0.000000e+00> : vector<64xf32>
    %30 = vector.multi_reduction <add>, %29, %cst_21 [1] : vector<64x64xf32> to vector<64xf32>
    %31 = vector.shape_cast %30 : vector<64xf32> to vector<64x1xf32>
    %cst_22 = arith.constant 1.000000e+00 : f32
    %32 = vector.broadcast %cst_22 : f32 to vector<64x1xf32>
    %33 = arith.divf %32, %31 : vector<64x1xf32>
    %34 = vector.broadcast %33 : vector<64x1xf32> to vector<64x64xf32>
    %35 = arith.mulf %29, %34 : vector<64x64xf32>
    %36 = vector.extract_strided_slice %20 {offsets = [0, 0], sizes = [64, 8], strides = [1, 1]} : vector<64x96xf32> to vector<64x8xf32>
    %cst_23 = arith.constant dense<0.000000e+00> : vector<64x8xf32>
    %37 = tpu.matmul %35, %36, %cst_23 {dimension_numbers = #tpu.dot_dimension_numbers<[1], [0], [0], [1], [0, 0, 1, 1], [], []>} : vector<64x64xf32>, vector<64x8xf32>, vector<64x8xf32> -> vector<64x8xf32>
    %38 = vector.extract_strided_slice %10 {offsets = [0, 8], sizes = [64, 8], strides = [1, 1]} : vector<64x96xf32> to vector<64x8xf32>
    %39 = vector.extract_strided_slice %15 {offsets = [0, 8], sizes = [64, 8], strides = [1, 1]} : vector<64x96xf32> to vector<64x8xf32>
    %cst_24 = arith.constant dense<0.000000e+00> : vector<64x64xf32>
    %40 = tpu.matmul %38, %39, %cst_24 {dimension_numbers = #tpu.dot_dimension_numbers<[1], [1], [0], [0], [0, 0, 1, 0], [], []>} : vector<64x8xf32>, vector<64x8xf32>, vector<64x64xf32> -> vector<64x64xf32>
    %41 = arith.addf %40, %2 : vector<64x64xf32>
    %cst_25 = arith.constant dense<0xFF800000> : vector<64xf32>
    %42 = vector.multi_reduction <maximumf>, %41, %cst_25 [1] : vector<64x64xf32> to vector<64xf32>
    %43 = vector.shape_cast %42 : vector<64xf32> to vector<64x1xf32>
    %44 = vector.broadcast %43 : vector<64x1xf32> to vector<64x64xf32>
    %45 = arith.subf %41, %44 : vector<64x64xf32>
    %46 = math.exp %45 : vector<64x64xf32>
    %cst_26 = arith.constant dense<0.000000e+00> : vector<64xf32>
    %47 = vector.multi_reduction <add>, %46, %cst_26 [1] : vector<64x64xf32> to vector<64xf32>
    %48 = vector.shape_cast %47 : vector<64xf32> to vector<64x1xf32>
    %cst_27 = arith.constant 1.000000e+00 : f32
    %49 = vector.broadcast %cst_27 : f32 to vector<64x1xf32>
    %50 = arith.divf %49, %48 : vector<64x1xf32>
    %51 = vector.broadcast %50 : vector<64x1xf32> to vector<64x64xf32>
    %52 = arith.mulf %46, %51 : vector<64x64xf32>
    %53 = vector.extract_strided_slice %20 {offsets = [0, 8], sizes = [64, 8], strides = [1, 1]} : vector<64x96xf32> to vector<64x8xf32>
    %cst_28 = arith.constant dense<0.000000e+00> : vector<64x8xf32>
    %54 = tpu.matmul %52, %53, %cst_28 {dimension_numbers = #tpu.dot_dimension_numbers<[1], [0], [0], [1], [0, 0, 1, 1], [], []>} : vector<64x64xf32>, vector<64x8xf32>, vector<64x8xf32> -> vector<64x8xf32>
    %55 = vector.extract_strided_slice %10 {offsets = [0, 16], sizes = [64, 8], strides = [1, 1]} : vector<64x96xf32> to vector<64x8xf32>
    %56 = vector.extract_strided_slice %15 {offsets = [0, 16], sizes = [64, 8], strides = [1, 1]} : vector<64x96xf32> to vector<64x8xf32>
    %cst_29 = arith.constant dense<0.000000e+00> : vector<64x64xf32>
    %57 = tpu.matmul %55, %56, %cst_29 {dimension_numbers = #tpu.dot_dimension_numbers<[1], [1], [0], [0], [0, 0, 1, 0], [], []>} : vector<64x8xf32>, vector<64x8xf32>, vector<64x64xf32> -> vector<64x64xf32>
    %58 = arith.addf %57, %2 : vector<64x64xf32>
    %cst_30 = arith.constant dense<0xFF800000> : vector<64xf32>
    %59 = vector.multi_reduction <maximumf>, %58, %cst_30 [1] : vector<64x64xf32> to vector<64xf32>
    %60 = vector.shape_cast %59 : vector<64xf32> to vector<64x1xf32>
    %61 = vector.broadcast %60 : vector<64x1xf32> to vector<64x64xf32>
    %62 = arith.subf %58, %61 : vector<64x64xf32>
    %63 = math.exp %62 : vector<64x64xf32>
    %cst_31 = arith.constant dense<0.000000e+00> : vector<64xf32>
    %64 = vector.multi_reduction <add>, %63, %cst_31 [1] : vector<64x64xf32> to vector<64xf32>
    %65 = vector.shape_cast %64 : vector<64xf32> to vector<64x1xf32>
    %cst_32 = arith.constant 1.000000e+00 : f32
    %66 = vector.broadcast %cst_32 : f32 to vector<64x1xf32>
    %67 = arith.divf %66, %65 : vector<64x1xf32>
    %68 = vector.broadcast %67 : vector<64x1xf32> to vector<64x64xf32>
    %69 = arith.mulf %63, %68 : vector<64x64xf32>
    %70 = vector.extract_strided_slice %20 {offsets = [0, 16], sizes = [64, 8], strides = [1, 1]} : vector<64x96xf32> to vector<64x8xf32>
    %cst_33 = arith.constant dense<0.000000e+00> : vector<64x8xf32>
    %71 = tpu.matmul %69, %70, %cst_33 {dimension_numbers = #tpu.dot_dimension_numbers<[1], [0], [0], [1], [0, 0, 1, 1], [], []>} : vector<64x64xf32>, vector<64x8xf32>, vector<64x8xf32> -> vector<64x8xf32>
    %72 = vector.extract_strided_slice %10 {offsets = [0, 24], sizes = [64, 8], strides = [1, 1]} : vector<64x96xf32> to vector<64x8xf32>
    %73 = vector.extract_strided_slice %15 {offsets = [0, 24], sizes = [64, 8], strides = [1, 1]} : vector<64x96xf32> to vector<64x8xf32>
    %cst_34 = arith.constant dense<0.000000e+00> : vector<64x64xf32>
    %74 = tpu.matmul %72, %73, %cst_34 {dimension_numbers = #tpu.dot_dimension_numbers<[1], [1], [0], [0], [0, 0, 1, 0], [], []>} : vector<64x8xf32>, vector<64x8xf32>, vector<64x64xf32> -> vector<64x64xf32>
    %75 = arith.addf %74, %2 : vector<64x64xf32>
    %cst_35 = arith.constant dense<0xFF800000> : vector<64xf32>
    %76 = vector.multi_reduction <maximumf>, %75, %cst_35 [1] : vector<64x64xf32> to vector<64xf32>
    %77 = vector.shape_cast %76 : vector<64xf32> to vector<64x1xf32>
    %78 = vector.broadcast %77 : vector<64x1xf32> to vector<64x64xf32>
    %79 = arith.subf %75, %78 : vector<64x64xf32>
    %80 = math.exp %79 : vector<64x64xf32>
    %cst_36 = arith.constant dense<0.000000e+00> : vector<64xf32>
    %81 = vector.multi_reduction <add>, %80, %cst_36 [1] : vector<64x64xf32> to vector<64xf32>
    %82 = vector.shape_cast %81 : vector<64xf32> to vector<64x1xf32>
    %cst_37 = arith.constant 1.000000e+00 : f32
    %83 = vector.broadcast %cst_37 : f32 to vector<64x1xf32>
    %84 = arith.divf %83, %82 : vector<64x1xf32>
    %85 = vector.broadcast %84 : vector<64x1xf32> to vector<64x64xf32>
    %86 = arith.mulf %80, %85 : vector<64x64xf32>
    %87 = vector.extract_strided_slice %20 {offsets = [0, 24], sizes = [64, 8], strides = [1, 1]} : vector<64x96xf32> to vector<64x8xf32>
    %cst_38 = arith.constant dense<0.000000e+00> : vector<64x8xf32>
    %88 = tpu.matmul %86, %87, %cst_38 {dimension_numbers = #tpu.dot_dimension_numbers<[1], [0], [0], [1], [0, 0, 1, 1], [], []>} : vector<64x64xf32>, vector<64x8xf32>, vector<64x8xf32> -> vector<64x8xf32>
    %89 = vector.extract_strided_slice %10 {offsets = [0, 32], sizes = [64, 8], strides = [1, 1]} : vector<64x96xf32> to vector<64x8xf32>
    %90 = vector.extract_strided_slice %15 {offsets = [0, 32], sizes = [64, 8], strides = [1, 1]} : vector<64x96xf32> to vector<64x8xf32>
    %cst_39 = arith.constant dense<0.000000e+00> : vector<64x64xf32>
    %91 = tpu.matmul %89, %90, %cst_39 {dimension_numbers = #tpu.dot_dimension_numbers<[1], [1], [0], [0], [0, 0, 1, 0], [], []>} : vector<64x8xf32>, vector<64x8xf32>, vector<64x64xf32> -> vector<64x64xf32>
    %92 = arith.addf %91, %3 : vector<64x64xf32>
    %cst_40 = arith.constant dense<0xFF800000> : vector<64xf32>
    %93 = vector.multi_reduction <maximumf>, %92, %cst_40 [1] : vector<64x64xf32> to vector<64xf32>
    %94 = vector.shape_cast %93 : vector<64xf32> to vector<64x1xf32>
    %95 = vector.broadcast %94 : vector<64x1xf32> to vector<64x64xf32>
    %96 = arith.subf %92, %95 : vector<64x64xf32>
    %97 = math.exp %96 : vector<64x64xf32>
    %cst_41 = arith.constant dense<0.000000e+00> : vector<64xf32>
    %98 = vector.multi_reduction <add>, %97, %cst_41 [1] : vector<64x64xf32> to vector<64xf32>
    %99 = vector.shape_cast %98 : vector<64xf32> to vector<64x1xf32>
    %cst_42 = arith.constant 1.000000e+00 : f32
    %100 = vector.broadcast %cst_42 : f32 to vector<64x1xf32>
    %101 = arith.divf %100, %99 : vector<64x1xf32>
    %102 = vector.broadcast %101 : vector<64x1xf32> to vector<64x64xf32>
    %103 = arith.mulf %97, %102 : vector<64x64xf32>
    %104 = vector.extract_strided_slice %20 {offsets = [0, 32], sizes = [64, 8], strides = [1, 1]} : vector<64x96xf32> to vector<64x8xf32>
    %cst_43 = arith.constant dense<0.000000e+00> : vector<64x8xf32>
    %105 = tpu.matmul %103, %104, %cst_43 {dimension_numbers = #tpu.dot_dimension_numbers<[1], [0], [0], [1], [0, 0, 1, 1], [], []>} : vector<64x64xf32>, vector<64x8xf32>, vector<64x8xf32> -> vector<64x8xf32>
    %106 = vector.extract_strided_slice %10 {offsets = [0, 40], sizes = [64, 8], strides = [1, 1]} : vector<64x96xf32> to vector<64x8xf32>
    %107 = vector.extract_strided_slice %15 {offsets = [0, 40], sizes = [64, 8], strides = [1, 1]} : vector<64x96xf32> to vector<64x8xf32>
    %cst_44 = arith.constant dense<0.000000e+00> : vector<64x64xf32>
    %108 = tpu.matmul %106, %107, %cst_44 {dimension_numbers = #tpu.dot_dimension_numbers<[1], [1], [0], [0], [0, 0, 1, 0], [], []>} : vector<64x8xf32>, vector<64x8xf32>, vector<64x64xf32> -> vector<64x64xf32>
    %109 = arith.addf %108, %3 : vector<64x64xf32>
    %cst_45 = arith.constant dense<0xFF800000> : vector<64xf32>
    %110 = vector.multi_reduction <maximumf>, %109, %cst_45 [1] : vector<64x64xf32> to vector<64xf32>
    %111 = vector.shape_cast %110 : vector<64xf32> to vector<64x1xf32>
    %112 = vector.broadcast %111 : vector<64x1xf32> to vector<64x64xf32>
    %113 = arith.subf %109, %112 : vector<64x64xf32>
    %114 = math.exp %113 : vector<64x64xf32>
    %cst_46 = arith.constant dense<0.000000e+00> : vector<64xf32>
    %115 = vector.multi_reduction <add>, %114, %cst_46 [1] : vector<64x64xf32> to vector<64xf32>
    %116 = vector.shape_cast %115 : vector<64xf32> to vector<64x1xf32>
    %cst_47 = arith.constant 1.000000e+00 : f32
    %117 = vector.broadcast %cst_47 : f32 to vector<64x1xf32>
    %118 = arith.divf %117, %116 : vector<64x1xf32>
    %119 = vector.broadcast %118 : vector<64x1xf32> to vector<64x64xf32>
    %120 = arith.mulf %114, %119 : vector<64x64xf32>
    %121 = vector.extract_strided_slice %20 {offsets = [0, 40], sizes = [64, 8], strides = [1, 1]} : vector<64x96xf32> to vector<64x8xf32>
    %cst_48 = arith.constant dense<0.000000e+00> : vector<64x8xf32>
    %122 = tpu.matmul %120, %121, %cst_48 {dimension_numbers = #tpu.dot_dimension_numbers<[1], [0], [0], [1], [0, 0, 1, 1], [], []>} : vector<64x64xf32>, vector<64x8xf32>, vector<64x8xf32> -> vector<64x8xf32>
    %123 = vector.extract_strided_slice %10 {offsets = [0, 48], sizes = [64, 8], strides = [1, 1]} : vector<64x96xf32> to vector<64x8xf32>
    %124 = vector.extract_strided_slice %15 {offsets = [0, 48], sizes = [64, 8], strides = [1, 1]} : vector<64x96xf32> to vector<64x8xf32>
    %cst_49 = arith.constant dense<0.000000e+00> : vector<64x64xf32>
    %125 = tpu.matmul %123, %124, %cst_49 {dimension_numbers = #tpu.dot_dimension_numbers<[1], [1], [0], [0], [0, 0, 1, 0], [], []>} : vector<64x8xf32>, vector<64x8xf32>, vector<64x64xf32> -> vector<64x64xf32>
    %126 = arith.addf %125, %3 : vector<64x64xf32>
    %cst_50 = arith.constant dense<0xFF800000> : vector<64xf32>
    %127 = vector.multi_reduction <maximumf>, %126, %cst_50 [1] : vector<64x64xf32> to vector<64xf32>
    %128 = vector.shape_cast %127 : vector<64xf32> to vector<64x1xf32>
    %129 = vector.broadcast %128 : vector<64x1xf32> to vector<64x64xf32>
    %130 = arith.subf %126, %129 : vector<64x64xf32>
    %131 = math.exp %130 : vector<64x64xf32>
    %cst_51 = arith.constant dense<0.000000e+00> : vector<64xf32>
    %132 = vector.multi_reduction <add>, %131, %cst_51 [1] : vector<64x64xf32> to vector<64xf32>
    %133 = vector.shape_cast %132 : vector<64xf32> to vector<64x1xf32>
    %cst_52 = arith.constant 1.000000e+00 : f32
    %134 = vector.broadcast %cst_52 : f32 to vector<64x1xf32>
    %135 = arith.divf %134, %133 : vector<64x1xf32>
    %136 = vector.broadcast %135 : vector<64x1xf32> to vector<64x64xf32>
    %137 = arith.mulf %131, %136 : vector<64x64xf32>
    %138 = vector.extract_strided_slice %20 {offsets = [0, 48], sizes = [64, 8], strides = [1, 1]} : vector<64x96xf32> to vector<64x8xf32>
    %cst_53 = arith.constant dense<0.000000e+00> : vector<64x8xf32>
    %139 = tpu.matmul %137, %138, %cst_53 {dimension_numbers = #tpu.dot_dimension_numbers<[1], [0], [0], [1], [0, 0, 1, 1], [], []>} : vector<64x64xf32>, vector<64x8xf32>, vector<64x8xf32> -> vector<64x8xf32>
    %140 = vector.extract_strided_slice %10 {offsets = [0, 56], sizes = [64, 8], strides = [1, 1]} : vector<64x96xf32> to vector<64x8xf32>
    %141 = vector.extract_strided_slice %15 {offsets = [0, 56], sizes = [64, 8], strides = [1, 1]} : vector<64x96xf32> to vector<64x8xf32>
    %cst_54 = arith.constant dense<0.000000e+00> : vector<64x64xf32>
    %142 = tpu.matmul %140, %141, %cst_54 {dimension_numbers = #tpu.dot_dimension_numbers<[1], [1], [0], [0], [0, 0, 1, 0], [], []>} : vector<64x8xf32>, vector<64x8xf32>, vector<64x64xf32> -> vector<64x64xf32>
    %143 = arith.addf %142, %3 : vector<64x64xf32>
    %cst_55 = arith.constant dense<0xFF800000> : vector<64xf32>
    %144 = vector.multi_reduction <maximumf>, %143, %cst_55 [1] : vector<64x64xf32> to vector<64xf32>
    %145 = vector.shape_cast %144 : vector<64xf32> to vector<64x1xf32>
    %146 = vector.broadcast %145 : vector<64x1xf32> to vector<64x64xf32>
    %147 = arith.subf %143, %146 : vector<64x64xf32>
    %148 = math.exp %147 : vector<64x64xf32>
    %cst_56 = arith.constant dense<0.000000e+00> : vector<64xf32>
    %149 = vector.multi_reduction <add>, %148, %cst_56 [1] : vector<64x64xf32> to vector<64xf32>
    %150 = vector.shape_cast %149 : vector<64xf32> to vector<64x1xf32>
    %cst_57 = arith.constant 1.000000e+00 : f32
    %151 = vector.broadcast %cst_57 : f32 to vector<64x1xf32>
    %152 = arith.divf %151, %150 : vector<64x1xf32>
    %153 = vector.broadcast %152 : vector<64x1xf32> to vector<64x64xf32>
    %154 = arith.mulf %148, %153 : vector<64x64xf32>
    %155 = vector.extract_strided_slice %20 {offsets = [0, 56], sizes = [64, 8], strides = [1, 1]} : vector<64x96xf32> to vector<64x8xf32>
    %cst_58 = arith.constant dense<0.000000e+00> : vector<64x8xf32>
    %156 = tpu.matmul %154, %155, %cst_58 {dimension_numbers = #tpu.dot_dimension_numbers<[1], [0], [0], [1], [0, 0, 1, 1], [], []>} : vector<64x64xf32>, vector<64x8xf32>, vector<64x8xf32> -> vector<64x8xf32>
    %157 = vector.extract_strided_slice %10 {offsets = [0, 64], sizes = [64, 8], strides = [1, 1]} : vector<64x96xf32> to vector<64x8xf32>
    %158 = vector.extract_strided_slice %15 {offsets = [0, 64], sizes = [64, 8], strides = [1, 1]} : vector<64x96xf32> to vector<64x8xf32>
    %cst_59 = arith.constant dense<0.000000e+00> : vector<64x64xf32>
    %159 = tpu.matmul %157, %158, %cst_59 {dimension_numbers = #tpu.dot_dimension_numbers<[1], [1], [0], [0], [0, 0, 1, 0], [], []>} : vector<64x8xf32>, vector<64x8xf32>, vector<64x64xf32> -> vector<64x64xf32>
    %160 = arith.addf %159, %4 : vector<64x64xf32>
    %cst_60 = arith.constant dense<0xFF800000> : vector<64xf32>
    %161 = vector.multi_reduction <maximumf>, %160, %cst_60 [1] : vector<64x64xf32> to vector<64xf32>
    %162 = vector.shape_cast %161 : vector<64xf32> to vector<64x1xf32>
    %163 = vector.broadcast %162 : vector<64x1xf32> to vector<64x64xf32>
    %164 = arith.subf %160, %163 : vector<64x64xf32>
    %165 = math.exp %164 : vector<64x64xf32>
    %cst_61 = arith.constant dense<0.000000e+00> : vector<64xf32>
    %166 = vector.multi_reduction <add>, %165, %cst_61 [1] : vector<64x64xf32> to vector<64xf32>
    %167 = vector.shape_cast %166 : vector<64xf32> to vector<64x1xf32>
    %cst_62 = arith.constant 1.000000e+00 : f32
    %168 = vector.broadcast %cst_62 : f32 to vector<64x1xf32>
    %169 = arith.divf %168, %167 : vector<64x1xf32>
    %170 = vector.broadcast %169 : vector<64x1xf32> to vector<64x64xf32>
    %171 = arith.mulf %165, %170 : vector<64x64xf32>
    %172 = vector.extract_strided_slice %20 {offsets = [0, 64], sizes = [64, 8], strides = [1, 1]} : vector<64x96xf32> to vector<64x8xf32>
    %cst_63 = arith.constant dense<0.000000e+00> : vector<64x8xf32>
    %173 = tpu.matmul %171, %172, %cst_63 {dimension_numbers = #tpu.dot_dimension_numbers<[1], [0], [0], [1], [0, 0, 1, 1], [], []>} : vector<64x64xf32>, vector<64x8xf32>, vector<64x8xf32> -> vector<64x8xf32>
    %174 = vector.extract_strided_slice %10 {offsets = [0, 72], sizes = [64, 8], strides = [1, 1]} : vector<64x96xf32> to vector<64x8xf32>
    %175 = vector.extract_strided_slice %15 {offsets = [0, 72], sizes = [64, 8], strides = [1, 1]} : vector<64x96xf32> to vector<64x8xf32>
    %cst_64 = arith.constant dense<0.000000e+00> : vector<64x64xf32>
    %176 = tpu.matmul %174, %175, %cst_64 {dimension_numbers = #tpu.dot_dimension_numbers<[1], [1], [0], [0], [0, 0, 1, 0], [], []>} : vector<64x8xf32>, vector<64x8xf32>, vector<64x64xf32> -> vector<64x64xf32>
    %177 = arith.addf %176, %4 : vector<64x64xf32>
    %cst_65 = arith.constant dense<0xFF800000> : vector<64xf32>
    %178 = vector.multi_reduction <maximumf>, %177, %cst_65 [1] : vector<64x64xf32> to vector<64xf32>
    %179 = vector.shape_cast %178 : vector<64xf32> to vector<64x1xf32>
    %180 = vector.broadcast %179 : vector<64x1xf32> to vector<64x64xf32>
    %181 = arith.subf %177, %180 : vector<64x64xf32>
    %182 = math.exp %181 : vector<64x64xf32>
    %cst_66 = arith.constant dense<0.000000e+00> : vector<64xf32>
    %183 = vector.multi_reduction <add>, %182, %cst_66 [1] : vector<64x64xf32> to vector<64xf32>
    %184 = vector.shape_cast %183 : vector<64xf32> to vector<64x1xf32>
    %cst_67 = arith.constant 1.000000e+00 : f32
    %185 = vector.broadcast %cst_67 : f32 to vector<64x1xf32>
    %186 = arith.divf %185, %184 : vector<64x1xf32>
    %187 = vector.broadcast %186 : vector<64x1xf32> to vector<64x64xf32>
    %188 = arith.mulf %182, %187 : vector<64x64xf32>
    %189 = vector.extract_strided_slice %20 {offsets = [0, 72], sizes = [64, 8], strides = [1, 1]} : vector<64x96xf32> to vector<64x8xf32>
    %cst_68 = arith.constant dense<0.000000e+00> : vector<64x8xf32>
    %190 = tpu.matmul %188, %189, %cst_68 {dimension_numbers = #tpu.dot_dimension_numbers<[1], [0], [0], [1], [0, 0, 1, 1], [], []>} : vector<64x64xf32>, vector<64x8xf32>, vector<64x8xf32> -> vector<64x8xf32>
    %191 = vector.extract_strided_slice %10 {offsets = [0, 80], sizes = [64, 8], strides = [1, 1]} : vector<64x96xf32> to vector<64x8xf32>
    %192 = vector.extract_strided_slice %15 {offsets = [0, 80], sizes = [64, 8], strides = [1, 1]} : vector<64x96xf32> to vector<64x8xf32>
    %cst_69 = arith.constant dense<0.000000e+00> : vector<64x64xf32>
    %193 = tpu.matmul %191, %192, %cst_69 {dimension_numbers = #tpu.dot_dimension_numbers<[1], [1], [0], [0], [0, 0, 1, 0], [], []>} : vector<64x8xf32>, vector<64x8xf32>, vector<64x64xf32> -> vector<64x64xf32>
    %194 = arith.addf %193, %4 : vector<64x64xf32>
    %cst_70 = arith.constant dense<0xFF800000> : vector<64xf32>
    %195 = vector.multi_reduction <maximumf>, %194, %cst_70 [1] : vector<64x64xf32> to vector<64xf32>
    %196 = vector.shape_cast %195 : vector<64xf32> to vector<64x1xf32>
    %197 = vector.broadcast %196 : vector<64x1xf32> to vector<64x64xf32>
    %198 = arith.subf %194, %197 : vector<64x64xf32>
    %199 = math.exp %198 : vector<64x64xf32>
    %cst_71 = arith.constant dense<0.000000e+00> : vector<64xf32>
    %200 = vector.multi_reduction <add>, %199, %cst_71 [1] : vector<64x64xf32> to vector<64xf32>
    %201 = vector.shape_cast %200 : vector<64xf32> to vector<64x1xf32>
    %cst_72 = arith.constant 1.000000e+00 : f32
    %202 = vector.broadcast %cst_72 : f32 to vector<64x1xf32>
    %203 = arith.divf %202, %201 : vector<64x1xf32>
    %204 = vector.broadcast %203 : vector<64x1xf32> to vector<64x64xf32>
    %205 = arith.mulf %199, %204 : vector<64x64xf32>
    %206 = vector.extract_strided_slice %20 {offsets = [0, 80], sizes = [64, 8], strides = [1, 1]} : vector<64x96xf32> to vector<64x8xf32>
    %cst_73 = arith.constant dense<0.000000e+00> : vector<64x8xf32>
    %207 = tpu.matmul %205, %206, %cst_73 {dimension_numbers = #tpu.dot_dimension_numbers<[1], [0], [0], [1], [0, 0, 1, 1], [], []>} : vector<64x64xf32>, vector<64x8xf32>, vector<64x8xf32> -> vector<64x8xf32>
    %208 = vector.extract_strided_slice %10 {offsets = [0, 88], sizes = [64, 8], strides = [1, 1]} : vector<64x96xf32> to vector<64x8xf32>
    %209 = vector.extract_strided_slice %15 {offsets = [0, 88], sizes = [64, 8], strides = [1, 1]} : vector<64x96xf32> to vector<64x8xf32>
    %cst_74 = arith.constant dense<0.000000e+00> : vector<64x64xf32>
    %210 = tpu.matmul %208, %209, %cst_74 {dimension_numbers = #tpu.dot_dimension_numbers<[1], [1], [0], [0], [0, 0, 1, 0], [], []>} : vector<64x8xf32>, vector<64x8xf32>, vector<64x64xf32> -> vector<64x64xf32>
    %211 = arith.addf %210, %4 : vector<64x64xf32>
    %cst_75 = arith.constant dense<0xFF800000> : vector<64xf32>
    %212 = vector.multi_reduction <maximumf>, %211, %cst_75 [1] : vector<64x64xf32> to vector<64xf32>
    %213 = vector.shape_cast %212 : vector<64xf32> to vector<64x1xf32>
    %214 = vector.broadcast %213 : vector<64x1xf32> to vector<64x64xf32>
    %215 = arith.subf %211, %214 : vector<64x64xf32>
    %216 = math.exp %215 : vector<64x64xf32>
    %cst_76 = arith.constant dense<0.000000e+00> : vector<64xf32>
    %217 = vector.multi_reduction <add>, %216, %cst_76 [1] : vector<64x64xf32> to vector<64xf32>
    %218 = vector.shape_cast %217 : vector<64xf32> to vector<64x1xf32>
    %cst_77 = arith.constant 1.000000e+00 : f32
    %219 = vector.broadcast %cst_77 : f32 to vector<64x1xf32>
    %220 = arith.divf %219, %218 : vector<64x1xf32>
    %221 = vector.broadcast %220 : vector<64x1xf32> to vector<64x64xf32>
    %222 = arith.mulf %216, %221 : vector<64x64xf32>
    %223 = vector.extract_strided_slice %20 {offsets = [0, 88], sizes = [64, 8], strides = [1, 1]} : vector<64x96xf32> to vector<64x8xf32>
    %cst_78 = arith.constant dense<0.000000e+00> : vector<64x8xf32>
    %224 = tpu.matmul %222, %223, %cst_78 {dimension_numbers = #tpu.dot_dimension_numbers<[1], [0], [0], [1], [0, 0, 1, 1], [], []>} : vector<64x64xf32>, vector<64x8xf32>, vector<64x8xf32> -> vector<64x8xf32>
    %225 = tpu.concatenate %37, %54, %71, %88, %105, %122, %139, %156, %173, %190, %207, %224 in 1 : vector<64x8xf32>, vector<64x8xf32>, vector<64x8xf32>, vector<64x8xf32>, vector<64x8xf32>, vector<64x8xf32>, vector<64x8xf32>, vector<64x8xf32>, vector<64x8xf32>, vector<64x8xf32>, vector<64x8xf32>, vector<64x8xf32> -> vector<64x96xf32>
    %c96 = arith.constant 96 : index
    %c0_79 = arith.constant 0 : index
    %226 = vector.load %arg3[%c96, %c0_79] : memref<384x96xf32, #tpu.memory_space<vmem>>, vector<96x96xf32>
    %cst_80 = arith.constant dense<0.000000e+00> : vector<64x96xf32>
    %227 = tpu.matmul %225, %226, %cst_80 {dimension_numbers = #tpu.dot_dimension_numbers<[1], [0], [0], [1], [0, 0, 1, 1], [], []>} : vector<64x96xf32>, vector<96x96xf32>, vector<64x96xf32> -> vector<64x96xf32>
    %c3 = arith.constant 3 : index
    %c0_81 = arith.constant 0 : index
    %228 = vector.load %arg6[%c3, %c0_81] : memref<8x96xf32, #tpu.memory_space<vmem>>, vector<1x96xf32>
    %229 = vector.broadcast %228 : vector<1x96xf32> to vector<64x96xf32>
    %230 = arith.addf %227, %229 : vector<64x96xf32>
    %c192_82 = arith.constant 192 : index
    %c0_83 = arith.constant 0 : index
    %231 = vector.load %arg3[%c192_82, %c0_83] : memref<384x96xf32, #tpu.memory_space<vmem>>, vector<96x96xf32>
    %cst_84 = arith.constant dense<0.000000e+00> : vector<64x96xf32>
    %232 = tpu.matmul %230, %231, %cst_84 {dimension_numbers = #tpu.dot_dimension_numbers<[1], [0], [0], [1], [0, 0, 1, 1], [], []>} : vector<64x96xf32>, vector<96x96xf32>, vector<64x96xf32> -> vector<64x96xf32>
    %c4 = arith.constant 4 : index
    %c0_85 = arith.constant 0 : index
    %233 = vector.load %arg6[%c4, %c0_85] : memref<8x96xf32, #tpu.memory_space<vmem>>, vector<1x96xf32>
    %234 = vector.broadcast %233 : vector<1x96xf32> to vector<64x96xf32>
    %235 = arith.addf %232, %234 : vector<64x96xf32>
    %236 = math.tanh %235 : vector<64x96xf32>
    %c288 = arith.constant 288 : index
    %c0_86 = arith.constant 0 : index
    %237 = vector.load %arg3[%c288, %c0_86] : memref<384x96xf32, #tpu.memory_space<vmem>>, vector<96x96xf32>
    %cst_87 = arith.constant dense<0.000000e+00> : vector<64x96xf32>
    %238 = tpu.matmul %230, %237, %cst_87 {dimension_numbers = #tpu.dot_dimension_numbers<[1], [0], [0], [1], [0, 0, 1, 1], [], []>} : vector<64x96xf32>, vector<96x96xf32>, vector<64x96xf32> -> vector<64x96xf32>
    %c5 = arith.constant 5 : index
    %c0_88 = arith.constant 0 : index
    %239 = vector.load %arg6[%c5, %c0_88] : memref<8x96xf32, #tpu.memory_space<vmem>>, vector<1x96xf32>
    %240 = vector.broadcast %239 : vector<1x96xf32> to vector<64x96xf32>
    %241 = arith.addf %238, %240 : vector<64x96xf32>
    %242 = arith.negf %241 : vector<64x96xf32>
    %243 = math.exp %242 : vector<64x96xf32>
    %cst_89 = arith.constant 1.000000e+00 : f32
    %244 = vector.broadcast %cst_89 : f32 to vector<64x96xf32>
    %245 = arith.addf %244, %243 : vector<64x96xf32>
    %246 = arith.divf %244, %245 : vector<64x96xf32>
    %247 = arith.mulf %236, %246 : vector<64x96xf32>
    %c0_90 = arith.constant 0 : index
    %c0_91 = arith.constant 0 : index
    %248 = vector.load %arg4[%c0_90, %c0_91] : memref<352x32xf32, #tpu.memory_space<vmem>>, vector<96x32xf32>
    %cst_92 = arith.constant dense<0.000000e+00> : vector<64x32xf32>
    %249 = tpu.matmul %247, %248, %cst_92 {dimension_numbers = #tpu.dot_dimension_numbers<[1], [0], [0], [1], [0, 0, 1, 1], [], []>} : vector<64x96xf32>, vector<96x32xf32>, vector<64x32xf32> -> vector<64x32xf32>
    %250 = arith.addf %0, %249 : vector<64x32xf32>
    %c7 = arith.constant 7 : index
    %c0_93 = arith.constant 0 : index
    %251 = vector.load %arg7[%c7, %c0_93] : memref<16x32xf32, #tpu.memory_space<vmem>>, vector<1x32xf32>
    %c8 = arith.constant 8 : index
    %c0_94 = arith.constant 0 : index
    %252 = vector.load %arg7[%c8, %c0_94] : memref<16x32xf32, #tpu.memory_space<vmem>>, vector<1x32xf32>
    %cst_95 = arith.constant dense<0.000000e+00> : vector<64xf32>
    %253 = vector.multi_reduction <add>, %250, %cst_95 [1] : vector<64x32xf32> to vector<64xf32>
    %254 = vector.shape_cast %253 : vector<64xf32> to vector<64x1xf32>
    %cst_96 = arith.constant 3.200000e+01 : f32
    %255 = vector.broadcast %cst_96 : f32 to vector<64x1xf32>
    %256 = arith.divf %254, %255 : vector<64x1xf32>
    %257 = vector.broadcast %256 : vector<64x1xf32> to vector<64x32xf32>
    %258 = arith.subf %250, %257 : vector<64x32xf32>
    %259 = arith.mulf %258, %258 : vector<64x32xf32>
    %cst_97 = arith.constant dense<0.000000e+00> : vector<64xf32>
    %260 = vector.multi_reduction <add>, %259, %cst_97 [1] : vector<64x32xf32> to vector<64xf32>
    %261 = vector.shape_cast %260 : vector<64xf32> to vector<64x1xf32>
    %cst_98 = arith.constant 3.200000e+01 : f32
    %262 = vector.broadcast %cst_98 : f32 to vector<64x1xf32>
    %263 = arith.divf %261, %262 : vector<64x1xf32>
    %cst_99 = arith.constant 9.99999974E-6 : f32
    %264 = vector.broadcast %cst_99 : f32 to vector<64x1xf32>
    %265 = arith.addf %263, %264 : vector<64x1xf32>
    %266 = math.rsqrt %265 : vector<64x1xf32>
    %267 = vector.broadcast %266 : vector<64x1xf32> to vector<64x32xf32>
    %268 = arith.mulf %258, %267 : vector<64x32xf32>
    %269 = vector.broadcast %251 : vector<1x32xf32> to vector<64x32xf32>
    %270 = arith.mulf %268, %269 : vector<64x32xf32>
    %271 = vector.broadcast %252 : vector<1x32xf32> to vector<64x32xf32>
    %272 = arith.addf %270, %271 : vector<64x32xf32>
    %c96_100 = arith.constant 96 : index
    %c0_101 = arith.constant 0 : index
    %273 = vector.load %arg4[%c96_100, %c0_101] : memref<352x32xf32, #tpu.memory_space<vmem>>, vector<32x32xf32>
    %cst_102 = arith.constant dense<0.000000e+00> : vector<64x32xf32>
    %274 = tpu.matmul %272, %273, %cst_102 {dimension_numbers = #tpu.dot_dimension_numbers<[1], [0], [0], [1], [0, 0, 1, 1], [], []>} : vector<64x32xf32>, vector<32x32xf32>, vector<64x32xf32> -> vector<64x32xf32>
    %c0_103 = arith.constant 0 : index
    %c0_104 = arith.constant 0 : index
    %275 = vector.load %arg7[%c0_103, %c0_104] : memref<16x32xf32, #tpu.memory_space<vmem>>, vector<1x32xf32>
    %276 = vector.broadcast %275 : vector<1x32xf32> to vector<64x32xf32>
    %277 = arith.addf %274, %276 : vector<64x32xf32>
    %c128_105 = arith.constant 128 : index
    %c0_106 = arith.constant 0 : index
    %278 = vector.load %arg4[%c128_105, %c0_106] : memref<352x32xf32, #tpu.memory_space<vmem>>, vector<32x32xf32>
    %cst_107 = arith.constant dense<0.000000e+00> : vector<128x32xf32>
    %279 = tpu.matmul %1, %278, %cst_107 {dimension_numbers = #tpu.dot_dimension_numbers<[1], [0], [0], [1], [0, 0, 1, 1], [], []>} : vector<128x32xf32>, vector<32x32xf32>, vector<128x32xf32> -> vector<128x32xf32>
    %c1_108 = arith.constant 1 : index
    %c0_109 = arith.constant 0 : index
    %280 = vector.load %arg7[%c1_108, %c0_109] : memref<16x32xf32, #tpu.memory_space<vmem>>, vector<1x32xf32>
    %281 = vector.broadcast %280 : vector<1x32xf32> to vector<128x32xf32>
    %282 = arith.addf %279, %281 : vector<128x32xf32>
    %c160 = arith.constant 160 : index
    %c0_110 = arith.constant 0 : index
    %283 = vector.load %arg4[%c160, %c0_110] : memref<352x32xf32, #tpu.memory_space<vmem>>, vector<32x32xf32>
    %cst_111 = arith.constant dense<0.000000e+00> : vector<128x32xf32>
    %284 = tpu.matmul %1, %283, %cst_111 {dimension_numbers = #tpu.dot_dimension_numbers<[1], [0], [0], [1], [0, 0, 1, 1], [], []>} : vector<128x32xf32>, vector<32x32xf32>, vector<128x32xf32> -> vector<128x32xf32>
    %c2_112 = arith.constant 2 : index
    %c0_113 = arith.constant 0 : index
    %285 = vector.load %arg7[%c2_112, %c0_113] : memref<16x32xf32, #tpu.memory_space<vmem>>, vector<1x32xf32>
    %286 = vector.broadcast %285 : vector<1x32xf32> to vector<128x32xf32>
    %287 = arith.addf %284, %286 : vector<128x32xf32>
    %288 = vector.extract_strided_slice %277 {offsets = [0, 0], sizes = [64, 8], strides = [1, 1]} : vector<64x32xf32> to vector<64x8xf32>
    %289 = vector.extract_strided_slice %282 {offsets = [0, 0], sizes = [128, 8], strides = [1, 1]} : vector<128x32xf32> to vector<128x8xf32>
    %cst_114 = arith.constant dense<0.000000e+00> : vector<64x128xf32>
    %290 = tpu.matmul %288, %289, %cst_114 {dimension_numbers = #tpu.dot_dimension_numbers<[1], [1], [0], [0], [0, 0, 1, 0], [], []>} : vector<64x8xf32>, vector<128x8xf32>, vector<64x128xf32> -> vector<64x128xf32>
    %291 = arith.addf %290, %5 : vector<64x128xf32>
    %cst_115 = arith.constant dense<0xFF800000> : vector<64xf32>
    %292 = vector.multi_reduction <maximumf>, %291, %cst_115 [1] : vector<64x128xf32> to vector<64xf32>
    %293 = vector.shape_cast %292 : vector<64xf32> to vector<64x1xf32>
    %294 = vector.broadcast %293 : vector<64x1xf32> to vector<64x128xf32>
    %295 = arith.subf %291, %294 : vector<64x128xf32>
    %296 = math.exp %295 : vector<64x128xf32>
    %cst_116 = arith.constant dense<0.000000e+00> : vector<64xf32>
    %297 = vector.multi_reduction <add>, %296, %cst_116 [1] : vector<64x128xf32> to vector<64xf32>
    %298 = vector.shape_cast %297 : vector<64xf32> to vector<64x1xf32>
    %cst_117 = arith.constant 1.000000e+00 : f32
    %299 = vector.broadcast %cst_117 : f32 to vector<64x1xf32>
    %300 = arith.divf %299, %298 : vector<64x1xf32>
    %301 = vector.broadcast %300 : vector<64x1xf32> to vector<64x128xf32>
    %302 = arith.mulf %296, %301 : vector<64x128xf32>
    %303 = vector.extract_strided_slice %287 {offsets = [0, 0], sizes = [128, 8], strides = [1, 1]} : vector<128x32xf32> to vector<128x8xf32>
    %cst_118 = arith.constant dense<0.000000e+00> : vector<64x8xf32>
    %304 = tpu.matmul %302, %303, %cst_118 {dimension_numbers = #tpu.dot_dimension_numbers<[1], [0], [0], [1], [0, 0, 1, 1], [], []>} : vector<64x128xf32>, vector<128x8xf32>, vector<64x8xf32> -> vector<64x8xf32>
    %305 = vector.extract_strided_slice %277 {offsets = [0, 8], sizes = [64, 8], strides = [1, 1]} : vector<64x32xf32> to vector<64x8xf32>
    %306 = vector.extract_strided_slice %282 {offsets = [0, 8], sizes = [128, 8], strides = [1, 1]} : vector<128x32xf32> to vector<128x8xf32>
    %cst_119 = arith.constant dense<0.000000e+00> : vector<64x128xf32>
    %307 = tpu.matmul %305, %306, %cst_119 {dimension_numbers = #tpu.dot_dimension_numbers<[1], [1], [0], [0], [0, 0, 1, 0], [], []>} : vector<64x8xf32>, vector<128x8xf32>, vector<64x128xf32> -> vector<64x128xf32>
    %308 = arith.addf %307, %5 : vector<64x128xf32>
    %cst_120 = arith.constant dense<0xFF800000> : vector<64xf32>
    %309 = vector.multi_reduction <maximumf>, %308, %cst_120 [1] : vector<64x128xf32> to vector<64xf32>
    %310 = vector.shape_cast %309 : vector<64xf32> to vector<64x1xf32>
    %311 = vector.broadcast %310 : vector<64x1xf32> to vector<64x128xf32>
    %312 = arith.subf %308, %311 : vector<64x128xf32>
    %313 = math.exp %312 : vector<64x128xf32>
    %cst_121 = arith.constant dense<0.000000e+00> : vector<64xf32>
    %314 = vector.multi_reduction <add>, %313, %cst_121 [1] : vector<64x128xf32> to vector<64xf32>
    %315 = vector.shape_cast %314 : vector<64xf32> to vector<64x1xf32>
    %cst_122 = arith.constant 1.000000e+00 : f32
    %316 = vector.broadcast %cst_122 : f32 to vector<64x1xf32>
    %317 = arith.divf %316, %315 : vector<64x1xf32>
    %318 = vector.broadcast %317 : vector<64x1xf32> to vector<64x128xf32>
    %319 = arith.mulf %313, %318 : vector<64x128xf32>
    %320 = vector.extract_strided_slice %287 {offsets = [0, 8], sizes = [128, 8], strides = [1, 1]} : vector<128x32xf32> to vector<128x8xf32>
    %cst_123 = arith.constant dense<0.000000e+00> : vector<64x8xf32>
    %321 = tpu.matmul %319, %320, %cst_123 {dimension_numbers = #tpu.dot_dimension_numbers<[1], [0], [0], [1], [0, 0, 1, 1], [], []>} : vector<64x128xf32>, vector<128x8xf32>, vector<64x8xf32> -> vector<64x8xf32>
    %322 = vector.extract_strided_slice %277 {offsets = [0, 16], sizes = [64, 8], strides = [1, 1]} : vector<64x32xf32> to vector<64x8xf32>
    %323 = vector.extract_strided_slice %282 {offsets = [0, 16], sizes = [128, 8], strides = [1, 1]} : vector<128x32xf32> to vector<128x8xf32>
    %cst_124 = arith.constant dense<0.000000e+00> : vector<64x128xf32>
    %324 = tpu.matmul %322, %323, %cst_124 {dimension_numbers = #tpu.dot_dimension_numbers<[1], [1], [0], [0], [0, 0, 1, 0], [], []>} : vector<64x8xf32>, vector<128x8xf32>, vector<64x128xf32> -> vector<64x128xf32>
    %325 = arith.addf %324, %5 : vector<64x128xf32>
    %cst_125 = arith.constant dense<0xFF800000> : vector<64xf32>
    %326 = vector.multi_reduction <maximumf>, %325, %cst_125 [1] : vector<64x128xf32> to vector<64xf32>
    %327 = vector.shape_cast %326 : vector<64xf32> to vector<64x1xf32>
    %328 = vector.broadcast %327 : vector<64x1xf32> to vector<64x128xf32>
    %329 = arith.subf %325, %328 : vector<64x128xf32>
    %330 = math.exp %329 : vector<64x128xf32>
    %cst_126 = arith.constant dense<0.000000e+00> : vector<64xf32>
    %331 = vector.multi_reduction <add>, %330, %cst_126 [1] : vector<64x128xf32> to vector<64xf32>
    %332 = vector.shape_cast %331 : vector<64xf32> to vector<64x1xf32>
    %cst_127 = arith.constant 1.000000e+00 : f32
    %333 = vector.broadcast %cst_127 : f32 to vector<64x1xf32>
    %334 = arith.divf %333, %332 : vector<64x1xf32>
    %335 = vector.broadcast %334 : vector<64x1xf32> to vector<64x128xf32>
    %336 = arith.mulf %330, %335 : vector<64x128xf32>
    %337 = vector.extract_strided_slice %287 {offsets = [0, 16], sizes = [128, 8], strides = [1, 1]} : vector<128x32xf32> to vector<128x8xf32>
    %cst_128 = arith.constant dense<0.000000e+00> : vector<64x8xf32>
    %338 = tpu.matmul %336, %337, %cst_128 {dimension_numbers = #tpu.dot_dimension_numbers<[1], [0], [0], [1], [0, 0, 1, 1], [], []>} : vector<64x128xf32>, vector<128x8xf32>, vector<64x8xf32> -> vector<64x8xf32>
    %339 = vector.extract_strided_slice %277 {offsets = [0, 24], sizes = [64, 8], strides = [1, 1]} : vector<64x32xf32> to vector<64x8xf32>
    %340 = vector.extract_strided_slice %282 {offsets = [0, 24], sizes = [128, 8], strides = [1, 1]} : vector<128x32xf32> to vector<128x8xf32>
    %cst_129 = arith.constant dense<0.000000e+00> : vector<64x128xf32>
    %341 = tpu.matmul %339, %340, %cst_129 {dimension_numbers = #tpu.dot_dimension_numbers<[1], [1], [0], [0], [0, 0, 1, 0], [], []>} : vector<64x8xf32>, vector<128x8xf32>, vector<64x128xf32> -> vector<64x128xf32>
    %342 = arith.addf %341, %5 : vector<64x128xf32>
    %cst_130 = arith.constant dense<0xFF800000> : vector<64xf32>
    %343 = vector.multi_reduction <maximumf>, %342, %cst_130 [1] : vector<64x128xf32> to vector<64xf32>
    %344 = vector.shape_cast %343 : vector<64xf32> to vector<64x1xf32>
    %345 = vector.broadcast %344 : vector<64x1xf32> to vector<64x128xf32>
    %346 = arith.subf %342, %345 : vector<64x128xf32>
    %347 = math.exp %346 : vector<64x128xf32>
    %cst_131 = arith.constant dense<0.000000e+00> : vector<64xf32>
    %348 = vector.multi_reduction <add>, %347, %cst_131 [1] : vector<64x128xf32> to vector<64xf32>
    %349 = vector.shape_cast %348 : vector<64xf32> to vector<64x1xf32>
    %cst_132 = arith.constant 1.000000e+00 : f32
    %350 = vector.broadcast %cst_132 : f32 to vector<64x1xf32>
    %351 = arith.divf %350, %349 : vector<64x1xf32>
    %352 = vector.broadcast %351 : vector<64x1xf32> to vector<64x128xf32>
    %353 = arith.mulf %347, %352 : vector<64x128xf32>
    %354 = vector.extract_strided_slice %287 {offsets = [0, 24], sizes = [128, 8], strides = [1, 1]} : vector<128x32xf32> to vector<128x8xf32>
    %cst_133 = arith.constant dense<0.000000e+00> : vector<64x8xf32>
    %355 = tpu.matmul %353, %354, %cst_133 {dimension_numbers = #tpu.dot_dimension_numbers<[1], [0], [0], [1], [0, 0, 1, 1], [], []>} : vector<64x128xf32>, vector<128x8xf32>, vector<64x8xf32> -> vector<64x8xf32>
    %356 = tpu.concatenate %304, %321, %338, %355 in 1 : vector<64x8xf32>, vector<64x8xf32>, vector<64x8xf32>, vector<64x8xf32> -> vector<64x32xf32>
    %c192_134 = arith.constant 192 : index
    %c0_135 = arith.constant 0 : index
    %357 = vector.load %arg4[%c192_134, %c0_135] : memref<352x32xf32, #tpu.memory_space<vmem>>, vector<32x32xf32>
    %cst_136 = arith.constant dense<0.000000e+00> : vector<64x32xf32>
    %358 = tpu.matmul %356, %357, %cst_136 {dimension_numbers = #tpu.dot_dimension_numbers<[1], [0], [0], [1], [0, 0, 1, 1], [], []>} : vector<64x32xf32>, vector<32x32xf32>, vector<64x32xf32> -> vector<64x32xf32>
    %c3_137 = arith.constant 3 : index
    %c0_138 = arith.constant 0 : index
    %359 = vector.load %arg7[%c3_137, %c0_138] : memref<16x32xf32, #tpu.memory_space<vmem>>, vector<1x32xf32>
    %360 = vector.broadcast %359 : vector<1x32xf32> to vector<64x32xf32>
    %361 = arith.addf %358, %360 : vector<64x32xf32>
    %c224 = arith.constant 224 : index
    %c0_139 = arith.constant 0 : index
    %362 = vector.load %arg4[%c224, %c0_139] : memref<352x32xf32, #tpu.memory_space<vmem>>, vector<32x32xf32>
    %cst_140 = arith.constant dense<0.000000e+00> : vector<64x32xf32>
    %363 = tpu.matmul %361, %362, %cst_140 {dimension_numbers = #tpu.dot_dimension_numbers<[1], [0], [0], [1], [0, 0, 1, 1], [], []>} : vector<64x32xf32>, vector<32x32xf32>, vector<64x32xf32> -> vector<64x32xf32>
    %c4_141 = arith.constant 4 : index
    %c0_142 = arith.constant 0 : index
    %364 = vector.load %arg7[%c4_141, %c0_142] : memref<16x32xf32, #tpu.memory_space<vmem>>, vector<1x32xf32>
    %365 = vector.broadcast %364 : vector<1x32xf32> to vector<64x32xf32>
    %366 = arith.addf %363, %365 : vector<64x32xf32>
    %367 = math.tanh %366 : vector<64x32xf32>
    %c256 = arith.constant 256 : index
    %c0_143 = arith.constant 0 : index
    %368 = vector.load %arg4[%c256, %c0_143] : memref<352x32xf32, #tpu.memory_space<vmem>>, vector<32x32xf32>
    %cst_144 = arith.constant dense<0.000000e+00> : vector<64x32xf32>
    %369 = tpu.matmul %361, %368, %cst_144 {dimension_numbers = #tpu.dot_dimension_numbers<[1], [0], [0], [1], [0, 0, 1, 1], [], []>} : vector<64x32xf32>, vector<32x32xf32>, vector<64x32xf32> -> vector<64x32xf32>
    %c5_145 = arith.constant 5 : index
    %c0_146 = arith.constant 0 : index
    %370 = vector.load %arg7[%c5_145, %c0_146] : memref<16x32xf32, #tpu.memory_space<vmem>>, vector<1x32xf32>
    %371 = vector.broadcast %370 : vector<1x32xf32> to vector<64x32xf32>
    %372 = arith.addf %369, %371 : vector<64x32xf32>
    %373 = arith.negf %372 : vector<64x32xf32>
    %374 = math.exp %373 : vector<64x32xf32>
    %cst_147 = arith.constant 1.000000e+00 : f32
    %375 = vector.broadcast %cst_147 : f32 to vector<64x32xf32>
    %376 = arith.addf %375, %374 : vector<64x32xf32>
    %377 = arith.divf %375, %376 : vector<64x32xf32>
    %378 = arith.mulf %367, %377 : vector<64x32xf32>
    %379 = arith.addf %272, %378 : vector<64x32xf32>
    %c9 = arith.constant 9 : index
    %c0_148 = arith.constant 0 : index
    %380 = vector.load %arg7[%c9, %c0_148] : memref<16x32xf32, #tpu.memory_space<vmem>>, vector<1x32xf32>
    %c10 = arith.constant 10 : index
    %c0_149 = arith.constant 0 : index
    %381 = vector.load %arg7[%c10, %c0_149] : memref<16x32xf32, #tpu.memory_space<vmem>>, vector<1x32xf32>
    %cst_150 = arith.constant dense<0.000000e+00> : vector<64xf32>
    %382 = vector.multi_reduction <add>, %379, %cst_150 [1] : vector<64x32xf32> to vector<64xf32>
    %383 = vector.shape_cast %382 : vector<64xf32> to vector<64x1xf32>
    %cst_151 = arith.constant 3.200000e+01 : f32
    %384 = vector.broadcast %cst_151 : f32 to vector<64x1xf32>
    %385 = arith.divf %383, %384 : vector<64x1xf32>
    %386 = vector.broadcast %385 : vector<64x1xf32> to vector<64x32xf32>
    %387 = arith.subf %379, %386 : vector<64x32xf32>
    %388 = arith.mulf %387, %387 : vector<64x32xf32>
    %cst_152 = arith.constant dense<0.000000e+00> : vector<64xf32>
    %389 = vector.multi_reduction <add>, %388, %cst_152 [1] : vector<64x32xf32> to vector<64xf32>
    %390 = vector.shape_cast %389 : vector<64xf32> to vector<64x1xf32>
    %cst_153 = arith.constant 3.200000e+01 : f32
    %391 = vector.broadcast %cst_153 : f32 to vector<64x1xf32>
    %392 = arith.divf %390, %391 : vector<64x1xf32>
    %cst_154 = arith.constant 9.99999974E-6 : f32
    %393 = vector.broadcast %cst_154 : f32 to vector<64x1xf32>
    %394 = arith.addf %392, %393 : vector<64x1xf32>
    %395 = math.rsqrt %394 : vector<64x1xf32>
    %396 = vector.broadcast %395 : vector<64x1xf32> to vector<64x32xf32>
    %397 = arith.mulf %387, %396 : vector<64x32xf32>
    %398 = vector.broadcast %380 : vector<1x32xf32> to vector<64x32xf32>
    %399 = arith.mulf %397, %398 : vector<64x32xf32>
    %400 = vector.broadcast %381 : vector<1x32xf32> to vector<64x32xf32>
    %401 = arith.addf %399, %400 : vector<64x32xf32>
    %c0_155 = arith.constant 0 : index
    %c0_156 = arith.constant 0 : index
    %402 = vector.load %arg5[%c0_155, %c0_156] : memref<32x64xf32, #tpu.memory_space<vmem>>, vector<32x64xf32>
    %cst_157 = arith.constant dense<0.000000e+00> : vector<64x64xf32>
    %403 = tpu.matmul %401, %402, %cst_157 {dimension_numbers = #tpu.dot_dimension_numbers<[1], [0], [0], [1], [0, 0, 1, 1], [], []>} : vector<64x32xf32>, vector<32x64xf32>, vector<64x64xf32> -> vector<64x64xf32>
    %c0_158 = arith.constant 0 : index
    %c0_159 = arith.constant 0 : index
    %404 = vector.load %arg8[%c0_158, %c0_159] : memref<1x64xf32, #tpu.memory_space<vmem>>, vector<1x64xf32>
    %405 = vector.broadcast %404 : vector<1x64xf32> to vector<64x64xf32>
    %406 = arith.addf %403, %405 : vector<64x64xf32>
    %cst_160 = arith.constant 0.000000e+00 : f32
    %407 = vector.broadcast %cst_160 : f32 to vector<64x64xf32>
    %408 = arith.maximumf %406, %407 : vector<64x64xf32>
    %c288_161 = arith.constant 288 : index
    %c0_162 = arith.constant 0 : index
    %409 = vector.load %arg4[%c288_161, %c0_162] : memref<352x32xf32, #tpu.memory_space<vmem>>, vector<64x32xf32>
    %cst_163 = arith.constant dense<0.000000e+00> : vector<64x32xf32>
    %410 = tpu.matmul %408, %409, %cst_163 {dimension_numbers = #tpu.dot_dimension_numbers<[1], [0], [0], [1], [0, 0, 1, 1], [], []>} : vector<64x64xf32>, vector<64x32xf32>, vector<64x32xf32> -> vector<64x32xf32>
    %c6 = arith.constant 6 : index
    %c0_164 = arith.constant 0 : index
    %411 = vector.load %arg7[%c6, %c0_164] : memref<16x32xf32, #tpu.memory_space<vmem>>, vector<1x32xf32>
    %412 = vector.broadcast %411 : vector<1x32xf32> to vector<64x32xf32>
    %413 = arith.addf %410, %412 : vector<64x32xf32>
    %414 = arith.addf %401, %413 : vector<64x32xf32>
    %c11 = arith.constant 11 : index
    %c0_165 = arith.constant 0 : index
    %415 = vector.load %arg7[%c11, %c0_165] : memref<16x32xf32, #tpu.memory_space<vmem>>, vector<1x32xf32>
    %c12 = arith.constant 12 : index
    %c0_166 = arith.constant 0 : index
    %416 = vector.load %arg7[%c12, %c0_166] : memref<16x32xf32, #tpu.memory_space<vmem>>, vector<1x32xf32>
    %cst_167 = arith.constant dense<0.000000e+00> : vector<64xf32>
    %417 = vector.multi_reduction <add>, %414, %cst_167 [1] : vector<64x32xf32> to vector<64xf32>
    %418 = vector.shape_cast %417 : vector<64xf32> to vector<64x1xf32>
    %cst_168 = arith.constant 3.200000e+01 : f32
    %419 = vector.broadcast %cst_168 : f32 to vector<64x1xf32>
    %420 = arith.divf %418, %419 : vector<64x1xf32>
    %421 = vector.broadcast %420 : vector<64x1xf32> to vector<64x32xf32>
    %422 = arith.subf %414, %421 : vector<64x32xf32>
    %423 = arith.mulf %422, %422 : vector<64x32xf32>
    %cst_169 = arith.constant dense<0.000000e+00> : vector<64xf32>
    %424 = vector.multi_reduction <add>, %423, %cst_169 [1] : vector<64x32xf32> to vector<64xf32>
    %425 = vector.shape_cast %424 : vector<64xf32> to vector<64x1xf32>
    %cst_170 = arith.constant 3.200000e+01 : f32
    %426 = vector.broadcast %cst_170 : f32 to vector<64x1xf32>
    %427 = arith.divf %425, %426 : vector<64x1xf32>
    %cst_171 = arith.constant 9.99999974E-6 : f32
    %428 = vector.broadcast %cst_171 : f32 to vector<64x1xf32>
    %429 = arith.addf %427, %428 : vector<64x1xf32>
    %430 = math.rsqrt %429 : vector<64x1xf32>
    %431 = vector.broadcast %430 : vector<64x1xf32> to vector<64x32xf32>
    %432 = arith.mulf %422, %431 : vector<64x32xf32>
    %433 = vector.broadcast %415 : vector<1x32xf32> to vector<64x32xf32>
    %434 = arith.mulf %432, %433 : vector<64x32xf32>
    %435 = vector.broadcast %416 : vector<1x32xf32> to vector<64x32xf32>
    %436 = arith.addf %434, %435 : vector<64x32xf32>
    %c0_172 = arith.constant 0 : index
    %c0_173 = arith.constant 0 : index
    %437 = vector.load %arg9[%c0_172, %c0_173] : memref<64x32xf32, #tpu.memory_space<vmem>>, vector<64x32xf32>
    tpu.vector_store %arg9[%c0_172, %c0_173], %436 {strides = array<i32>} : memref<64x32xf32, #tpu.memory_space<vmem>>, vector<64x32xf32>,
    return
  }
}

</mosaic_0001>

<llo_original>
// kernel: tpu_custom_call.1
$region0: #{tpu_custom_call.1}
  #allocation0 [shape = 'u32[]', space=smem, size = 0x4, offset = 0x4, fixed_abs, tag = 'smem constant byte address 0x4 - core index']
  #allocation1 [shape = 'u32[144,128]{1,0:T(1,128)}', space=vmem, size = 0x12000, scoped, tag = 'internal scratch']
  %s0 = inlined_call_operand.vmem [shape: f32[64,32], index: 0, kind: input, shape index: {}]
  %s1 = inlined_call_operand.vmem [shape: f32[128,32], index: 1, kind: input, shape index: {}]
  %s2 = inlined_call_operand.vmem [shape: f32[256,128], index: 2, kind: input, shape index: {}]
  %s3 = inlined_call_operand.vmem [shape: f32[384,96], index: 3, kind: input, shape index: {}]
  %s4 = inlined_call_operand.vmem [shape: f32[352,32], index: 4, kind: input, shape index: {}]
  %s5 = inlined_call_operand.vmem [shape: f32[32,64], index: 5, kind: input, shape index: {}]
  %s6 = inlined_call_operand.vmem [shape: f32[8,96], index: 6, kind: input, shape index: {}]
  %s7 = inlined_call_operand.vmem [shape: f32[16,32], index: 7, kind: input, shape index: {}]
  %s8 = inlined_call_operand.vmem [shape: f32[1,64], index: 8, kind: input, shape index: {}]
  %s9 = inlined_call_operand.vmem [shape: f32[64,32], index: 9, kind: output, shape index: {}]
  %s10 = sld [smem:[#allocation0]]
  $region46: #{tpu_custom_call.1} parent=0
    _
  %s12 = ssub.s32 1, %s10
  %s13 = scalar_select 0, %s12, %s10
  // Predicated region
  $region2: #{tpu_custom_call.1} parent=0 // pred_check
    _
  $region3: #{tpu_custom_call.1} parent=0 // pred_check_branch
    %15 = sbr.rel (0) target = $region5
  $region4: #{tpu_custom_call.1} parent=0 // pred_region
    _
  $region5: #{tpu_custom_call.1} parent=0 // pred_fallthru
    _
  // Predicated region
  $region6: #{tpu_custom_call.1} parent=0 // pred_check
    _
  $region7: #{tpu_custom_call.1} parent=0 // pred_check_branch
    %17 = sbr.rel (0) target = $region9
  $region8: #{tpu_custom_call.1} parent=0 // pred_region
    _
  $region9: #{tpu_custom_call.1} parent=0 // pred_fallthru
    _
  // Predicated region
  $region10: #{tpu_custom_call.1} parent=0 // pred_check
    _
  $region11: #{tpu_custom_call.1} parent=0 // pred_check_branch
    %19 = sbr.rel (0) target = $region13
  $region12: #{tpu_custom_call.1} parent=0 // pred_region
    _
  $region13: #{tpu_custom_call.1} parent=0 // pred_fallthru
    _
  // Predicated region
  $region14: #{tpu_custom_call.1} parent=0 // pred_check
    _
  $region15: #{tpu_custom_call.1} parent=0 // pred_check_branch
    %21 = sbr.rel (0) target = $region17
  $region16: #{tpu_custom_call.1} parent=0 // pred_region
    _
  $region17: #{tpu_custom_call.1} parent=0 // pred_fallthru
    _
  // Predicated region
  $region18: #{tpu_custom_call.1} parent=0 // pred_check
    _
  $region19: #{tpu_custom_call.1} parent=0 // pred_check_branch
    %23 = sbr.rel (0) target = $region21
  $region20: #{tpu_custom_call.1} parent=0 // pred_region
    _
  $region21: #{tpu_custom_call.1} parent=0 // pred_fallthru
    _
  // Predicated region
  $region22: #{tpu_custom_call.1} parent=0 // pred_check
    _
  $region23: #{tpu_custom_call.1} parent=0 // pred_check_branch
    %25 = sbr.rel (0) target = $region25
  $region24: #{tpu_custom_call.1} parent=0 // pred_region
    _
  $region25: #{tpu_custom_call.1} parent=0 // pred_fallthru
    _
  // Predicated region
  $region26: #{tpu_custom_call.1} parent=0 // pred_check
    _
  $region27: #{tpu_custom_call.1} parent=0 // pred_check_branch
    %27 = sbr.rel (0) target = $region29
  $region28: #{tpu_custom_call.1} parent=0 // pred_region
    _
  $region29: #{tpu_custom_call.1} parent=0 // pred_fallthru
    _
  // Predicated region
  $region30: #{tpu_custom_call.1} parent=0 // pred_check
    _
  $region31: #{tpu_custom_call.1} parent=0 // pred_check_branch
    %29 = sbr.rel (0) target = $region33
  $region32: #{tpu_custom_call.1} parent=0 // pred_region
    _
  $region33: #{tpu_custom_call.1} parent=0 // pred_fallthru
    _
  // Predicated region
  $region34: #{tpu_custom_call.1} parent=0 // pred_check
    _
  $region35: #{tpu_custom_call.1} parent=0 // pred_check_branch
    %31 = sbr.rel (0) target = $region37
  $region36: #{tpu_custom_call.1} parent=0 // pred_region
    _
  $region37: #{tpu_custom_call.1} parent=0 // pred_fallthru
    _
  %v32 = vld [vmem:[%s0] sm:$0xff]
  %v33 = vld [vmem:[%s0 + $0x8] sm:$0xff]
  %v34 = vld [vmem:[%s0 + $0x10] sm:$0xff]
  %v35 = vld [vmem:[%s0 + $0x18] sm:$0xff]
  %v36 = vld [vmem:[%s0 + $0x20] sm:$0xff]
  %v37 = vld [vmem:[%s0 + $0x28] sm:$0xff]
  %v38 = vld [vmem:[%s0 + $0x30] sm:$0xff]
  %v39 = vld [vmem:[%s0 + $0x38] sm:$0xff]
  %v40 = vld [vmem:[%s1] sm:$0xff]
  %v41 = vld [vmem:[%s1 + $0x8] sm:$0xff]
  %v42 = vld [vmem:[%s1 + $0x10] sm:$0xff]
  %v43 = vld [vmem:[%s1 + $0x18] sm:$0xff]
  %v44 = vld [vmem:[%s1 + $0x20] sm:$0xff]
  %v45 = vld [vmem:[%s1 + $0x28] sm:$0xff]
  %v46 = vld [vmem:[%s1 + $0x30] sm:$0xff]
  %v47 = vld [vmem:[%s1 + $0x38] sm:$0xff]
  %v48 = vld [vmem:[%s1 + $0x40] sm:$0xff]
  %v49 = vld [vmem:[%s1 + $0x48] sm:$0xff]
  %v50 = vld [vmem:[%s1 + $0x50] sm:$0xff]
  %v51 = vld [vmem:[%s1 + $0x58] sm:$0xff]
  %v52 = vld [vmem:[%s1 + $0x60] sm:$0xff]
  %v53 = vld [vmem:[%s1 + $0x68] sm:$0xff]
  %v54 = vld [vmem:[%s1 + $0x70] sm:$0xff]
  %v55 = vld [vmem:[%s1 + $0x78] sm:$0xff]
  %v56 = vld [vmem:[%s2] sm:$0xff]
  %v57 = vld [vmem:[%s2 + $0x8] sm:$0xff]
  %v58 = vld [vmem:[%s2 + $0x10] sm:$0xff]
  %v59 = vld [vmem:[%s2 + $0x18] sm:$0xff]
  %v60 = vld [vmem:[%s2 + $0x20] sm:$0xff]
  %v61 = vld [vmem:[%s2 + $0x28] sm:$0xff]
  %v62 = vld [vmem:[%s2 + $0x30] sm:$0xff]
  %v63 = vld [vmem:[%s2 + $0x38] sm:$0xff]
  %v64 = vld [vmem:[%s2 + $0x40] sm:$0xff]
  %v65 = vld [vmem:[%s2 + $0x48] sm:$0xff]
  %v66 = vld [vmem:[%s2 + $0x50] sm:$0xff]
  %v67 = vld [vmem:[%s2 + $0x58] sm:$0xff]
  %v68 = vld [vmem:[%s2 + $0x60] sm:$0xff]
  %v69 = vld [vmem:[%s2 + $0x68] sm:$0xff]
  %v70 = vld [vmem:[%s2 + $0x70] sm:$0xff]
  %v71 = vld [vmem:[%s2 + $0x78] sm:$0xff]
  %v72 = vld [vmem:[%s2 + $0x80] sm:$0xff]
  %v73 = vld [vmem:[%s2 + $0x88] sm:$0xff]
  %v74 = vld [vmem:[%s2 + $0x90] sm:$0xff]
  %v75 = vld [vmem:[%s2 + $0x98] sm:$0xff]
  %v76 = vld [vmem:[%s2 + $0xa0] sm:$0xff]
  %v77 = vld [vmem:[%s2 + $0xa8] sm:$0xff]
  %v78 = vld [vmem:[%s2 + $0xb0] sm:$0xff]
  %v79 = vld [vmem:[%s2 + $0xb8] sm:$0xff]
  %v80 = vld [vmem:[%s2 + $0xc0] sm:$0xff]
  %v81 = vld [vmem:[%s2 + $0xc8] sm:$0xff]
  %v82 = vld [vmem:[%s2 + $0xd0] sm:$0xff]
  %v83 = vld [vmem:[%s2 + $0xd8] sm:$0xff]
  %v84 = vld [vmem:[%s2 + $0xe0] sm:$0xff]
  %v85 = vld [vmem:[%s2 + $0xe8] sm:$0xff]
  %v86 = vld [vmem:[%s2 + $0xf0] sm:$0xff]
  %v87 = vld [vmem:[%s2 + $0xf8] sm:$0xff]
  %v88 = vld [vmem:[%s3] sm:$0xff]
  %v89 = vld [vmem:[%s3 + $0x8] sm:$0xff]
  %v90 = vld [vmem:[%s3 + $0x10] sm:$0xff]
  %v91 = vld [vmem:[%s3 + $0x18] sm:$0xff]
  %v92 = vld [vmem:[%s6] sm:$0x1]
  %v93 = vlaneseq
  %v94 = vshrl.u32 %v93, 7
  %v95 = vsub.s32 0, %v94
  %v96 = vrot.slane %v92, %v95
  %vm97 = vcmask 261120
  %v99 = vsel %vm97, %v32, 0
  %v102 = vsel %vm97, %v33, 0
  %v105 = vsel %vm97, %v34, 0
  %v108 = vsel %vm97, %v35, 0
  %v111 = vsel %vm97, %v36, 0
  %v114 = vsel %vm97, %v37, 0
  %v117 = vsel %vm97, %v38, 0
  %v120 = vsel %vm97, %v39, 0
  %122 = vmatprep.subr.mxu0 0.0
  %123 = vmatpush1.msra.mxu0 %v88
  %124 = vmatprep.subr.mxu0 0.0
  %125 = vmatpush1.msra.mxu0 %v89
  %126 = vmatprep.subr.mxu0 0.0
  %127 = vmatpush1.msra.mxu0 %v90
  %128 = vmatprep.subr.mxu0 0.0
  %129 = vmatpush1.msra.mxu0 %v91
  %130 = vmatprep.subr.mxu0 0.0
  %131 = vmatpush1.msra.mxu0 0.0
  %132 = vmatprep.subr.mxu0 0.0
  %133 = vmatpush1.msra.mxu0 0.0
  %134 = vmatprep.subr.mxu0 0.0
  %135 = vmatpush1.msra.mxu0 0.0
  %136 = vmatprep.subr.mxu0 0.0
  %137 = vmatpush1.msra.mxu0 0.0
  %138 = vmatprep.subr.mxu0 0.0
  %139 = vmatpush1.msra.mxu0 0.0
  %140 = vmatprep.subr.mxu0 0.0
  %141 = vmatpush1.msra.mxu0 0.0
  %142 = vmatprep.subr.mxu0 0.0
  %143 = vmatpush1.msra.mxu0 0.0
  %144 = vmatprep.subr.mxu0 0.0
  %145 = vmatpush1.msra.mxu0 0.0
  %146 = vmatprep.subr.mxu0 0.0
  %147 = vmatpush1.msra.mxu0 0.0
  %148 = vmatprep.subr.mxu0 0.0
  %149 = vmatpush1.msra.mxu0 0.0
  %150 = vmatprep.subr.mxu0 0.0
  %151 = vmatpush1.msra.mxu0 0.0
  %152 = vmatprep.subr.mxu0 0.0
  %153 = vmatpush1.msra.mxu0 0.0
  %154 = vmatprep.subr.mxu0 0.0
  %155 = vmatpush1.msra.mxu0 0.0
  %156 = vmatprep.subr.mxu0 0.0
  %157 = vmatpush1.msra.mxu0 0.0
  %158 = vmatprep.subr.mxu0 0.0
  %159 = vmatpush1.msra.mxu0 0.0
  %160 = vmatprep.subr.mxu0 0.0
  %161 = vmatpush1.msra.mxu0 0.0
  %162 = vmatprep.subr.mxu0 0.0
  %163 = vmatpush1.msra.mxu0 0.0
  %164 = vmatprep.subr.mxu0 0.0
  %165 = vmatpush1.msra.mxu0 0.0
  %166 = vmatprep.subr.mxu0 0.0
  %167 = vmatpush1.msra.mxu0 0.0
  %168 = vmatprep.subr.mxu0 0.0
  %169 = vmatpush1.msra.mxu0 0.0
  %170 = vmatprep.subr.mxu0 0.0
  %171 = vmatpush1.msra.mxu0 0.0
  %172 = vmatprep.subr.mxu0 0.0
  %173 = vmatpush1.msra.mxu0 0.0
  %174 = vmatprep.subr.mxu0 0.0
  %175 = vmatpush1.msra.mxu0 0.0
  %176 = vmatprep.subr.mxu0 0.0
  %177 = vmatpush1.msra.mxu0 0.0
  %178 = vmatprep.subr.mxu0 0.0
  %179 = vmatpush1.msra.mxu0 0.0
  %180 = vmatprep.subr.mxu0 0.0
  %181 = vmatpush1.msra.mxu0 0.0
  %182 = vmatprep.subr.mxu0 0.0
  %183 = vmatpush1.msra.mxu0 0.0
  %184 = vmatprep.subr.mxu0 0.0
  %185 = vmatpush1.msra.mxu0 0.0
  %186 = vmatprep.mubr.f32.mxu0 0.0
  %187 = vmatmul.mubr.f32.gmra.mrb[0].mxu0 %v99
  %v188 = vpop.f32.mrb[0].mxu0
  %v189 = vadd.f32 %v96, %v188
  %v190 = vpop.f32.mrb[0].mxu0
  %191 = vmatprep.mubr.f32.mxu0 0.0
  %192 = vmatmul.mubr.f32.gmra.mrb[0].mxu0 %v102
  %v193 = vpop.f32.mrb[0].mxu0
  %v194 = vadd.f32 %v96, %v193
  %v195 = vpop.f32.mrb[0].mxu0
  %196 = vmatprep.mubr.f32.mxu0 0.0
  %197 = vmatmul.mubr.f32.gmra.mrb[0].mxu0 %v105
  %v198 = vpop.f32.mrb[0].mxu0
  %v199 = vadd.f32 %v96, %v198
  %v200 = vpop.f32.mrb[0].mxu0
  %201 = vmatprep.mubr.f32.mxu0 0.0
  %202 = vmatmul.mubr.f32.gmra.mrb[0].mxu0 %v108
  %v203 = vpop.f32.mrb[0].mxu0
  %v204 = vadd.f32 %v96, %v203
  %v205 = vpop.f32.mrb[0].mxu0
  %206 = vmatprep.mubr.f32.mxu0 0.0
  %207 = vmatmul.mubr.f32.gmra.mrb[0].mxu0 %v111
  %v208 = vpop.f32.mrb[0].mxu0
  %v209 = vadd.f32 %v96, %v208
  %v210 = vpop.f32.mrb[0].mxu0
  %211 = vmatprep.mubr.f32.mxu0 0.0
  %212 = vmatmul.mubr.f32.gmra.mrb[0].mxu0 %v114
  %v213 = vpop.f32.mrb[0].mxu0
  %v214 = vadd.f32 %v96, %v213
  %v215 = vpop.f32.mrb[0].mxu0
  %216 = vmatprep.mubr.f32.mxu0 0.0
  %217 = vmatmul.mubr.f32.gmra.mrb[0].mxu0 %v117
  %v218 = vpop.f32.mrb[0].mxu0
  %v219 = vadd.f32 %v96, %v218
  %v220 = vpop.f32.mrb[0].mxu0
  %221 = vmatprep.mubr.f32.mxu0 0.0
  %222 = vmatmul.mubr.f32.gmra.mrb[0].mxu0 %v120
  %v223 = vpop.f32.mrb[0].mxu0
  %v224 = vadd.f32 %v96, %v223
  %v225 = vpop.f32.mrb[0].mxu0
  %226 = vdwg.mxu0
  %v227 = vld [vmem:[%s3 + $0x20] sm:$0xff]
  %v228 = vld [vmem:[%s3 + $0x28] sm:$0xff]
  %v229 = vld [vmem:[%s3 + $0x30] sm:$0xff]
  %v230 = vld [vmem:[%s3 + $0x38] sm:$0xff]
  %v231 = vld [vmem:[%s6 + $0x1] sm:$0x1]
  %v232 = vlaneseq
  %v233 = vshrl.u32 %v232, 7
  %v234 = vsub.s32 0, %v233
  %v235 = vrot.slane %v231, %v234
  %236 = vmatprep.subr.mxu0 0.0
  %237 = vmatpush1.msra.mxu0 %v227
  %238 = vmatprep.subr.mxu0 0.0
  %239 = vmatpush1.msra.mxu0 %v228
  %240 = vmatprep.subr.mxu0 0.0
  %241 = vmatpush1.msra.mxu0 %v229
  %242 = vmatprep.subr.mxu0 0.0
  %243 = vmatpush1.msra.mxu0 %v230
  %244 = vmatprep.subr.mxu0 0.0
  %245 = vmatpush1.msra.mxu0 0.0
  %246 = vmatprep.subr.mxu0 0.0
  %247 = vmatpush1.msra.mxu0 0.0
  %248 = vmatprep.subr.mxu0 0.0
  %249 = vmatpush1.msra.mxu0 0.0
  %250 = vmatprep.subr.mxu0 0.0
  %251 = vmatpush1.msra.mxu0 0.0
  %252 = vmatprep.subr.mxu0 0.0
  %253 = vmatpush1.msra.mxu0 0.0
  %254 = vmatprep.subr.mxu0 0.0
  %255 = vmatpush1.msra.mxu0 0.0
  %256 = vmatprep.subr.mxu0 0.0
  %257 = vmatpush1.msra.mxu0 0.0
  %258 = vmatprep.subr.mxu0 0.0
  %259 = vmatpush1.msra.mxu0 0.0
  %260 = vmatprep.subr.mxu0 0.0
  %261 = vmatpush1.msra.mxu0 0.0
  %262 = vmatprep.subr.mxu0 0.0
  %263 = vmatpush1.msra.mxu0 0.0
  %264 = vmatprep.subr.mxu0 0.0
  %265 = vmatpush1.msra.mxu0 0.0
  %266 = vmatprep.subr.mxu0 0.0
  %267 = vmatpush1.msra.mxu0 0.0
  %268 = vmatprep.subr.mxu0 0.0
  %269 = vmatpush1.msra.mxu0 0.0
  %270 = vmatprep.subr.mxu0 0.0
  %271 = vmatpush1.msra.mxu0 0.0
  %272 = vmatprep.subr.mxu0 0.0
  %273 = vmatpush1.msra.mxu0 0.0
  %274 = vmatprep.subr.mxu0 0.0
  %275 = vmatpush1.msra.mxu0 0.0
  %276 = vmatprep.subr.mxu0 0.0
  %277 = vmatpush1.msra.mxu0 0.0
  %278 = vmatprep.subr.mxu0 0.0
  %279 = vmatpush1.msra.mxu0 0.0
  %280 = vmatprep.subr.mxu0 0.0
  %281 = vmatpush1.msra.mxu0 0.0
  %282 = vmatprep.subr.mxu0 0.0
  %283 = vmatpush1.msra.mxu0 0.0
  %284 = vmatprep.subr.mxu0 0.0
  %285 = vmatpush1.msra.mxu0 0.0
  %286 = vmatprep.subr.mxu0 0.0
  %287 = vmatpush1.msra.mxu0 0.0
  %288 = vmatprep.subr.mxu0 0.0
  %289 = vmatpush1.msra.mxu0 0.0
  %290 = vmatprep.subr.mxu0 0.0
  %291 = vmatpush1.msra.mxu0 0.0
  %292 = vmatprep.subr.mxu0 0.0
  %293 = vmatpush1.msra.mxu0 0.0
  %294 = vmatprep.subr.mxu0 0.0
  %295 = vmatpush1.msra.mxu0 0.0
  %296 = vmatprep.subr.mxu0 0.0
  %297 = vmatpush1.msra.mxu0 0.0
  %298 = vmatprep.subr.mxu0 0.0
  %299 = vmatpush1.msra.mxu0 0.0
  %300 = vmatprep.mubr.f32.mxu0 0.0
  %301 = vmatmul.mubr.f32.gmra.mrb[0].mxu0 %v99
  %v302 = vpop.f32.mrb[0].mxu0
  %v303 = vadd.f32 %v235, %v302
  %v304 = vpop.f32.mrb[0].mxu0
  %305 = vmatprep.mubr.f32.mxu0 0.0
  %306 = vmatmul.mubr.f32.gmra.mrb[0].mxu0 %v102
  %v307 = vpop.f32.mrb[0].mxu0
  %v308 = vadd.f32 %v235, %v307
  %v309 = vpop.f32.mrb[0].mxu0
  %310 = vmatprep.mubr.f32.mxu0 0.0
  %311 = vmatmul.mubr.f32.gmra.mrb[0].mxu0 %v105
  %v312 = vpop.f32.mrb[0].mxu0
  %v313 = vadd.f32 %v235, %v312
  %v314 = vpop.f32.mrb[0].mxu0
  %315 = vmatprep.mubr.f32.mxu0 0.0
  %316 = vmatmul.mubr.f32.gmra.mrb[0].mxu0 %v108
  %v317 = vpop.f32.mrb[0].mxu0
  %v318 = vadd.f32 %v235, %v317
  %v319 = vpop.f32.mrb[0].mxu0
  %320 = vmatprep.mubr.f32.mxu0 0.0
  %321 = vmatmul.mubr.f32.gmra.mrb[0].mxu0 %v111
  %v322 = vpop.f32.mrb[0].mxu0
  %v323 = vadd.f32 %v235, %v322
  %v324 = vpop.f32.mrb[0].mxu0
  %325 = vmatprep.mubr.f32.mxu0 0.0
  %326 = vmatmul.mubr.f32.gmra.mrb[0].mxu0 %v114
  %v327 = vpop.f32.mrb[0].mxu0
  %v328 = vadd.f32 %v235, %v327
  %v329 = vpop.f32.mrb[0].mxu0
  %330 = vmatprep.mubr.f32.mxu0 0.0
  %331 = vmatmul.mubr.f32.gmra.mrb[0].mxu0 %v117
  %v332 = vpop.f32.mrb[0].mxu0
  %v333 = vadd.f32 %v235, %v332
  %v334 = vpop.f32.mrb[0].mxu0
  %335 = vmatprep.mubr.f32.mxu0 0.0
  %336 = vmatmul.mubr.f32.gmra.mrb[0].mxu0 %v120
  %v337 = vpop.f32.mrb[0].mxu0
  %v338 = vadd.f32 %v235, %v337
  %v339 = vpop.f32.mrb[0].mxu0
  %340 = vdwg.mxu0
  %v341 = vld [vmem:[%s3 + $0x40] sm:$0xff]
  %v342 = vld [vmem:[%s3 + $0x48] sm:$0xff]
  %v343 = vld [vmem:[%s3 + $0x50] sm:$0xff]
  %v344 = vld [vmem:[%s3 + $0x58] sm:$0xff]
  %v345 = vld [vmem:[%s6 + $0x2] sm:$0x1]
  %v346 = vlaneseq
  %v347 = vshrl.u32 %v346, 7
  %v348 = vsub.s32 0, %v347
  %v349 = vrot.slane %v345, %v348
  %350 = vmatprep.subr.mxu0 0.0
  %351 = vmatpush1.msra.mxu0 %v341
  %352 = vmatprep.subr.mxu0 0.0
  %353 = vmatpush1.msra.mxu0 %v342
  %354 = vmatprep.subr.mxu0 0.0
  %355 = vmatpush1.msra.mxu0 %v343
  %356 = vmatprep.subr.mxu0 0.0
  %357 = vmatpush1.msra.mxu0 %v344
  %358 = vmatprep.subr.mxu0 0.0
  %359 = vmatpush1.msra.mxu0 0.0
  %360 = vmatprep.subr.mxu0 0.0
  %361 = vmatpush1.msra.mxu0 0.0
  %362 = vmatprep.subr.mxu0 0.0
  %363 = vmatpush1.msra.mxu0 0.0
  %364 = vmatprep.subr.mxu0 0.0
  %365 = vmatpush1.msra.mxu0 0.0
  %366 = vmatprep.subr.mxu0 0.0
  %367 = vmatpush1.msra.mxu0 0.0
  %368 = vmatprep.subr.mxu0 0.0
  %369 = vmatpush1.msra.mxu0 0.0
  %370 = vmatprep.subr.mxu0 0.0
  %371 = vmatpush1.msra.mxu0 0.0
  %372 = vmatprep.subr.mxu0 0.0
  %373 = vmatpush1.msra.mxu0 0.0
  %374 = vmatprep.subr.mxu0 0.0
  %375 = vmatpush1.msra.mxu0 0.0
  %376 = vmatprep.subr.mxu0 0.0
  %377 = vmatpush1.msra.mxu0 0.0
  %378 = vmatprep.subr.mxu0 0.0
  %379 = vmatpush1.msra.mxu0 0.0
  %380 = vmatprep.subr.mxu0 0.0
  %381 = vmatpush1.msra.mxu0 0.0
  %382 = vmatprep.subr.mxu0 0.0
  %383 = vmatpush1.msra.mxu0 0.0
  %384 = vmatprep.subr.mxu0 0.0
  %385 = vmatpush1.msra.mxu0 0.0
  %386 = vmatprep.subr.mxu0 0.0
  %387 = vmatpush1.msra.mxu0 0.0
  %388 = vmatprep.subr.mxu0 0.0
  %389 = vmatpush1.msra.mxu0 0.0
  %390 = vmatprep.subr.mxu0 0.0
  %391 = vmatpush1.msra.mxu0 0.0
  %392 = vmatprep.subr.mxu0 0.0
  %393 = vmatpush1.msra.mxu0 0.0
  %394 = vmatprep.subr.mxu0 0.0
  %395 = vmatpush1.msra.mxu0 0.0
  %396 = vmatprep.subr.mxu0 0.0
  %397 = vmatpush1.msra.mxu0 0.0
  %398 = vmatprep.subr.mxu0 0.0
  %399 = vmatpush1.msra.mxu0 0.0
  %400 = vmatprep.subr.mxu0 0.0
  %401 = vmatpush1.msra.mxu0 0.0
  %402 = vmatprep.subr.mxu0 0.0
  %403 = vmatpush1.msra.mxu0 0.0
  %404 = vmatprep.subr.mxu0 0.0
  %405 = vmatpush1.msra.mxu0 0.0
  %406 = vmatprep.subr.mxu0 0.0
  %407 = vmatpush1.msra.mxu0 0.0
  %408 = vmatprep.subr.mxu0 0.0
  %409 = vmatpush1.msra.mxu0 0.0
  %410 = vmatprep.subr.mxu0 0.0
  %411 = vmatpush1.msra.mxu0 0.0
  %412 = vmatprep.subr.mxu0 0.0
  %413 = vmatpush1.msra.mxu0 0.0
  %414 = vmatprep.mubr.f32.mxu0 0.0
  %415 = vmatmul.mubr.f32.gmra.mrb[0].mxu0 %v99
  %v416 = vpop.f32.mrb[0].mxu0
  %v417 = vadd.f32 %v349, %v416
  %v418 = vpop.f32.mrb[0].mxu0
  %419 = vmatprep.mubr.f32.mxu0 0.0
  %420 = vmatmul.mubr.f32.gmra.mrb[0].mxu0 %v102
  %v421 = vpop.f32.mrb[0].mxu0
  %v422 = vadd.f32 %v349, %v421
  %v423 = vpop.f32.mrb[0].mxu0
  %424 = vmatprep.mubr.f32.mxu0 0.0
  %425 = vmatmul.mubr.f32.gmra.mrb[0].mxu0 %v105
  %v426 = vpop.f32.mrb[0].mxu0
  %v427 = vadd.f32 %v349, %v426
  %v428 = vpop.f32.mrb[0].mxu0
  %429 = vmatprep.mubr.f32.mxu0 0.0
  %430 = vmatmul.mubr.f32.gmra.mrb[0].mxu0 %v108
  %v431 = vpop.f32.mrb[0].mxu0
  %v432 = vadd.f32 %v349, %v431
  %v433 = vpop.f32.mrb[0].mxu0
  %434 = vmatprep.mubr.f32.mxu0 0.0
  %435 = vmatmul.mubr.f32.gmra.mrb[0].mxu0 %v111
  %v436 = vpop.f32.mrb[0].mxu0
  %v437 = vadd.f32 %v349, %v436
  %v438 = vpop.f32.mrb[0].mxu0
  %439 = vmatprep.mubr.f32.mxu0 0.0
  %440 = vmatmul.mubr.f32.gmra.mrb[0].mxu0 %v114
  %v441 = vpop.f32.mrb[0].mxu0
  %v442 = vadd.f32 %v349, %v441
  %v443 = vpop.f32.mrb[0].mxu0
  %444 = vmatprep.mubr.f32.mxu0 0.0
  %445 = vmatmul.mubr.f32.gmra.mrb[0].mxu0 %v117
  %v446 = vpop.f32.mrb[0].mxu0
  %v447 = vadd.f32 %v349, %v446
  %v448 = vpop.f32.mrb[0].mxu0
  %449 = vmatprep.mubr.f32.mxu0 0.0
  %450 = vmatmul.mubr.f32.gmra.mrb[0].mxu0 %v120
  %v451 = vpop.f32.mrb[0].mxu0
  %v452 = vadd.f32 %v349, %v451
  %v453 = vpop.f32.mrb[0].mxu0
  %454 = vdwg.mxu0
  %vm455 = vcmask 64512
  %v457 = vsel %vm455, %v189, 0
  %v460 = vsel %vm455, %v194, 0
  %v463 = vsel %vm455, %v199, 0
  %v466 = vsel %vm455, %v204, 0
  %v469 = vsel %vm455, %v209, 0
  %v472 = vsel %vm455, %v214, 0
  %v475 = vsel %vm455, %v219, 0
  %v478 = vsel %vm455, %v224, 0
  %v481 = vsel %vm455, %v303, 0
  %v484 = vsel %vm455, %v308, 0
  %v487 = vsel %vm455, %v313, 0
  %v490 = vsel %vm455, %v318, 0
  %v493 = vsel %vm455, %v323, 0
  %v496 = vsel %vm455, %v328, 0
  %v499 = vsel %vm455, %v333, 0
  %v502 = vsel %vm455, %v338, 0
  %504 = vmatprep.subr.mxu0 0.0
  %505 = vmatpush1.xpose.msra.mxu0 %v481
  %506 = vmatprep.subr.mxu0 0.0
  %507 = vmatpush1.xpose.msra.mxu0 %v484
  %508 = vmatprep.subr.mxu0 0.0
  %509 = vmatpush1.xpose.msra.mxu0 %v487
  %510 = vmatprep.subr.mxu0 0.0
  %511 = vmatpush1.xpose.msra.mxu0 %v490
  %512 = vmatprep.subr.mxu0 0.0
  %513 = vmatpush1.xpose.msra.mxu0 %v493
  %514 = vmatprep.subr.mxu0 0.0
  %515 = vmatpush1.xpose.msra.mxu0 %v496
  %516 = vmatprep.subr.mxu0 0.0
  %517 = vmatpush1.xpose.msra.mxu0 %v499
  %518 = vmatprep.subr.mxu0 0.0
  %519 = vmatpush1.xpose.msra.mxu0 %v502
  %520 = vmatprep.subr.mxu0 0.0
  %521 = vmatpush1.xpose.msra.mxu0 0.0
  %522 = vmatprep.subr.mxu0 0.0
  %523 = vmatpush1.xpose.msra.mxu0 0.0
  %524 = vmatprep.subr.mxu0 0.0
  %525 = vmatpush1.xpose.msra.mxu0 0.0
  %526 = vmatprep.subr.mxu0 0.0
  %527 = vmatpush1.xpose.msra.mxu0 0.0
  %528 = vmatprep.subr.mxu0 0.0
  %529 = vmatpush1.xpose.msra.mxu0 0.0
  %530 = vmatprep.subr.mxu0 0.0
  %531 = vmatpush1.xpose.msra.mxu0 0.0
  %532 = vmatprep.subr.mxu0 0.0
  %533 = vmatpush1.xpose.msra.mxu0 0.0
  %534 = vmatprep.subr.mxu0 0.0
  %535 = vmatpush1.xpose.msra.mxu0 0.0
  %536 = vmatprep.subr.mxu0 0.0
  %537 = vmatpush1.xpose.msra.mxu0 0.0
  %538 = vmatprep.subr.mxu0 0.0
  %539 = vmatpush1.xpose.msra.mxu0 0.0
  %540 = vmatprep.subr.mxu0 0.0
  %541 = vmatpush1.xpose.msra.mxu0 0.0
  %542 = vmatprep.subr.mxu0 0.0
  %543 = vmatpush1.xpose.msra.mxu0 0.0
  %544 = vmatprep.subr.mxu0 0.0
  %545 = vmatpush1.xpose.msra.mxu0 0.0
  %546 = vmatprep.subr.mxu0 0.0
  %547 = vmatpush1.xpose.msra.mxu0 0.0
  %548 = vmatprep.subr.mxu0 0.0
  %549 = vmatpush1.xpose.msra.mxu0 0.0
  %550 = vmatprep.subr.mxu0 0.0
  %551 = vmatpush1.xpose.msra.mxu0 0.0
  %552 = vmatprep.subr.mxu0 0.0
  %553 = vmatpush1.xpose.msra.mxu0 0.0
  %554 = vmatprep.subr.mxu0 0.0
  %555 = vmatpush1.xpose.msra.mxu0 0.0
  %556 = vmatprep.subr.mxu0 0.0
  %557 = vmatpush1.xpose.msra.mxu0 0.0
  %558 = vmatprep.subr.mxu0 0.0
  %559 = vmatpush1.xpose.msra.mxu0 0.0
  %560 = vmatprep.subr.mxu0 0.0
  %561 = vmatpush1.xpose.msra.mxu0 0.0
  %562 = vmatprep.subr.mxu0 0.0
  %563 = vmatpush1.xpose.msra.mxu0 0.0
  %564 = vmatprep.subr.mxu0 0.0
  %565 = vmatpush1.xpose.msra.mxu0 0.0
  %566 = vmatprep.subr.mxu0 0.0
  %567 = vmatpush1.xpose.msra.mxu0 0.0
  %568 = vmatprep.mubr.f32.mxu0 0.0
  %569 = vmatmul.mubr.f32.gmra.mrb[0].mxu0 %v457
  %v570 = vpop.f32.mrb[0].mxu0
  %v571 = vadd.f32 %v56, %v570
  %v572 = vpop.f32.mrb[0].mxu0
  %573 = vmatprep.mubr.f32.mxu0 0.0
  %574 = vmatmul.mubr.f32.gmra.mrb[0].mxu0 %v460
  %v575 = vpop.f32.mrb[0].mxu0
  %v576 = vadd.f32 %v57, %v575
  %v577 = vpop.f32.mrb[0].mxu0
  %578 = vmatprep.mubr.f32.mxu0 0.0
  %579 = vmatmul.mubr.f32.gmra.mrb[0].mxu0 %v463
  %v580 = vpop.f32.mrb[0].mxu0
  %v581 = vadd.f32 %v58, %v580
  %v582 = vpop.f32.mrb[0].mxu0
  %583 = vmatprep.mubr.f32.mxu0 0.0
  %584 = vmatmul.mubr.f32.gmra.mrb[0].mxu0 %v466
  %v585 = vpop.f32.mrb[0].mxu0
  %v586 = vadd.f32 %v59, %v585
  %v587 = vpop.f32.mrb[0].mxu0
  %588 = vmatprep.mubr.f32.mxu0 0.0
  %589 = vmatmul.mubr.f32.gmra.mrb[0].mxu0 %v469
  %v590 = vpop.f32.mrb[0].mxu0
  %v591 = vadd.f32 %v60, %v590
  %v592 = vpop.f32.mrb[0].mxu0
  %593 = vmatprep.mubr.f32.mxu0 0.0
  %594 = vmatmul.mubr.f32.gmra.mrb[0].mxu0 %v472
  %v595 = vpop.f32.mrb[0].mxu0
  %v596 = vadd.f32 %v61, %v595
  %v597 = vpop.f32.mrb[0].mxu0
  %598 = vmatprep.mubr.f32.mxu0 0.0
  %599 = vmatmul.mubr.f32.gmra.mrb[0].mxu0 %v475
  %v600 = vpop.f32.mrb[0].mxu0
  %v601 = vadd.f32 %v62, %v600
  %v602 = vpop.f32.mrb[0].mxu0
  %603 = vmatprep.mubr.f32.mxu0 0.0
  %604 = vmatmul.mubr.f32.gmra.mrb[0].mxu0 %v478
  %v605 = vpop.f32.mrb[0].mxu0
  %v606 = vadd.f32 %v63, %v605
  %v607 = vpop.f32.mrb[0].mxu0
  %608 = vdwg.mxu0
  %vm609 = vcmask 523264
  %v610 = vsel %vm609, %v571, -inf
  %611 = vmax.xlane.f32.xlu0 %v610
  %v612 = vpop.xlane.xlu0 %611
  %v613 = vsel %vm609, %v576, -inf
  %614 = vmax.xlane.f32.xlu0 %v613
  %v615 = vpop.xlane.xlu0 %614
  %v616 = vsel %vm609, %v581, -inf
  %617 = vmax.xlane.f32.xlu0 %v616
  %v618 = vpop.xlane.xlu0 %617
  %v619 = vsel %vm609, %v586, -inf
  %620 = vmax.xlane.f32.xlu0 %v619
  %v621 = vpop.xlane.xlu0 %620
  %v622 = vsel %vm609, %v591, -inf
  %623 = vmax.xlane.f32.xlu0 %v622
  %v624 = vpop.xlane.xlu0 %623
  %v625 = vsel %vm609, %v596, -inf
  %626 = vmax.xlane.f32.xlu0 %v625
  %v627 = vpop.xlane.xlu0 %626
  %v628 = vsel %vm609, %v601, -inf
  %629 = vmax.xlane.f32.xlu0 %v628
  %v630 = vpop.xlane.xlu0 %629
  %v631 = vsel %vm609, %v606, -inf
  %632 = vmax.xlane.f32.xlu0 %v631
  %v633 = vpop.xlane.xlu0 %632
  %v634 = vsub.f32 %v571, %v612
  %v635 = vsub.f32 %v576, %v615
  %v636 = vsub.f32 %v581, %v618
  %v637 = vsub.f32 %v586, %v621
  %v638 = vsub.f32 %v591, %v624
  %v639 = vsub.f32 %v596, %v627
  %v640 = vsub.f32 %v601, %v630
  %v641 = vsub.f32 %v606, %v633
  %v642 = vmul.f32 %v634, 1.442695
  %v643 = vpow.pop %v642
  %v644 = vmul.f32 %v635, 1.442695
  %v645 = vpow.pop %v644
  %v646 = vmul.f32 %v636, 1.442695
  %v647 = vpow.pop %v646
  %v648 = vmul.f32 %v637, 1.442695
  %v649 = vpow.pop %v648
  %v650 = vmul.f32 %v638, 1.442695
  %v651 = vpow.pop %v650
  %v652 = vmul.f32 %v639, 1.442695
  %v653 = vpow.pop %v652
  %v654 = vmul.f32 %v640, 1.442695
  %v655 = vpow.pop %v654
  %v656 = vmul.f32 %v641, 1.442695
  %v657 = vpow.pop %v656
  %v658 = vsel %vm609, %v643, 0.0
  %659 = vadd.xlane.f32.xlu0 %v658
  %v660 = vpop.xlane.xlu0 %659
  %v661 = vsel %vm609, %v645, 0.0
  %662 = vadd.xlane.f32.xlu0 %v661
  %v663 = vpop.xlane.xlu0 %662
  %v664 = vsel %vm609, %v647, 0.0
  %665 = vadd.xlane.f32.xlu0 %v664
  %v666 = vpop.xlane.xlu0 %665
  %v667 = vsel %vm609, %v649, 0.0
  %668 = vadd.xlane.f32.xlu0 %v667
  %v669 = vpop.xlane.xlu0 %668
  %v670 = vsel %vm609, %v651, 0.0
  %671 = vadd.xlane.f32.xlu0 %v670
  %v672 = vpop.xlane.xlu0 %671
  %v673 = vsel %vm609, %v653, 0.0
  %674 = vadd.xlane.f32.xlu0 %v673
  %v675 = vpop.xlane.xlu0 %674
  %v676 = vsel %vm609, %v655, 0.0
  %677 = vadd.xlane.f32.xlu0 %v676
  %v678 = vpop.xlane.xlu0 %677
  %v679 = vsel %vm609, %v657, 0.0
  %680 = vadd.xlane.f32.xlu0 %v679
  %v681 = vpop.xlane.xlu0 %680
  %v682 = vrcp.pop %v660
  %v683 = vmul.f32 1.0, %v682
  %v684 = vrcp.pop %v663
  %v685 = vmul.f32 1.0, %v684
  %v686 = vrcp.pop %v666
  %v687 = vmul.f32 1.0, %v686
  %v688 = vrcp.pop %v669
  %v689 = vmul.f32 1.0, %v688
  %v690 = vrcp.pop %v672
  %v691 = vmul.f32 1.0, %v690
  %v692 = vrcp.pop %v675
  %v693 = vmul.f32 1.0, %v692
  %v694 = vrcp.pop %v678
  %v695 = vmul.f32 1.0, %v694
  %v696 = vrcp.pop %v681
  %v697 = vmul.f32 1.0, %v696
  %v698 = vmul.f32 %v643, %v683
  %v699 = vmul.f32 %v645, %v685
  %v700 = vmul.f32 %v647, %v687
  %v701 = vmul.f32 %v649, %v689
  %v702 = vmul.f32 %v651, %v691
  %v703 = vmul.f32 %v653, %v693
  %v704 = vmul.f32 %v655, %v695
  %v705 = vmul.f32 %v657, %v697
  %v707 = vsel %vm609, %v698, 0
  %v710 = vsel %vm609, %v699, 0
  %v713 = vsel %vm609, %v700, 0
  %v716 = vsel %vm609, %v701, 0
  %v719 = vsel %vm609, %v702, 0
  %v722 = vsel %vm609, %v703, 0
  %v725 = vsel %vm609, %v704, 0
  %v728 = vsel %vm609, %v705, 0
  %730 = vmatprep.subr.mxu0 0.0
  %731 = vmatpush1.msra.mxu0 %v417
  %732 = vmatprep.subr.mxu0 0.0
  %733 = vmatpush1.msra.mxu0 %v422
  %734 = vmatprep.subr.mxu0 0.0
  %735 = vmatpush1.msra.mxu0 %v427
  %736 = vmatprep.subr.mxu0 0.0
  %737 = vmatpush1.msra.mxu0 %v432
  %738 = vmatprep.subr.mxu0 0.0
  %739 = vmatpush1.msra.mxu0 %v437
  %740 = vmatprep.subr.mxu0 0.0
  %741 = vmatpush1.msra.mxu0 %v442
  %742 = vmatprep.subr.mxu0 0.0
  %743 = vmatpush1.msra.mxu0 %v447
  %744 = vmatprep.subr.mxu0 0.0
  %745 = vmatpush1.msra.mxu0 %v452
  %746 = vmatprep.subr.mxu0 0.0
  %747 = vmatpush1.msra.mxu0 0.0
  %748 = vmatprep.subr.mxu0 0.0
  %749 = vmatpush1.msra.mxu0 0.0
  %750 = vmatprep.subr.mxu0 0.0
  %751 = vmatpush1.msra.mxu0 0.0
  %752 = vmatprep.subr.mxu0 0.0
  %753 = vmatpush1.msra.mxu0 0.0
  %754 = vmatprep.subr.mxu0 0.0
  %755 = vmatpush1.msra.mxu0 0.0
  %756 = vmatprep.subr.mxu0 0.0
  %757 = vmatpush1.msra.mxu0 0.0
  %758 = vmatprep.subr.mxu0 0.0
  %759 = vmatpush1.msra.mxu0 0.0
  %760 = vmatprep.subr.mxu0 0.0
  %761 = vmatpush1.msra.mxu0 0.0
  %762 = vmatprep.subr.mxu0 0.0
  %763 = vmatpush1.msra.mxu0 0.0
  %764 = vmatprep.subr.mxu0 0.0
  %765 = vmatpush1.msra.mxu0 0.0
  %766 = vmatprep.subr.mxu0 0.0
  %767 = vmatpush1.msra.mxu0 0.0
  %768 = vmatprep.subr.mxu0 0.0
  %769 = vmatpush1.msra.mxu0 0.0
  %770 = vmatprep.subr.mxu0 0.0
  %771 = vmatpush1.msra.mxu0 0.0
  %772 = vmatprep.subr.mxu0 0.0
  %773 = vmatpush1.msra.mxu0 0.0
  %774 = vmatprep.subr.mxu0 0.0
  %775 = vmatpush1.msra.mxu0 0.0
  %776 = vmatprep.subr.mxu0 0.0
  %777 = vmatpush1.msra.mxu0 0.0
  %778 = vmatprep.subr.mxu0 0.0
  %779 = vmatpush1.msra.mxu0 0.0
  %780 = vmatprep.subr.mxu0 0.0
  %781 = vmatpush1.msra.mxu0 0.0
  %782 = vmatprep.subr.mxu0 0.0
  %783 = vmatpush1.msra.mxu0 0.0
  %784 = vmatprep.subr.mxu0 0.0
  %785 = vmatpush1.msra.mxu0 0.0
  %786 = vmatprep.subr.mxu0 0.0
  %787 = vmatpush1.msra.mxu0 0.0
  %788 = vmatprep.subr.mxu0 0.0
  %789 = vmatpush1.msra.mxu0 0.0
  %790 = vmatprep.subr.mxu0 0.0
  %791 = vmatpush1.msra.mxu0 0.0
  %792 = vmatprep.subr.mxu0 0.0
  %793 = vmatpush1.msra.mxu0 0.0
  %794 = vmatprep.mubr.f32.mxu0 0.0
  %795 = vmatmul.mubr.f32.gmra.mrb[0].mxu0 %v707
  %v796 = vpop.f32.mrb[0].mxu0
  %v797 = vadd.f32 0.0, %v796
  %v798 = vpop.f32.mrb[0].mxu0
  %799 = vmatprep.mubr.f32.mxu0 0.0
  %800 = vmatmul.mubr.f32.gmra.mrb[0].mxu0 %v710
  %v801 = vpop.f32.mrb[0].mxu0
  %v802 = vadd.f32 0.0, %v801
  %v803 = vpop.f32.mrb[0].mxu0
  %804 = vmatprep.mubr.f32.mxu0 0.0
  %805 = vmatmul.mubr.f32.gmra.mrb[0].mxu0 %v713
  %v806 = vpop.f32.mrb[0].mxu0
  %v807 = vadd.f32 0.0, %v806
  %v808 = vpop.f32.mrb[0].mxu0
  %809 = vmatprep.mubr.f32.mxu0 0.0
  %810 = vmatmul.mubr.f32.gmra.mrb[0].mxu0 %v716
  %v811 = vpop.f32.mrb[0].mxu0
  %v812 = vadd.f32 0.0, %v811
  %v813 = vpop.f32.mrb[0].mxu0
  %814 = vmatprep.mubr.f32.mxu0 0.0
  %815 = vmatmul.mubr.f32.gmra.mrb[0].mxu0 %v719
  %v816 = vpop.f32.mrb[0].mxu0
  %v817 = vadd.f32 0.0, %v816
  %v818 = vpop.f32.mrb[0].mxu0
  %819 = vmatprep.mubr.f32.mxu0 0.0
  %820 = vmatmul.mubr.f32.gmra.mrb[0].mxu0 %v722
  %v821 = vpop.f32.mrb[0].mxu0
  %v822 = vadd.f32 0.0, %v821
  %v823 = vpop.f32.mrb[0].mxu0
  %824 = vmatprep.mubr.f32.mxu0 0.0
  %825 = vmatmul.mubr.f32.gmra.mrb[0].mxu0 %v725
  %v826 = vpop.f32.mrb[0].mxu0
  %v827 = vadd.f32 0.0, %v826
  %v828 = vpop.f32.mrb[0].mxu0
  %829 = vmatprep.mubr.f32.mxu0 0.0
  %830 = vmatmul.mubr.f32.gmra.mrb[0].mxu0 %v728
  %v831 = vpop.f32.mrb[0].mxu0
  %v832 = vadd.f32 0.0, %v831
  %v833 = vpop.f32.mrb[0].mxu0
  %834 = vdwg.mxu0
  %835 = vrot.lane.b32.xlu0 %v189, 120
  %v836 = vpop.permute.xlu0 %835
  %837 = vrot.lane.b32.xlu0 %v194, 120
  %v838 = vpop.permute.xlu0 %837
  %839 = vrot.lane.b32.xlu0 %v199, 120
  %v840 = vpop.permute.xlu0 %839
  %841 = vrot.lane.b32.xlu0 %v204, 120
  %v842 = vpop.permute.xlu0 %841
  %843 = vrot.lane.b32.xlu0 %v209, 120
  %v844 = vpop.permute.xlu0 %843
  %845 = vrot.lane.b32.xlu0 %v214, 120
  %v846 = vpop.permute.xlu0 %845
  %847 = vrot.lane.b32.xlu0 %v219, 120
  %v848 = vpop.permute.xlu0 %847
  %849 = vrot.lane.b32.xlu0 %v224, 120
  %v850 = vpop.permute.xlu0 %849
  %851 = vrot.lane.b32.xlu0 %v303, 120
  %v852 = vpop.permute.xlu0 %851
  %853 = vrot.lane.b32.xlu0 %v308, 120
  %v854 = vpop.permute.xlu0 %853
  %855 = vrot.lane.b32.xlu0 %v313, 120
  %v856 = vpop.permute.xlu0 %855
  %857 = vrot.lane.b32.xlu0 %v318, 120
  %v858 = vpop.permute.xlu0 %857
  %859 = vrot.lane.b32.xlu0 %v323, 120
  %v860 = vpop.permute.xlu0 %859
  %861 = vrot.lane.b32.xlu0 %v328, 120
  %v862 = vpop.permute.xlu0 %861
  %863 = vrot.lane.b32.xlu0 %v333, 120
  %v864 = vpop.permute.xlu0 %863
  %865 = vrot.lane.b32.xlu0 %v338, 120
  %v866 = vpop.permute.xlu0 %865
  %v867 = vsel %vm455, %v836, 0
  %v869 = vsel %vm455, %v838, 0
  %v871 = vsel %vm455, %v840, 0
  %v873 = vsel %vm455, %v842, 0
  %v875 = vsel %vm455, %v844, 0
  %v877 = vsel %vm455, %v846, 0
  %v879 = vsel %vm455, %v848, 0
  %v881 = vsel %vm455, %v850, 0
  %v883 = vsel %vm455, %v852, 0
  %v885 = vsel %vm455, %v854, 0
  %v887 = vsel %vm455, %v856, 0
  %v889 = vsel %vm455, %v858, 0
  %v891 = vsel %vm455, %v860, 0
  %v893 = vsel %vm455, %v862, 0
  %v895 = vsel %vm455, %v864, 0
  %v897 = vsel %vm455, %v866, 0
  %899 = vmatprep.subr.mxu0 0.0
  %900 = vmatpush1.xpose.msra.mxu0 %v883
  %901 = vmatprep.subr.mxu0 0.0
  %902 = vmatpush1.xpose.msra.mxu0 %v885
  %903 = vmatprep.subr.mxu0 0.0
  %904 = vmatpush1.xpose.msra.mxu0 %v887
  %905 = vmatprep.subr.mxu0 0.0
  %906 = vmatpush1.xpose.msra.mxu0 %v889
  %907 = vmatprep.subr.mxu0 0.0
  %908 = vmatpush1.xpose.msra.mxu0 %v891
  %909 = vmatprep.subr.mxu0 0.0
  %910 = vmatpush1.xpose.msra.mxu0 %v893
  %911 = vmatprep.subr.mxu0 0.0
  %912 = vmatpush1.xpose.msra.mxu0 %v895
  %913 = vmatprep.subr.mxu0 0.0
  %914 = vmatpush1.xpose.msra.mxu0 %v897
  %915 = vmatprep.subr.mxu0 0.0
  %916 = vmatpush1.xpose.msra.mxu0 0.0
  %917 = vmatprep.subr.mxu0 0.0
  %918 = vmatpush1.xpose.msra.mxu0 0.0
  %919 = vmatprep.subr.mxu0 0.0
  %920 = vmatpush1.xpose.msra.mxu0 0.0
  %921 = vmatprep.subr.mxu0 0.0
  %922 = vmatpush1.xpose.msra.mxu0 0.0
  %923 = vmatprep.subr.mxu0 0.0
  %924 = vmatpush1.xpose.msra.mxu0 0.0
  %925 = vmatprep.subr.mxu0 0.0
  %926 = vmatpush1.xpose.msra.mxu0 0.0
  %927 = vmatprep.subr.mxu0 0.0
  %928 = vmatpush1.xpose.msra.mxu0 0.0
  %929 = vmatprep.subr.mxu0 0.0
  %930 = vmatpush1.xpose.msra.mxu0 0.0
  %931 = vmatprep.subr.mxu0 0.0
  %932 = vmatpush1.xpose.msra.mxu0 0.0
  %933 = vmatprep.subr.mxu0 0.0
  %934 = vmatpush1.xpose.msra.mxu0 0.0
  %935 = vmatprep.subr.mxu0 0.0
  %936 = vmatpush1.xpose.msra.mxu0 0.0
  %937 = vmatprep.subr.mxu0 0.0
  %938 = vmatpush1.xpose.msra.mxu0 0.0
  %939 = vmatprep.subr.mxu0 0.0
  %940 = vmatpush1.xpose.msra.mxu0 0.0
  %941 = vmatprep.subr.mxu0 0.0
  %942 = vmatpush1.xpose.msra.mxu0 0.0
  %943 = vmatprep.subr.mxu0 0.0
  %944 = vmatpush1.xpose.msra.mxu0 0.0
  %945 = vmatprep.subr.mxu0 0.0
  %946 = vmatpush1.xpose.msra.mxu0 0.0
  %947 = vmatprep.subr.mxu0 0.0
  %948 = vmatpush1.xpose.msra.mxu0 0.0
  %949 = vmatprep.subr.mxu0 0.0
  %950 = vmatpush1.xpose.msra.mxu0 0.0
  %951 = vmatprep.subr.mxu0 0.0
  %952 = vmatpush1.xpose.msra.mxu0 0.0
  %953 = vmatprep.subr.mxu0 0.0
  %954 = vmatpush1.xpose.msra.mxu0 0.0
  %955 = vmatprep.subr.mxu0 0.0
  %956 = vmatpush1.xpose.msra.mxu0 0.0
  %957 = vmatprep.subr.mxu0 0.0
  %958 = vmatpush1.xpose.msra.mxu0 0.0
  %959 = vmatprep.subr.mxu0 0.0
  %960 = vmatpush1.xpose.msra.mxu0 0.0
  %961 = vmatprep.subr.mxu0 0.0
  %962 = vmatpush1.xpose.msra.mxu0 0.0
  %963 = vmatprep.mubr.f32.mxu0 0.0
  %964 = vmatmul.mubr.f32.gmra.mrb[0].mxu0 %v867
  %v965 = vpop.f32.mrb[0].mxu0
  %v966 = vadd.f32 %v56, %v965
  %v967 = vpop.f32.mrb[0].mxu0
  %968 = vmatprep.mubr.f32.mxu0 0.0
  %969 = vmatmul.mubr.f32.gmra.mrb[0].mxu0 %v869
  %v970 = vpop.f32.mrb[0].mxu0
  %v971 = vadd.f32 %v57, %v970
  %v972 = vpop.f32.mrb[0].mxu0
  %973 = vmatprep.mubr.f32.mxu0 0.0
  %974 = vmatmul.mubr.f32.gmra.mrb[0].mxu0 %v871
  %v975 = vpop.f32.mrb[0].mxu0
  %v976 = vadd.f32 %v58, %v975
  %v977 = vpop.f32.mrb[0].mxu0
  %978 = vmatprep.mubr.f32.mxu0 0.0
  %979 = vmatmul.mubr.f32.gmra.mrb[0].mxu0 %v873
  %v980 = vpop.f32.mrb[0].mxu0
  %v981 = vadd.f32 %v59, %v980
  %v982 = vpop.f32.mrb[0].mxu0
  %983 = vmatprep.mubr.f32.mxu0 0.0
  %984 = vmatmul.mubr.f32.gmra.mrb[0].mxu0 %v875
  %v985 = vpop.f32.mrb[0].mxu0
  %v986 = vadd.f32 %v60, %v985
  %v987 = vpop.f32.mrb[0].mxu0
  %988 = vmatprep.mubr.f32.mxu0 0.0
  %989 = vmatmul.mubr.f32.gmra.mrb[0].mxu0 %v877
  %v990 = vpop.f32.mrb[0].mxu0
  %v991 = vadd.f32 %v61, %v990
  %v992 = vpop.f32.mrb[0].mxu0
  %993 = vmatprep.mubr.f32.mxu0 0.0
  %994 = vmatmul.mubr.f32.gmra.mrb[0].mxu0 %v879
  %v995 = vpop.f32.mrb[0].mxu0
  %v996 = vadd.f32 %v62, %v995
  %v997 = vpop.f32.mrb[0].mxu0
  %998 = vmatprep.mubr.f32.mxu0 0.0
  %999 = vmatmul.mubr.f32.gmra.mrb[0].mxu0 %v881
  %v1000 = vpop.f32.mrb[0].mxu0
  %v1001 = vadd.f32 %v63, %v1000
  %v1002 = vpop.f32.mrb[0].mxu0
  %1003 = vdwg.mxu0
  %v1004 = vsel %vm609, %v966, -inf
  %1005 = vmax.xlane.f32.xlu0 %v1004
  %v1006 = vpop.xlane.xlu0 %1005
  %v1007 = vsel %vm609, %v971, -inf
  %1008 = vmax.xlane.f32.xlu0 %v1007
  %v1009 = vpop.xlane.xlu0 %1008
  %v1010 = vsel %vm609, %v976, -inf
  %1011 = vmax.xlane.f32.xlu0 %v1010
  %v1012 = vpop.xlane.xlu0 %1011
  %v1013 = vsel %vm609, %v981, -inf
  %1014 = vmax.xlane.f32.xlu0 %v1013
  %v1015 = vpop.xlane.xlu0 %1014
  %v1016 = vsel %vm609, %v986, -inf
  %1017 = vmax.xlane.f32.xlu0 %v1016
  %v1018 = vpop.xlane.xlu0 %1017
  %v1019 = vsel %vm609, %v991, -inf
  %1020 = vmax.xlane.f32.xlu0 %v1019
  %v1021 = vpop.xlane.xlu0 %1020
  %v1022 = vsel %vm609, %v996, -inf
  %1023 = vmax.xlane.f32.xlu0 %v1022
  %v1024 = vpop.xlane.xlu0 %1023
  %v1025 = vsel %vm609, %v1001, -inf
  %1026 = vmax.xlane.f32.xlu0 %v1025
  %v1027 = vpop.xlane.xlu0 %1026
  %v1028 = vsub.f32 %v966, %v1006
  %v1029 = vsub.f32 %v971, %v1009
  %v1030 = vsub.f32 %v976, %v1012
  %v1031 = vsub.f32 %v981, %v1015
  %v1032 = vsub.f32 %v986, %v1018
  %v1033 = vsub.f32 %v991, %v1021
  %v1034 = vsub.f32 %v996, %v1024
  %v1035 = vsub.f32 %v1001, %v1027
  %v1036 = vmul.f32 %v1028, 1.442695
  %v1037 = vpow.pop %v1036
  %v1038 = vmul.f32 %v1029, 1.442695
  %v1039 = vpow.pop %v1038
  %v1040 = vmul.f32 %v1030, 1.442695
  %v1041 = vpow.pop %v1040
  %v1042 = vmul.f32 %v1031, 1.442695
  %v1043 = vpow.pop %v1042
  %v1044 = vmul.f32 %v1032, 1.442695
  %v1045 = vpow.pop %v1044
  %v1046 = vmul.f32 %v1033, 1.442695
  %v1047 = vpow.pop %v1046
  %v1048 = vmul.f32 %v1034, 1.442695
  %v1049 = vpow.pop %v1048
  %v1050 = vmul.f32 %v1035, 1.442695
  %v1051 = vpow.pop %v1050
  %v1052 = vsel %vm609, %v1037, 0.0
  %1053 = vadd.xlane.f32.xlu0 %v1052
  %v1054 = vpop.xlane.xlu0 %1053
  %v1055 = vsel %vm609, %v1039, 0.0
  %1056 = vadd.xlane.f32.xlu0 %v1055
  %v1057 = vpop.xlane.xlu0 %1056
  %v1058 = vsel %vm609, %v1041, 0.0
  %1059 = vadd.xlane.f32.xlu0 %v1058
  %v1060 = vpop.xlane.xlu0 %1059
  %v1061 = vsel %vm609, %v1043, 0.0
  %1062 = vadd.xlane.f32.xlu0 %v1061
  %v1063 = vpop.xlane.xlu0 %1062
  %v1064 = vsel %vm609, %v1045, 0.0
  %1065 = vadd.xlane.f32.xlu0 %v1064
  %v1066 = vpop.xlane.xlu0 %1065
  %v1067 = vsel %vm609, %v1047, 0.0
  %1068 = vadd.xlane.f32.xlu0 %v1067
  %v1069 = vpop.xlane.xlu0 %1068
  %v1070 = vsel %vm609, %v1049, 0.0
  %1071 = vadd.xlane.f32.xlu0 %v1070
  %v1072 = vpop.xlane.xlu0 %1071
  %v1073 = vsel %vm609, %v1051, 0.0
  %1074 = vadd.xlane.f32.xlu0 %v1073
  %v1075 = vpop.xlane.xlu0 %1074
  %v1076 = vrcp.pop %v1054
  %v1077 = vmul.f32 1.0, %v1076
  %v1078 = vrcp.pop %v1057
  %v1079 = vmul.f32 1.0, %v1078
  %v1080 = vrcp.pop %v1060
  %v1081 = vmul.f32 1.0, %v1080
  %v1082 = vrcp.pop %v1063
  %v1083 = vmul.f32 1.0, %v1082
  %v1084 = vrcp.pop %v1066
  %v1085 = vmul.f32 1.0, %v1084
  %v1086 = vrcp.pop %v1069
  %v1087 = vmul.f32 1.0, %v1086
  %v1088 = vrcp.pop %v1072
  %v1089 = vmul.f32 1.0, %v1088
  %v1090 = vrcp.pop %v1075
  %v1091 = vmul.f32 1.0, %v1090
  %v1092 = vmul.f32 %v1037, %v1077
  %v1093 = vmul.f32 %v1039, %v1079
  %v1094 = vmul.f32 %v1041, %v1081
  %v1095 = vmul.f32 %v1043, %v1083
  %v1096 = vmul.f32 %v1045, %v1085
  %v1097 = vmul.f32 %v1047, %v1087
  %v1098 = vmul.f32 %v1049, %v1089
  %v1099 = vmul.f32 %v1051, %v1091
  %1108 = vrot.lane.b32.xlu0 %v417, 120
  %v1109 = vpop.permute.xlu0 %1108
  %1110 = vrot.lane.b32.xlu0 %v422, 120
  %v1111 = vpop.permute.xlu0 %1110
  %1112 = vrot.lane.b32.xlu0 %v427, 120
  %v1113 = vpop.permute.xlu0 %1112
  %1114 = vrot.lane.b32.xlu0 %v432, 120
  %v1115 = vpop.permute.xlu0 %1114
  %1116 = vrot.lane.b32.xlu0 %v437, 120
  %v1117 = vpop.permute.xlu0 %1116
  %1118 = vrot.lane.b32.xlu0 %v442, 120
  %v1119 = vpop.permute.xlu0 %1118
  %1120 = vrot.lane.b32.xlu0 %v447, 120
  %v1121 = vpop.permute.xlu0 %1120
  %1122 = vrot.lane.b32.xlu0 %v452, 120
  %v1123 = vpop.permute.xlu0 %1122
  %v1133 = vsel %vm609, %v1092, 0
  %v1136 = vsel %vm609, %v1093, 0
  %v1139 = vsel %vm609, %v1094, 0
  %v1142 = vsel %vm609, %v1095, 0
  %v1145 = vsel %vm609, %v1096, 0
  %v1148 = vsel %vm609, %v1097, 0
  %v1151 = vsel %vm609, %v1098, 0
  %v1154 = vsel %vm609, %v1099, 0
  %1156 = vmatprep.subr.mxu0 0.0
  %1157 = vmatpush1.msra.mxu0 %v1109
  %1158 = vmatprep.subr.mxu0 0.0
  %1159 = vmatpush1.msra.mxu0 %v1111
  %1160 = vmatprep.subr.mxu0 0.0
  %1161 = vmatpush1.msra.mxu0 %v1113
  %1162 = vmatprep.subr.mxu0 0.0
  %1163 = vmatpush1.msra.mxu0 %v1115
  %1164 = vmatprep.subr.mxu0 0.0
  %1165 = vmatpush1.msra.mxu0 %v1117
  %1166 = vmatprep.subr.mxu0 0.0
  %1167 = vmatpush1.msra.mxu0 %v1119
  %1168 = vmatprep.subr.mxu0 0.0
  %1169 = vmatpush1.msra.mxu0 %v1121
  %1170 = vmatprep.subr.mxu0 0.0
  %1171 = vmatpush1.msra.mxu0 %v1123
  %1172 = vmatprep.subr.mxu0 0.0
  %1173 = vmatpush1.msra.mxu0 0.0
  %1174 = vmatprep.subr.mxu0 0.0
  %1175 = vmatpush1.msra.mxu0 0.0
  %1176 = vmatprep.subr.mxu0 0.0
  %1177 = vmatpush1.msra.mxu0 0.0
  %1178 = vmatprep.subr.mxu0 0.0
  %1179 = vmatpush1.msra.mxu0 0.0
  %1180 = vmatprep.subr.mxu0 0.0
  %1181 = vmatpush1.msra.mxu0 0.0
  %1182 = vmatprep.subr.mxu0 0.0
  %1183 = vmatpush1.msra.mxu0 0.0
  %1184 = vmatprep.subr.mxu0 0.0
  %1185 = vmatpush1.msra.mxu0 0.0
  %1186 = vmatprep.subr.mxu0 0.0
  %1187 = vmatpush1.msra.mxu0 0.0
  %1188 = vmatprep.subr.mxu0 0.0
  %1189 = vmatpush1.msra.mxu0 0.0
  %1190 = vmatprep.subr.mxu0 0.0
  %1191 = vmatpush1.msra.mxu0 0.0
  %1192 = vmatprep.subr.mxu0 0.0
  %1193 = vmatpush1.msra.mxu0 0.0
  %1194 = vmatprep.subr.mxu0 0.0
  %1195 = vmatpush1.msra.mxu0 0.0
  %1196 = vmatprep.subr.mxu0 0.0
  %1197 = vmatpush1.msra.mxu0 0.0
  %1198 = vmatprep.subr.mxu0 0.0
  %1199 = vmatpush1.msra.mxu0 0.0
  %1200 = vmatprep.subr.mxu0 0.0
  %1201 = vmatpush1.msra.mxu0 0.0
  %1202 = vmatprep.subr.mxu0 0.0
  %1203 = vmatpush1.msra.mxu0 0.0
  %1204 = vmatprep.subr.mxu0 0.0
  %1205 = vmatpush1.msra.mxu0 0.0
  %1206 = vmatprep.subr.mxu0 0.0
  %1207 = vmatpush1.msra.mxu0 0.0
  %1208 = vmatprep.subr.mxu0 0.0
  %1209 = vmatpush1.msra.mxu0 0.0
  %1210 = vmatprep.subr.mxu0 0.0
  %1211 = vmatpush1.msra.mxu0 0.0
  %1212 = vmatprep.subr.mxu0 0.0
  %1213 = vmatpush1.msra.mxu0 0.0
  %1214 = vmatprep.subr.mxu0 0.0
  %1215 = vmatpush1.msra.mxu0 0.0
  %1216 = vmatprep.subr.mxu0 0.0
  %1217 = vmatpush1.msra.mxu0 0.0
  %1218 = vmatprep.subr.mxu0 0.0
  %1219 = vmatpush1.msra.mxu0 0.0
  %1220 = vmatprep.mubr.f32.mxu0 0.0
  %1221 = vmatmul.mubr.f32.gmra.mrb[0].mxu0 %v1133
  %v1222 = vpop.f32.mrb[0].mxu0
  %v1223 = vadd.f32 0.0, %v1222
  %v1224 = vpop.f32.mrb[0].mxu0
  %1225 = vmatprep.mubr.f32.mxu0 0.0
  %1226 = vmatmul.mubr.f32.gmra.mrb[0].mxu0 %v1136
  %v1227 = vpop.f32.mrb[0].mxu0
  %v1228 = vadd.f32 0.0, %v1227
  %v1229 = vpop.f32.mrb[0].mxu0
  %1230 = vmatprep.mubr.f32.mxu0 0.0
  %1231 = vmatmul.mubr.f32.gmra.mrb[0].mxu0 %v1139
  %v1232 = vpop.f32.mrb[0].mxu0
  %v1233 = vadd.f32 0.0, %v1232
  %v1234 = vpop.f32.mrb[0].mxu0
  %1235 = vmatprep.mubr.f32.mxu0 0.0
  %1236 = vmatmul.mubr.f32.gmra.mrb[0].mxu0 %v1142
  %v1237 = vpop.f32.mrb[0].mxu0
  %v1238 = vadd.f32 0.0, %v1237
  %v1239 = vpop.f32.mrb[0].mxu0
  %1240 = vmatprep.mubr.f32.mxu0 0.0
  %1241 = vmatmul.mubr.f32.gmra.mrb[0].mxu0 %v1145
  %v1242 = vpop.f32.mrb[0].mxu0
  %v1243 = vadd.f32 0.0, %v1242
  %v1244 = vpop.f32.mrb[0].mxu0
  %1245 = vmatprep.mubr.f32.mxu0 0.0
  %1246 = vmatmul.mubr.f32.gmra.mrb[0].mxu0 %v1148
  %v1247 = vpop.f32.mrb[0].mxu0
  %v1248 = vadd.f32 0.0, %v1247
  %v1249 = vpop.f32.mrb[0].mxu0
  %1250 = vmatprep.mubr.f32.mxu0 0.0
  %1251 = vmatmul.mubr.f32.gmra.mrb[0].mxu0 %v1151
  %v1252 = vpop.f32.mrb[0].mxu0
  %v1253 = vadd.f32 0.0, %v1252
  %v1254 = vpop.f32.mrb[0].mxu0
  %1255 = vmatprep.mubr.f32.mxu0 0.0
  %1256 = vmatmul.mubr.f32.gmra.mrb[0].mxu0 %v1154
  %v1257 = vpop.f32.mrb[0].mxu0
  %v1258 = vadd.f32 0.0, %v1257
  %v1259 = vpop.f32.mrb[0].mxu0
  %1260 = vdwg.mxu0
  %1261 = vrot.lane.b32.xlu0 %v189, 112
  %v1262 = vpop.permute.xlu0 %1261
  %1263 = vrot.lane.b32.xlu0 %v194, 112
  %v1264 = vpop.permute.xlu0 %1263
  %1265 = vrot.lane.b32.xlu0 %v199, 112
  %v1266 = vpop.permute.xlu0 %1265
  %1267 = vrot.lane.b32.xlu0 %v204, 112
  %v1268 = vpop.permute.xlu0 %1267
  %1269 = vrot.lane.b32.xlu0 %v209, 112
  %v1270 = vpop.permute.xlu0 %1269
  %1271 = vrot.lane.b32.xlu0 %v214, 112
  %v1272 = vpop.permute.xlu0 %1271
  %1273 = vrot.lane.b32.xlu0 %v219, 112
  %v1274 = vpop.permute.xlu0 %1273
  %1275 = vrot.lane.b32.xlu0 %v224, 112
  %v1276 = vpop.permute.xlu0 %1275
  %1277 = vrot.lane.b32.xlu0 %v303, 112
  %v1278 = vpop.permute.xlu0 %1277
  %1279 = vrot.lane.b32.xlu0 %v308, 112
  %v1280 = vpop.permute.xlu0 %1279
  %1281 = vrot.lane.b32.xlu0 %v313, 112
  %v1282 = vpop.permute.xlu0 %1281
  %1283 = vrot.lane.b32.xlu0 %v318, 112
  %v1284 = vpop.permute.xlu0 %1283
  %1285 = vrot.lane.b32.xlu0 %v323, 112
  %v1286 = vpop.permute.xlu0 %1285
  %1287 = vrot.lane.b32.xlu0 %v328, 112
  %v1288 = vpop.permute.xlu0 %1287
  %1289 = vrot.lane.b32.xlu0 %v333, 112
  %v1290 = vpop.permute.xlu0 %1289
  %1291 = vrot.lane.b32.xlu0 %v338, 112
  %v1292 = vpop.permute.xlu0 %1291
  %v1293 = vsel %vm455, %v1262, 0
  %v1295 = vsel %vm455, %v1264, 0
  %v1297 = vsel %vm455, %v1266, 0
  %v1299 = vsel %vm455, %v1268, 0
  %v1301 = vsel %vm455, %v1270, 0
  %v1303 = vsel %vm455, %v1272, 0
  %v1305 = vsel %vm455, %v1274, 0
  %v1307 = vsel %vm455, %v1276, 0
  %v1309 = vsel %vm455, %v1278, 0
  %v1311 = vsel %vm455, %v1280, 0
  %v1313 = vsel %vm455, %v1282, 0
  %v1315 = vsel %vm455, %v1284, 0
  %v1317 = vsel %vm455, %v1286, 0
  %v1319 = vsel %vm455, %v1288, 0
  %v1321 = vsel %vm455, %v1290, 0
  %v1323 = vsel %vm455, %v1292, 0
  %1325 = vmatprep.subr.mxu0 0.0
  %1326 = vmatpush1.xpose.msra.mxu0 %v1309
  %1327 = vmatprep.subr.mxu0 0.0
  %1328 = vmatpush1.xpose.msra.mxu0 %v1311
  %1329 = vmatprep.subr.mxu0 0.0
  %1330 = vmatpush1.xpose.msra.mxu0 %v1313
  %1331 = vmatprep.subr.mxu0 0.0
  %1332 = vmatpush1.xpose.msra.mxu0 %v1315
  %1333 = vmatprep.subr.mxu0 0.0
  %1334 = vmatpush1.xpose.msra.mxu0 %v1317
  %1335 = vmatprep.subr.mxu0 0.0
  %1336 = vmatpush1.xpose.msra.mxu0 %v1319
  %1337 = vmatprep.subr.mxu0 0.0
  %1338 = vmatpush1.xpose.msra.mxu0 %v1321
  %1339 = vmatprep.subr.mxu0 0.0
  %1340 = vmatpush1.xpose.msra.mxu0 %v1323
  %1341 = vmatprep.subr.mxu0 0.0
  %1342 = vmatpush1.xpose.msra.mxu0 0.0
  %1343 = vmatprep.subr.mxu0 0.0
  %1344 = vmatpush1.xpose.msra.mxu0 0.0
  %1345 = vmatprep.subr.mxu0 0.0
  %1346 = vmatpush1.xpose.msra.mxu0 0.0
  %1347 = vmatprep.subr.mxu0 0.0
  %1348 = vmatpush1.xpose.msra.mxu0 0.0
  %1349 = vmatprep.subr.mxu0 0.0
  %1350 = vmatpush1.xpose.msra.mxu0 0.0
  %1351 = vmatprep.subr.mxu0 0.0
  %1352 = vmatpush1.xpose.msra.mxu0 0.0
  %1353 = vmatprep.subr.mxu0 0.0
  %1354 = vmatpush1.xpose.msra.mxu0 0.0
  %1355 = vmatprep.subr.mxu0 0.0
  %1356 = vmatpush1.xpose.msra.mxu0 0.0
  %1357 = vmatprep.subr.mxu0 0.0
  %1358 = vmatpush1.xpose.msra.mxu0 0.0
  %1359 = vmatprep.subr.mxu0 0.0
  %1360 = vmatpush1.xpose.msra.mxu0 0.0
  %1361 = vmatprep.subr.mxu0 0.0
  %1362 = vmatpush1.xpose.msra.mxu0 0.0
  %1363 = vmatprep.subr.mxu0 0.0
  %1364 = vmatpush1.xpose.msra.mxu0 0.0
  %1365 = vmatprep.subr.mxu0 0.0
  %1366 = vmatpush1.xpose.msra.mxu0 0.0
  %1367 = vmatprep.subr.mxu0 0.0
  %1368 = vmatpush1.xpose.msra.mxu0 0.0
  %1369 = vmatprep.subr.mxu0 0.0
  %1370 = vmatpush1.xpose.msra.mxu0 0.0
  %1371 = vmatprep.subr.mxu0 0.0
  %1372 = vmatpush1.xpose.msra.mxu0 0.0
  %1373 = vmatprep.subr.mxu0 0.0
  %1374 = vmatpush1.xpose.msra.mxu0 0.0
  %1375 = vmatprep.subr.mxu0 0.0
  %1376 = vmatpush1.xpose.msra.mxu0 0.0
  %1377 = vmatprep.subr.mxu0 0.0
  %1378 = vmatpush1.xpose.msra.mxu0 0.0
  %1379 = vmatprep.subr.mxu0 0.0
  %1380 = vmatpush1.xpose.msra.mxu0 0.0
  %1381 = vmatprep.subr.mxu0 0.0
  %1382 = vmatpush1.xpose.msra.mxu0 0.0
  %1383 = vmatprep.subr.mxu0 0.0
  %1384 = vmatpush1.xpose.msra.mxu0 0.0
  %1385 = vmatprep.subr.mxu0 0.0
  %1386 = vmatpush1.xpose.msra.mxu0 0.0
  %1387 = vmatprep.subr.mxu0 0.0
  %1388 = vmatpush1.xpose.msra.mxu0 0.0
  %1389 = vmatprep.mubr.f32.mxu0 0.0
  %1390 = vmatmul.mubr.f32.gmra.mrb[0].mxu0 %v1293
  %v1391 = vpop.f32.mrb[0].mxu0
  %v1392 = vadd.f32 %v56, %v1391
  %v1393 = vpop.f32.mrb[0].mxu0
  %1394 = vmatprep.mubr.f32.mxu0 0.0
  %1395 = vmatmul.mubr.f32.gmra.mrb[0].mxu0 %v1295
  %v1396 = vpop.f32.mrb[0].mxu0
  %v1397 = vadd.f32 %v57, %v1396
  %v1398 = vpop.f32.mrb[0].mxu0
  %1399 = vmatprep.mubr.f32.mxu0 0.0
  %1400 = vmatmul.mubr.f32.gmra.mrb[0].mxu0 %v1297
  %v1401 = vpop.f32.mrb[0].mxu0
  %v1402 = vadd.f32 %v58, %v1401
  %v1403 = vpop.f32.mrb[0].mxu0
  %1404 = vmatprep.mubr.f32.mxu0 0.0
  %1405 = vmatmul.mubr.f32.gmra.mrb[0].mxu0 %v1299
  %v1406 = vpop.f32.mrb[0].mxu0
  %v1407 = vadd.f32 %v59, %v1406
  %v1408 = vpop.f32.mrb[0].mxu0
  %1409 = vmatprep.mubr.f32.mxu0 0.0
  %1410 = vmatmul.mubr.f32.gmra.mrb[0].mxu0 %v1301
  %v1411 = vpop.f32.mrb[0].mxu0
  %v1412 = vadd.f32 %v60, %v1411
  %v1413 = vpop.f32.mrb[0].mxu0
  %1414 = vmatprep.mubr.f32.mxu0 0.0
  %1415 = vmatmul.mubr.f32.gmra.mrb[0].mxu0 %v1303
  %v1416 = vpop.f32.mrb[0].mxu0
  %v1417 = vadd.f32 %v61, %v1416
  %v1418 = vpop.f32.mrb[0].mxu0
  %1419 = vmatprep.mubr.f32.mxu0 0.0
  %1420 = vmatmul.mubr.f32.gmra.mrb[0].mxu0 %v1305
  %v1421 = vpop.f32.mrb[0].mxu0
  %v1422 = vadd.f32 %v62, %v1421
  %v1423 = vpop.f32.mrb[0].mxu0
  %1424 = vmatprep.mubr.f32.mxu0 0.0
  %1425 = vmatmul.mubr.f32.gmra.mrb[0].mxu0 %v1307
  %v1426 = vpop.f32.mrb[0].mxu0
  %v1427 = vadd.f32 %v63, %v1426
  %v1428 = vpop.f32.mrb[0].mxu0
  %1429 = vdwg.mxu0
  %v1430 = vsel %vm609, %v1392, -inf
  %1431 = vmax.xlane.f32.xlu0 %v1430
  %v1432 = vpop.xlane.xlu0 %1431
  %v1433 = vsel %vm609, %v1397, -inf
  %1434 = vmax.xlane.f32.xlu0 %v1433
  %v1435 = vpop.xlane.xlu0 %1434
  %v1436 = vsel %vm609, %v1402, -inf
  %1437 = vmax.xlane.f32.xlu0 %v1436
  %v1438 = vpop.xlane.xlu0 %1437
  %v1439 = vsel %vm609, %v1407, -inf
  %1440 = vmax.xlane.f32.xlu0 %v1439
  %v1441 = vpop.xlane.xlu0 %1440
  %v1442 = vsel %vm609, %v1412, -inf
  %1443 = vmax.xlane.f32.xlu0 %v1442
  %v1444 = vpop.xlane.xlu0 %1443
  %v1445 = vsel %vm609, %v1417, -inf
  %1446 = vmax.xlane.f32.xlu0 %v1445
  %v1447 = vpop.xlane.xlu0 %1446
  %v1448 = vsel %vm609, %v1422, -inf
  %1449 = vmax.xlane.f32.xlu0 %v1448
  %v1450 = vpop.xlane.xlu0 %1449
  %v1451 = vsel %vm609, %v1427, -inf
  %1452 = vmax.xlane.f32.xlu0 %v1451
  %v1453 = vpop.xlane.xlu0 %1452
  %v1454 = vsub.f32 %v1392, %v1432
  %v1455 = vsub.f32 %v1397, %v1435
  %v1456 = vsub.f32 %v1402, %v1438
  %v1457 = vsub.f32 %v1407, %v1441
  %v1458 = vsub.f32 %v1412, %v1444
  %v1459 = vsub.f32 %v1417, %v1447
  %v1460 = vsub.f32 %v1422, %v1450
  %v1461 = vsub.f32 %v1427, %v1453
  %v1462 = vmul.f32 %v1454, 1.442695
  %v1463 = vpow.pop %v1462
  %v1464 = vmul.f32 %v1455, 1.442695
  %v1465 = vpow.pop %v1464
  %v1466 = vmul.f32 %v1456, 1.442695
  %v1467 = vpow.pop %v1466
  %v1468 = vmul.f32 %v1457, 1.442695
  %v1469 = vpow.pop %v1468
  %v1470 = vmul.f32 %v1458, 1.442695
  %v1471 = vpow.pop %v1470
  %v1472 = vmul.f32 %v1459, 1.442695
  %v1473 = vpow.pop %v1472
  %v1474 = vmul.f32 %v1460, 1.442695
  %v1475 = vpow.pop %v1474
  %v1476 = vmul.f32 %v1461, 1.442695
  %v1477 = vpow.pop %v1476
  %v1478 = vsel %vm609, %v1463, 0.0
  %1479 = vadd.xlane.f32.xlu0 %v1478
  %v1480 = vpop.xlane.xlu0 %1479
  %v1481 = vsel %vm609, %v1465, 0.0
  %1482 = vadd.xlane.f32.xlu0 %v1481
  %v1483 = vpop.xlane.xlu0 %1482
  %v1484 = vsel %vm609, %v1467, 0.0
  %1485 = vadd.xlane.f32.xlu0 %v1484
  %v1486 = vpop.xlane.xlu0 %1485
  %v1487 = vsel %vm609, %v1469, 0.0
  %1488 = vadd.xlane.f32.xlu0 %v1487
  %v1489 = vpop.xlane.xlu0 %1488
  %v1490 = vsel %vm609, %v1471, 0.0
  %1491 = vadd.xlane.f32.xlu0 %v1490
  %v1492 = vpop.xlane.xlu0 %1491
  %v1493 = vsel %vm609, %v1473, 0.0
  %1494 = vadd.xlane.f32.xlu0 %v1493
  %v1495 = vpop.xlane.xlu0 %1494
  %v1496 = vsel %vm609, %v1475, 0.0
  %1497 = vadd.xlane.f32.xlu0 %v1496
  %v1498 = vpop.xlane.xlu0 %1497
  %v1499 = vsel %vm609, %v1477, 0.0
  %1500 = vadd.xlane.f32.xlu0 %v1499
  %v1501 = vpop.xlane.xlu0 %1500
  %v1502 = vrcp.pop %v1480
  %v1503 = vmul.f32 1.0, %v1502
  %v1504 = vrcp.pop %v1483
  %v1505 = vmul.f32 1.0, %v1504
  %v1506 = vrcp.pop %v1486
  %v1507 = vmul.f32 1.0, %v1506
  %v1508 = vrcp.pop %v1489
  %v1509 = vmul.f32 1.0, %v1508
  %v1510 = vrcp.pop %v1492
  %v1511 = vmul.f32 1.0, %v1510
  %v1512 = vrcp.pop %v1495
  %v1513 = vmul.f32 1.0, %v1512
  %v1514 = vrcp.pop %v1498
  %v1515 = vmul.f32 1.0, %v1514
  %v1516 = vrcp.pop %v1501
  %v1517 = vmul.f32 1.0, %v1516
  %v1518 = vmul.f32 %v1463, %v1503
  %v1519 = vmul.f32 %v1465, %v1505
  %v1520 = vmul.f32 %v1467, %v1507
  %v1521 = vmul.f32 %v1469, %v1509
  %v1522 = vmul.f32 %v1471, %v1511
  %v1523 = vmul.f32 %v1473, %v1513
  %v1524 = vmul.f32 %v1475, %v1515
  %v1525 = vmul.f32 %v1477, %v1517
  %1526 = vrot.lane.b32.xlu0 %v417, 112
  %v1527 = vpop.permute.xlu0 %1526
  %1528 = vrot.lane.b32.xlu0 %v422, 112
  %v1529 = vpop.permute.xlu0 %1528
  %1530 = vrot.lane.b32.xlu0 %v427, 112
  %v1531 = vpop.permute.xlu0 %1530
  %1532 = vrot.lane.b32.xlu0 %v432, 112
  %v1533 = vpop.permute.xlu0 %1532
  %1534 = vrot.lane.b32.xlu0 %v437, 112
  %v1535 = vpop.permute.xlu0 %1534
  %1536 = vrot.lane.b32.xlu0 %v442, 112
  %v1537 = vpop.permute.xlu0 %1536
  %1538 = vrot.lane.b32.xlu0 %v447, 112
  %v1539 = vpop.permute.xlu0 %1538
  %1540 = vrot.lane.b32.xlu0 %v452, 112
  %v1541 = vpop.permute.xlu0 %1540
  %v1551 = vsel %vm609, %v1518, 0
  %v1554 = vsel %vm609, %v1519, 0
  %v1557 = vsel %vm609, %v1520, 0
  %v1560 = vsel %vm609, %v1521, 0
  %v1563 = vsel %vm609, %v1522, 0
  %v1566 = vsel %vm609, %v1523, 0
  %v1569 = vsel %vm609, %v1524, 0
  %v1572 = vsel %vm609, %v1525, 0
  %1574 = vmatprep.subr.mxu0 0.0
  %1575 = vmatpush1.msra.mxu0 %v1527
  %1576 = vmatprep.subr.mxu0 0.0
  %1577 = vmatpush1.msra.mxu0 %v1529
  %1578 = vmatprep.subr.mxu0 0.0
  %1579 = vmatpush1.msra.mxu0 %v1531
  %1580 = vmatprep.subr.mxu0 0.0
  %1581 = vmatpush1.msra.mxu0 %v1533
  %1582 = vmatprep.subr.mxu0 0.0
  %1583 = vmatpush1.msra.mxu0 %v1535
  %1584 = vmatprep.subr.mxu0 0.0
  %1585 = vmatpush1.msra.mxu0 %v1537
  %1586 = vmatprep.subr.mxu0 0.0
  %1587 = vmatpush1.msra.mxu0 %v1539
  %1588 = vmatprep.subr.mxu0 0.0
  %1589 = vmatpush1.msra.mxu0 %v1541
  %1590 = vmatprep.subr.mxu0 0.0
  %1591 = vmatpush1.msra.mxu0 0.0
  %1592 = vmatprep.subr.mxu0 0.0
  %1593 = vmatpush1.msra.mxu0 0.0
  %1594 = vmatprep.subr.mxu0 0.0
  %1595 = vmatpush1.msra.mxu0 0.0
  %1596 = vmatprep.subr.mxu0 0.0
  %1597 = vmatpush1.msra.mxu0 0.0
  %1598 = vmatprep.subr.mxu0 0.0
  %1599 = vmatpush1.msra.mxu0 0.0
  %1600 = vmatprep.subr.mxu0 0.0
  %1601 = vmatpush1.msra.mxu0 0.0
  %1602 = vmatprep.subr.mxu0 0.0
  %1603 = vmatpush1.msra.mxu0 0.0
  %1604 = vmatprep.subr.mxu0 0.0
  %1605 = vmatpush1.msra.mxu0 0.0
  %1606 = vmatprep.subr.mxu0 0.0
  %1607 = vmatpush1.msra.mxu0 0.0
  %1608 = vmatprep.subr.mxu0 0.0
  %1609 = vmatpush1.msra.mxu0 0.0
  %1610 = vmatprep.subr.mxu0 0.0
  %1611 = vmatpush1.msra.mxu0 0.0
  %1612 = vmatprep.subr.mxu0 0.0
  %1613 = vmatpush1.msra.mxu0 0.0
  %1614 = vmatprep.subr.mxu0 0.0
  %1615 = vmatpush1.msra.mxu0 0.0
  %1616 = vmatprep.subr.mxu0 0.0
  %1617 = vmatpush1.msra.mxu0 0.0
  %1618 = vmatprep.subr.mxu0 0.0
  %1619 = vmatpush1.msra.mxu0 0.0
  %1620 = vmatprep.subr.mxu0 0.0
  %1621 = vmatpush1.msra.mxu0 0.0
  %1622 = vmatprep.subr.mxu0 0.0
  %1623 = vmatpush1.msra.mxu0 0.0
  %1624 = vmatprep.subr.mxu0 0.0
  %1625 = vmatpush1.msra.mxu0 0.0
  %1626 = vmatprep.subr.mxu0 0.0
  %1627 = vmatpush1.msra.mxu0 0.0
  %1628 = vmatprep.subr.mxu0 0.0
  %1629 = vmatpush1.msra.mxu0 0.0
  %1630 = vmatprep.subr.mxu0 0.0
  %1631 = vmatpush1.msra.mxu0 0.0
  %1632 = vmatprep.subr.mxu0 0.0
  %1633 = vmatpush1.msra.mxu0 0.0
  %1634 = vmatprep.subr.mxu0 0.0
  %1635 = vmatpush1.msra.mxu0 0.0
  %1636 = vmatprep.subr.mxu0 0.0
  %1637 = vmatpush1.msra.mxu0 0.0
  %1638 = vmatprep.mubr.f32.mxu0 0.0
  %1639 = vmatmul.mubr.f32.gmra.mrb[0].mxu0 %v1551
  %v1640 = vpop.f32.mrb[0].mxu0
  %v1641 = vadd.f32 0.0, %v1640
  %v1642 = vpop.f32.mrb[0].mxu0
  %1643 = vmatprep.mubr.f32.mxu0 0.0
  %1644 = vmatmul.mubr.f32.gmra.mrb[0].mxu0 %v1554
  %v1645 = vpop.f32.mrb[0].mxu0
  %v1646 = vadd.f32 0.0, %v1645
  %v1647 = vpop.f32.mrb[0].mxu0
  %1648 = vmatprep.mubr.f32.mxu0 0.0
  %1649 = vmatmul.mubr.f32.gmra.mrb[0].mxu0 %v1557
  %v1650 = vpop.f32.mrb[0].mxu0
  %v1651 = vadd.f32 0.0, %v1650
  %v1652 = vpop.f32.mrb[0].mxu0
  %1653 = vmatprep.mubr.f32.mxu0 0.0
  %1654 = vmatmul.mubr.f32.gmra.mrb[0].mxu0 %v1560
  %v1655 = vpop.f32.mrb[0].mxu0
  %v1656 = vadd.f32 0.0, %v1655
  %v1657 = vpop.f32.mrb[0].mxu0
  %1658 = vmatprep.mubr.f32.mxu0 0.0
  %1659 = vmatmul.mubr.f32.gmra.mrb[0].mxu0 %v1563
  %v1660 = vpop.f32.mrb[0].mxu0
  %v1661 = vadd.f32 0.0, %v1660
  %v1662 = vpop.f32.mrb[0].mxu0
  %1663 = vmatprep.mubr.f32.mxu0 0.0
  %1664 = vmatmul.mubr.f32.gmra.mrb[0].mxu0 %v1566
  %v1665 = vpop.f32.mrb[0].mxu0
  %v1666 = vadd.f32 0.0, %v1665
  %v1667 = vpop.f32.mrb[0].mxu0
  %1668 = vmatprep.mubr.f32.mxu0 0.0
  %1669 = vmatmul.mubr.f32.gmra.mrb[0].mxu0 %v1569
  %v1670 = vpop.f32.mrb[0].mxu0
  %v1671 = vadd.f32 0.0, %v1670
  %v1672 = vpop.f32.mrb[0].mxu0
  %1673 = vmatprep.mubr.f32.mxu0 0.0
  %1674 = vmatmul.mubr.f32.gmra.mrb[0].mxu0 %v1572
  %v1675 = vpop.f32.mrb[0].mxu0
  %v1676 = vadd.f32 0.0, %v1675
  %v1677 = vpop.f32.mrb[0].mxu0
  %1678 = vdwg.mxu0
  %1679 = vrot.lane.b32.xlu0 %v189, 104
  %v1680 = vpop.permute.xlu0 %1679
  %1681 = vrot.lane.b32.xlu0 %v194, 104
  %v1682 = vpop.permute.xlu0 %1681
  %1683 = vrot.lane.b32.xlu0 %v199, 104
  %v1684 = vpop.permute.xlu0 %1683
  %1685 = vrot.lane.b32.xlu0 %v204, 104
  %v1686 = vpop.permute.xlu0 %1685
  %1687 = vrot.lane.b32.xlu0 %v209, 104
  %v1688 = vpop.permute.xlu0 %1687
  %1689 = vrot.lane.b32.xlu0 %v214, 104
  %v1690 = vpop.permute.xlu0 %1689
  %1691 = vrot.lane.b32.xlu0 %v219, 104
  %v1692 = vpop.permute.xlu0 %1691
  %1693 = vrot.lane.b32.xlu0 %v224, 104
  %v1694 = vpop.permute.xlu0 %1693
  %1695 = vrot.lane.b32.xlu0 %v303, 104
  %v1696 = vpop.permute.xlu0 %1695
  %1697 = vrot.lane.b32.xlu0 %v308, 104
  %v1698 = vpop.permute.xlu0 %1697
  %1699 = vrot.lane.b32.xlu0 %v313, 104
  %v1700 = vpop.permute.xlu0 %1699
  %1701 = vrot.lane.b32.xlu0 %v318, 104
  %v1702 = vpop.permute.xlu0 %1701
  %1703 = vrot.lane.b32.xlu0 %v323, 104
  %v1704 = vpop.permute.xlu0 %1703
  %1705 = vrot.lane.b32.xlu0 %v328, 104
  %v1706 = vpop.permute.xlu0 %1705
  %1707 = vrot.lane.b32.xlu0 %v333, 104
  %v1708 = vpop.permute.xlu0 %1707
  %1709 = vrot.lane.b32.xlu0 %v338, 104
  %v1710 = vpop.permute.xlu0 %1709
  %v1711 = vsel %vm455, %v1680, 0
  %v1713 = vsel %vm455, %v1682, 0
  %v1715 = vsel %vm455, %v1684, 0
  %v1717 = vsel %vm455, %v1686, 0
  %v1719 = vsel %vm455, %v1688, 0
  %v1721 = vsel %vm455, %v1690, 0
  %v1723 = vsel %vm455, %v1692, 0
  %v1725 = vsel %vm455, %v1694, 0
  %v1727 = vsel %vm455, %v1696, 0
  %v1729 = vsel %vm455, %v1698, 0
  %v1731 = vsel %vm455, %v1700, 0
  %v1733 = vsel %vm455, %v1702, 0
  %v1735 = vsel %vm455, %v1704, 0
  %v1737 = vsel %vm455, %v1706, 0
  %v1739 = vsel %vm455, %v1708, 0
  %v1741 = vsel %vm455, %v1710, 0
  %1743 = vmatprep.subr.mxu0 0.0
  %1744 = vmatpush1.xpose.msra.mxu0 %v1727
  %1745 = vmatprep.subr.mxu0 0.0
  %1746 = vmatpush1.xpose.msra.mxu0 %v1729
  %1747 = vmatprep.subr.mxu0 0.0
  %1748 = vmatpush1.xpose.msra.mxu0 %v1731
  %1749 = vmatprep.subr.mxu0 0.0
  %1750 = vmatpush1.xpose.msra.mxu0 %v1733
  %1751 = vmatprep.subr.mxu0 0.0
  %1752 = vmatpush1.xpose.msra.mxu0 %v1735
  %1753 = vmatprep.subr.mxu0 0.0
  %1754 = vmatpush1.xpose.msra.mxu0 %v1737
  %1755 = vmatprep.subr.mxu0 0.0
  %1756 = vmatpush1.xpose.msra.mxu0 %v1739
  %1757 = vmatprep.subr.mxu0 0.0
  %1758 = vmatpush1.xpose.msra.mxu0 %v1741
  %1759 = vmatprep.subr.mxu0 0.0
  %1760 = vmatpush1.xpose.msra.mxu0 0.0
  %1761 = vmatprep.subr.mxu0 0.0
  %1762 = vmatpush1.xpose.msra.mxu0 0.0
  %1763 = vmatprep.subr.mxu0 0.0
  %1764 = vmatpush1.xpose.msra.mxu0 0.0
  %1765 = vmatprep.subr.mxu0 0.0
  %1766 = vmatpush1.xpose.msra.mxu0 0.0
  %1767 = vmatprep.subr.mxu0 0.0
  %1768 = vmatpush1.xpose.msra.mxu0 0.0
  %1769 = vmatprep.subr.mxu0 0.0
  %1770 = vmatpush1.xpose.msra.mxu0 0.0
  %1771 = vmatprep.subr.mxu0 0.0
  %1772 = vmatpush1.xpose.msra.mxu0 0.0
  %1773 = vmatprep.subr.mxu0 0.0
  %1774 = vmatpush1.xpose.msra.mxu0 0.0
  %1775 = vmatprep.subr.mxu0 0.0
  %1776 = vmatpush1.xpose.msra.mxu0 0.0
  %1777 = vmatprep.subr.mxu0 0.0
  %1778 = vmatpush1.xpose.msra.mxu0 0.0
  %1779 = vmatprep.subr.mxu0 0.0
  %1780 = vmatpush1.xpose.msra.mxu0 0.0
  %1781 = vmatprep.subr.mxu0 0.0
  %1782 = vmatpush1.xpose.msra.mxu0 0.0
  %1783 = vmatprep.subr.mxu0 0.0
  %1784 = vmatpush1.xpose.msra.mxu0 0.0
  %1785 = vmatprep.subr.mxu0 0.0
  %1786 = vmatpush1.xpose.msra.mxu0 0.0
  %1787 = vmatprep.subr.mxu0 0.0
  %1788 = vmatpush1.xpose.msra.mxu0 0.0
  %1789 = vmatprep.subr.mxu0 0.0
  %1790 = vmatpush1.xpose.msra.mxu0 0.0
  %1791 = vmatprep.subr.mxu0 0.0
  %1792 = vmatpush1.xpose.msra.mxu0 0.0
  %1793 = vmatprep.subr.mxu0 0.0
  %1794 = vmatpush1.xpose.msra.mxu0 0.0
  %1795 = vmatprep.subr.mxu0 0.0
  %1796 = vmatpush1.xpose.msra.mxu0 0.0
  %1797 = vmatprep.subr.mxu0 0.0
  %1798 = vmatpush1.xpose.msra.mxu0 0.0
  %1799 = vmatprep.subr.mxu0 0.0
  %1800 = vmatpush1.xpose.msra.mxu0 0.0
  %1801 = vmatprep.subr.mxu0 0.0
  %1802 = vmatpush1.xpose.msra.mxu0 0.0
  %1803 = vmatprep.subr.mxu0 0.0
  %1804 = vmatpush1.xpose.msra.mxu0 0.0
  %1805 = vmatprep.subr.mxu0 0.0
  %1806 = vmatpush1.xpose.msra.mxu0 0.0
  %1807 = vmatprep.mubr.f32.mxu0 0.0
  %1808 = vmatmul.mubr.f32.gmra.mrb[0].mxu0 %v1711
  %v1809 = vpop.f32.mrb[0].mxu0
  %v1810 = vadd.f32 %v56, %v1809
  %v1811 = vpop.f32.mrb[0].mxu0
  %1812 = vmatprep.mubr.f32.mxu0 0.0
  %1813 = vmatmul.mubr.f32.gmra.mrb[0].mxu0 %v1713
  %v1814 = vpop.f32.mrb[0].mxu0
  %v1815 = vadd.f32 %v57, %v1814
  %v1816 = vpop.f32.mrb[0].mxu0
  %1817 = vmatprep.mubr.f32.mxu0 0.0
  %1818 = vmatmul.mubr.f32.gmra.mrb[0].mxu0 %v1715
  %v1819 = vpop.f32.mrb[0].mxu0
  %v1820 = vadd.f32 %v58, %v1819
  %v1821 = vpop.f32.mrb[0].mxu0
  %1822 = vmatprep.mubr.f32.mxu0 0.0
  %1823 = vmatmul.mubr.f32.gmra.mrb[0].mxu0 %v1717
  %v1824 = vpop.f32.mrb[0].mxu0
  %v1825 = vadd.f32 %v59, %v1824
  %v1826 = vpop.f32.mrb[0].mxu0
  %1827 = vmatprep.mubr.f32.mxu0 0.0
  %1828 = vmatmul.mubr.f32.gmra.mrb[0].mxu0 %v1719
  %v1829 = vpop.f32.mrb[0].mxu0
  %v1830 = vadd.f32 %v60, %v1829
  %v1831 = vpop.f32.mrb[0].mxu0
  %1832 = vmatprep.mubr.f32.mxu0 0.0
  %1833 = vmatmul.mubr.f32.gmra.mrb[0].mxu0 %v1721
  %v1834 = vpop.f32.mrb[0].mxu0
  %v1835 = vadd.f32 %v61, %v1834
  %v1836 = vpop.f32.mrb[0].mxu0
  %1837 = vmatprep.mubr.f32.mxu0 0.0
  %1838 = vmatmul.mubr.f32.gmra.mrb[0].mxu0 %v1723
  %v1839 = vpop.f32.mrb[0].mxu0
  %v1840 = vadd.f32 %v62, %v1839
  %v1841 = vpop.f32.mrb[0].mxu0
  %1842 = vmatprep.mubr.f32.mxu0 0.0
  %1843 = vmatmul.mubr.f32.gmra.mrb[0].mxu0 %v1725
  %v1844 = vpop.f32.mrb[0].mxu0
  %v1845 = vadd.f32 %v63, %v1844
  %v1846 = vpop.f32.mrb[0].mxu0
  %1847 = vdwg.mxu0
  %v1848 = vsel %vm609, %v1810, -inf
  %1849 = vmax.xlane.f32.xlu0 %v1848
  %v1850 = vpop.xlane.xlu0 %1849
  %v1851 = vsel %vm609, %v1815, -inf
  %1852 = vmax.xlane.f32.xlu0 %v1851
  %v1853 = vpop.xlane.xlu0 %1852
  %v1854 = vsel %vm609, %v1820, -inf
  %1855 = vmax.xlane.f32.xlu0 %v1854
  %v1856 = vpop.xlane.xlu0 %1855
  %v1857 = vsel %vm609, %v1825, -inf
  %1858 = vmax.xlane.f32.xlu0 %v1857
  %v1859 = vpop.xlane.xlu0 %1858
  %v1860 = vsel %vm609, %v1830, -inf
  %1861 = vmax.xlane.f32.xlu0 %v1860
  %v1862 = vpop.xlane.xlu0 %1861
  %v1863 = vsel %vm609, %v1835, -inf
  %1864 = vmax.xlane.f32.xlu0 %v1863
  %v1865 = vpop.xlane.xlu0 %1864
  %v1866 = vsel %vm609, %v1840, -inf
  %1867 = vmax.xlane.f32.xlu0 %v1866
  %v1868 = vpop.xlane.xlu0 %1867
  %v1869 = vsel %vm609, %v1845, -inf
  %1870 = vmax.xlane.f32.xlu0 %v1869
  %v1871 = vpop.xlane.xlu0 %1870
  %v1872 = vsub.f32 %v1810, %v1850
  %v1873 = vsub.f32 %v1815, %v1853
  %v1874 = vsub.f32 %v1820, %v1856
  %v1875 = vsub.f32 %v1825, %v1859
  %v1876 = vsub.f32 %v1830, %v1862
  %v1877 = vsub.f32 %v1835, %v1865
  %v1878 = vsub.f32 %v1840, %v1868
  %v1879 = vsub.f32 %v1845, %v1871
  %v1880 = vmul.f32 %v1872, 1.442695
  %v1881 = vpow.pop %v1880
  %v1882 = vmul.f32 %v1873, 1.442695
  %v1883 = vpow.pop %v1882
  %v1884 = vmul.f32 %v1874, 1.442695
  %v1885 = vpow.pop %v1884
  %v1886 = vmul.f32 %v1875, 1.442695
  %v1887 = vpow.pop %v1886
  %v1888 = vmul.f32 %v1876, 1.442695
  %v1889 = vpow.pop %v1888
  %v1890 = vmul.f32 %v1877, 1.442695
  %v1891 = vpow.pop %v1890
  %v1892 = vmul.f32 %v1878, 1.442695
  %v1893 = vpow.pop %v1892
  %v1894 = vmul.f32 %v1879, 1.442695
  %v1895 = vpow.pop %v1894
  %v1896 = vsel %vm609, %v1881, 0.0
  %1897 = vadd.xlane.f32.xlu0 %v1896
  %v1898 = vpop.xlane.xlu0 %1897
  %v1899 = vsel %vm609, %v1883, 0.0
  %1900 = vadd.xlane.f32.xlu0 %v1899
  %v1901 = vpop.xlane.xlu0 %1900
  %v1902 = vsel %vm609, %v1885, 0.0
  %1903 = vadd.xlane.f32.xlu0 %v1902
  %v1904 = vpop.xlane.xlu0 %1903
  %v1905 = vsel %vm609, %v1887, 0.0
  %1906 = vadd.xlane.f32.xlu0 %v1905
  %v1907 = vpop.xlane.xlu0 %1906
  %v1908 = vsel %vm609, %v1889, 0.0
  %1909 = vadd.xlane.f32.xlu0 %v1908
  %v1910 = vpop.xlane.xlu0 %1909
  %v1911 = vsel %vm609, %v1891, 0.0
  %1912 = vadd.xlane.f32.xlu0 %v1911
  %v1913 = vpop.xlane.xlu0 %1912
  %v1914 = vsel %vm609, %v1893, 0.0
  %1915 = vadd.xlane.f32.xlu0 %v1914
  %v1916 = vpop.xlane.xlu0 %1915
  %v1917 = vsel %vm609, %v1895, 0.0
  %1918 = vadd.xlane.f32.xlu0 %v1917
  %v1919 = vpop.xlane.xlu0 %1918
  %v1920 = vrcp.pop %v1898
  %v1921 = vmul.f32 1.0, %v1920
  %v1922 = vrcp.pop %v1901
  %v1923 = vmul.f32 1.0, %v1922
  %v1924 = vrcp.pop %v1904
  %v1925 = vmul.f32 1.0, %v1924
  %v1926 = vrcp.pop %v1907
  %v1927 = vmul.f32 1.0, %v1926
  %v1928 = vrcp.pop %v1910
  %v1929 = vmul.f32 1.0, %v1928
  %v1930 = vrcp.pop %v1913
  %v1931 = vmul.f32 1.0, %v1930
  %v1932 = vrcp.pop %v1916
  %v1933 = vmul.f32 1.0, %v1932
  %v1934 = vrcp.pop %v1919
  %v1935 = vmul.f32 1.0, %v1934
  %v1936 = vmul.f32 %v1881, %v1921
  %v1937 = vmul.f32 %v1883, %v1923
  %v1938 = vmul.f32 %v1885, %v1925
  %v1939 = vmul.f32 %v1887, %v1927
  %v1940 = vmul.f32 %v1889, %v1929
  %v1941 = vmul.f32 %v1891, %v1931
  %v1942 = vmul.f32 %v1893, %v1933
  %v1943 = vmul.f32 %v1895, %v1935
  %1944 = vrot.lane.b32.xlu0 %v417, 104
  %v1945 = vpop.permute.xlu0 %1944
  %1946 = vrot.lane.b32.xlu0 %v422, 104
  %v1947 = vpop.permute.xlu0 %1946
  %1948 = vrot.lane.b32.xlu0 %v427, 104
  %v1949 = vpop.permute.xlu0 %1948
  %1950 = vrot.lane.b32.xlu0 %v432, 104
  %v1951 = vpop.permute.xlu0 %1950
  %1952 = vrot.lane.b32.xlu0 %v437, 104
  %v1953 = vpop.permute.xlu0 %1952
  %1954 = vrot.lane.b32.xlu0 %v442, 104
  %v1955 = vpop.permute.xlu0 %1954
  %1956 = vrot.lane.b32.xlu0 %v447, 104
  %v1957 = vpop.permute.xlu0 %1956
  %1958 = vrot.lane.b32.xlu0 %v452, 104
  %v1959 = vpop.permute.xlu0 %1958
  %v1969 = vsel %vm609, %v1936, 0
  %v1972 = vsel %vm609, %v1937, 0
  %v1975 = vsel %vm609, %v1938, 0
  %v1978 = vsel %vm609, %v1939, 0
  %v1981 = vsel %vm609, %v1940, 0
  %v1984 = vsel %vm609, %v1941, 0
  %v1987 = vsel %vm609, %v1942, 0
  %v1990 = vsel %vm609, %v1943, 0
  %1992 = vmatprep.subr.mxu0 0.0
  %1993 = vmatpush1.msra.mxu0 %v1945
  %1994 = vmatprep.subr.mxu0 0.0
  %1995 = vmatpush1.msra.mxu0 %v1947
  %1996 = vmatprep.subr.mxu0 0.0
  %1997 = vmatpush1.msra.mxu0 %v1949
  %1998 = vmatprep.subr.mxu0 0.0
  %1999 = vmatpush1.msra.mxu0 %v1951
  %2000 = vmatprep.subr.mxu0 0.0
  %2001 = vmatpush1.msra.mxu0 %v1953
  %2002 = vmatprep.subr.mxu0 0.0
  %2003 = vmatpush1.msra.mxu0 %v1955
  %2004 = vmatprep.subr.mxu0 0.0
  %2005 = vmatpush1.msra.mxu0 %v1957
  %2006 = vmatprep.subr.mxu0 0.0
  %2007 = vmatpush1.msra.mxu0 %v1959
  %2008 = vmatprep.subr.mxu0 0.0
  %2009 = vmatpush1.msra.mxu0 0.0
  %2010 = vmatprep.subr.mxu0 0.0
  %2011 = vmatpush1.msra.mxu0 0.0
  %2012 = vmatprep.subr.mxu0 0.0
  %2013 = vmatpush1.msra.mxu0 0.0
  %2014 = vmatprep.subr.mxu0 0.0
  %2015 = vmatpush1.msra.mxu0 0.0
  %2016 = vmatprep.subr.mxu0 0.0
  %2017 = vmatpush1.msra.mxu0 0.0
  %2018 = vmatprep.subr.mxu0 0.0
  %2019 = vmatpush1.msra.mxu0 0.0
  %2020 = vmatprep.subr.mxu0 0.0
  %2021 = vmatpush1.msra.mxu0 0.0
  %2022 = vmatprep.subr.mxu0 0.0
  %2023 = vmatpush1.msra.mxu0 0.0
  %2024 = vmatprep.subr.mxu0 0.0
  %2025 = vmatpush1.msra.mxu0 0.0
  %2026 = vmatprep.subr.mxu0 0.0
  %2027 = vmatpush1.msra.mxu0 0.0
  %2028 = vmatprep.subr.mxu0 0.0
  %2029 = vmatpush1.msra.mxu0 0.0
  %2030 = vmatprep.subr.mxu0 0.0
  %2031 = vmatpush1.msra.mxu0 0.0
  %2032 = vmatprep.subr.mxu0 0.0
  %2033 = vmatpush1.msra.mxu0 0.0
  %2034 = vmatprep.subr.mxu0 0.0
  %2035 = vmatpush1.msra.mxu0 0.0
  %2036 = vmatprep.subr.mxu0 0.0
  %2037 = vmatpush1.msra.mxu0 0.0
  %2038 = vmatprep.subr.mxu0 0.0
  %2039 = vmatpush1.msra.mxu0 0.0
  %2040 = vmatprep.subr.mxu0 0.0
  %2041 = vmatpush1.msra.mxu0 0.0
  %2042 = vmatprep.subr.mxu0 0.0
  %2043 = vmatpush1.msra.mxu0 0.0
  %2044 = vmatprep.subr.mxu0 0.0
  %2045 = vmatpush1.msra.mxu0 0.0
  %2046 = vmatprep.subr.mxu0 0.0
  %2047 = vmatpush1.msra.mxu0 0.0
  %2048 = vmatprep.subr.mxu0 0.0
  %2049 = vmatpush1.msra.mxu0 0.0
  %2050 = vmatprep.subr.mxu0 0.0
  %2051 = vmatpush1.msra.mxu0 0.0
  %2052 = vmatprep.subr.mxu0 0.0
  %2053 = vmatpush1.msra.mxu0 0.0
  %2054 = vmatprep.subr.mxu0 0.0
  %2055 = vmatpush1.msra.mxu0 0.0
  %2056 = vmatprep.mubr.f32.mxu0 0.0
  %2057 = vmatmul.mubr.f32.gmra.mrb[0].mxu0 %v1969
  %v2058 = vpop.f32.mrb[0].mxu0
  %v2059 = vadd.f32 0.0, %v2058
  %v2060 = vpop.f32.mrb[0].mxu0
  %2061 = vmatprep.mubr.f32.mxu0 0.0
  %2062 = vmatmul.mubr.f32.gmra.mrb[0].mxu0 %v1972
  %v2063 = vpop.f32.mrb[0].mxu0
  %v2064 = vadd.f32 0.0, %v2063
  %v2065 = vpop.f32.mrb[0].mxu0
  %2066 = vmatprep.mubr.f32.mxu0 0.0
  %2067 = vmatmul.mubr.f32.gmra.mrb[0].mxu0 %v1975
  %v2068 = vpop.f32.mrb[0].mxu0
  %v2069 = vadd.f32 0.0, %v2068
  %v2070 = vpop.f32.mrb[0].mxu0
  %2071 = vmatprep.mubr.f32.mxu0 0.0
  %2072 = vmatmul.mubr.f32.gmra.mrb[0].mxu0 %v1978
  %v2073 = vpop.f32.mrb[0].mxu0
  %v2074 = vadd.f32 0.0, %v2073
  %v2075 = vpop.f32.mrb[0].mxu0
  %2076 = vmatprep.mubr.f32.mxu0 0.0
  %2077 = vmatmul.mubr.f32.gmra.mrb[0].mxu0 %v1981
  %v2078 = vpop.f32.mrb[0].mxu0
  %v2079 = vadd.f32 0.0, %v2078
  %v2080 = vpop.f32.mrb[0].mxu0
  %2081 = vmatprep.mubr.f32.mxu0 0.0
  %2082 = vmatmul.mubr.f32.gmra.mrb[0].mxu0 %v1984
  %v2083 = vpop.f32.mrb[0].mxu0
  %v2084 = vadd.f32 0.0, %v2083
  %v2085 = vpop.f32.mrb[0].mxu0
  %2086 = vmatprep.mubr.f32.mxu0 0.0
  %2087 = vmatmul.mubr.f32.gmra.mrb[0].mxu0 %v1987
  %v2088 = vpop.f32.mrb[0].mxu0
  %v2089 = vadd.f32 0.0, %v2088
  %v2090 = vpop.f32.mrb[0].mxu0
  %2091 = vmatprep.mubr.f32.mxu0 0.0
  %2092 = vmatmul.mubr.f32.gmra.mrb[0].mxu0 %v1990
  %v2093 = vpop.f32.mrb[0].mxu0
  %v2094 = vadd.f32 0.0, %v2093
  %v2095 = vpop.f32.mrb[0].mxu0
  %2096 = vdwg.mxu0
  %2097 = vrot.lane.b32.xlu0 %v189, 96
  %v2098 = vpop.permute.xlu0 %2097
  %2099 = vrot.lane.b32.xlu0 %v194, 96
  %v2100 = vpop.permute.xlu0 %2099
  %2101 = vrot.lane.b32.xlu0 %v199, 96
  %v2102 = vpop.permute.xlu0 %2101
  %2103 = vrot.lane.b32.xlu0 %v204, 96
  %v2104 = vpop.permute.xlu0 %2103
  %2105 = vrot.lane.b32.xlu0 %v209, 96
  %v2106 = vpop.permute.xlu0 %2105
  %2107 = vrot.lane.b32.xlu0 %v214, 96
  %v2108 = vpop.permute.xlu0 %2107
  %2109 = vrot.lane.b32.xlu0 %v219, 96
  %v2110 = vpop.permute.xlu0 %2109
  %2111 = vrot.lane.b32.xlu0 %v224, 96
  %v2112 = vpop.permute.xlu0 %2111
  %2113 = vrot.lane.b32.xlu0 %v303, 96
  %v2114 = vpop.permute.xlu0 %2113
  %2115 = vrot.lane.b32.xlu0 %v308, 96
  %v2116 = vpop.permute.xlu0 %2115
  %2117 = vrot.lane.b32.xlu0 %v313, 96
  %v2118 = vpop.permute.xlu0 %2117
  %2119 = vrot.lane.b32.xlu0 %v318, 96
  %v2120 = vpop.permute.xlu0 %2119
  %2121 = vrot.lane.b32.xlu0 %v323, 96
  %v2122 = vpop.permute.xlu0 %2121
  %2123 = vrot.lane.b32.xlu0 %v328, 96
  %v2124 = vpop.permute.xlu0 %2123
  %2125 = vrot.lane.b32.xlu0 %v333, 96
  %v2126 = vpop.permute.xlu0 %2125
  %2127 = vrot.lane.b32.xlu0 %v338, 96
  %v2128 = vpop.permute.xlu0 %2127
  %v2129 = vsel %vm455, %v2098, 0
  %v2131 = vsel %vm455, %v2100, 0
  %v2133 = vsel %vm455, %v2102, 0
  %v2135 = vsel %vm455, %v2104, 0
  %v2137 = vsel %vm455, %v2106, 0
  %v2139 = vsel %vm455, %v2108, 0
  %v2141 = vsel %vm455, %v2110, 0
  %v2143 = vsel %vm455, %v2112, 0
  %v2145 = vsel %vm455, %v2114, 0
  %v2147 = vsel %vm455, %v2116, 0
  %v2149 = vsel %vm455, %v2118, 0
  %v2151 = vsel %vm455, %v2120, 0
  %v2153 = vsel %vm455, %v2122, 0
  %v2155 = vsel %vm455, %v2124, 0
  %v2157 = vsel %vm455, %v2126, 0
  %v2159 = vsel %vm455, %v2128, 0
  %2161 = vmatprep.subr.mxu0 0.0
  %2162 = vmatpush1.xpose.msra.mxu0 %v2145
  %2163 = vmatprep.subr.mxu0 0.0
  %2164 = vmatpush1.xpose.msra.mxu0 %v2147
  %2165 = vmatprep.subr.mxu0 0.0
  %2166 = vmatpush1.xpose.msra.mxu0 %v2149
  %2167 = vmatprep.subr.mxu0 0.0
  %2168 = vmatpush1.xpose.msra.mxu0 %v2151
  %2169 = vmatprep.subr.mxu0 0.0
  %2170 = vmatpush1.xpose.msra.mxu0 %v2153
  %2171 = vmatprep.subr.mxu0 0.0
  %2172 = vmatpush1.xpose.msra.mxu0 %v2155
  %2173 = vmatprep.subr.mxu0 0.0
  %2174 = vmatpush1.xpose.msra.mxu0 %v2157
  %2175 = vmatprep.subr.mxu0 0.0
  %2176 = vmatpush1.xpose.msra.mxu0 %v2159
  %2177 = vmatprep.subr.mxu0 0.0
  %2178 = vmatpush1.xpose.msra.mxu0 0.0
  %2179 = vmatprep.subr.mxu0 0.0
  %2180 = vmatpush1.xpose.msra.mxu0 0.0
  %2181 = vmatprep.subr.mxu0 0.0
  %2182 = vmatpush1.xpose.msra.mxu0 0.0
  %2183 = vmatprep.subr.mxu0 0.0
  %2184 = vmatpush1.xpose.msra.mxu0 0.0
  %2185 = vmatprep.subr.mxu0 0.0
  %2186 = vmatpush1.xpose.msra.mxu0 0.0
  %2187 = vmatprep.subr.mxu0 0.0
  %2188 = vmatpush1.xpose.msra.mxu0 0.0
  %2189 = vmatprep.subr.mxu0 0.0
  %2190 = vmatpush1.xpose.msra.mxu0 0.0
  %2191 = vmatprep.subr.mxu0 0.0
  %2192 = vmatpush1.xpose.msra.mxu0 0.0
  %2193 = vmatprep.subr.mxu0 0.0
  %2194 = vmatpush1.xpose.msra.mxu0 0.0
  %2195 = vmatprep.subr.mxu0 0.0
  %2196 = vmatpush1.xpose.msra.mxu0 0.0
  %2197 = vmatprep.subr.mxu0 0.0
  %2198 = vmatpush1.xpose.msra.mxu0 0.0
  %2199 = vmatprep.subr.mxu0 0.0
  %2200 = vmatpush1.xpose.msra.mxu0 0.0
  %2201 = vmatprep.subr.mxu0 0.0
  %2202 = vmatpush1.xpose.msra.mxu0 0.0
  %2203 = vmatprep.subr.mxu0 0.0
  %2204 = vmatpush1.xpose.msra.mxu0 0.0
  %2205 = vmatprep.subr.mxu0 0.0
  %2206 = vmatpush1.xpose.msra.mxu0 0.0
  %2207 = vmatprep.subr.mxu0 0.0
  %2208 = vmatpush1.xpose.msra.mxu0 0.0
  %2209 = vmatprep.subr.mxu0 0.0
  %2210 = vmatpush1.xpose.msra.mxu0 0.0
  %2211 = vmatprep.subr.mxu0 0.0
  %2212 = vmatpush1.xpose.msra.mxu0 0.0
  %2213 = vmatprep.subr.mxu0 0.0
  %2214 = vmatpush1.xpose.msra.mxu0 0.0
  %2215 = vmatprep.subr.mxu0 0.0
  %2216 = vmatpush1.xpose.msra.mxu0 0.0
  %2217 = vmatprep.subr.mxu0 0.0
  %2218 = vmatpush1.xpose.msra.mxu0 0.0
  %2219 = vmatprep.subr.mxu0 0.0
  %2220 = vmatpush1.xpose.msra.mxu0 0.0
  %2221 = vmatprep.subr.mxu0 0.0
  %2222 = vmatpush1.xpose.msra.mxu0 0.0
  %2223 = vmatprep.subr.mxu0 0.0
  %2224 = vmatpush1.xpose.msra.mxu0 0.0
  %2225 = vmatprep.mubr.f32.mxu0 0.0
  %2226 = vmatmul.mubr.f32.gmra.mrb[0].mxu0 %v2129
  %v2227 = vpop.f32.mrb[0].mxu0
  %v2228 = vadd.f32 %v64, %v2227
  %v2229 = vpop.f32.mrb[0].mxu0
  %2230 = vmatprep.mubr.f32.mxu0 0.0
  %2231 = vmatmul.mubr.f32.gmra.mrb[0].mxu0 %v2131
  %v2232 = vpop.f32.mrb[0].mxu0
  %v2233 = vadd.f32 %v65, %v2232
  %v2234 = vpop.f32.mrb[0].mxu0
  %2235 = vmatprep.mubr.f32.mxu0 0.0
  %2236 = vmatmul.mubr.f32.gmra.mrb[0].mxu0 %v2133
  %v2237 = vpop.f32.mrb[0].mxu0
  %v2238 = vadd.f32 %v66, %v2237
  %v2239 = vpop.f32.mrb[0].mxu0
  %2240 = vmatprep.mubr.f32.mxu0 0.0
  %2241 = vmatmul.mubr.f32.gmra.mrb[0].mxu0 %v2135
  %v2242 = vpop.f32.mrb[0].mxu0
  %v2243 = vadd.f32 %v67, %v2242
  %v2244 = vpop.f32.mrb[0].mxu0
  %2245 = vmatprep.mubr.f32.mxu0 0.0
  %2246 = vmatmul.mubr.f32.gmra.mrb[0].mxu0 %v2137
  %v2247 = vpop.f32.mrb[0].mxu0
  %v2248 = vadd.f32 %v68, %v2247
  %v2249 = vpop.f32.mrb[0].mxu0
  %2250 = vmatprep.mubr.f32.mxu0 0.0
  %2251 = vmatmul.mubr.f32.gmra.mrb[0].mxu0 %v2139
  %v2252 = vpop.f32.mrb[0].mxu0
  %v2253 = vadd.f32 %v69, %v2252
  %v2254 = vpop.f32.mrb[0].mxu0
  %2255 = vmatprep.mubr.f32.mxu0 0.0
  %2256 = vmatmul.mubr.f32.gmra.mrb[0].mxu0 %v2141
  %v2257 = vpop.f32.mrb[0].mxu0
  %v2258 = vadd.f32 %v70, %v2257
  %v2259 = vpop.f32.mrb[0].mxu0
  %2260 = vmatprep.mubr.f32.mxu0 0.0
  %2261 = vmatmul.mubr.f32.gmra.mrb[0].mxu0 %v2143
  %v2262 = vpop.f32.mrb[0].mxu0
  %v2263 = vadd.f32 %v71, %v2262
  %v2264 = vpop.f32.mrb[0].mxu0
  %2265 = vdwg.mxu0
  %v2266 = vsel %vm609, %v2228, -inf
  %2267 = vmax.xlane.f32.xlu0 %v2266
  %v2268 = vpop.xlane.xlu0 %2267
  %v2269 = vsel %vm609, %v2233, -inf
  %2270 = vmax.xlane.f32.xlu0 %v2269
  %v2271 = vpop.xlane.xlu0 %2270
  %v2272 = vsel %vm609, %v2238, -inf
  %2273 = vmax.xlane.f32.xlu0 %v2272
  %v2274 = vpop.xlane.xlu0 %2273
  %v2275 = vsel %vm609, %v2243, -inf
  %2276 = vmax.xlane.f32.xlu0 %v2275
  %v2277 = vpop.xlane.xlu0 %2276
  %v2278 = vsel %vm609, %v2248, -inf
  %2279 = vmax.xlane.f32.xlu0 %v2278
  %v2280 = vpop.xlane.xlu0 %2279
  %v2281 = vsel %vm609, %v2253, -inf
  %2282 = vmax.xlane.f32.xlu0 %v2281
  %v2283 = vpop.xlane.xlu0 %2282
  %v2284 = vsel %vm609, %v2258, -inf
  %2285 = vmax.xlane.f32.xlu0 %v2284
  %v2286 = vpop.xlane.xlu0 %2285
  %v2287 = vsel %vm609, %v2263, -inf
  %2288 = vmax.xlane.f32.xlu0 %v2287
  %v2289 = vpop.xlane.xlu0 %2288
  %v2290 = vsub.f32 %v2228, %v2268
  %v2291 = vsub.f32 %v2233, %v2271
  %v2292 = vsub.f32 %v2238, %v2274
  %v2293 = vsub.f32 %v2243, %v2277
  %v2294 = vsub.f32 %v2248, %v2280
  %v2295 = vsub.f32 %v2253, %v2283
  %v2296 = vsub.f32 %v2258, %v2286
  %v2297 = vsub.f32 %v2263, %v2289
  %v2298 = vmul.f32 %v2290, 1.442695
  %v2299 = vpow.pop %v2298
  %v2300 = vmul.f32 %v2291, 1.442695
  %v2301 = vpow.pop %v2300
  %v2302 = vmul.f32 %v2292, 1.442695
  %v2303 = vpow.pop %v2302
  %v2304 = vmul.f32 %v2293, 1.442695
  %v2305 = vpow.pop %v2304
  %v2306 = vmul.f32 %v2294, 1.442695
  %v2307 = vpow.pop %v2306
  %v2308 = vmul.f32 %v2295, 1.442695
  %v2309 = vpow.pop %v2308
  %v2310 = vmul.f32 %v2296, 1.442695
  %v2311 = vpow.pop %v2310
  %v2312 = vmul.f32 %v2297, 1.442695
  %v2313 = vpow.pop %v2312
  %v2314 = vsel %vm609, %v2299, 0.0
  %2315 = vadd.xlane.f32.xlu0 %v2314
  %v2316 = vpop.xlane.xlu0 %2315
  %v2317 = vsel %vm609, %v2301, 0.0
  %2318 = vadd.xlane.f32.xlu0 %v2317
  %v2319 = vpop.xlane.xlu0 %2318
  %v2320 = vsel %vm609, %v2303, 0.0
  %2321 = vadd.xlane.f32.xlu0 %v2320
  %v2322 = vpop.xlane.xlu0 %2321
  %v2323 = vsel %vm609, %v2305, 0.0
  %2324 = vadd.xlane.f32.xlu0 %v2323
  %v2325 = vpop.xlane.xlu0 %2324
  %v2326 = vsel %vm609, %v2307, 0.0
  %2327 = vadd.xlane.f32.xlu0 %v2326
  %v2328 = vpop.xlane.xlu0 %2327
  %v2329 = vsel %vm609, %v2309, 0.0
  %2330 = vadd.xlane.f32.xlu0 %v2329
  %v2331 = vpop.xlane.xlu0 %2330
  %v2332 = vsel %vm609, %v2311, 0.0
  %2333 = vadd.xlane.f32.xlu0 %v2332
  %v2334 = vpop.xlane.xlu0 %2333
  %v2335 = vsel %vm609, %v2313, 0.0
  %2336 = vadd.xlane.f32.xlu0 %v2335
  %v2337 = vpop.xlane.xlu0 %2336
  %v2338 = vrcp.pop %v2316
  %v2339 = vmul.f32 1.0, %v2338
  %v2340 = vrcp.pop %v2319
  %v2341 = vmul.f32 1.0, %v2340
  %v2342 = vrcp.pop %v2322
  %v2343 = vmul.f32 1.0, %v2342
  %v2344 = vrcp.pop %v2325
  %v2345 = vmul.f32 1.0, %v2344
  %v2346 = vrcp.pop %v2328
  %v2347 = vmul.f32 1.0, %v2346
  %v2348 = vrcp.pop %v2331
  %v2349 = vmul.f32 1.0, %v2348
  %v2350 = vrcp.pop %v2334
  %v2351 = vmul.f32 1.0, %v2350
  %v2352 = vrcp.pop %v2337
  %v2353 = vmul.f32 1.0, %v2352
  %v2354 = vmul.f32 %v2299, %v2339
  %v2355 = vmul.f32 %v2301, %v2341
  %v2356 = vmul.f32 %v2303, %v2343
  %v2357 = vmul.f32 %v2305, %v2345
  %v2358 = vmul.f32 %v2307, %v2347
  %v2359 = vmul.f32 %v2309, %v2349
  %v2360 = vmul.f32 %v2311, %v2351
  %v2361 = vmul.f32 %v2313, %v2353
  %2362 = vrot.lane.b32.xlu0 %v417, 96
  %v2363 = vpop.permute.xlu0 %2362
  %2364 = vrot.lane.b32.xlu0 %v422, 96
  %v2365 = vpop.permute.xlu0 %2364
  %2366 = vrot.lane.b32.xlu0 %v427, 96
  %v2367 = vpop.permute.xlu0 %2366
  %2368 = vrot.lane.b32.xlu0 %v432, 96
  %v2369 = vpop.permute.xlu0 %2368
  %2370 = vrot.lane.b32.xlu0 %v437, 96
  %v2371 = vpop.permute.xlu0 %2370
  %2372 = vrot.lane.b32.xlu0 %v442, 96
  %v2373 = vpop.permute.xlu0 %2372
  %2374 = vrot.lane.b32.xlu0 %v447, 96
  %v2375 = vpop.permute.xlu0 %2374
  %2376 = vrot.lane.b32.xlu0 %v452, 96
  %v2377 = vpop.permute.xlu0 %2376
  %v2387 = vsel %vm609, %v2354, 0
  %v2390 = vsel %vm609, %v2355, 0
  %v2393 = vsel %vm609, %v2356, 0
  %v2396 = vsel %vm609, %v2357, 0
  %v2399 = vsel %vm609, %v2358, 0
  %v2402 = vsel %vm609, %v2359, 0
  %v2405 = vsel %vm609, %v2360, 0
  %v2408 = vsel %vm609, %v2361, 0
  %2410 = vmatprep.subr.mxu0 0.0
  %2411 = vmatpush1.msra.mxu0 %v2363
  %2412 = vmatprep.subr.mxu0 0.0
  %2413 = vmatpush1.msra.mxu0 %v2365
  %2414 = vmatprep.subr.mxu0 0.0
  %2415 = vmatpush1.msra.mxu0 %v2367
  %2416 = vmatprep.subr.mxu0 0.0
  %2417 = vmatpush1.msra.mxu0 %v2369
  %2418 = vmatprep.subr.mxu0 0.0
  %2419 = vmatpush1.msra.mxu0 %v2371
  %2420 = vmatprep.subr.mxu0 0.0
  %2421 = vmatpush1.msra.mxu0 %v2373
  %2422 = vmatprep.subr.mxu0 0.0
  %2423 = vmatpush1.msra.mxu0 %v2375
  %2424 = vmatprep.subr.mxu0 0.0
  %2425 = vmatpush1.msra.mxu0 %v2377
  %2426 = vmatprep.subr.mxu0 0.0
  %2427 = vmatpush1.msra.mxu0 0.0
  %2428 = vmatprep.subr.mxu0 0.0
  %2429 = vmatpush1.msra.mxu0 0.0
  %2430 = vmatprep.subr.mxu0 0.0
  %2431 = vmatpush1.msra.mxu0 0.0
  %2432 = vmatprep.subr.mxu0 0.0
  %2433 = vmatpush1.msra.mxu0 0.0
  %2434 = vmatprep.subr.mxu0 0.0
  %2435 = vmatpush1.msra.mxu0 0.0
  %2436 = vmatprep.subr.mxu0 0.0
  %2437 = vmatpush1.msra.mxu0 0.0
  %2438 = vmatprep.subr.mxu0 0.0
  %2439 = vmatpush1.msra.mxu0 0.0
  %2440 = vmatprep.subr.mxu0 0.0
  %2441 = vmatpush1.msra.mxu0 0.0
  %2442 = vmatprep.subr.mxu0 0.0
  %2443 = vmatpush1.msra.mxu0 0.0
  %2444 = vmatprep.subr.mxu0 0.0
  %2445 = vmatpush1.msra.mxu0 0.0
  %2446 = vmatprep.subr.mxu0 0.0
  %2447 = vmatpush1.msra.mxu0 0.0
  %2448 = vmatprep.subr.mxu0 0.0
  %2449 = vmatpush1.msra.mxu0 0.0
  %2450 = vmatprep.subr.mxu0 0.0
  %2451 = vmatpush1.msra.mxu0 0.0
  %2452 = vmatprep.subr.mxu0 0.0
  %2453 = vmatpush1.msra.mxu0 0.0
  %2454 = vmatprep.subr.mxu0 0.0
  %2455 = vmatpush1.msra.mxu0 0.0
  %2456 = vmatprep.subr.mxu0 0.0
  %2457 = vmatpush1.msra.mxu0 0.0
  %2458 = vmatprep.subr.mxu0 0.0
  %2459 = vmatpush1.msra.mxu0 0.0
  %2460 = vmatprep.subr.mxu0 0.0
  %2461 = vmatpush1.msra.mxu0 0.0
  %2462 = vmatprep.subr.mxu0 0.0
  %2463 = vmatpush1.msra.mxu0 0.0
  %2464 = vmatprep.subr.mxu0 0.0
  %2465 = vmatpush1.msra.mxu0 0.0
  %2466 = vmatprep.subr.mxu0 0.0
  %2467 = vmatpush1.msra.mxu0 0.0
  %2468 = vmatprep.subr.mxu0 0.0
  %2469 = vmatpush1.msra.mxu0 0.0
  %2470 = vmatprep.subr.mxu0 0.0
  %2471 = vmatpush1.msra.mxu0 0.0
  %2472 = vmatprep.subr.mxu0 0.0
  %2473 = vmatpush1.msra.mxu0 0.0
  %2474 = vmatprep.mubr.f32.mxu0 0.0
  %2475 = vmatmul.mubr.f32.gmra.mrb[0].mxu0 %v2387
  %v2476 = vpop.f32.mrb[0].mxu0
  %v2477 = vadd.f32 0.0, %v2476
  %v2478 = vpop.f32.mrb[0].mxu0
  %2479 = vmatprep.mubr.f32.mxu0 0.0
  %2480 = vmatmul.mubr.f32.gmra.mrb[0].mxu0 %v2390
  %v2481 = vpop.f32.mrb[0].mxu0
  %v2482 = vadd.f32 0.0, %v2481
  %v2483 = vpop.f32.mrb[0].mxu0
  %2484 = vmatprep.mubr.f32.mxu0 0.0
  %2485 = vmatmul.mubr.f32.gmra.mrb[0].mxu0 %v2393
  %v2486 = vpop.f32.mrb[0].mxu0
  %v2487 = vadd.f32 0.0, %v2486
  %v2488 = vpop.f32.mrb[0].mxu0
  %2489 = vmatprep.mubr.f32.mxu0 0.0
  %2490 = vmatmul.mubr.f32.gmra.mrb[0].mxu0 %v2396
  %v2491 = vpop.f32.mrb[0].mxu0
  %v2492 = vadd.f32 0.0, %v2491
  %v2493 = vpop.f32.mrb[0].mxu0
  %2494 = vmatprep.mubr.f32.mxu0 0.0
  %2495 = vmatmul.mubr.f32.gmra.mrb[0].mxu0 %v2399
  %v2496 = vpop.f32.mrb[0].mxu0
  %v2497 = vadd.f32 0.0, %v2496
  %v2498 = vpop.f32.mrb[0].mxu0
  %2499 = vmatprep.mubr.f32.mxu0 0.0
  %2500 = vmatmul.mubr.f32.gmra.mrb[0].mxu0 %v2402
  %v2501 = vpop.f32.mrb[0].mxu0
  %v2502 = vadd.f32 0.0, %v2501
  %v2503 = vpop.f32.mrb[0].mxu0
  %2504 = vmatprep.mubr.f32.mxu0 0.0
  %2505 = vmatmul.mubr.f32.gmra.mrb[0].mxu0 %v2405
  %v2506 = vpop.f32.mrb[0].mxu0
  %v2507 = vadd.f32 0.0, %v2506
  %v2508 = vpop.f32.mrb[0].mxu0
  %2509 = vmatprep.mubr.f32.mxu0 0.0
  %2510 = vmatmul.mubr.f32.gmra.mrb[0].mxu0 %v2408
  %v2511 = vpop.f32.mrb[0].mxu0
  %v2512 = vadd.f32 0.0, %v2511
  %v2513 = vpop.f32.mrb[0].mxu0
  %2514 = vdwg.mxu0
  %2515 = vrot.lane.b32.xlu0 %v189, 88
  %v2516 = vpop.permute.xlu0 %2515
  %2517 = vrot.lane.b32.xlu0 %v194, 88
  %v2518 = vpop.permute.xlu0 %2517
  %2519 = vrot.lane.b32.xlu0 %v199, 88
  %v2520 = vpop.permute.xlu0 %2519
  %2521 = vrot.lane.b32.xlu0 %v204, 88
  %v2522 = vpop.permute.xlu0 %2521
  %2523 = vrot.lane.b32.xlu0 %v209, 88
  %v2524 = vpop.permute.xlu0 %2523
  %2525 = vrot.lane.b32.xlu0 %v214, 88
  %v2526 = vpop.permute.xlu0 %2525
  %2527 = vrot.lane.b32.xlu0 %v219, 88
  %v2528 = vpop.permute.xlu0 %2527
  %2529 = vrot.lane.b32.xlu0 %v224, 88
  %v2530 = vpop.permute.xlu0 %2529
  %2531 = vrot.lane.b32.xlu0 %v303, 88
  %v2532 = vpop.permute.xlu0 %2531
  %2533 = vrot.lane.b32.xlu0 %v308, 88
  %v2534 = vpop.permute.xlu0 %2533
  %2535 = vrot.lane.b32.xlu0 %v313, 88
  %v2536 = vpop.permute.xlu0 %2535
  %2537 = vrot.lane.b32.xlu0 %v318, 88
  %v2538 = vpop.permute.xlu0 %2537
  %2539 = vrot.lane.b32.xlu0 %v323, 88
  %v2540 = vpop.permute.xlu0 %2539
  %2541 = vrot.lane.b32.xlu0 %v328, 88
  %v2542 = vpop.permute.xlu0 %2541
  %2543 = vrot.lane.b32.xlu0 %v333, 88
  %v2544 = vpop.permute.xlu0 %2543
  %2545 = vrot.lane.b32.xlu0 %v338, 88
  %v2546 = vpop.permute.xlu0 %2545
  %v2547 = vsel %vm455, %v2516, 0
  %v2549 = vsel %vm455, %v2518, 0
  %v2551 = vsel %vm455, %v2520, 0
  %v2553 = vsel %vm455, %v2522, 0
  %v2555 = vsel %vm455, %v2524, 0
  %v2557 = vsel %vm455, %v2526, 0
  %v2559 = vsel %vm455, %v2528, 0
  %v2561 = vsel %vm455, %v2530, 0
  %v2563 = vsel %vm455, %v2532, 0
  %v2565 = vsel %vm455, %v2534, 0
  %v2567 = vsel %vm455, %v2536, 0
  %v2569 = vsel %vm455, %v2538, 0
  %v2571 = vsel %vm455, %v2540, 0
  %v2573 = vsel %vm455, %v2542, 0
  %v2575 = vsel %vm455, %v2544, 0
  %v2577 = vsel %vm455, %v2546, 0
  %2579 = vmatprep.subr.mxu0 0.0
  %2580 = vmatpush1.xpose.msra.mxu0 %v2563
  %2581 = vmatprep.subr.mxu0 0.0
  %2582 = vmatpush1.xpose.msra.mxu0 %v2565
  %2583 = vmatprep.subr.mxu0 0.0
  %2584 = vmatpush1.xpose.msra.mxu0 %v2567
  %2585 = vmatprep.subr.mxu0 0.0
  %2586 = vmatpush1.xpose.msra.mxu0 %v2569
  %2587 = vmatprep.subr.mxu0 0.0
  %2588 = vmatpush1.xpose.msra.mxu0 %v2571
  %2589 = vmatprep.subr.mxu0 0.0
  %2590 = vmatpush1.xpose.msra.mxu0 %v2573
  %2591 = vmatprep.subr.mxu0 0.0
  %2592 = vmatpush1.xpose.msra.mxu0 %v2575
  %2593 = vmatprep.subr.mxu0 0.0
  %2594 = vmatpush1.xpose.msra.mxu0 %v2577
  %2595 = vmatprep.subr.mxu0 0.0
  %2596 = vmatpush1.xpose.msra.mxu0 0.0
  %2597 = vmatprep.subr.mxu0 0.0
  %2598 = vmatpush1.xpose.msra.mxu0 0.0
  %2599 = vmatprep.subr.mxu0 0.0
  %2600 = vmatpush1.xpose.msra.mxu0 0.0
  %2601 = vmatprep.subr.mxu0 0.0
  %2602 = vmatpush1.xpose.msra.mxu0 0.0
  %2603 = vmatprep.subr.mxu0 0.0
  %2604 = vmatpush1.xpose.msra.mxu0 0.0
  %2605 = vmatprep.subr.mxu0 0.0
  %2606 = vmatpush1.xpose.msra.mxu0 0.0
  %2607 = vmatprep.subr.mxu0 0.0
  %2608 = vmatpush1.xpose.msra.mxu0 0.0
  %2609 = vmatprep.subr.mxu0 0.0
  %2610 = vmatpush1.xpose.msra.mxu0 0.0
  %2611 = vmatprep.subr.mxu0 0.0
  %2612 = vmatpush1.xpose.msra.mxu0 0.0
  %2613 = vmatprep.subr.mxu0 0.0
  %2614 = vmatpush1.xpose.msra.mxu0 0.0
  %2615 = vmatprep.subr.mxu0 0.0
  %2616 = vmatpush1.xpose.msra.mxu0 0.0
  %2617 = vmatprep.subr.mxu0 0.0
  %2618 = vmatpush1.xpose.msra.mxu0 0.0
  %2619 = vmatprep.subr.mxu0 0.0
  %2620 = vmatpush1.xpose.msra.mxu0 0.0
  %2621 = vmatprep.subr.mxu0 0.0
  %2622 = vmatpush1.xpose.msra.mxu0 0.0
  %2623 = vmatprep.subr.mxu0 0.0
  %2624 = vmatpush1.xpose.msra.mxu0 0.0
  %2625 = vmatprep.subr.mxu0 0.0
  %2626 = vmatpush1.xpose.msra.mxu0 0.0
  %2627 = vmatprep.subr.mxu0 0.0
  %2628 = vmatpush1.xpose.msra.mxu0 0.0
  %2629 = vmatprep.subr.mxu0 0.0
  %2630 = vmatpush1.xpose.msra.mxu0 0.0
  %2631 = vmatprep.subr.mxu0 0.0
  %2632 = vmatpush1.xpose.msra.mxu0 0.0
  %2633 = vmatprep.subr.mxu0 0.0
  %2634 = vmatpush1.xpose.msra.mxu0 0.0
  %2635 = vmatprep.subr.mxu0 0.0
  %2636 = vmatpush1.xpose.msra.mxu0 0.0
  %2637 = vmatprep.subr.mxu0 0.0
  %2638 = vmatpush1.xpose.msra.mxu0 0.0
  %2639 = vmatprep.subr.mxu0 0.0
  %2640 = vmatpush1.xpose.msra.mxu0 0.0
  %2641 = vmatprep.subr.mxu0 0.0
  %2642 = vmatpush1.xpose.msra.mxu0 0.0
  %2643 = vmatprep.mubr.f32.mxu0 0.0
  %2644 = vmatmul.mubr.f32.gmra.mrb[0].mxu0 %v2547
  %v2645 = vpop.f32.mrb[0].mxu0
  %v2646 = vadd.f32 %v64, %v2645
  %v2647 = vpop.f32.mrb[0].mxu0
  %2648 = vmatprep.mubr.f32.mxu0 0.0
  %2649 = vmatmul.mubr.f32.gmra.mrb[0].mxu0 %v2549
  %v2650 = vpop.f32.mrb[0].mxu0
  %v2651 = vadd.f32 %v65, %v2650
  %v2652 = vpop.f32.mrb[0].mxu0
  %2653 = vmatprep.mubr.f32.mxu0 0.0
  %2654 = vmatmul.mubr.f32.gmra.mrb[0].mxu0 %v2551
  %v2655 = vpop.f32.mrb[0].mxu0
  %v2656 = vadd.f32 %v66, %v2655
  %v2657 = vpop.f32.mrb[0].mxu0
  %2658 = vmatprep.mubr.f32.mxu0 0.0
  %2659 = vmatmul.mubr.f32.gmra.mrb[0].mxu0 %v2553
  %v2660 = vpop.f32.mrb[0].mxu0
  %v2661 = vadd.f32 %v67, %v2660
  %v2662 = vpop.f32.mrb[0].mxu0
  %2663 = vmatprep.mubr.f32.mxu0 0.0
  %2664 = vmatmul.mubr.f32.gmra.mrb[0].mxu0 %v2555
  %v2665 = vpop.f32.mrb[0].mxu0
  %v2666 = vadd.f32 %v68, %v2665
  %v2667 = vpop.f32.mrb[0].mxu0
  %2668 = vmatprep.mubr.f32.mxu0 0.0
  %2669 = vmatmul.mubr.f32.gmra.mrb[0].mxu0 %v2557
  %v2670 = vpop.f32.mrb[0].mxu0
  %v2671 = vadd.f32 %v69, %v2670
  %v2672 = vpop.f32.mrb[0].mxu0
  %2673 = vmatprep.mubr.f32.mxu0 0.0
  %2674 = vmatmul.mubr.f32.gmra.mrb[0].mxu0 %v2559
  %v2675 = vpop.f32.mrb[0].mxu0
  %v2676 = vadd.f32 %v70, %v2675
  %v2677 = vpop.f32.mrb[0].mxu0
  %2678 = vmatprep.mubr.f32.mxu0 0.0
  %2679 = vmatmul.mubr.f32.gmra.mrb[0].mxu0 %v2561
  %v2680 = vpop.f32.mrb[0].mxu0
  %v2681 = vadd.f32 %v71, %v2680
  %v2682 = vpop.f32.mrb[0].mxu0
  %2683 = vdwg.mxu0
  %v2684 = vsel %vm609, %v2646, -inf
  %2685 = vmax.xlane.f32.xlu0 %v2684
  %v2686 = vpop.xlane.xlu0 %2685
  %v2687 = vsel %vm609, %v2651, -inf
  %2688 = vmax.xlane.f32.xlu0 %v2687
  %v2689 = vpop.xlane.xlu0 %2688
  %v2690 = vsel %vm609, %v2656, -inf
  %2691 = vmax.xlane.f32.xlu0 %v2690
  %v2692 = vpop.xlane.xlu0 %2691
  %v2693 = vsel %vm609, %v2661, -inf
  %2694 = vmax.xlane.f32.xlu0 %v2693
  %v2695 = vpop.xlane.xlu0 %2694
  %v2696 = vsel %vm609, %v2666, -inf
  %2697 = vmax.xlane.f32.xlu0 %v2696
  %v2698 = vpop.xlane.xlu0 %2697
  %v2699 = vsel %vm609, %v2671, -inf
  %2700 = vmax.xlane.f32.xlu0 %v2699
  %v2701 = vpop.xlane.xlu0 %2700
  %v2702 = vsel %vm609, %v2676, -inf
  %2703 = vmax.xlane.f32.xlu0 %v2702
  %v2704 = vpop.xlane.xlu0 %2703
  %v2705 = vsel %vm609, %v2681, -inf
  %2706 = vmax.xlane.f32.xlu0 %v2705
  %v2707 = vpop.xlane.xlu0 %2706
  %v2708 = vsub.f32 %v2646, %v2686
  %v2709 = vsub.f32 %v2651, %v2689
  %v2710 = vsub.f32 %v2656, %v2692
  %v2711 = vsub.f32 %v2661, %v2695
  %v2712 = vsub.f32 %v2666, %v2698
  %v2713 = vsub.f32 %v2671, %v2701
  %v2714 = vsub.f32 %v2676, %v2704
  %v2715 = vsub.f32 %v2681, %v2707
  %v2716 = vmul.f32 %v2708, 1.442695
  %v2717 = vpow.pop %v2716
  %v2718 = vmul.f32 %v2709, 1.442695
  %v2719 = vpow.pop %v2718
  %v2720 = vmul.f32 %v2710, 1.442695
  %v2721 = vpow.pop %v2720
  %v2722 = vmul.f32 %v2711, 1.442695
  %v2723 = vpow.pop %v2722
  %v2724 = vmul.f32 %v2712, 1.442695
  %v2725 = vpow.pop %v2724
  %v2726 = vmul.f32 %v2713, 1.442695
  %v2727 = vpow.pop %v2726
  %v2728 = vmul.f32 %v2714, 1.442695
  %v2729 = vpow.pop %v2728
  %v2730 = vmul.f32 %v2715, 1.442695
  %v2731 = vpow.pop %v2730
  %v2732 = vsel %vm609, %v2717, 0.0
  %2733 = vadd.xlane.f32.xlu0 %v2732
  %v2734 = vpop.xlane.xlu0 %2733
  %v2735 = vsel %vm609, %v2719, 0.0
  %2736 = vadd.xlane.f32.xlu0 %v2735
  %v2737 = vpop.xlane.xlu0 %2736
  %v2738 = vsel %vm609, %v2721, 0.0
  %2739 = vadd.xlane.f32.xlu0 %v2738
  %v2740 = vpop.xlane.xlu0 %2739
  %v2741 = vsel %vm609, %v2723, 0.0
  %2742 = vadd.xlane.f32.xlu0 %v2741
  %v2743 = vpop.xlane.xlu0 %2742
  %v2744 = vsel %vm609, %v2725, 0.0
  %2745 = vadd.xlane.f32.xlu0 %v2744
  %v2746 = vpop.xlane.xlu0 %2745
  %v2747 = vsel %vm609, %v2727, 0.0
  %2748 = vadd.xlane.f32.xlu0 %v2747
  %v2749 = vpop.xlane.xlu0 %2748
  %v2750 = vsel %vm609, %v2729, 0.0
  %2751 = vadd.xlane.f32.xlu0 %v2750
  %v2752 = vpop.xlane.xlu0 %2751
  %v2753 = vsel %vm609, %v2731, 0.0
  %2754 = vadd.xlane.f32.xlu0 %v2753
  %v2755 = vpop.xlane.xlu0 %2754
  %v2756 = vrcp.pop %v2734
  %v2757 = vmul.f32 1.0, %v2756
  %v2758 = vrcp.pop %v2737
  %v2759 = vmul.f32 1.0, %v2758
  %v2760 = vrcp.pop %v2740
  %v2761 = vmul.f32 1.0, %v2760
  %v2762 = vrcp.pop %v2743
  %v2763 = vmul.f32 1.0, %v2762
  %v2764 = vrcp.pop %v2746
  %v2765 = vmul.f32 1.0, %v2764
  %v2766 = vrcp.pop %v2749
  %v2767 = vmul.f32 1.0, %v2766
  %v2768 = vrcp.pop %v2752
  %v2769 = vmul.f32 1.0, %v2768
  %v2770 = vrcp.pop %v2755
  %v2771 = vmul.f32 1.0, %v2770
  %v2772 = vmul.f32 %v2717, %v2757
  %v2773 = vmul.f32 %v2719, %v2759
  %v2774 = vmul.f32 %v2721, %v2761
  %v2775 = vmul.f32 %v2723, %v2763
  %v2776 = vmul.f32 %v2725, %v2765
  %v2777 = vmul.f32 %v2727, %v2767
  %v2778 = vmul.f32 %v2729, %v2769
  %v2779 = vmul.f32 %v2731, %v2771
  %2780 = vrot.lane.b32.xlu0 %v417, 88
  %v2781 = vpop.permute.xlu0 %2780
  %2782 = vrot.lane.b32.xlu0 %v422, 88
  %v2783 = vpop.permute.xlu0 %2782
  %2784 = vrot.lane.b32.xlu0 %v427, 88
  %v2785 = vpop.permute.xlu0 %2784
  %2786 = vrot.lane.b32.xlu0 %v432, 88
  %v2787 = vpop.permute.xlu0 %2786
  %2788 = vrot.lane.b32.xlu0 %v437, 88
  %v2789 = vpop.permute.xlu0 %2788
  %2790 = vrot.lane.b32.xlu0 %v442, 88
  %v2791 = vpop.permute.xlu0 %2790
  %2792 = vrot.lane.b32.xlu0 %v447, 88
  %v2793 = vpop.permute.xlu0 %2792
  %2794 = vrot.lane.b32.xlu0 %v452, 88
  %v2795 = vpop.permute.xlu0 %2794
  %v2805 = vsel %vm609, %v2772, 0
  %v2808 = vsel %vm609, %v2773, 0
  %v2811 = vsel %vm609, %v2774, 0
  %v2814 = vsel %vm609, %v2775, 0
  %v2817 = vsel %vm609, %v2776, 0
  %v2820 = vsel %vm609, %v2777, 0
  %v2823 = vsel %vm609, %v2778, 0
  %v2826 = vsel %vm609, %v2779, 0
  %2828 = vmatprep.subr.mxu0 0.0
  %2829 = vmatpush1.msra.mxu0 %v2781
  %2830 = vmatprep.subr.mxu0 0.0
  %2831 = vmatpush1.msra.mxu0 %v2783
  %2832 = vmatprep.subr.mxu0 0.0
  %2833 = vmatpush1.msra.mxu0 %v2785
  %2834 = vmatprep.subr.mxu0 0.0
  %2835 = vmatpush1.msra.mxu0 %v2787
  %2836 = vmatprep.subr.mxu0 0.0
  %2837 = vmatpush1.msra.mxu0 %v2789
  %2838 = vmatprep.subr.mxu0 0.0
  %2839 = vmatpush1.msra.mxu0 %v2791
  %2840 = vmatprep.subr.mxu0 0.0
  %2841 = vmatpush1.msra.mxu0 %v2793
  %2842 = vmatprep.subr.mxu0 0.0
  %2843 = vmatpush1.msra.mxu0 %v2795
  %2844 = vmatprep.subr.mxu0 0.0
  %2845 = vmatpush1.msra.mxu0 0.0
  %2846 = vmatprep.subr.mxu0 0.0
  %2847 = vmatpush1.msra.mxu0 0.0
  %2848 = vmatprep.subr.mxu0 0.0
  %2849 = vmatpush1.msra.mxu0 0.0
  %2850 = vmatprep.subr.mxu0 0.0
  %2851 = vmatpush1.msra.mxu0 0.0
  %2852 = vmatprep.subr.mxu0 0.0
  %2853 = vmatpush1.msra.mxu0 0.0
  %2854 = vmatprep.subr.mxu0 0.0
  %2855 = vmatpush1.msra.mxu0 0.0
  %2856 = vmatprep.subr.mxu0 0.0
  %2857 = vmatpush1.msra.mxu0 0.0
  %2858 = vmatprep.subr.mxu0 0.0
  %2859 = vmatpush1.msra.mxu0 0.0
  %2860 = vmatprep.subr.mxu0 0.0
  %2861 = vmatpush1.msra.mxu0 0.0
  %2862 = vmatprep.subr.mxu0 0.0
  %2863 = vmatpush1.msra.mxu0 0.0
  %2864 = vmatprep.subr.mxu0 0.0
  %2865 = vmatpush1.msra.mxu0 0.0
  %2866 = vmatprep.subr.mxu0 0.0
  %2867 = vmatpush1.msra.mxu0 0.0
  %2868 = vmatprep.subr.mxu0 0.0
  %2869 = vmatpush1.msra.mxu0 0.0
  %2870 = vmatprep.subr.mxu0 0.0
  %2871 = vmatpush1.msra.mxu0 0.0
  %2872 = vmatprep.subr.mxu0 0.0
  %2873 = vmatpush1.msra.mxu0 0.0
  %2874 = vmatprep.subr.mxu0 0.0
  %2875 = vmatpush1.msra.mxu0 0.0
  %2876 = vmatprep.subr.mxu0 0.0
  %2877 = vmatpush1.msra.mxu0 0.0
  %2878 = vmatprep.subr.mxu0 0.0
  %2879 = vmatpush1.msra.mxu0 0.0
  %2880 = vmatprep.subr.mxu0 0.0
  %2881 = vmatpush1.msra.mxu0 0.0
  %2882 = vmatprep.subr.mxu0 0.0
  %2883 = vmatpush1.msra.mxu0 0.0
  %2884 = vmatprep.subr.mxu0 0.0
  %2885 = vmatpush1.msra.mxu0 0.0
  %2886 = vmatprep.subr.mxu0 0.0
  %2887 = vmatpush1.msra.mxu0 0.0
  %2888 = vmatprep.subr.mxu0 0.0
  %2889 = vmatpush1.msra.mxu0 0.0
  %2890 = vmatprep.subr.mxu0 0.0
  %2891 = vmatpush1.msra.mxu0 0.0
  %2892 = vmatprep.mubr.f32.mxu0 0.0
  %2893 = vmatmul.mubr.f32.gmra.mrb[0].mxu0 %v2805
  %v2894 = vpop.f32.mrb[0].mxu0
  %v2895 = vadd.f32 0.0, %v2894
  %v2896 = vpop.f32.mrb[0].mxu0
  %2897 = vmatprep.mubr.f32.mxu0 0.0
  %2898 = vmatmul.mubr.f32.gmra.mrb[0].mxu0 %v2808
  %v2899 = vpop.f32.mrb[0].mxu0
  %v2900 = vadd.f32 0.0, %v2899
  %v2901 = vpop.f32.mrb[0].mxu0
  %2902 = vmatprep.mubr.f32.mxu0 0.0
  %2903 = vmatmul.mubr.f32.gmra.mrb[0].mxu0 %v2811
  %v2904 = vpop.f32.mrb[0].mxu0
  %v2905 = vadd.f32 0.0, %v2904
  %v2906 = vpop.f32.mrb[0].mxu0
  %2907 = vmatprep.mubr.f32.mxu0 0.0
  %2908 = vmatmul.mubr.f32.gmra.mrb[0].mxu0 %v2814
  %v2909 = vpop.f32.mrb[0].mxu0
  %v2910 = vadd.f32 0.0, %v2909
  %v2911 = vpop.f32.mrb[0].mxu0
  %2912 = vmatprep.mubr.f32.mxu0 0.0
  %2913 = vmatmul.mubr.f32.gmra.mrb[0].mxu0 %v2817
  %v2914 = vpop.f32.mrb[0].mxu0
  %v2915 = vadd.f32 0.0, %v2914
  %v2916 = vpop.f32.mrb[0].mxu0
  %2917 = vmatprep.mubr.f32.mxu0 0.0
  %2918 = vmatmul.mubr.f32.gmra.mrb[0].mxu0 %v2820
  %v2919 = vpop.f32.mrb[0].mxu0
  %v2920 = vadd.f32 0.0, %v2919
  %v2921 = vpop.f32.mrb[0].mxu0
  %2922 = vmatprep.mubr.f32.mxu0 0.0
  %2923 = vmatmul.mubr.f32.gmra.mrb[0].mxu0 %v2823
  %v2924 = vpop.f32.mrb[0].mxu0
  %v2925 = vadd.f32 0.0, %v2924
  %v2926 = vpop.f32.mrb[0].mxu0
  %2927 = vmatprep.mubr.f32.mxu0 0.0
  %2928 = vmatmul.mubr.f32.gmra.mrb[0].mxu0 %v2826
  %v2929 = vpop.f32.mrb[0].mxu0
  %v2930 = vadd.f32 0.0, %v2929
  %v2931 = vpop.f32.mrb[0].mxu0
  %2932 = vdwg.mxu0
  %2933 = vrot.lane.b32.xlu0 %v189, 80
  %v2934 = vpop.permute.xlu0 %2933
  %2935 = vrot.lane.b32.xlu0 %v194, 80
  %v2936 = vpop.permute.xlu0 %2935
  %2937 = vrot.lane.b32.xlu0 %v199, 80
  %v2938 = vpop.permute.xlu0 %2937
  %2939 = vrot.lane.b32.xlu0 %v204, 80
  %v2940 = vpop.permute.xlu0 %2939
  %2941 = vrot.lane.b32.xlu0 %v209, 80
  %v2942 = vpop.permute.xlu0 %2941
  %2943 = vrot.lane.b32.xlu0 %v214, 80
  %v2944 = vpop.permute.xlu0 %2943
  %2945 = vrot.lane.b32.xlu0 %v219, 80
  %v2946 = vpop.permute.xlu0 %2945
  %2947 = vrot.lane.b32.xlu0 %v224, 80
  %v2948 = vpop.permute.xlu0 %2947
  %2949 = vrot.lane.b32.xlu0 %v303, 80
  %v2950 = vpop.permute.xlu0 %2949
  %2951 = vrot.lane.b32.xlu0 %v308, 80
  %v2952 = vpop.permute.xlu0 %2951
  %2953 = vrot.lane.b32.xlu0 %v313, 80
  %v2954 = vpop.permute.xlu0 %2953
  %2955 = vrot.lane.b32.xlu0 %v318, 80
  %v2956 = vpop.permute.xlu0 %2955
  %2957 = vrot.lane.b32.xlu0 %v323, 80
  %v2958 = vpop.permute.xlu0 %2957
  %2959 = vrot.lane.b32.xlu0 %v328, 80
  %v2960 = vpop.permute.xlu0 %2959
  %2961 = vrot.lane.b32.xlu0 %v333, 80
  %v2962 = vpop.permute.xlu0 %2961
  %2963 = vrot.lane.b32.xlu0 %v338, 80
  %v2964 = vpop.permute.xlu0 %2963
  %v2965 = vsel %vm455, %v2934, 0
  %v2967 = vsel %vm455, %v2936, 0
  %v2969 = vsel %vm455, %v2938, 0
  %v2971 = vsel %vm455, %v2940, 0
  %v2973 = vsel %vm455, %v2942, 0
  %v2975 = vsel %vm455, %v2944, 0
  %v2977 = vsel %vm455, %v2946, 0
  %v2979 = vsel %vm455, %v2948, 0
  %v2981 = vsel %vm455, %v2950, 0
  %v2983 = vsel %vm455, %v2952, 0
  %v2985 = vsel %vm455, %v2954, 0
  %v2987 = vsel %vm455, %v2956, 0
  %v2989 = vsel %vm455, %v2958, 0
  %v2991 = vsel %vm455, %v2960, 0
  %v2993 = vsel %vm455, %v2962, 0
  %v2995 = vsel %vm455, %v2964, 0
  %2997 = vmatprep.subr.mxu0 0.0
  %2998 = vmatpush1.xpose.msra.mxu0 %v2981
  %2999 = vmatprep.subr.mxu0 0.0
  %3000 = vmatpush1.xpose.msra.mxu0 %v2983
  %3001 = vmatprep.subr.mxu0 0.0
  %3002 = vmatpush1.xpose.msra.mxu0 %v2985
  %3003 = vmatprep.subr.mxu0 0.0
  %3004 = vmatpush1.xpose.msra.mxu0 %v2987
  %3005 = vmatprep.subr.mxu0 0.0
  %3006 = vmatpush1.xpose.msra.mxu0 %v2989
  %3007 = vmatprep.subr.mxu0 0.0
  %3008 = vmatpush1.xpose.msra.mxu0 %v2991
  %3009 = vmatprep.subr.mxu0 0.0
  %3010 = vmatpush1.xpose.msra.mxu0 %v2993
  %3011 = vmatprep.subr.mxu0 0.0
  %3012 = vmatpush1.xpose.msra.mxu0 %v2995
  %3013 = vmatprep.subr.mxu0 0.0
  %3014 = vmatpush1.xpose.msra.mxu0 0.0
  %3015 = vmatprep.subr.mxu0 0.0
  %3016 = vmatpush1.xpose.msra.mxu0 0.0
  %3017 = vmatprep.subr.mxu0 0.0
  %3018 = vmatpush1.xpose.msra.mxu0 0.0
  %3019 = vmatprep.subr.mxu0 0.0
  %3020 = vmatpush1.xpose.msra.mxu0 0.0
  %3021 = vmatprep.subr.mxu0 0.0
  %3022 = vmatpush1.xpose.msra.mxu0 0.0
  %3023 = vmatprep.subr.mxu0 0.0
  %3024 = vmatpush1.xpose.msra.mxu0 0.0
  %3025 = vmatprep.subr.mxu0 0.0
  %3026 = vmatpush1.xpose.msra.mxu0 0.0
  %3027 = vmatprep.subr.mxu0 0.0
  %3028 = vmatpush1.xpose.msra.mxu0 0.0
  %3029 = vmatprep.subr.mxu0 0.0
  %3030 = vmatpush1.xpose.msra.mxu0 0.0
  %3031 = vmatprep.subr.mxu0 0.0
  %3032 = vmatpush1.xpose.msra.mxu0 0.0
  %3033 = vmatprep.subr.mxu0 0.0
  %3034 = vmatpush1.xpose.msra.mxu0 0.0
  %3035 = vmatprep.subr.mxu0 0.0
  %3036 = vmatpush1.xpose.msra.mxu0 0.0
  %3037 = vmatprep.subr.mxu0 0.0
  %3038 = vmatpush1.xpose.msra.mxu0 0.0
  %3039 = vmatprep.subr.mxu0 0.0
  %3040 = vmatpush1.xpose.msra.mxu0 0.0
  %3041 = vmatprep.subr.mxu0 0.0
  %3042 = vmatpush1.xpose.msra.mxu0 0.0
  %3043 = vmatprep.subr.mxu0 0.0
  %3044 = vmatpush1.xpose.msra.mxu0 0.0
  %3045 = vmatprep.subr.mxu0 0.0
  %3046 = vmatpush1.xpose.msra.mxu0 0.0
  %3047 = vmatprep.subr.mxu0 0.0
  %3048 = vmatpush1.xpose.msra.mxu0 0.0
  %3049 = vmatprep.subr.mxu0 0.0
  %3050 = vmatpush1.xpose.msra.mxu0 0.0
  %3051 = vmatprep.subr.mxu0 0.0
  %3052 = vmatpush1.xpose.msra.mxu0 0.0
  %3053 = vmatprep.subr.mxu0 0.0
  %3054 = vmatpush1.xpose.msra.mxu0 0.0
  %3055 = vmatprep.subr.mxu0 0.0
  %3056 = vmatpush1.xpose.msra.mxu0 0.0
  %3057 = vmatprep.subr.mxu0 0.0
  %3058 = vmatpush1.xpose.msra.mxu0 0.0
  %3059 = vmatprep.subr.mxu0 0.0
  %3060 = vmatpush1.xpose.msra.mxu0 0.0
  %3061 = vmatprep.mubr.f32.mxu0 0.0
  %3062 = vmatmul.mubr.f32.gmra.mrb[0].mxu0 %v2965
  %v3063 = vpop.f32.mrb[0].mxu0
  %v3064 = vadd.f32 %v64, %v3063
  %v3065 = vpop.f32.mrb[0].mxu0
  %3066 = vmatprep.mubr.f32.mxu0 0.0
  %3067 = vmatmul.mubr.f32.gmra.mrb[0].mxu0 %v2967
  %v3068 = vpop.f32.mrb[0].mxu0
  %v3069 = vadd.f32 %v65, %v3068
  %v3070 = vpop.f32.mrb[0].mxu0
  %3071 = vmatprep.mubr.f32.mxu0 0.0
  %3072 = vmatmul.mubr.f32.gmra.mrb[0].mxu0 %v2969
  %v3073 = vpop.f32.mrb[0].mxu0
  %v3074 = vadd.f32 %v66, %v3073
  %v3075 = vpop.f32.mrb[0].mxu0
  %3076 = vmatprep.mubr.f32.mxu0 0.0
  %3077 = vmatmul.mubr.f32.gmra.mrb[0].mxu0 %v2971
  %v3078 = vpop.f32.mrb[0].mxu0
  %v3079 = vadd.f32 %v67, %v3078
  %v3080 = vpop.f32.mrb[0].mxu0
  %3081 = vmatprep.mubr.f32.mxu0 0.0
  %3082 = vmatmul.mubr.f32.gmra.mrb[0].mxu0 %v2973
  %v3083 = vpop.f32.mrb[0].mxu0
  %v3084 = vadd.f32 %v68, %v3083
  %v3085 = vpop.f32.mrb[0].mxu0
  %3086 = vmatprep.mubr.f32.mxu0 0.0
  %3087 = vmatmul.mubr.f32.gmra.mrb[0].mxu0 %v2975
  %v3088 = vpop.f32.mrb[0].mxu0
  %v3089 = vadd.f32 %v69, %v3088
  %v3090 = vpop.f32.mrb[0].mxu0
  %3091 = vmatprep.mubr.f32.mxu0 0.0
  %3092 = vmatmul.mubr.f32.gmra.mrb[0].mxu0 %v2977
  %v3093 = vpop.f32.mrb[0].mxu0
  %v3094 = vadd.f32 %v70, %v3093
  %v3095 = vpop.f32.mrb[0].mxu0
  %3096 = vmatprep.mubr.f32.mxu0 0.0
  %3097 = vmatmul.mubr.f32.gmra.mrb[0].mxu0 %v2979
  %v3098 = vpop.f32.mrb[0].mxu0
  %v3099 = vadd.f32 %v71, %v3098
  %v3100 = vpop.f32.mrb[0].mxu0
  %3101 = vdwg.mxu0
  %v3102 = vsel %vm609, %v3064, -inf
  %3103 = vmax.xlane.f32.xlu0 %v3102
  %v3104 = vpop.xlane.xlu0 %3103
  %v3105 = vsel %vm609, %v3069, -inf
  %3106 = vmax.xlane.f32.xlu0 %v3105
  %v3107 = vpop.xlane.xlu0 %3106
  %v3108 = vsel %vm609, %v3074, -inf
  %3109 = vmax.xlane.f32.xlu0 %v3108
  %v3110 = vpop.xlane.xlu0 %3109
  %v3111 = vsel %vm609, %v3079, -inf
  %3112 = vmax.xlane.f32.xlu0 %v3111
  %v3113 = vpop.xlane.xlu0 %3112
  %v3114 = vsel %vm609, %v3084, -inf
  %3115 = vmax.xlane.f32.xlu0 %v3114
  %v3116 = vpop.xlane.xlu0 %3115
  %v3117 = vsel %vm609, %v3089, -inf
  %3118 = vmax.xlane.f32.xlu0 %v3117
  %v3119 = vpop.xlane.xlu0 %3118
  %v3120 = vsel %vm609, %v3094, -inf
  %3121 = vmax.xlane.f32.xlu0 %v3120
  %v3122 = vpop.xlane.xlu0 %3121
  %v3123 = vsel %vm609, %v3099, -inf
  %3124 = vmax.xlane.f32.xlu0 %v3123
  %v3125 = vpop.xlane.xlu0 %3124
  %v3126 = vsub.f32 %v3064, %v3104
  %v3127 = vsub.f32 %v3069, %v3107
  %v3128 = vsub.f32 %v3074, %v3110
  %v3129 = vsub.f32 %v3079, %v3113
  %v3130 = vsub.f32 %v3084, %v3116
  %v3131 = vsub.f32 %v3089, %v3119
  %v3132 = vsub.f32 %v3094, %v3122
  %v3133 = vsub.f32 %v3099, %v3125
  %v3134 = vmul.f32 %v3126, 1.442695
  %v3135 = vpow.pop %v3134
  %v3136 = vmul.f32 %v3127, 1.442695
  %v3137 = vpow.pop %v3136
  %v3138 = vmul.f32 %v3128, 1.442695
  %v3139 = vpow.pop %v3138
  %v3140 = vmul.f32 %v3129, 1.442695
  %v3141 = vpow.pop %v3140
  %v3142 = vmul.f32 %v3130, 1.442695
  %v3143 = vpow.pop %v3142
  %v3144 = vmul.f32 %v3131, 1.442695
  %v3145 = vpow.pop %v3144
  %v3146 = vmul.f32 %v3132, 1.442695
  %v3147 = vpow.pop %v3146
  %v3148 = vmul.f32 %v3133, 1.442695
  %v3149 = vpow.pop %v3148
  %v3150 = vsel %vm609, %v3135, 0.0
  %3151 = vadd.xlane.f32.xlu0 %v3150
  %v3152 = vpop.xlane.xlu0 %3151
  %v3153 = vsel %vm609, %v3137, 0.0
  %3154 = vadd.xlane.f32.xlu0 %v3153
  %v3155 = vpop.xlane.xlu0 %3154
  %v3156 = vsel %vm609, %v3139, 0.0
  %3157 = vadd.xlane.f32.xlu0 %v3156
  %v3158 = vpop.xlane.xlu0 %3157
  %v3159 = vsel %vm609, %v3141, 0.0
  %3160 = vadd.xlane.f32.xlu0 %v3159
  %v3161 = vpop.xlane.xlu0 %3160
  %v3162 = vsel %vm609, %v3143, 0.0
  %3163 = vadd.xlane.f32.xlu0 %v3162
  %v3164 = vpop.xlane.xlu0 %3163
  %v3165 = vsel %vm609, %v3145, 0.0
  %3166 = vadd.xlane.f32.xlu0 %v3165
  %v3167 = vpop.xlane.xlu0 %3166
  %v3168 = vsel %vm609, %v3147, 0.0
  %3169 = vadd.xlane.f32.xlu0 %v3168
  %v3170 = vpop.xlane.xlu0 %3169
  %v3171 = vsel %vm609, %v3149, 0.0
  %3172 = vadd.xlane.f32.xlu0 %v3171
  %v3173 = vpop.xlane.xlu0 %3172
  %v3174 = vrcp.pop %v3152
  %v3175 = vmul.f32 1.0, %v3174
  %v3176 = vrcp.pop %v3155
  %v3177 = vmul.f32 1.0, %v3176
  %v3178 = vrcp.pop %v3158
  %v3179 = vmul.f32 1.0, %v3178
  %v3180 = vrcp.pop %v3161
  %v3181 = vmul.f32 1.0, %v3180
  %v3182 = vrcp.pop %v3164
  %v3183 = vmul.f32 1.0, %v3182
  %v3184 = vrcp.pop %v3167
  %v3185 = vmul.f32 1.0, %v3184
  %v3186 = vrcp.pop %v3170
  %v3187 = vmul.f32 1.0, %v3186
  %v3188 = vrcp.pop %v3173
  %v3189 = vmul.f32 1.0, %v3188
  %v3190 = vmul.f32 %v3135, %v3175
  %v3191 = vmul.f32 %v3137, %v3177
  %v3192 = vmul.f32 %v3139, %v3179
  %v3193 = vmul.f32 %v3141, %v3181
  %v3194 = vmul.f32 %v3143, %v3183
  %v3195 = vmul.f32 %v3145, %v3185
  %v3196 = vmul.f32 %v3147, %v3187
  %v3197 = vmul.f32 %v3149, %v3189
  %3198 = vrot.lane.b32.xlu0 %v417, 80
  %v3199 = vpop.permute.xlu0 %3198
  %3200 = vrot.lane.b32.xlu0 %v422, 80
  %v3201 = vpop.permute.xlu0 %3200
  %3202 = vrot.lane.b32.xlu0 %v427, 80
  %v3203 = vpop.permute.xlu0 %3202
  %3204 = vrot.lane.b32.xlu0 %v432, 80
  %v3205 = vpop.permute.xlu0 %3204
  %3206 = vrot.lane.b32.xlu0 %v437, 80
  %v3207 = vpop.permute.xlu0 %3206
  %3208 = vrot.lane.b32.xlu0 %v442, 80
  %v3209 = vpop.permute.xlu0 %3208
  %3210 = vrot.lane.b32.xlu0 %v447, 80
  %v3211 = vpop.permute.xlu0 %3210
  %3212 = vrot.lane.b32.xlu0 %v452, 80
  %v3213 = vpop.permute.xlu0 %3212
  %v3223 = vsel %vm609, %v3190, 0
  %v3226 = vsel %vm609, %v3191, 0
  %v3229 = vsel %vm609, %v3192, 0
  %v3232 = vsel %vm609, %v3193, 0
  %v3235 = vsel %vm609, %v3194, 0
  %v3238 = vsel %vm609, %v3195, 0
  %v3241 = vsel %vm609, %v3196, 0
  %v3244 = vsel %vm609, %v3197, 0
  %3246 = vmatprep.subr.mxu0 0.0
  %3247 = vmatpush1.msra.mxu0 %v3199
  %3248 = vmatprep.subr.mxu0 0.0
  %3249 = vmatpush1.msra.mxu0 %v3201
  %3250 = vmatprep.subr.mxu0 0.0
  %3251 = vmatpush1.msra.mxu0 %v3203
  %3252 = vmatprep.subr.mxu0 0.0
  %3253 = vmatpush1.msra.mxu0 %v3205
  %3254 = vmatprep.subr.mxu0 0.0
  %3255 = vmatpush1.msra.mxu0 %v3207
  %3256 = vmatprep.subr.mxu0 0.0
  %3257 = vmatpush1.msra.mxu0 %v3209
  %3258 = vmatprep.subr.mxu0 0.0
  %3259 = vmatpush1.msra.mxu0 %v3211
  %3260 = vmatprep.subr.mxu0 0.0
  %3261 = vmatpush1.msra.mxu0 %v3213
  %3262 = vmatprep.subr.mxu0 0.0
  %3263 = vmatpush1.msra.mxu0 0.0
  %3264 = vmatprep.subr.mxu0 0.0
  %3265 = vmatpush1.msra.mxu0 0.0
  %3266 = vmatprep.subr.mxu0 0.0
  %3267 = vmatpush1.msra.mxu0 0.0
  %3268 = vmatprep.subr.mxu0 0.0
  %3269 = vmatpush1.msra.mxu0 0.0
  %3270 = vmatprep.subr.mxu0 0.0
  %3271 = vmatpush1.msra.mxu0 0.0
  %3272 = vmatprep.subr.mxu0 0.0
  %3273 = vmatpush1.msra.mxu0 0.0
  %3274 = vmatprep.subr.mxu0 0.0
  %3275 = vmatpush1.msra.mxu0 0.0
  %3276 = vmatprep.subr.mxu0 0.0
  %3277 = vmatpush1.msra.mxu0 0.0
  %3278 = vmatprep.subr.mxu0 0.0
  %3279 = vmatpush1.msra.mxu0 0.0
  %3280 = vmatprep.subr.mxu0 0.0
  %3281 = vmatpush1.msra.mxu0 0.0
  %3282 = vmatprep.subr.mxu0 0.0
  %3283 = vmatpush1.msra.mxu0 0.0
  %3284 = vmatprep.subr.mxu0 0.0
  %3285 = vmatpush1.msra.mxu0 0.0
  %3286 = vmatprep.subr.mxu0 0.0
  %3287 = vmatpush1.msra.mxu0 0.0
  %3288 = vmatprep.subr.mxu0 0.0
  %3289 = vmatpush1.msra.mxu0 0.0
  %3290 = vmatprep.subr.mxu0 0.0
  %3291 = vmatpush1.msra.mxu0 0.0
  %3292 = vmatprep.subr.mxu0 0.0
  %3293 = vmatpush1.msra.mxu0 0.0
  %3294 = vmatprep.subr.mxu0 0.0
  %3295 = vmatpush1.msra.mxu0 0.0
  %3296 = vmatprep.subr.mxu0 0.0
  %3297 = vmatpush1.msra.mxu0 0.0
  %3298 = vmatprep.subr.mxu0 0.0
  %3299 = vmatpush1.msra.mxu0 0.0
  %3300 = vmatprep.subr.mxu0 0.0
  %3301 = vmatpush1.msra.mxu0 0.0
  %3302 = vmatprep.subr.mxu0 0.0
  %3303 = vmatpush1.msra.mxu0 0.0
  %3304 = vmatprep.subr.mxu0 0.0
  %3305 = vmatpush1.msra.mxu0 0.0
  %3306 = vmatprep.subr.mxu0 0.0
  %3307 = vmatpush1.msra.mxu0 0.0
  %3308 = vmatprep.subr.mxu0 0.0
  %3309 = vmatpush1.msra.mxu0 0.0
  %3310 = vmatprep.mubr.f32.mxu0 0.0
  %3311 = vmatmul.mubr.f32.gmra.mrb[0].mxu0 %v3223
  %v3312 = vpop.f32.mrb[0].mxu0
  %v3313 = vadd.f32 0.0, %v3312
  %v3314 = vpop.f32.mrb[0].mxu0
  %3315 = vmatprep.mubr.f32.mxu0 0.0
  %3316 = vmatmul.mubr.f32.gmra.mrb[0].mxu0 %v3226
  %v3317 = vpop.f32.mrb[0].mxu0
  %v3318 = vadd.f32 0.0, %v3317
  %v3319 = vpop.f32.mrb[0].mxu0
  %3320 = vmatprep.mubr.f32.mxu0 0.0
  %3321 = vmatmul.mubr.f32.gmra.mrb[0].mxu0 %v3229
  %v3322 = vpop.f32.mrb[0].mxu0
  %v3323 = vadd.f32 0.0, %v3322
  %v3324 = vpop.f32.mrb[0].mxu0
  %3325 = vmatprep.mubr.f32.mxu0 0.0
  %3326 = vmatmul.mubr.f32.gmra.mrb[0].mxu0 %v3232
  %v3327 = vpop.f32.mrb[0].mxu0
  %v3328 = vadd.f32 0.0, %v3327
  %v3329 = vpop.f32.mrb[0].mxu0
  %3330 = vmatprep.mubr.f32.mxu0 0.0
  %3331 = vmatmul.mubr.f32.gmra.mrb[0].mxu0 %v3235
  %v3332 = vpop.f32.mrb[0].mxu0
  %v3333 = vadd.f32 0.0, %v3332
  %v3334 = vpop.f32.mrb[0].mxu0
  %3335 = vmatprep.mubr.f32.mxu0 0.0
  %3336 = vmatmul.mubr.f32.gmra.mrb[0].mxu0 %v3238
  %v3337 = vpop.f32.mrb[0].mxu0
  %v3338 = vadd.f32 0.0, %v3337
  %v3339 = vpop.f32.mrb[0].mxu0
  %3340 = vmatprep.mubr.f32.mxu0 0.0
  %3341 = vmatmul.mubr.f32.gmra.mrb[0].mxu0 %v3241
  %v3342 = vpop.f32.mrb[0].mxu0
  %v3343 = vadd.f32 0.0, %v3342
  %v3344 = vpop.f32.mrb[0].mxu0
  %3345 = vmatprep.mubr.f32.mxu0 0.0
  %3346 = vmatmul.mubr.f32.gmra.mrb[0].mxu0 %v3244
  %v3347 = vpop.f32.mrb[0].mxu0
  %v3348 = vadd.f32 0.0, %v3347
  %v3349 = vpop.f32.mrb[0].mxu0
  %3350 = vdwg.mxu0
  %3351 = vrot.lane.b32.xlu0 %v189, 72
  %v3352 = vpop.permute.xlu0 %3351
  %3353 = vrot.lane.b32.xlu0 %v194, 72
  %v3354 = vpop.permute.xlu0 %3353
  %3355 = vrot.lane.b32.xlu0 %v199, 72
  %v3356 = vpop.permute.xlu0 %3355
  %3357 = vrot.lane.b32.xlu0 %v204, 72
  %v3358 = vpop.permute.xlu0 %3357
  %3359 = vrot.lane.b32.xlu0 %v209, 72
  %v3360 = vpop.permute.xlu0 %3359
  %3361 = vrot.lane.b32.xlu0 %v214, 72
  %v3362 = vpop.permute.xlu0 %3361
  %3363 = vrot.lane.b32.xlu0 %v219, 72
  %v3364 = vpop.permute.xlu0 %3363
  %3365 = vrot.lane.b32.xlu0 %v224, 72
  %v3366 = vpop.permute.xlu0 %3365
  %3367 = vrot.lane.b32.xlu0 %v303, 72
  %v3368 = vpop.permute.xlu0 %3367
  %3369 = vrot.lane.b32.xlu0 %v308, 72
  %v3370 = vpop.permute.xlu0 %3369
  %3371 = vrot.lane.b32.xlu0 %v313, 72
  %v3372 = vpop.permute.xlu0 %3371
  %3373 = vrot.lane.b32.xlu0 %v318, 72
  %v3374 = vpop.permute.xlu0 %3373
  %3375 = vrot.lane.b32.xlu0 %v323, 72
  %v3376 = vpop.permute.xlu0 %3375
  %3377 = vrot.lane.b32.xlu0 %v328, 72
  %v3378 = vpop.permute.xlu0 %3377
  %3379 = vrot.lane.b32.xlu0 %v333, 72
  %v3380 = vpop.permute.xlu0 %3379
  %3381 = vrot.lane.b32.xlu0 %v338, 72
  %v3382 = vpop.permute.xlu0 %3381
  %v3383 = vsel %vm455, %v3352, 0
  %v3385 = vsel %vm455, %v3354, 0
  %v3387 = vsel %vm455, %v3356, 0
  %v3389 = vsel %vm455, %v3358, 0
  %v3391 = vsel %vm455, %v3360, 0
  %v3393 = vsel %vm455, %v3362, 0
  %v3395 = vsel %vm455, %v3364, 0
  %v3397 = vsel %vm455, %v3366, 0
  %v3399 = vsel %vm455, %v3368, 0
  %v3401 = vsel %vm455, %v3370, 0
  %v3403 = vsel %vm455, %v3372, 0
  %v3405 = vsel %vm455, %v3374, 0
  %v3407 = vsel %vm455, %v3376, 0
  %v3409 = vsel %vm455, %v3378, 0
  %v3411 = vsel %vm455, %v3380, 0
  %v3413 = vsel %vm455, %v3382, 0
  %3415 = vmatprep.subr.mxu0 0.0
  %3416 = vmatpush1.xpose.msra.mxu0 %v3399
  %3417 = vmatprep.subr.mxu0 0.0
  %3418 = vmatpush1.xpose.msra.mxu0 %v3401
  %3419 = vmatprep.subr.mxu0 0.0
  %3420 = vmatpush1.xpose.msra.mxu0 %v3403
  %3421 = vmatprep.subr.mxu0 0.0
  %3422 = vmatpush1.xpose.msra.mxu0 %v3405
  %3423 = vmatprep.subr.mxu0 0.0
  %3424 = vmatpush1.xpose.msra.mxu0 %v3407
  %3425 = vmatprep.subr.mxu0 0.0
  %3426 = vmatpush1.xpose.msra.mxu0 %v3409
  %3427 = vmatprep.subr.mxu0 0.0
  %3428 = vmatpush1.xpose.msra.mxu0 %v3411
  %3429 = vmatprep.subr.mxu0 0.0
  %3430 = vmatpush1.xpose.msra.mxu0 %v3413
  %3431 = vmatprep.subr.mxu0 0.0
  %3432 = vmatpush1.xpose.msra.mxu0 0.0
  %3433 = vmatprep.subr.mxu0 0.0
  %3434 = vmatpush1.xpose.msra.mxu0 0.0
  %3435 = vmatprep.subr.mxu0 0.0
  %3436 = vmatpush1.xpose.msra.mxu0 0.0
  %3437 = vmatprep.subr.mxu0 0.0
  %3438 = vmatpush1.xpose.msra.mxu0 0.0
  %3439 = vmatprep.subr.mxu0 0.0
  %3440 = vmatpush1.xpose.msra.mxu0 0.0
  %3441 = vmatprep.subr.mxu0 0.0
  %3442 = vmatpush1.xpose.msra.mxu0 0.0
  %3443 = vmatprep.subr.mxu0 0.0
  %3444 = vmatpush1.xpose.msra.mxu0 0.0
  %3445 = vmatprep.subr.mxu0 0.0
  %3446 = vmatpush1.xpose.msra.mxu0 0.0
  %3447 = vmatprep.subr.mxu0 0.0
  %3448 = vmatpush1.xpose.msra.mxu0 0.0
  %3449 = vmatprep.subr.mxu0 0.0
  %3450 = vmatpush1.xpose.msra.mxu0 0.0
  %3451 = vmatprep.subr.mxu0 0.0
  %3452 = vmatpush1.xpose.msra.mxu0 0.0
  %3453 = vmatprep.subr.mxu0 0.0
  %3454 = vmatpush1.xpose.msra.mxu0 0.0
  %3455 = vmatprep.subr.mxu0 0.0
  %3456 = vmatpush1.xpose.msra.mxu0 0.0
  %3457 = vmatprep.subr.mxu0 0.0
  %3458 = vmatpush1.xpose.msra.mxu0 0.0
  %3459 = vmatprep.subr.mxu0 0.0
  %3460 = vmatpush1.xpose.msra.mxu0 0.0
  %3461 = vmatprep.subr.mxu0 0.0
  %3462 = vmatpush1.xpose.msra.mxu0 0.0
  %3463 = vmatprep.subr.mxu0 0.0
  %3464 = vmatpush1.xpose.msra.mxu0 0.0
  %3465 = vmatprep.subr.mxu0 0.0
  %3466 = vmatpush1.xpose.msra.mxu0 0.0
  %3467 = vmatprep.subr.mxu0 0.0
  %3468 = vmatpush1.xpose.msra.mxu0 0.0
  %3469 = vmatprep.subr.mxu0 0.0
  %3470 = vmatpush1.xpose.msra.mxu0 0.0
  %3471 = vmatprep.subr.mxu0 0.0
  %3472 = vmatpush1.xpose.msra.mxu0 0.0
  %3473 = vmatprep.subr.mxu0 0.0
  %3474 = vmatpush1.xpose.msra.mxu0 0.0
  %3475 = vmatprep.subr.mxu0 0.0
  %3476 = vmatpush1.xpose.msra.mxu0 0.0
  %3477 = vmatprep.subr.mxu0 0.0
  %3478 = vmatpush1.xpose.msra.mxu0 0.0
  %3479 = vmatprep.mubr.f32.mxu0 0.0
  %3480 = vmatmul.mubr.f32.gmra.mrb[0].mxu0 %v3383
  %v3481 = vpop.f32.mrb[0].mxu0
  %v3482 = vadd.f32 %v64, %v3481
  %v3483 = vpop.f32.mrb[0].mxu0
  %3484 = vmatprep.mubr.f32.mxu0 0.0
  %3485 = vmatmul.mubr.f32.gmra.mrb[0].mxu0 %v3385
  %v3486 = vpop.f32.mrb[0].mxu0
  %v3487 = vadd.f32 %v65, %v3486
  %v3488 = vpop.f32.mrb[0].mxu0
  %3489 = vmatprep.mubr.f32.mxu0 0.0
  %3490 = vmatmul.mubr.f32.gmra.mrb[0].mxu0 %v3387
  %v3491 = vpop.f32.mrb[0].mxu0
  %v3492 = vadd.f32 %v66, %v3491
  %v3493 = vpop.f32.mrb[0].mxu0
  %3494 = vmatprep.mubr.f32.mxu0 0.0
  %3495 = vmatmul.mubr.f32.gmra.mrb[0].mxu0 %v3389
  %v3496 = vpop.f32.mrb[0].mxu0
  %v3497 = vadd.f32 %v67, %v3496
  %v3498 = vpop.f32.mrb[0].mxu0
  %3499 = vmatprep.mubr.f32.mxu0 0.0
  %3500 = vmatmul.mubr.f32.gmra.mrb[0].mxu0 %v3391
  %v3501 = vpop.f32.mrb[0].mxu0
  %v3502 = vadd.f32 %v68, %v3501
  %v3503 = vpop.f32.mrb[0].mxu0
  %3504 = vmatprep.mubr.f32.mxu0 0.0
  %3505 = vmatmul.mubr.f32.gmra.mrb[0].mxu0 %v3393
  %v3506 = vpop.f32.mrb[0].mxu0
  %v3507 = vadd.f32 %v69, %v3506
  %v3508 = vpop.f32.mrb[0].mxu0
  %3509 = vmatprep.mubr.f32.mxu0 0.0
  %3510 = vmatmul.mubr.f32.gmra.mrb[0].mxu0 %v3395
  %v3511 = vpop.f32.mrb[0].mxu0
  %v3512 = vadd.f32 %v70, %v3511
  %v3513 = vpop.f32.mrb[0].mxu0
  %3514 = vmatprep.mubr.f32.mxu0 0.0
  %3515 = vmatmul.mubr.f32.gmra.mrb[0].mxu0 %v3397
  %v3516 = vpop.f32.mrb[0].mxu0
  %v3517 = vadd.f32 %v71, %v3516
  %v3518 = vpop.f32.mrb[0].mxu0
  %3519 = vdwg.mxu0
  %v3520 = vsel %vm609, %v3482, -inf
  %3521 = vmax.xlane.f32.xlu0 %v3520
  %v3522 = vpop.xlane.xlu0 %3521
  %v3523 = vsel %vm609, %v3487, -inf
  %3524 = vmax.xlane.f32.xlu0 %v3523
  %v3525 = vpop.xlane.xlu0 %3524
  %v3526 = vsel %vm609, %v3492, -inf
  %3527 = vmax.xlane.f32.xlu0 %v3526
  %v3528 = vpop.xlane.xlu0 %3527
  %v3529 = vsel %vm609, %v3497, -inf
  %3530 = vmax.xlane.f32.xlu0 %v3529
  %v3531 = vpop.xlane.xlu0 %3530
  %v3532 = vsel %vm609, %v3502, -inf
  %3533 = vmax.xlane.f32.xlu0 %v3532
  %v3534 = vpop.xlane.xlu0 %3533
  %v3535 = vsel %vm609, %v3507, -inf
  %3536 = vmax.xlane.f32.xlu0 %v3535
  %v3537 = vpop.xlane.xlu0 %3536
  %v3538 = vsel %vm609, %v3512, -inf
  %3539 = vmax.xlane.f32.xlu0 %v3538
  %v3540 = vpop.xlane.xlu0 %3539
  %v3541 = vsel %vm609, %v3517, -inf
  %3542 = vmax.xlane.f32.xlu0 %v3541
  %v3543 = vpop.xlane.xlu0 %3542
  %v3544 = vsub.f32 %v3482, %v3522
  %v3545 = vsub.f32 %v3487, %v3525
  %v3546 = vsub.f32 %v3492, %v3528
  %v3547 = vsub.f32 %v3497, %v3531
  %v3548 = vsub.f32 %v3502, %v3534
  %v3549 = vsub.f32 %v3507, %v3537
  %v3550 = vsub.f32 %v3512, %v3540
  %v3551 = vsub.f32 %v3517, %v3543
  %v3552 = vmul.f32 %v3544, 1.442695
  %v3553 = vpow.pop %v3552
  %v3554 = vmul.f32 %v3545, 1.442695
  %v3555 = vpow.pop %v3554
  %v3556 = vmul.f32 %v3546, 1.442695
  %v3557 = vpow.pop %v3556
  %v3558 = vmul.f32 %v3547, 1.442695
  %v3559 = vpow.pop %v3558
  %v3560 = vmul.f32 %v3548, 1.442695
  %v3561 = vpow.pop %v3560
  %v3562 = vmul.f32 %v3549, 1.442695
  %v3563 = vpow.pop %v3562
  %v3564 = vmul.f32 %v3550, 1.442695
  %v3565 = vpow.pop %v3564
  %v3566 = vmul.f32 %v3551, 1.442695
  %v3567 = vpow.pop %v3566
  %v3568 = vsel %vm609, %v3553, 0.0
  %3569 = vadd.xlane.f32.xlu0 %v3568
  %v3570 = vpop.xlane.xlu0 %3569
  %v3571 = vsel %vm609, %v3555, 0.0
  %3572 = vadd.xlane.f32.xlu0 %v3571
  %v3573 = vpop.xlane.xlu0 %3572
  %v3574 = vsel %vm609, %v3557, 0.0
  %3575 = vadd.xlane.f32.xlu0 %v3574
  %v3576 = vpop.xlane.xlu0 %3575
  %v3577 = vsel %vm609, %v3559, 0.0
  %3578 = vadd.xlane.f32.xlu0 %v3577
  %v3579 = vpop.xlane.xlu0 %3578
  %v3580 = vsel %vm609, %v3561, 0.0
  %3581 = vadd.xlane.f32.xlu0 %v3580
  %v3582 = vpop.xlane.xlu0 %3581
  %v3583 = vsel %vm609, %v3563, 0.0
  %3584 = vadd.xlane.f32.xlu0 %v3583
  %v3585 = vpop.xlane.xlu0 %3584
  %v3586 = vsel %vm609, %v3565, 0.0
  %3587 = vadd.xlane.f32.xlu0 %v3586
  %v3588 = vpop.xlane.xlu0 %3587
  %v3589 = vsel %vm609, %v3567, 0.0
  %3590 = vadd.xlane.f32.xlu0 %v3589
  %v3591 = vpop.xlane.xlu0 %3590
  %v3592 = vrcp.pop %v3570
  %v3593 = vmul.f32 1.0, %v3592
  %v3594 = vrcp.pop %v3573
  %v3595 = vmul.f32 1.0, %v3594
  %v3596 = vrcp.pop %v3576
  %v3597 = vmul.f32 1.0, %v3596
  %v3598 = vrcp.pop %v3579
  %v3599 = vmul.f32 1.0, %v3598
  %v3600 = vrcp.pop %v3582
  %v3601 = vmul.f32 1.0, %v3600
  %v3602 = vrcp.pop %v3585
  %v3603 = vmul.f32 1.0, %v3602
  %v3604 = vrcp.pop %v3588
  %v3605 = vmul.f32 1.0, %v3604
  %v3606 = vrcp.pop %v3591
  %v3607 = vmul.f32 1.0, %v3606
  %v3608 = vmul.f32 %v3553, %v3593
  %v3609 = vmul.f32 %v3555, %v3595
  %v3610 = vmul.f32 %v3557, %v3597
  %v3611 = vmul.f32 %v3559, %v3599
  %v3612 = vmul.f32 %v3561, %v3601
  %v3613 = vmul.f32 %v3563, %v3603
  %v3614 = vmul.f32 %v3565, %v3605
  %v3615 = vmul.f32 %v3567, %v3607
  %3616 = vrot.lane.b32.xlu0 %v417, 72
  %v3617 = vpop.permute.xlu0 %3616
  %3618 = vrot.lane.b32.xlu0 %v422, 72
  %v3619 = vpop.permute.xlu0 %3618
  %3620 = vrot.lane.b32.xlu0 %v427, 72
  %v3621 = vpop.permute.xlu0 %3620
  %3622 = vrot.lane.b32.xlu0 %v432, 72
  %v3623 = vpop.permute.xlu0 %3622
  %3624 = vrot.lane.b32.xlu0 %v437, 72
  %v3625 = vpop.permute.xlu0 %3624
  %3626 = vrot.lane.b32.xlu0 %v442, 72
  %v3627 = vpop.permute.xlu0 %3626
  %3628 = vrot.lane.b32.xlu0 %v447, 72
  %v3629 = vpop.permute.xlu0 %3628
  %3630 = vrot.lane.b32.xlu0 %v452, 72
  %v3631 = vpop.permute.xlu0 %3630
  %v3641 = vsel %vm609, %v3608, 0
  %v3644 = vsel %vm609, %v3609, 0
  %v3647 = vsel %vm609, %v3610, 0
  %v3650 = vsel %vm609, %v3611, 0
  %v3653 = vsel %vm609, %v3612, 0
  %v3656 = vsel %vm609, %v3613, 0
  %v3659 = vsel %vm609, %v3614, 0
  %v3662 = vsel %vm609, %v3615, 0
  %3664 = vmatprep.subr.mxu0 0.0
  %3665 = vmatpush1.msra.mxu0 %v3617
  %3666 = vmatprep.subr.mxu0 0.0
  %3667 = vmatpush1.msra.mxu0 %v3619
  %3668 = vmatprep.subr.mxu0 0.0
  %3669 = vmatpush1.msra.mxu0 %v3621
  %3670 = vmatprep.subr.mxu0 0.0
  %3671 = vmatpush1.msra.mxu0 %v3623
  %3672 = vmatprep.subr.mxu0 0.0
  %3673 = vmatpush1.msra.mxu0 %v3625
  %3674 = vmatprep.subr.mxu0 0.0
  %3675 = vmatpush1.msra.mxu0 %v3627
  %3676 = vmatprep.subr.mxu0 0.0
  %3677 = vmatpush1.msra.mxu0 %v3629
  %3678 = vmatprep.subr.mxu0 0.0
  %3679 = vmatpush1.msra.mxu0 %v3631
  %3680 = vmatprep.subr.mxu0 0.0
  %3681 = vmatpush1.msra.mxu0 0.0
  %3682 = vmatprep.subr.mxu0 0.0
  %3683 = vmatpush1.msra.mxu0 0.0
  %3684 = vmatprep.subr.mxu0 0.0
  %3685 = vmatpush1.msra.mxu0 0.0
  %3686 = vmatprep.subr.mxu0 0.0
  %3687 = vmatpush1.msra.mxu0 0.0
  %3688 = vmatprep.subr.mxu0 0.0
  %3689 = vmatpush1.msra.mxu0 0.0
  %3690 = vmatprep.subr.mxu0 0.0
  %3691 = vmatpush1.msra.mxu0 0.0
  %3692 = vmatprep.subr.mxu0 0.0
  %3693 = vmatpush1.msra.mxu0 0.0
  %3694 = vmatprep.subr.mxu0 0.0
  %3695 = vmatpush1.msra.mxu0 0.0
  %3696 = vmatprep.subr.mxu0 0.0
  %3697 = vmatpush1.msra.mxu0 0.0
  %3698 = vmatprep.subr.mxu0 0.0
  %3699 = vmatpush1.msra.mxu0 0.0
  %3700 = vmatprep.subr.mxu0 0.0
  %3701 = vmatpush1.msra.mxu0 0.0
  %3702 = vmatprep.subr.mxu0 0.0
  %3703 = vmatpush1.msra.mxu0 0.0
  %3704 = vmatprep.subr.mxu0 0.0
  %3705 = vmatpush1.msra.mxu0 0.0
  %3706 = vmatprep.subr.mxu0 0.0
  %3707 = vmatpush1.msra.mxu0 0.0
  %3708 = vmatprep.subr.mxu0 0.0
  %3709 = vmatpush1.msra.mxu0 0.0
  %3710 = vmatprep.subr.mxu0 0.0
  %3711 = vmatpush1.msra.mxu0 0.0
  %3712 = vmatprep.subr.mxu0 0.0
  %3713 = vmatpush1.msra.mxu0 0.0
  %3714 = vmatprep.subr.mxu0 0.0
  %3715 = vmatpush1.msra.mxu0 0.0
  %3716 = vmatprep.subr.mxu0 0.0
  %3717 = vmatpush1.msra.mxu0 0.0
  %3718 = vmatprep.subr.mxu0 0.0
  %3719 = vmatpush1.msra.mxu0 0.0
  %3720 = vmatprep.subr.mxu0 0.0
  %3721 = vmatpush1.msra.mxu0 0.0
  %3722 = vmatprep.subr.mxu0 0.0
  %3723 = vmatpush1.msra.mxu0 0.0
  %3724 = vmatprep.subr.mxu0 0.0
  %3725 = vmatpush1.msra.mxu0 0.0
  %3726 = vmatprep.subr.mxu0 0.0
  %3727 = vmatpush1.msra.mxu0 0.0
  %3728 = vmatprep.mubr.f32.mxu0 0.0
  %3729 = vmatmul.mubr.f32.gmra.mrb[0].mxu0 %v3641
  %v3730 = vpop.f32.mrb[0].mxu0
  %v3731 = vadd.f32 0.0, %v3730
  %v3732 = vpop.f32.mrb[0].mxu0
  %3733 = vmatprep.mubr.f32.mxu0 0.0
  %3734 = vmatmul.mubr.f32.gmra.mrb[0].mxu0 %v3644
  %v3735 = vpop.f32.mrb[0].mxu0
  %v3736 = vadd.f32 0.0, %v3735
  %v3737 = vpop.f32.mrb[0].mxu0
  %3738 = vmatprep.mubr.f32.mxu0 0.0
  %3739 = vmatmul.mubr.f32.gmra.mrb[0].mxu0 %v3647
  %v3740 = vpop.f32.mrb[0].mxu0
  %v3741 = vadd.f32 0.0, %v3740
  %v3742 = vpop.f32.mrb[0].mxu0
  %3743 = vmatprep.mubr.f32.mxu0 0.0
  %3744 = vmatmul.mubr.f32.gmra.mrb[0].mxu0 %v3650
  %v3745 = vpop.f32.mrb[0].mxu0
  %v3746 = vadd.f32 0.0, %v3745
  %v3747 = vpop.f32.mrb[0].mxu0
  %3748 = vmatprep.mubr.f32.mxu0 0.0
  %3749 = vmatmul.mubr.f32.gmra.mrb[0].mxu0 %v3653
  %v3750 = vpop.f32.mrb[0].mxu0
  %v3751 = vadd.f32 0.0, %v3750
  %v3752 = vpop.f32.mrb[0].mxu0
  %3753 = vmatprep.mubr.f32.mxu0 0.0
  %3754 = vmatmul.mubr.f32.gmra.mrb[0].mxu0 %v3656
  %v3755 = vpop.f32.mrb[0].mxu0
  %v3756 = vadd.f32 0.0, %v3755
  %v3757 = vpop.f32.mrb[0].mxu0
  %3758 = vmatprep.mubr.f32.mxu0 0.0
  %3759 = vmatmul.mubr.f32.gmra.mrb[0].mxu0 %v3659
  %v3760 = vpop.f32.mrb[0].mxu0
  %v3761 = vadd.f32 0.0, %v3760
  %v3762 = vpop.f32.mrb[0].mxu0
  %3763 = vmatprep.mubr.f32.mxu0 0.0
  %3764 = vmatmul.mubr.f32.gmra.mrb[0].mxu0 %v3662
  %v3765 = vpop.f32.mrb[0].mxu0
  %v3766 = vadd.f32 0.0, %v3765
  %v3767 = vpop.f32.mrb[0].mxu0
  %3768 = vdwg.mxu0
  %3769 = vrot.lane.b32.xlu0 %v189, 64
  %v3770 = vpop.permute.xlu0 %3769
  %3771 = vrot.lane.b32.xlu0 %v194, 64
  %v3772 = vpop.permute.xlu0 %3771
  %3773 = vrot.lane.b32.xlu0 %v199, 64
  %v3774 = vpop.permute.xlu0 %3773
  %3775 = vrot.lane.b32.xlu0 %v204, 64
  %v3776 = vpop.permute.xlu0 %3775
  %3777 = vrot.lane.b32.xlu0 %v209, 64
  %v3778 = vpop.permute.xlu0 %3777
  %3779 = vrot.lane.b32.xlu0 %v214, 64
  %v3780 = vpop.permute.xlu0 %3779
  %3781 = vrot.lane.b32.xlu0 %v219, 64
  %v3782 = vpop.permute.xlu0 %3781
  %3783 = vrot.lane.b32.xlu0 %v224, 64
  %v3784 = vpop.permute.xlu0 %3783
  %3785 = vrot.lane.b32.xlu0 %v303, 64
  %v3786 = vpop.permute.xlu0 %3785
  %3787 = vrot.lane.b32.xlu0 %v308, 64
  %v3788 = vpop.permute.xlu0 %3787
  %3789 = vrot.lane.b32.xlu0 %v313, 64
  %v3790 = vpop.permute.xlu0 %3789
  %3791 = vrot.lane.b32.xlu0 %v318, 64
  %v3792 = vpop.permute.xlu0 %3791
  %3793 = vrot.lane.b32.xlu0 %v323, 64
  %v3794 = vpop.permute.xlu0 %3793
  %3795 = vrot.lane.b32.xlu0 %v328, 64
  %v3796 = vpop.permute.xlu0 %3795
  %3797 = vrot.lane.b32.xlu0 %v333, 64
  %v3798 = vpop.permute.xlu0 %3797
  %3799 = vrot.lane.b32.xlu0 %v338, 64
  %v3800 = vpop.permute.xlu0 %3799
  %v3801 = vsel %vm455, %v3770, 0
  %v3803 = vsel %vm455, %v3772, 0
  %v3805 = vsel %vm455, %v3774, 0
  %v3807 = vsel %vm455, %v3776, 0
  %v3809 = vsel %vm455, %v3778, 0
  %v3811 = vsel %vm455, %v3780, 0
  %v3813 = vsel %vm455, %v3782, 0
  %v3815 = vsel %vm455, %v3784, 0
  %v3817 = vsel %vm455, %v3786, 0
  %v3819 = vsel %vm455, %v3788, 0
  %v3821 = vsel %vm455, %v3790, 0
  %v3823 = vsel %vm455, %v3792, 0
  %v3825 = vsel %vm455, %v3794, 0
  %v3827 = vsel %vm455, %v3796, 0
  %v3829 = vsel %vm455, %v3798, 0
  %v3831 = vsel %vm455, %v3800, 0
  %3833 = vmatprep.subr.mxu0 0.0
  %3834 = vmatpush1.xpose.msra.mxu0 %v3817
  %3835 = vmatprep.subr.mxu0 0.0
  %3836 = vmatpush1.xpose.msra.mxu0 %v3819
  %3837 = vmatprep.subr.mxu0 0.0
  %3838 = vmatpush1.xpose.msra.mxu0 %v3821
  %3839 = vmatprep.subr.mxu0 0.0
  %3840 = vmatpush1.xpose.msra.mxu0 %v3823
  %3841 = vmatprep.subr.mxu0 0.0
  %3842 = vmatpush1.xpose.msra.mxu0 %v3825
  %3843 = vmatprep.subr.mxu0 0.0
  %3844 = vmatpush1.xpose.msra.mxu0 %v3827
  %3845 = vmatprep.subr.mxu0 0.0
  %3846 = vmatpush1.xpose.msra.mxu0 %v3829
  %3847 = vmatprep.subr.mxu0 0.0
  %3848 = vmatpush1.xpose.msra.mxu0 %v3831
  %3849 = vmatprep.subr.mxu0 0.0
  %3850 = vmatpush1.xpose.msra.mxu0 0.0
  %3851 = vmatprep.subr.mxu0 0.0
  %3852 = vmatpush1.xpose.msra.mxu0 0.0
  %3853 = vmatprep.subr.mxu0 0.0
  %3854 = vmatpush1.xpose.msra.mxu0 0.0
  %3855 = vmatprep.subr.mxu0 0.0
  %3856 = vmatpush1.xpose.msra.mxu0 0.0
  %3857 = vmatprep.subr.mxu0 0.0
  %3858 = vmatpush1.xpose.msra.mxu0 0.0
  %3859 = vmatprep.subr.mxu0 0.0
  %3860 = vmatpush1.xpose.msra.mxu0 0.0
  %3861 = vmatprep.subr.mxu0 0.0
  %3862 = vmatpush1.xpose.msra.mxu0 0.0
  %3863 = vmatprep.subr.mxu0 0.0
  %3864 = vmatpush1.xpose.msra.mxu0 0.0
  %3865 = vmatprep.subr.mxu0 0.0
  %3866 = vmatpush1.xpose.msra.mxu0 0.0
  %3867 = vmatprep.subr.mxu0 0.0
  %3868 = vmatpush1.xpose.msra.mxu0 0.0
  %3869 = vmatprep.subr.mxu0 0.0
  %3870 = vmatpush1.xpose.msra.mxu0 0.0
  %3871 = vmatprep.subr.mxu0 0.0
  %3872 = vmatpush1.xpose.msra.mxu0 0.0
  %3873 = vmatprep.subr.mxu0 0.0
  %3874 = vmatpush1.xpose.msra.mxu0 0.0
  %3875 = vmatprep.subr.mxu0 0.0
  %3876 = vmatpush1.xpose.msra.mxu0 0.0
  %3877 = vmatprep.subr.mxu0 0.0
  %3878 = vmatpush1.xpose.msra.mxu0 0.0
  %3879 = vmatprep.subr.mxu0 0.0
  %3880 = vmatpush1.xpose.msra.mxu0 0.0
  %3881 = vmatprep.subr.mxu0 0.0
  %3882 = vmatpush1.xpose.msra.mxu0 0.0
  %3883 = vmatprep.subr.mxu0 0.0
  %3884 = vmatpush1.xpose.msra.mxu0 0.0
  %3885 = vmatprep.subr.mxu0 0.0
  %3886 = vmatpush1.xpose.msra.mxu0 0.0
  %3887 = vmatprep.subr.mxu0 0.0
  %3888 = vmatpush1.xpose.msra.mxu0 0.0
  %3889 = vmatprep.subr.mxu0 0.0
  %3890 = vmatpush1.xpose.msra.mxu0 0.0
  %3891 = vmatprep.subr.mxu0 0.0
  %3892 = vmatpush1.xpose.msra.mxu0 0.0
  %3893 = vmatprep.subr.mxu0 0.0
  %3894 = vmatpush1.xpose.msra.mxu0 0.0
  %3895 = vmatprep.subr.mxu0 0.0
  %3896 = vmatpush1.xpose.msra.mxu0 0.0
  %3897 = vmatprep.mubr.f32.mxu0 0.0
  %3898 = vmatmul.mubr.f32.gmra.mrb[0].mxu0 %v3801
  %v3899 = vpop.f32.mrb[0].mxu0
  %v3900 = vadd.f32 %v72, %v3899
  %v3901 = vpop.f32.mrb[0].mxu0
  %3902 = vmatprep.mubr.f32.mxu0 0.0
  %3903 = vmatmul.mubr.f32.gmra.mrb[0].mxu0 %v3803
  %v3904 = vpop.f32.mrb[0].mxu0
  %v3905 = vadd.f32 %v73, %v3904
  %v3906 = vpop.f32.mrb[0].mxu0
  %3907 = vmatprep.mubr.f32.mxu0 0.0
  %3908 = vmatmul.mubr.f32.gmra.mrb[0].mxu0 %v3805
  %v3909 = vpop.f32.mrb[0].mxu0
  %v3910 = vadd.f32 %v74, %v3909
  %v3911 = vpop.f32.mrb[0].mxu0
  %3912 = vmatprep.mubr.f32.mxu0 0.0
  %3913 = vmatmul.mubr.f32.gmra.mrb[0].mxu0 %v3807
  %v3914 = vpop.f32.mrb[0].mxu0
  %v3915 = vadd.f32 %v75, %v3914
  %v3916 = vpop.f32.mrb[0].mxu0
  %3917 = vmatprep.mubr.f32.mxu0 0.0
  %3918 = vmatmul.mubr.f32.gmra.mrb[0].mxu0 %v3809
  %v3919 = vpop.f32.mrb[0].mxu0
  %v3920 = vadd.f32 %v76, %v3919
  %v3921 = vpop.f32.mrb[0].mxu0
  %3922 = vmatprep.mubr.f32.mxu0 0.0
  %3923 = vmatmul.mubr.f32.gmra.mrb[0].mxu0 %v3811
  %v3924 = vpop.f32.mrb[0].mxu0
  %v3925 = vadd.f32 %v77, %v3924
  %v3926 = vpop.f32.mrb[0].mxu0
  %3927 = vmatprep.mubr.f32.mxu0 0.0
  %3928 = vmatmul.mubr.f32.gmra.mrb[0].mxu0 %v3813
  %v3929 = vpop.f32.mrb[0].mxu0
  %v3930 = vadd.f32 %v78, %v3929
  %v3931 = vpop.f32.mrb[0].mxu0
  %3932 = vmatprep.mubr.f32.mxu0 0.0
  %3933 = vmatmul.mubr.f32.gmra.mrb[0].mxu0 %v3815
  %v3934 = vpop.f32.mrb[0].mxu0
  %v3935 = vadd.f32 %v79, %v3934
  %v3936 = vpop.f32.mrb[0].mxu0
  %3937 = vdwg.mxu0
  %v3938 = vsel %vm609, %v3900, -inf
  %3939 = vmax.xlane.f32.xlu0 %v3938
  %v3940 = vpop.xlane.xlu0 %3939
  %v3941 = vsel %vm609, %v3905, -inf
  %3942 = vmax.xlane.f32.xlu0 %v3941
  %v3943 = vpop.xlane.xlu0 %3942
  %v3944 = vsel %vm609, %v3910, -inf
  %3945 = vmax.xlane.f32.xlu0 %v3944
  %v3946 = vpop.xlane.xlu0 %3945
  %v3947 = vsel %vm609, %v3915, -inf
  %3948 = vmax.xlane.f32.xlu0 %v3947
  %v3949 = vpop.xlane.xlu0 %3948
  %v3950 = vsel %vm609, %v3920, -inf
  %3951 = vmax.xlane.f32.xlu0 %v3950
  %v3952 = vpop.xlane.xlu0 %3951
  %v3953 = vsel %vm609, %v3925, -inf
  %3954 = vmax.xlane.f32.xlu0 %v3953
  %v3955 = vpop.xlane.xlu0 %3954
  %v3956 = vsel %vm609, %v3930, -inf
  %3957 = vmax.xlane.f32.xlu0 %v3956
  %v3958 = vpop.xlane.xlu0 %3957
  %v3959 = vsel %vm609, %v3935, -inf
  %3960 = vmax.xlane.f32.xlu0 %v3959
  %v3961 = vpop.xlane.xlu0 %3960
  %v3962 = vsub.f32 %v3900, %v3940
  %v3963 = vsub.f32 %v3905, %v3943
  %v3964 = vsub.f32 %v3910, %v3946
  %v3965 = vsub.f32 %v3915, %v3949
  %v3966 = vsub.f32 %v3920, %v3952
  %v3967 = vsub.f32 %v3925, %v3955
  %v3968 = vsub.f32 %v3930, %v3958
  %v3969 = vsub.f32 %v3935, %v3961
  %v3970 = vmul.f32 %v3962, 1.442695
  %v3971 = vpow.pop %v3970
  %v3972 = vmul.f32 %v3963, 1.442695
  %v3973 = vpow.pop %v3972
  %v3974 = vmul.f32 %v3964, 1.442695
  %v3975 = vpow.pop %v3974
  %v3976 = vmul.f32 %v3965, 1.442695
  %v3977 = vpow.pop %v3976
  %v3978 = vmul.f32 %v3966, 1.442695
  %v3979 = vpow.pop %v3978
  %v3980 = vmul.f32 %v3967, 1.442695
  %v3981 = vpow.pop %v3980
  %v3982 = vmul.f32 %v3968, 1.442695
  %v3983 = vpow.pop %v3982
  %v3984 = vmul.f32 %v3969, 1.442695
  %v3985 = vpow.pop %v3984
  %v3986 = vsel %vm609, %v3971, 0.0
  %3987 = vadd.xlane.f32.xlu0 %v3986
  %v3988 = vpop.xlane.xlu0 %3987
  %v3989 = vsel %vm609, %v3973, 0.0
  %3990 = vadd.xlane.f32.xlu0 %v3989
  %v3991 = vpop.xlane.xlu0 %3990
  %v3992 = vsel %vm609, %v3975, 0.0
  %3993 = vadd.xlane.f32.xlu0 %v3992
  %v3994 = vpop.xlane.xlu0 %3993
  %v3995 = vsel %vm609, %v3977, 0.0
  %3996 = vadd.xlane.f32.xlu0 %v3995
  %v3997 = vpop.xlane.xlu0 %3996
  %v3998 = vsel %vm609, %v3979, 0.0
  %3999 = vadd.xlane.f32.xlu0 %v3998
  %v4000 = vpop.xlane.xlu0 %3999
  %v4001 = vsel %vm609, %v3981, 0.0
  %4002 = vadd.xlane.f32.xlu0 %v4001
  %v4003 = vpop.xlane.xlu0 %4002
  %v4004 = vsel %vm609, %v3983, 0.0
  %4005 = vadd.xlane.f32.xlu0 %v4004
  %v4006 = vpop.xlane.xlu0 %4005
  %v4007 = vsel %vm609, %v3985, 0.0
  %4008 = vadd.xlane.f32.xlu0 %v4007
  %v4009 = vpop.xlane.xlu0 %4008
  %v4010 = vrcp.pop %v3988
  %v4011 = vmul.f32 1.0, %v4010
  %v4012 = vrcp.pop %v3991
  %v4013 = vmul.f32 1.0, %v4012
  %v4014 = vrcp.pop %v3994
  %v4015 = vmul.f32 1.0, %v4014
  %v4016 = vrcp.pop %v3997
  %v4017 = vmul.f32 1.0, %v4016
  %v4018 = vrcp.pop %v4000
  %v4019 = vmul.f32 1.0, %v4018
  %v4020 = vrcp.pop %v4003
  %v4021 = vmul.f32 1.0, %v4020
  %v4022 = vrcp.pop %v4006
  %v4023 = vmul.f32 1.0, %v4022
  %v4024 = vrcp.pop %v4009
  %v4025 = vmul.f32 1.0, %v4024
  %v4026 = vmul.f32 %v3971, %v4011
  %v4027 = vmul.f32 %v3973, %v4013
  %v4028 = vmul.f32 %v3975, %v4015
  %v4029 = vmul.f32 %v3977, %v4017
  %v4030 = vmul.f32 %v3979, %v4019
  %v4031 = vmul.f32 %v3981, %v4021
  %v4032 = vmul.f32 %v3983, %v4023
  %v4033 = vmul.f32 %v3985, %v4025
  %4034 = vrot.lane.b32.xlu0 %v417, 64
  %v4035 = vpop.permute.xlu0 %4034
  %4036 = vrot.lane.b32.xlu0 %v422, 64
  %v4037 = vpop.permute.xlu0 %4036
  %4038 = vrot.lane.b32.xlu0 %v427, 64
  %v4039 = vpop.permute.xlu0 %4038
  %4040 = vrot.lane.b32.xlu0 %v432, 64
  %v4041 = vpop.permute.xlu0 %4040
  %4042 = vrot.lane.b32.xlu0 %v437, 64
  %v4043 = vpop.permute.xlu0 %4042
  %4044 = vrot.lane.b32.xlu0 %v442, 64
  %v4045 = vpop.permute.xlu0 %4044
  %4046 = vrot.lane.b32.xlu0 %v447, 64
  %v4047 = vpop.permute.xlu0 %4046
  %4048 = vrot.lane.b32.xlu0 %v452, 64
  %v4049 = vpop.permute.xlu0 %4048
  %v4059 = vsel %vm609, %v4026, 0
  %v4062 = vsel %vm609, %v4027, 0
  %v4065 = vsel %vm609, %v4028, 0
  %v4068 = vsel %vm609, %v4029, 0
  %v4071 = vsel %vm609, %v4030, 0
  %v4074 = vsel %vm609, %v4031, 0
  %v4077 = vsel %vm609, %v4032, 0
  %v4080 = vsel %vm609, %v4033, 0
  %4082 = vmatprep.subr.mxu0 0.0
  %4083 = vmatpush1.msra.mxu0 %v4035
  %4084 = vmatprep.subr.mxu0 0.0
  %4085 = vmatpush1.msra.mxu0 %v4037
  %4086 = vmatprep.subr.mxu0 0.0
  %4087 = vmatpush1.msra.mxu0 %v4039
  %4088 = vmatprep.subr.mxu0 0.0
  %4089 = vmatpush1.msra.mxu0 %v4041
  %4090 = vmatprep.subr.mxu0 0.0
  %4091 = vmatpush1.msra.mxu0 %v4043
  %4092 = vmatprep.subr.mxu0 0.0
  %4093 = vmatpush1.msra.mxu0 %v4045
  %4094 = vmatprep.subr.mxu0 0.0
  %4095 = vmatpush1.msra.mxu0 %v4047
  %4096 = vmatprep.subr.mxu0 0.0
  %4097 = vmatpush1.msra.mxu0 %v4049
  %4098 = vmatprep.subr.mxu0 0.0
  %4099 = vmatpush1.msra.mxu0 0.0
  %4100 = vmatprep.subr.mxu0 0.0
  %4101 = vmatpush1.msra.mxu0 0.0
  %4102 = vmatprep.subr.mxu0 0.0
  %4103 = vmatpush1.msra.mxu0 0.0
  %4104 = vmatprep.subr.mxu0 0.0
  %4105 = vmatpush1.msra.mxu0 0.0
  %4106 = vmatprep.subr.mxu0 0.0
  %4107 = vmatpush1.msra.mxu0 0.0
  %4108 = vmatprep.subr.mxu0 0.0
  %4109 = vmatpush1.msra.mxu0 0.0
  %4110 = vmatprep.subr.mxu0 0.0
  %4111 = vmatpush1.msra.mxu0 0.0
  %4112 = vmatprep.subr.mxu0 0.0
  %4113 = vmatpush1.msra.mxu0 0.0
  %4114 = vmatprep.subr.mxu0 0.0
  %4115 = vmatpush1.msra.mxu0 0.0
  %4116 = vmatprep.subr.mxu0 0.0
  %4117 = vmatpush1.msra.mxu0 0.0
  %4118 = vmatprep.subr.mxu0 0.0
  %4119 = vmatpush1.msra.mxu0 0.0
  %4120 = vmatprep.subr.mxu0 0.0
  %4121 = vmatpush1.msra.mxu0 0.0
  %4122 = vmatprep.subr.mxu0 0.0
  %4123 = vmatpush1.msra.mxu0 0.0
  %4124 = vmatprep.subr.mxu0 0.0
  %4125 = vmatpush1.msra.mxu0 0.0
  %4126 = vmatprep.subr.mxu0 0.0
  %4127 = vmatpush1.msra.mxu0 0.0
  %4128 = vmatprep.subr.mxu0 0.0
  %4129 = vmatpush1.msra.mxu0 0.0
  %4130 = vmatprep.subr.mxu0 0.0
  %4131 = vmatpush1.msra.mxu0 0.0
  %4132 = vmatprep.subr.mxu0 0.0
  %4133 = vmatpush1.msra.mxu0 0.0
  %4134 = vmatprep.subr.mxu0 0.0
  %4135 = vmatpush1.msra.mxu0 0.0
  %4136 = vmatprep.subr.mxu0 0.0
  %4137 = vmatpush1.msra.mxu0 0.0
  %4138 = vmatprep.subr.mxu0 0.0
  %4139 = vmatpush1.msra.mxu0 0.0
  %4140 = vmatprep.subr.mxu0 0.0
  %4141 = vmatpush1.msra.mxu0 0.0
  %4142 = vmatprep.subr.mxu0 0.0
  %4143 = vmatpush1.msra.mxu0 0.0
  %4144 = vmatprep.subr.mxu0 0.0
  %4145 = vmatpush1.msra.mxu0 0.0
  %4146 = vmatprep.mubr.f32.mxu0 0.0
  %4147 = vmatmul.mubr.f32.gmra.mrb[0].mxu0 %v4059
  %v4148 = vpop.f32.mrb[0].mxu0
  %v4149 = vadd.f32 0.0, %v4148
  %v4150 = vpop.f32.mrb[0].mxu0
  %4151 = vmatprep.mubr.f32.mxu0 0.0
  %4152 = vmatmul.mubr.f32.gmra.mrb[0].mxu0 %v4062
  %v4153 = vpop.f32.mrb[0].mxu0
  %v4154 = vadd.f32 0.0, %v4153
  %v4155 = vpop.f32.mrb[0].mxu0
  %4156 = vmatprep.mubr.f32.mxu0 0.0
  %4157 = vmatmul.mubr.f32.gmra.mrb[0].mxu0 %v4065
  %v4158 = vpop.f32.mrb[0].mxu0
  %v4159 = vadd.f32 0.0, %v4158
  %v4160 = vpop.f32.mrb[0].mxu0
  %4161 = vmatprep.mubr.f32.mxu0 0.0
  %4162 = vmatmul.mubr.f32.gmra.mrb[0].mxu0 %v4068
  %v4163 = vpop.f32.mrb[0].mxu0
  %v4164 = vadd.f32 0.0, %v4163
  %v4165 = vpop.f32.mrb[0].mxu0
  %4166 = vmatprep.mubr.f32.mxu0 0.0
  %4167 = vmatmul.mubr.f32.gmra.mrb[0].mxu0 %v4071
  %v4168 = vpop.f32.mrb[0].mxu0
  %v4169 = vadd.f32 0.0, %v4168
  %v4170 = vpop.f32.mrb[0].mxu0
  %4171 = vmatprep.mubr.f32.mxu0 0.0
  %4172 = vmatmul.mubr.f32.gmra.mrb[0].mxu0 %v4074
  %v4173 = vpop.f32.mrb[0].mxu0
  %v4174 = vadd.f32 0.0, %v4173
  %v4175 = vpop.f32.mrb[0].mxu0
  %4176 = vmatprep.mubr.f32.mxu0 0.0
  %4177 = vmatmul.mubr.f32.gmra.mrb[0].mxu0 %v4077
  %v4178 = vpop.f32.mrb[0].mxu0
  %v4179 = vadd.f32 0.0, %v4178
  %v4180 = vpop.f32.mrb[0].mxu0
  %4181 = vmatprep.mubr.f32.mxu0 0.0
  %4182 = vmatmul.mubr.f32.gmra.mrb[0].mxu0 %v4080
  %v4183 = vpop.f32.mrb[0].mxu0
  %v4184 = vadd.f32 0.0, %v4183
  %v4185 = vpop.f32.mrb[0].mxu0
  %4186 = vdwg.mxu0
  %4187 = vrot.lane.b32.xlu0 %v189, 56
  %v4188 = vpop.permute.xlu0 %4187
  %4189 = vrot.lane.b32.xlu0 %v194, 56
  %v4190 = vpop.permute.xlu0 %4189
  %4191 = vrot.lane.b32.xlu0 %v199, 56
  %v4192 = vpop.permute.xlu0 %4191
  %4193 = vrot.lane.b32.xlu0 %v204, 56
  %v4194 = vpop.permute.xlu0 %4193
  %4195 = vrot.lane.b32.xlu0 %v209, 56
  %v4196 = vpop.permute.xlu0 %4195
  %4197 = vrot.lane.b32.xlu0 %v214, 56
  %v4198 = vpop.permute.xlu0 %4197
  %4199 = vrot.lane.b32.xlu0 %v219, 56
  %v4200 = vpop.permute.xlu0 %4199
  %4201 = vrot.lane.b32.xlu0 %v224, 56
  %v4202 = vpop.permute.xlu0 %4201
  %4203 = vrot.lane.b32.xlu0 %v303, 56
  %v4204 = vpop.permute.xlu0 %4203
  %4205 = vrot.lane.b32.xlu0 %v308, 56
  %v4206 = vpop.permute.xlu0 %4205
  %4207 = vrot.lane.b32.xlu0 %v313, 56
  %v4208 = vpop.permute.xlu0 %4207
  %4209 = vrot.lane.b32.xlu0 %v318, 56
  %v4210 = vpop.permute.xlu0 %4209
  %4211 = vrot.lane.b32.xlu0 %v323, 56
  %v4212 = vpop.permute.xlu0 %4211
  %4213 = vrot.lane.b32.xlu0 %v328, 56
  %v4214 = vpop.permute.xlu0 %4213
  %4215 = vrot.lane.b32.xlu0 %v333, 56
  %v4216 = vpop.permute.xlu0 %4215
  %4217 = vrot.lane.b32.xlu0 %v338, 56
  %v4218 = vpop.permute.xlu0 %4217
  %v4219 = vsel %vm455, %v4188, 0
  %v4221 = vsel %vm455, %v4190, 0
  %v4223 = vsel %vm455, %v4192, 0
  %v4225 = vsel %vm455, %v4194, 0
  %v4227 = vsel %vm455, %v4196, 0
  %v4229 = vsel %vm455, %v4198, 0
  %v4231 = vsel %vm455, %v4200, 0
  %v4233 = vsel %vm455, %v4202, 0
  %v4235 = vsel %vm455, %v4204, 0
  %v4237 = vsel %vm455, %v4206, 0
  %v4239 = vsel %vm455, %v4208, 0
  %v4241 = vsel %vm455, %v4210, 0
  %v4243 = vsel %vm455, %v4212, 0
  %v4245 = vsel %vm455, %v4214, 0
  %v4247 = vsel %vm455, %v4216, 0
  %v4249 = vsel %vm455, %v4218, 0
  %4251 = vmatprep.subr.mxu0 0.0
  %4252 = vmatpush1.xpose.msra.mxu0 %v4235
  %4253 = vmatprep.subr.mxu0 0.0
  %4254 = vmatpush1.xpose.msra.mxu0 %v4237
  %4255 = vmatprep.subr.mxu0 0.0
  %4256 = vmatpush1.xpose.msra.mxu0 %v4239
  %4257 = vmatprep.subr.mxu0 0.0
  %4258 = vmatpush1.xpose.msra.mxu0 %v4241
  %4259 = vmatprep.subr.mxu0 0.0
  %4260 = vmatpush1.xpose.msra.mxu0 %v4243
  %4261 = vmatprep.subr.mxu0 0.0
  %4262 = vmatpush1.xpose.msra.mxu0 %v4245
  %4263 = vmatprep.subr.mxu0 0.0
  %4264 = vmatpush1.xpose.msra.mxu0 %v4247
  %4265 = vmatprep.subr.mxu0 0.0
  %4266 = vmatpush1.xpose.msra.mxu0 %v4249
  %4267 = vmatprep.subr.mxu0 0.0
  %4268 = vmatpush1.xpose.msra.mxu0 0.0
  %4269 = vmatprep.subr.mxu0 0.0
  %4270 = vmatpush1.xpose.msra.mxu0 0.0
  %4271 = vmatprep.subr.mxu0 0.0
  %4272 = vmatpush1.xpose.msra.mxu0 0.0
  %4273 = vmatprep.subr.mxu0 0.0
  %4274 = vmatpush1.xpose.msra.mxu0 0.0
  %4275 = vmatprep.subr.mxu0 0.0
  %4276 = vmatpush1.xpose.msra.mxu0 0.0
  %4277 = vmatprep.subr.mxu0 0.0
  %4278 = vmatpush1.xpose.msra.mxu0 0.0
  %4279 = vmatprep.subr.mxu0 0.0
  %4280 = vmatpush1.xpose.msra.mxu0 0.0
  %4281 = vmatprep.subr.mxu0 0.0
  %4282 = vmatpush1.xpose.msra.mxu0 0.0
  %4283 = vmatprep.subr.mxu0 0.0
  %4284 = vmatpush1.xpose.msra.mxu0 0.0
  %4285 = vmatprep.subr.mxu0 0.0
  %4286 = vmatpush1.xpose.msra.mxu0 0.0
  %4287 = vmatprep.subr.mxu0 0.0
  %4288 = vmatpush1.xpose.msra.mxu0 0.0
  %4289 = vmatprep.subr.mxu0 0.0
  %4290 = vmatpush1.xpose.msra.mxu0 0.0
  %4291 = vmatprep.subr.mxu0 0.0
  %4292 = vmatpush1.xpose.msra.mxu0 0.0
  %4293 = vmatprep.subr.mxu0 0.0
  %4294 = vmatpush1.xpose.msra.mxu0 0.0
  %4295 = vmatprep.subr.mxu0 0.0
  %4296 = vmatpush1.xpose.msra.mxu0 0.0
  %4297 = vmatprep.subr.mxu0 0.0
  %4298 = vmatpush1.xpose.msra.mxu0 0.0
  %4299 = vmatprep.subr.mxu0 0.0
  %4300 = vmatpush1.xpose.msra.mxu0 0.0
  %4301 = vmatprep.subr.mxu0 0.0
  %4302 = vmatpush1.xpose.msra.mxu0 0.0
  %4303 = vmatprep.subr.mxu0 0.0
  %4304 = vmatpush1.xpose.msra.mxu0 0.0
  %4305 = vmatprep.subr.mxu0 0.0
  %4306 = vmatpush1.xpose.msra.mxu0 0.0
  %4307 = vmatprep.subr.mxu0 0.0
  %4308 = vmatpush1.xpose.msra.mxu0 0.0
  %4309 = vmatprep.subr.mxu0 0.0
  %4310 = vmatpush1.xpose.msra.mxu0 0.0
  %4311 = vmatprep.subr.mxu0 0.0
  %4312 = vmatpush1.xpose.msra.mxu0 0.0
  %4313 = vmatprep.subr.mxu0 0.0
  %4314 = vmatpush1.xpose.msra.mxu0 0.0
  %4315 = vmatprep.mubr.f32.mxu0 0.0
  %4316 = vmatmul.mubr.f32.gmra.mrb[0].mxu0 %v4219
  %v4317 = vpop.f32.mrb[0].mxu0
  %v4318 = vadd.f32 %v72, %v4317
  %v4319 = vpop.f32.mrb[0].mxu0
  %4320 = vmatprep.mubr.f32.mxu0 0.0
  %4321 = vmatmul.mubr.f32.gmra.mrb[0].mxu0 %v4221
  %v4322 = vpop.f32.mrb[0].mxu0
  %v4323 = vadd.f32 %v73, %v4322
  %v4324 = vpop.f32.mrb[0].mxu0
  %4325 = vmatprep.mubr.f32.mxu0 0.0
  %4326 = vmatmul.mubr.f32.gmra.mrb[0].mxu0 %v4223
  %v4327 = vpop.f32.mrb[0].mxu0
  %v4328 = vadd.f32 %v74, %v4327
  %v4329 = vpop.f32.mrb[0].mxu0
  %4330 = vmatprep.mubr.f32.mxu0 0.0
  %4331 = vmatmul.mubr.f32.gmra.mrb[0].mxu0 %v4225
  %v4332 = vpop.f32.mrb[0].mxu0
  %v4333 = vadd.f32 %v75, %v4332
  %v4334 = vpop.f32.mrb[0].mxu0
  %4335 = vmatprep.mubr.f32.mxu0 0.0
  %4336 = vmatmul.mubr.f32.gmra.mrb[0].mxu0 %v4227
  %v4337 = vpop.f32.mrb[0].mxu0
  %v4338 = vadd.f32 %v76, %v4337
  %v4339 = vpop.f32.mrb[0].mxu0
  %4340 = vmatprep.mubr.f32.mxu0 0.0
  %4341 = vmatmul.mubr.f32.gmra.mrb[0].mxu0 %v4229
  %v4342 = vpop.f32.mrb[0].mxu0
  %v4343 = vadd.f32 %v77, %v4342
  %v4344 = vpop.f32.mrb[0].mxu0
  %4345 = vmatprep.mubr.f32.mxu0 0.0
  %4346 = vmatmul.mubr.f32.gmra.mrb[0].mxu0 %v4231
  %v4347 = vpop.f32.mrb[0].mxu0
  %v4348 = vadd.f32 %v78, %v4347
  %v4349 = vpop.f32.mrb[0].mxu0
  %4350 = vmatprep.mubr.f32.mxu0 0.0
  %4351 = vmatmul.mubr.f32.gmra.mrb[0].mxu0 %v4233
  %v4352 = vpop.f32.mrb[0].mxu0
  %v4353 = vadd.f32 %v79, %v4352
  %v4354 = vpop.f32.mrb[0].mxu0
  %4355 = vdwg.mxu0
  %v4356 = vsel %vm609, %v4318, -inf
  %4357 = vmax.xlane.f32.xlu0 %v4356
  %v4358 = vpop.xlane.xlu0 %4357
  %v4359 = vsel %vm609, %v4323, -inf
  %4360 = vmax.xlane.f32.xlu0 %v4359
  %v4361 = vpop.xlane.xlu0 %4360
  %v4362 = vsel %vm609, %v4328, -inf
  %4363 = vmax.xlane.f32.xlu0 %v4362
  %v4364 = vpop.xlane.xlu0 %4363
  %v4365 = vsel %vm609, %v4333, -inf
  %4366 = vmax.xlane.f32.xlu0 %v4365
  %v4367 = vpop.xlane.xlu0 %4366
  %v4368 = vsel %vm609, %v4338, -inf
  %4369 = vmax.xlane.f32.xlu0 %v4368
  %v4370 = vpop.xlane.xlu0 %4369
  %v4371 = vsel %vm609, %v4343, -inf
  %4372 = vmax.xlane.f32.xlu0 %v4371
  %v4373 = vpop.xlane.xlu0 %4372
  %v4374 = vsel %vm609, %v4348, -inf
  %4375 = vmax.xlane.f32.xlu0 %v4374
  %v4376 = vpop.xlane.xlu0 %4375
  %v4377 = vsel %vm609, %v4353, -inf
  %4378 = vmax.xlane.f32.xlu0 %v4377
  %v4379 = vpop.xlane.xlu0 %4378
  %v4380 = vsub.f32 %v4318, %v4358
  %v4381 = vsub.f32 %v4323, %v4361
  %v4382 = vsub.f32 %v4328, %v4364
  %v4383 = vsub.f32 %v4333, %v4367
  %v4384 = vsub.f32 %v4338, %v4370
  %v4385 = vsub.f32 %v4343, %v4373
  %v4386 = vsub.f32 %v4348, %v4376
  %v4387 = vsub.f32 %v4353, %v4379
  %v4388 = vmul.f32 %v4380, 1.442695
  %v4389 = vpow.pop %v4388
  %v4390 = vmul.f32 %v4381, 1.442695
  %v4391 = vpow.pop %v4390
  %v4392 = vmul.f32 %v4382, 1.442695
  %v4393 = vpow.pop %v4392
  %v4394 = vmul.f32 %v4383, 1.442695
  %v4395 = vpow.pop %v4394
  %v4396 = vmul.f32 %v4384, 1.442695
  %v4397 = vpow.pop %v4396
  %v4398 = vmul.f32 %v4385, 1.442695
  %v4399 = vpow.pop %v4398
  %v4400 = vmul.f32 %v4386, 1.442695
  %v4401 = vpow.pop %v4400
  %v4402 = vmul.f32 %v4387, 1.442695
  %v4403 = vpow.pop %v4402
  %v4404 = vsel %vm609, %v4389, 0.0
  %4405 = vadd.xlane.f32.xlu0 %v4404
  %v4406 = vpop.xlane.xlu0 %4405
  %v4407 = vsel %vm609, %v4391, 0.0
  %4408 = vadd.xlane.f32.xlu0 %v4407
  %v4409 = vpop.xlane.xlu0 %4408
  %v4410 = vsel %vm609, %v4393, 0.0
  %4411 = vadd.xlane.f32.xlu0 %v4410
  %v4412 = vpop.xlane.xlu0 %4411
  %v4413 = vsel %vm609, %v4395, 0.0
  %4414 = vadd.xlane.f32.xlu0 %v4413
  %v4415 = vpop.xlane.xlu0 %4414
  %v4416 = vsel %vm609, %v4397, 0.0
  %4417 = vadd.xlane.f32.xlu0 %v4416
  %v4418 = vpop.xlane.xlu0 %4417
  %v4419 = vsel %vm609, %v4399, 0.0
  %4420 = vadd.xlane.f32.xlu0 %v4419
  %v4421 = vpop.xlane.xlu0 %4420
  %v4422 = vsel %vm609, %v4401, 0.0
  %4423 = vadd.xlane.f32.xlu0 %v4422
  %v4424 = vpop.xlane.xlu0 %4423
  %v4425 = vsel %vm609, %v4403, 0.0
  %4426 = vadd.xlane.f32.xlu0 %v4425
  %v4427 = vpop.xlane.xlu0 %4426
  %v4428 = vrcp.pop %v4406
  %v4429 = vmul.f32 1.0, %v4428
  %v4430 = vrcp.pop %v4409
  %v4431 = vmul.f32 1.0, %v4430
  %v4432 = vrcp.pop %v4412
  %v4433 = vmul.f32 1.0, %v4432
  %v4434 = vrcp.pop %v4415
  %v4435 = vmul.f32 1.0, %v4434
  %v4436 = vrcp.pop %v4418
  %v4437 = vmul.f32 1.0, %v4436
  %v4438 = vrcp.pop %v4421
  %v4439 = vmul.f32 1.0, %v4438
  %v4440 = vrcp.pop %v4424
  %v4441 = vmul.f32 1.0, %v4440
  %v4442 = vrcp.pop %v4427
  %v4443 = vmul.f32 1.0, %v4442
  %v4444 = vmul.f32 %v4389, %v4429
  %v4445 = vmul.f32 %v4391, %v4431
  %v4446 = vmul.f32 %v4393, %v4433
  %v4447 = vmul.f32 %v4395, %v4435
  %v4448 = vmul.f32 %v4397, %v4437
  %v4449 = vmul.f32 %v4399, %v4439
  %v4450 = vmul.f32 %v4401, %v4441
  %v4451 = vmul.f32 %v4403, %v4443
  %4452 = vrot.lane.b32.xlu0 %v417, 56
  %v4453 = vpop.permute.xlu0 %4452
  %4454 = vrot.lane.b32.xlu0 %v422, 56
  %v4455 = vpop.permute.xlu0 %4454
  %4456 = vrot.lane.b32.xlu0 %v427, 56
  %v4457 = vpop.permute.xlu0 %4456
  %4458 = vrot.lane.b32.xlu0 %v432, 56
  %v4459 = vpop.permute.xlu0 %4458
  %4460 = vrot.lane.b32.xlu0 %v437, 56
  %v4461 = vpop.permute.xlu0 %4460
  %4462 = vrot.lane.b32.xlu0 %v442, 56
  %v4463 = vpop.permute.xlu0 %4462
  %4464 = vrot.lane.b32.xlu0 %v447, 56
  %v4465 = vpop.permute.xlu0 %4464
  %4466 = vrot.lane.b32.xlu0 %v452, 56
  %v4467 = vpop.permute.xlu0 %4466
  %v4477 = vsel %vm609, %v4444, 0
  %v4480 = vsel %vm609, %v4445, 0
  %v4483 = vsel %vm609, %v4446, 0
  %v4486 = vsel %vm609, %v4447, 0
  %v4489 = vsel %vm609, %v4448, 0
  %v4492 = vsel %vm609, %v4449, 0
  %v4495 = vsel %vm609, %v4450, 0
  %v4498 = vsel %vm609, %v4451, 0
  %4500 = vmatprep.subr.mxu0 0.0
  %4501 = vmatpush1.msra.mxu0 %v4453
  %4502 = vmatprep.subr.mxu0 0.0
  %4503 = vmatpush1.msra.mxu0 %v4455
  %4504 = vmatprep.subr.mxu0 0.0
  %4505 = vmatpush1.msra.mxu0 %v4457
  %4506 = vmatprep.subr.mxu0 0.0
  %4507 = vmatpush1.msra.mxu0 %v4459
  %4508 = vmatprep.subr.mxu0 0.0
  %4509 = vmatpush1.msra.mxu0 %v4461
  %4510 = vmatprep.subr.mxu0 0.0
  %4511 = vmatpush1.msra.mxu0 %v4463
  %4512 = vmatprep.subr.mxu0 0.0
  %4513 = vmatpush1.msra.mxu0 %v4465
  %4514 = vmatprep.subr.mxu0 0.0
  %4515 = vmatpush1.msra.mxu0 %v4467
  %4516 = vmatprep.subr.mxu0 0.0
  %4517 = vmatpush1.msra.mxu0 0.0
  %4518 = vmatprep.subr.mxu0 0.0
  %4519 = vmatpush1.msra.mxu0 0.0
  %4520 = vmatprep.subr.mxu0 0.0
  %4521 = vmatpush1.msra.mxu0 0.0
  %4522 = vmatprep.subr.mxu0 0.0
  %4523 = vmatpush1.msra.mxu0 0.0
  %4524 = vmatprep.subr.mxu0 0.0
  %4525 = vmatpush1.msra.mxu0 0.0
  %4526 = vmatprep.subr.mxu0 0.0
  %4527 = vmatpush1.msra.mxu0 0.0
  %4528 = vmatprep.subr.mxu0 0.0
  %4529 = vmatpush1.msra.mxu0 0.0
  %4530 = vmatprep.subr.mxu0 0.0
  %4531 = vmatpush1.msra.mxu0 0.0
  %4532 = vmatprep.subr.mxu0 0.0
  %4533 = vmatpush1.msra.mxu0 0.0
  %4534 = vmatprep.subr.mxu0 0.0
  %4535 = vmatpush1.msra.mxu0 0.0
  %4536 = vmatprep.subr.mxu0 0.0
  %4537 = vmatpush1.msra.mxu0 0.0
  %4538 = vmatprep.subr.mxu0 0.0
  %4539 = vmatpush1.msra.mxu0 0.0
  %4540 = vmatprep.subr.mxu0 0.0
  %4541 = vmatpush1.msra.mxu0 0.0
  %4542 = vmatprep.subr.mxu0 0.0
  %4543 = vmatpush1.msra.mxu0 0.0
  %4544 = vmatprep.subr.mxu0 0.0
  %4545 = vmatpush1.msra.mxu0 0.0
  %4546 = vmatprep.subr.mxu0 0.0
  %4547 = vmatpush1.msra.mxu0 0.0
  %4548 = vmatprep.subr.mxu0 0.0
  %4549 = vmatpush1.msra.mxu0 0.0
  %4550 = vmatprep.subr.mxu0 0.0
  %4551 = vmatpush1.msra.mxu0 0.0
  %4552 = vmatprep.subr.mxu0 0.0
  %4553 = vmatpush1.msra.mxu0 0.0
  %4554 = vmatprep.subr.mxu0 0.0
  %4555 = vmatpush1.msra.mxu0 0.0
  %4556 = vmatprep.subr.mxu0 0.0
  %4557 = vmatpush1.msra.mxu0 0.0
  %4558 = vmatprep.subr.mxu0 0.0
  %4559 = vmatpush1.msra.mxu0 0.0
  %4560 = vmatprep.subr.mxu0 0.0
  %4561 = vmatpush1.msra.mxu0 0.0
  %4562 = vmatprep.subr.mxu0 0.0
  %4563 = vmatpush1.msra.mxu0 0.0
  %4564 = vmatprep.mubr.f32.mxu0 0.0
  %4565 = vmatmul.mubr.f32.gmra.mrb[0].mxu0 %v4477
  %v4566 = vpop.f32.mrb[0].mxu0
  %v4567 = vadd.f32 0.0, %v4566
  %v4568 = vpop.f32.mrb[0].mxu0
  %4569 = vmatprep.mubr.f32.mxu0 0.0
  %4570 = vmatmul.mubr.f32.gmra.mrb[0].mxu0 %v4480
  %v4571 = vpop.f32.mrb[0].mxu0
  %v4572 = vadd.f32 0.0, %v4571
  %v4573 = vpop.f32.mrb[0].mxu0
  %4574 = vmatprep.mubr.f32.mxu0 0.0
  %4575 = vmatmul.mubr.f32.gmra.mrb[0].mxu0 %v4483
  %v4576 = vpop.f32.mrb[0].mxu0
  %v4577 = vadd.f32 0.0, %v4576
  %v4578 = vpop.f32.mrb[0].mxu0
  %4579 = vmatprep.mubr.f32.mxu0 0.0
  %4580 = vmatmul.mubr.f32.gmra.mrb[0].mxu0 %v4486
  %v4581 = vpop.f32.mrb[0].mxu0
  %v4582 = vadd.f32 0.0, %v4581
  %v4583 = vpop.f32.mrb[0].mxu0
  %4584 = vmatprep.mubr.f32.mxu0 0.0
  %4585 = vmatmul.mubr.f32.gmra.mrb[0].mxu0 %v4489
  %v4586 = vpop.f32.mrb[0].mxu0
  %v4587 = vadd.f32 0.0, %v4586
  %v4588 = vpop.f32.mrb[0].mxu0
  %4589 = vmatprep.mubr.f32.mxu0 0.0
  %4590 = vmatmul.mubr.f32.gmra.mrb[0].mxu0 %v4492
  %v4591 = vpop.f32.mrb[0].mxu0
  %v4592 = vadd.f32 0.0, %v4591
  %v4593 = vpop.f32.mrb[0].mxu0
  %4594 = vmatprep.mubr.f32.mxu0 0.0
  %4595 = vmatmul.mubr.f32.gmra.mrb[0].mxu0 %v4495
  %v4596 = vpop.f32.mrb[0].mxu0
  %v4597 = vadd.f32 0.0, %v4596
  %v4598 = vpop.f32.mrb[0].mxu0
  %4599 = vmatprep.mubr.f32.mxu0 0.0
  %4600 = vmatmul.mubr.f32.gmra.mrb[0].mxu0 %v4498
  %v4601 = vpop.f32.mrb[0].mxu0
  %v4602 = vadd.f32 0.0, %v4601
  %v4603 = vpop.f32.mrb[0].mxu0
  %4604 = vdwg.mxu0
  %4605 = vrot.lane.b32.xlu0 %v189, 48
  %v4606 = vpop.permute.xlu0 %4605
  %4607 = vrot.lane.b32.xlu0 %v194, 48
  %v4608 = vpop.permute.xlu0 %4607
  %4609 = vrot.lane.b32.xlu0 %v199, 48
  %v4610 = vpop.permute.xlu0 %4609
  %4611 = vrot.lane.b32.xlu0 %v204, 48
  %v4612 = vpop.permute.xlu0 %4611
  %4613 = vrot.lane.b32.xlu0 %v209, 48
  %v4614 = vpop.permute.xlu0 %4613
  %4615 = vrot.lane.b32.xlu0 %v214, 48
  %v4616 = vpop.permute.xlu0 %4615
  %4617 = vrot.lane.b32.xlu0 %v219, 48
  %v4618 = vpop.permute.xlu0 %4617
  %4619 = vrot.lane.b32.xlu0 %v224, 48
  %v4620 = vpop.permute.xlu0 %4619
  %4621 = vrot.lane.b32.xlu0 %v303, 48
  %v4622 = vpop.permute.xlu0 %4621
  %4623 = vrot.lane.b32.xlu0 %v308, 48
  %v4624 = vpop.permute.xlu0 %4623
  %4625 = vrot.lane.b32.xlu0 %v313, 48
  %v4626 = vpop.permute.xlu0 %4625
  %4627 = vrot.lane.b32.xlu0 %v318, 48
  %v4628 = vpop.permute.xlu0 %4627
  %4629 = vrot.lane.b32.xlu0 %v323, 48
  %v4630 = vpop.permute.xlu0 %4629
  %4631 = vrot.lane.b32.xlu0 %v328, 48
  %v4632 = vpop.permute.xlu0 %4631
  %4633 = vrot.lane.b32.xlu0 %v333, 48
  %v4634 = vpop.permute.xlu0 %4633
  %4635 = vrot.lane.b32.xlu0 %v338, 48
  %v4636 = vpop.permute.xlu0 %4635
  %v4637 = vsel %vm455, %v4606, 0
  %v4639 = vsel %vm455, %v4608, 0
  %v4641 = vsel %vm455, %v4610, 0
  %v4643 = vsel %vm455, %v4612, 0
  %v4645 = vsel %vm455, %v4614, 0
  %v4647 = vsel %vm455, %v4616, 0
  %v4649 = vsel %vm455, %v4618, 0
  %v4651 = vsel %vm455, %v4620, 0
  %v4653 = vsel %vm455, %v4622, 0
  %v4655 = vsel %vm455, %v4624, 0
  %v4657 = vsel %vm455, %v4626, 0
  %v4659 = vsel %vm455, %v4628, 0
  %v4661 = vsel %vm455, %v4630, 0
  %v4663 = vsel %vm455, %v4632, 0
  %v4665 = vsel %vm455, %v4634, 0
  %v4667 = vsel %vm455, %v4636, 0
  %4669 = vmatprep.subr.mxu0 0.0
  %4670 = vmatpush1.xpose.msra.mxu0 %v4653
  %4671 = vmatprep.subr.mxu0 0.0
  %4672 = vmatpush1.xpose.msra.mxu0 %v4655
  %4673 = vmatprep.subr.mxu0 0.0
  %4674 = vmatpush1.xpose.msra.mxu0 %v4657
  %4675 = vmatprep.subr.mxu0 0.0
  %4676 = vmatpush1.xpose.msra.mxu0 %v4659
  %4677 = vmatprep.subr.mxu0 0.0
  %4678 = vmatpush1.xpose.msra.mxu0 %v4661
  %4679 = vmatprep.subr.mxu0 0.0
  %4680 = vmatpush1.xpose.msra.mxu0 %v4663
  %4681 = vmatprep.subr.mxu0 0.0
  %4682 = vmatpush1.xpose.msra.mxu0 %v4665
  %4683 = vmatprep.subr.mxu0 0.0
  %4684 = vmatpush1.xpose.msra.mxu0 %v4667
  %4685 = vmatprep.subr.mxu0 0.0
  %4686 = vmatpush1.xpose.msra.mxu0 0.0
  %4687 = vmatprep.subr.mxu0 0.0
  %4688 = vmatpush1.xpose.msra.mxu0 0.0
  %4689 = vmatprep.subr.mxu0 0.0
  %4690 = vmatpush1.xpose.msra.mxu0 0.0
  %4691 = vmatprep.subr.mxu0 0.0
  %4692 = vmatpush1.xpose.msra.mxu0 0.0
  %4693 = vmatprep.subr.mxu0 0.0
  %4694 = vmatpush1.xpose.msra.mxu0 0.0
  %4695 = vmatprep.subr.mxu0 0.0
  %4696 = vmatpush1.xpose.msra.mxu0 0.0
  %4697 = vmatprep.subr.mxu0 0.0
  %4698 = vmatpush1.xpose.msra.mxu0 0.0
  %4699 = vmatprep.subr.mxu0 0.0
  %4700 = vmatpush1.xpose.msra.mxu0 0.0
  %4701 = vmatprep.subr.mxu0 0.0
  %4702 = vmatpush1.xpose.msra.mxu0 0.0
  %4703 = vmatprep.subr.mxu0 0.0
  %4704 = vmatpush1.xpose.msra.mxu0 0.0
  %4705 = vmatprep.subr.mxu0 0.0
  %4706 = vmatpush1.xpose.msra.mxu0 0.0
  %4707 = vmatprep.subr.mxu0 0.0
  %4708 = vmatpush1.xpose.msra.mxu0 0.0
  %4709 = vmatprep.subr.mxu0 0.0
  %4710 = vmatpush1.xpose.msra.mxu0 0.0
  %4711 = vmatprep.subr.mxu0 0.0
  %4712 = vmatpush1.xpose.msra.mxu0 0.0
  %4713 = vmatprep.subr.mxu0 0.0
  %4714 = vmatpush1.xpose.msra.mxu0 0.0
  %4715 = vmatprep.subr.mxu0 0.0
  %4716 = vmatpush1.xpose.msra.mxu0 0.0
  %4717 = vmatprep.subr.mxu0 0.0
  %4718 = vmatpush1.xpose.msra.mxu0 0.0
  %4719 = vmatprep.subr.mxu0 0.0
  %4720 = vmatpush1.xpose.msra.mxu0 0.0
  %4721 = vmatprep.subr.mxu0 0.0
  %4722 = vmatpush1.xpose.msra.mxu0 0.0
  %4723 = vmatprep.subr.mxu0 0.0
  %4724 = vmatpush1.xpose.msra.mxu0 0.0
  %4725 = vmatprep.subr.mxu0 0.0
  %4726 = vmatpush1.xpose.msra.mxu0 0.0
  %4727 = vmatprep.subr.mxu0 0.0
  %4728 = vmatpush1.xpose.msra.mxu0 0.0
  %4729 = vmatprep.subr.mxu0 0.0
  %4730 = vmatpush1.xpose.msra.mxu0 0.0
  %4731 = vmatprep.subr.mxu0 0.0
  %4732 = vmatpush1.xpose.msra.mxu0 0.0
  %4733 = vmatprep.mubr.f32.mxu0 0.0
  %4734 = vmatmul.mubr.f32.gmra.mrb[0].mxu0 %v4637
  %v4735 = vpop.f32.mrb[0].mxu0
  %v4736 = vadd.f32 %v72, %v4735
  %v4737 = vpop.f32.mrb[0].mxu0
  %4738 = vmatprep.mubr.f32.mxu0 0.0
  %4739 = vmatmul.mubr.f32.gmra.mrb[0].mxu0 %v4639
  %v4740 = vpop.f32.mrb[0].mxu0
  %v4741 = vadd.f32 %v73, %v4740
  %v4742 = vpop.f32.mrb[0].mxu0
  %4743 = vmatprep.mubr.f32.mxu0 0.0
  %4744 = vmatmul.mubr.f32.gmra.mrb[0].mxu0 %v4641
  %v4745 = vpop.f32.mrb[0].mxu0
  %v4746 = vadd.f32 %v74, %v4745
  %v4747 = vpop.f32.mrb[0].mxu0
  %4748 = vmatprep.mubr.f32.mxu0 0.0
  %4749 = vmatmul.mubr.f32.gmra.mrb[0].mxu0 %v4643
  %v4750 = vpop.f32.mrb[0].mxu0
  %v4751 = vadd.f32 %v75, %v4750
  %v4752 = vpop.f32.mrb[0].mxu0
  %4753 = vmatprep.mubr.f32.mxu0 0.0
  %4754 = vmatmul.mubr.f32.gmra.mrb[0].mxu0 %v4645
  %v4755 = vpop.f32.mrb[0].mxu0
  %v4756 = vadd.f32 %v76, %v4755
  %v4757 = vpop.f32.mrb[0].mxu0
  %4758 = vmatprep.mubr.f32.mxu0 0.0
  %4759 = vmatmul.mubr.f32.gmra.mrb[0].mxu0 %v4647
  %v4760 = vpop.f32.mrb[0].mxu0
  %v4761 = vadd.f32 %v77, %v4760
  %v4762 = vpop.f32.mrb[0].mxu0
  %4763 = vmatprep.mubr.f32.mxu0 0.0
  %4764 = vmatmul.mubr.f32.gmra.mrb[0].mxu0 %v4649
  %v4765 = vpop.f32.mrb[0].mxu0
  %v4766 = vadd.f32 %v78, %v4765
  %v4767 = vpop.f32.mrb[0].mxu0
  %4768 = vmatprep.mubr.f32.mxu0 0.0
  %4769 = vmatmul.mubr.f32.gmra.mrb[0].mxu0 %v4651
  %v4770 = vpop.f32.mrb[0].mxu0
  %v4771 = vadd.f32 %v79, %v4770
  %v4772 = vpop.f32.mrb[0].mxu0
  %4773 = vdwg.mxu0
  %v4774 = vsel %vm609, %v4736, -inf
  %4775 = vmax.xlane.f32.xlu0 %v4774
  %v4776 = vpop.xlane.xlu0 %4775
  %v4777 = vsel %vm609, %v4741, -inf
  %4778 = vmax.xlane.f32.xlu0 %v4777
  %v4779 = vpop.xlane.xlu0 %4778
  %v4780 = vsel %vm609, %v4746, -inf
  %4781 = vmax.xlane.f32.xlu0 %v4780
  %v4782 = vpop.xlane.xlu0 %4781
  %v4783 = vsel %vm609, %v4751, -inf
  %4784 = vmax.xlane.f32.xlu0 %v4783
  %v4785 = vpop.xlane.xlu0 %4784
  %v4786 = vsel %vm609, %v4756, -inf
  %4787 = vmax.xlane.f32.xlu0 %v4786
  %v4788 = vpop.xlane.xlu0 %4787
  %v4789 = vsel %vm609, %v4761, -inf
  %4790 = vmax.xlane.f32.xlu0 %v4789
  %v4791 = vpop.xlane.xlu0 %4790
  %v4792 = vsel %vm609, %v4766, -inf
  %4793 = vmax.xlane.f32.xlu0 %v4792
  %v4794 = vpop.xlane.xlu0 %4793
  %v4795 = vsel %vm609, %v4771, -inf
  %4796 = vmax.xlane.f32.xlu0 %v4795
  %v4797 = vpop.xlane.xlu0 %4796
  %v4798 = vsub.f32 %v4736, %v4776
  %v4799 = vsub.f32 %v4741, %v4779
  %v4800 = vsub.f32 %v4746, %v4782
  %v4801 = vsub.f32 %v4751, %v4785
  %v4802 = vsub.f32 %v4756, %v4788
  %v4803 = vsub.f32 %v4761, %v4791
  %v4804 = vsub.f32 %v4766, %v4794
  %v4805 = vsub.f32 %v4771, %v4797
  %v4806 = vmul.f32 %v4798, 1.442695
  %v4807 = vpow.pop %v4806
  %v4808 = vmul.f32 %v4799, 1.442695
  %v4809 = vpow.pop %v4808
  %v4810 = vmul.f32 %v4800, 1.442695
  %v4811 = vpow.pop %v4810
  %v4812 = vmul.f32 %v4801, 1.442695
  %v4813 = vpow.pop %v4812
  %v4814 = vmul.f32 %v4802, 1.442695
  %v4815 = vpow.pop %v4814
  %v4816 = vmul.f32 %v4803, 1.442695
  %v4817 = vpow.pop %v4816
  %v4818 = vmul.f32 %v4804, 1.442695
  %v4819 = vpow.pop %v4818
  %v4820 = vmul.f32 %v4805, 1.442695
  %v4821 = vpow.pop %v4820
  %v4822 = vsel %vm609, %v4807, 0.0
  %4823 = vadd.xlane.f32.xlu0 %v4822
  %v4824 = vpop.xlane.xlu0 %4823
  %v4825 = vsel %vm609, %v4809, 0.0
  %4826 = vadd.xlane.f32.xlu0 %v4825
  %v4827 = vpop.xlane.xlu0 %4826
  %v4828 = vsel %vm609, %v4811, 0.0
  %4829 = vadd.xlane.f32.xlu0 %v4828
  %v4830 = vpop.xlane.xlu0 %4829
  %v4831 = vsel %vm609, %v4813, 0.0
  %4832 = vadd.xlane.f32.xlu0 %v4831
  %v4833 = vpop.xlane.xlu0 %4832
  %v4834 = vsel %vm609, %v4815, 0.0
  %4835 = vadd.xlane.f32.xlu0 %v4834
  %v4836 = vpop.xlane.xlu0 %4835
  %v4837 = vsel %vm609, %v4817, 0.0
  %4838 = vadd.xlane.f32.xlu0 %v4837
  %v4839 = vpop.xlane.xlu0 %4838
  %v4840 = vsel %vm609, %v4819, 0.0
  %4841 = vadd.xlane.f32.xlu0 %v4840
  %v4842 = vpop.xlane.xlu0 %4841
  %v4843 = vsel %vm609, %v4821, 0.0
  %4844 = vadd.xlane.f32.xlu0 %v4843
  %v4845 = vpop.xlane.xlu0 %4844
  %v4846 = vrcp.pop %v4824
  %v4847 = vmul.f32 1.0, %v4846
  %v4848 = vrcp.pop %v4827
  %v4849 = vmul.f32 1.0, %v4848
  %v4850 = vrcp.pop %v4830
  %v4851 = vmul.f32 1.0, %v4850
  %v4852 = vrcp.pop %v4833
  %v4853 = vmul.f32 1.0, %v4852
  %v4854 = vrcp.pop %v4836
  %v4855 = vmul.f32 1.0, %v4854
  %v4856 = vrcp.pop %v4839
  %v4857 = vmul.f32 1.0, %v4856
  %v4858 = vrcp.pop %v4842
  %v4859 = vmul.f32 1.0, %v4858
  %v4860 = vrcp.pop %v4845
  %v4861 = vmul.f32 1.0, %v4860
  %v4862 = vmul.f32 %v4807, %v4847
  %v4863 = vmul.f32 %v4809, %v4849
  %v4864 = vmul.f32 %v4811, %v4851
  %v4865 = vmul.f32 %v4813, %v4853
  %v4866 = vmul.f32 %v4815, %v4855
  %v4867 = vmul.f32 %v4817, %v4857
  %v4868 = vmul.f32 %v4819, %v4859
  %v4869 = vmul.f32 %v4821, %v4861
  %4870 = vrot.lane.b32.xlu0 %v417, 48
  %v4871 = vpop.permute.xlu0 %4870
  %4872 = vrot.lane.b32.xlu0 %v422, 48
  %v4873 = vpop.permute.xlu0 %4872
  %4874 = vrot.lane.b32.xlu0 %v427, 48
  %v4875 = vpop.permute.xlu0 %4874
  %4876 = vrot.lane.b32.xlu0 %v432, 48
  %v4877 = vpop.permute.xlu0 %4876
  %4878 = vrot.lane.b32.xlu0 %v437, 48
  %v4879 = vpop.permute.xlu0 %4878
  %4880 = vrot.lane.b32.xlu0 %v442, 48
  %v4881 = vpop.permute.xlu0 %4880
  %4882 = vrot.lane.b32.xlu0 %v447, 48
  %v4883 = vpop.permute.xlu0 %4882
  %4884 = vrot.lane.b32.xlu0 %v452, 48
  %v4885 = vpop.permute.xlu0 %4884
  %v4895 = vsel %vm609, %v4862, 0
  %v4898 = vsel %vm609, %v4863, 0
  %v4901 = vsel %vm609, %v4864, 0
  %v4904 = vsel %vm609, %v4865, 0
  %v4907 = vsel %vm609, %v4866, 0
  %v4910 = vsel %vm609, %v4867, 0
  %v4913 = vsel %vm609, %v4868, 0
  %v4916 = vsel %vm609, %v4869, 0
  %4918 = vmatprep.subr.mxu0 0.0
  %4919 = vmatpush1.msra.mxu0 %v4871
  %4920 = vmatprep.subr.mxu0 0.0
  %4921 = vmatpush1.msra.mxu0 %v4873
  %4922 = vmatprep.subr.mxu0 0.0
  %4923 = vmatpush1.msra.mxu0 %v4875
  %4924 = vmatprep.subr.mxu0 0.0
  %4925 = vmatpush1.msra.mxu0 %v4877
  %4926 = vmatprep.subr.mxu0 0.0
  %4927 = vmatpush1.msra.mxu0 %v4879
  %4928 = vmatprep.subr.mxu0 0.0
  %4929 = vmatpush1.msra.mxu0 %v4881
  %4930 = vmatprep.subr.mxu0 0.0
  %4931 = vmatpush1.msra.mxu0 %v4883
  %4932 = vmatprep.subr.mxu0 0.0
  %4933 = vmatpush1.msra.mxu0 %v4885
  %4934 = vmatprep.subr.mxu0 0.0
  %4935 = vmatpush1.msra.mxu0 0.0
  %4936 = vmatprep.subr.mxu0 0.0
  %4937 = vmatpush1.msra.mxu0 0.0
  %4938 = vmatprep.subr.mxu0 0.0
  %4939 = vmatpush1.msra.mxu0 0.0
  %4940 = vmatprep.subr.mxu0 0.0
  %4941 = vmatpush1.msra.mxu0 0.0
  %4942 = vmatprep.subr.mxu0 0.0
  %4943 = vmatpush1.msra.mxu0 0.0
  %4944 = vmatprep.subr.mxu0 0.0
  %4945 = vmatpush1.msra.mxu0 0.0
  %4946 = vmatprep.subr.mxu0 0.0
  %4947 = vmatpush1.msra.mxu0 0.0
  %4948 = vmatprep.subr.mxu0 0.0
  %4949 = vmatpush1.msra.mxu0 0.0
  %4950 = vmatprep.subr.mxu0 0.0
  %4951 = vmatpush1.msra.mxu0 0.0
  %4952 = vmatprep.subr.mxu0 0.0
  %4953 = vmatpush1.msra.mxu0 0.0
  %4954 = vmatprep.subr.mxu0 0.0
  %4955 = vmatpush1.msra.mxu0 0.0
  %4956 = vmatprep.subr.mxu0 0.0
  %4957 = vmatpush1.msra.mxu0 0.0
  %4958 = vmatprep.subr.mxu0 0.0
  %4959 = vmatpush1.msra.mxu0 0.0
  %4960 = vmatprep.subr.mxu0 0.0
  %4961 = vmatpush1.msra.mxu0 0.0
  %4962 = vmatprep.subr.mxu0 0.0
  %4963 = vmatpush1.msra.mxu0 0.0
  %4964 = vmatprep.subr.mxu0 0.0
  %4965 = vmatpush1.msra.mxu0 0.0
  %4966 = vmatprep.subr.mxu0 0.0
  %4967 = vmatpush1.msra.mxu0 0.0
  %4968 = vmatprep.subr.mxu0 0.0
  %4969 = vmatpush1.msra.mxu0 0.0
  %4970 = vmatprep.subr.mxu0 0.0
  %4971 = vmatpush1.msra.mxu0 0.0
  %4972 = vmatprep.subr.mxu0 0.0
  %4973 = vmatpush1.msra.mxu0 0.0
  %4974 = vmatprep.subr.mxu0 0.0
  %4975 = vmatpush1.msra.mxu0 0.0
  %4976 = vmatprep.subr.mxu0 0.0
  %4977 = vmatpush1.msra.mxu0 0.0
  %4978 = vmatprep.subr.mxu0 0.0
  %4979 = vmatpush1.msra.mxu0 0.0
  %4980 = vmatprep.subr.mxu0 0.0
  %4981 = vmatpush1.msra.mxu0 0.0
  %4982 = vmatprep.mubr.f32.mxu0 0.0
  %4983 = vmatmul.mubr.f32.gmra.mrb[0].mxu0 %v4895
  %v4984 = vpop.f32.mrb[0].mxu0
  %v4985 = vadd.f32 0.0, %v4984
  %v4986 = vpop.f32.mrb[0].mxu0
  %4987 = vmatprep.mubr.f32.mxu0 0.0
  %4988 = vmatmul.mubr.f32.gmra.mrb[0].mxu0 %v4898
  %v4989 = vpop.f32.mrb[0].mxu0
  %v4990 = vadd.f32 0.0, %v4989
  %v4991 = vpop.f32.mrb[0].mxu0
  %4992 = vmatprep.mubr.f32.mxu0 0.0
  %4993 = vmatmul.mubr.f32.gmra.mrb[0].mxu0 %v4901
  %v4994 = vpop.f32.mrb[0].mxu0
  %v4995 = vadd.f32 0.0, %v4994
  %v4996 = vpop.f32.mrb[0].mxu0
  %4997 = vmatprep.mubr.f32.mxu0 0.0
  %4998 = vmatmul.mubr.f32.gmra.mrb[0].mxu0 %v4904
  %v4999 = vpop.f32.mrb[0].mxu0
  %v5000 = vadd.f32 0.0, %v4999
  %v5001 = vpop.f32.mrb[0].mxu0
  %5002 = vmatprep.mubr.f32.mxu0 0.0
  %5003 = vmatmul.mubr.f32.gmra.mrb[0].mxu0 %v4907
  %v5004 = vpop.f32.mrb[0].mxu0
  %v5005 = vadd.f32 0.0, %v5004
  %v5006 = vpop.f32.mrb[0].mxu0
  %5007 = vmatprep.mubr.f32.mxu0 0.0
  %5008 = vmatmul.mubr.f32.gmra.mrb[0].mxu0 %v4910
  %v5009 = vpop.f32.mrb[0].mxu0
  %v5010 = vadd.f32 0.0, %v5009
  %v5011 = vpop.f32.mrb[0].mxu0
  %5012 = vmatprep.mubr.f32.mxu0 0.0
  %5013 = vmatmul.mubr.f32.gmra.mrb[0].mxu0 %v4913
  %v5014 = vpop.f32.mrb[0].mxu0
  %v5015 = vadd.f32 0.0, %v5014
  %v5016 = vpop.f32.mrb[0].mxu0
  %5017 = vmatprep.mubr.f32.mxu0 0.0
  %5018 = vmatmul.mubr.f32.gmra.mrb[0].mxu0 %v4916
  %v5019 = vpop.f32.mrb[0].mxu0
  %v5020 = vadd.f32 0.0, %v5019
  %v5021 = vpop.f32.mrb[0].mxu0
  %5022 = vdwg.mxu0
  %5023 = vrot.lane.b32.xlu0 %v189, 40
  %v5024 = vpop.permute.xlu0 %5023
  %5025 = vrot.lane.b32.xlu0 %v194, 40
  %v5026 = vpop.permute.xlu0 %5025
  %5027 = vrot.lane.b32.xlu0 %v199, 40
  %v5028 = vpop.permute.xlu0 %5027
  %5029 = vrot.lane.b32.xlu0 %v204, 40
  %v5030 = vpop.permute.xlu0 %5029
  %5031 = vrot.lane.b32.xlu0 %v209, 40
  %v5032 = vpop.permute.xlu0 %5031
  %5033 = vrot.lane.b32.xlu0 %v214, 40
  %v5034 = vpop.permute.xlu0 %5033
  %5035 = vrot.lane.b32.xlu0 %v219, 40
  %v5036 = vpop.permute.xlu0 %5035
  %5037 = vrot.lane.b32.xlu0 %v224, 40
  %v5038 = vpop.permute.xlu0 %5037
  %5039 = vrot.lane.b32.xlu0 %v303, 40
  %v5040 = vpop.permute.xlu0 %5039
  %5041 = vrot.lane.b32.xlu0 %v308, 40
  %v5042 = vpop.permute.xlu0 %5041
  %5043 = vrot.lane.b32.xlu0 %v313, 40
  %v5044 = vpop.permute.xlu0 %5043
  %5045 = vrot.lane.b32.xlu0 %v318, 40
  %v5046 = vpop.permute.xlu0 %5045
  %5047 = vrot.lane.b32.xlu0 %v323, 40
  %v5048 = vpop.permute.xlu0 %5047
  %5049 = vrot.lane.b32.xlu0 %v328, 40
  %v5050 = vpop.permute.xlu0 %5049
  %5051 = vrot.lane.b32.xlu0 %v333, 40
  %v5052 = vpop.permute.xlu0 %5051
  %5053 = vrot.lane.b32.xlu0 %v338, 40
  %v5054 = vpop.permute.xlu0 %5053
  %v5055 = vsel %vm455, %v5024, 0
  %v5057 = vsel %vm455, %v5026, 0
  %v5059 = vsel %vm455, %v5028, 0
  %v5061 = vsel %vm455, %v5030, 0
  %v5063 = vsel %vm455, %v5032, 0
  %v5065 = vsel %vm455, %v5034, 0
  %v5067 = vsel %vm455, %v5036, 0
  %v5069 = vsel %vm455, %v5038, 0
  %v5071 = vsel %vm455, %v5040, 0
  %v5073 = vsel %vm455, %v5042, 0
  %v5075 = vsel %vm455, %v5044, 0
  %v5077 = vsel %vm455, %v5046, 0
  %v5079 = vsel %vm455, %v5048, 0
  %v5081 = vsel %vm455, %v5050, 0
  %v5083 = vsel %vm455, %v5052, 0
  %v5085 = vsel %vm455, %v5054, 0
  %5087 = vmatprep.subr.mxu0 0.0
  %5088 = vmatpush1.xpose.msra.mxu0 %v5071
  %5089 = vmatprep.subr.mxu0 0.0
  %5090 = vmatpush1.xpose.msra.mxu0 %v5073
  %5091 = vmatprep.subr.mxu0 0.0
  %5092 = vmatpush1.xpose.msra.mxu0 %v5075
  %5093 = vmatprep.subr.mxu0 0.0
  %5094 = vmatpush1.xpose.msra.mxu0 %v5077
  %5095 = vmatprep.subr.mxu0 0.0
  %5096 = vmatpush1.xpose.msra.mxu0 %v5079
  %5097 = vmatprep.subr.mxu0 0.0
  %5098 = vmatpush1.xpose.msra.mxu0 %v5081
  %5099 = vmatprep.subr.mxu0 0.0
  %5100 = vmatpush1.xpose.msra.mxu0 %v5083
  %5101 = vmatprep.subr.mxu0 0.0
  %5102 = vmatpush1.xpose.msra.mxu0 %v5085
  %5103 = vmatprep.subr.mxu0 0.0
  %5104 = vmatpush1.xpose.msra.mxu0 0.0
  %5105 = vmatprep.subr.mxu0 0.0
  %5106 = vmatpush1.xpose.msra.mxu0 0.0
  %5107 = vmatprep.subr.mxu0 0.0
  %5108 = vmatpush1.xpose.msra.mxu0 0.0
  %5109 = vmatprep.subr.mxu0 0.0
  %5110 = vmatpush1.xpose.msra.mxu0 0.0
  %5111 = vmatprep.subr.mxu0 0.0
  %5112 = vmatpush1.xpose.msra.mxu0 0.0
  %5113 = vmatprep.subr.mxu0 0.0
  %5114 = vmatpush1.xpose.msra.mxu0 0.0
  %5115 = vmatprep.subr.mxu0 0.0
  %5116 = vmatpush1.xpose.msra.mxu0 0.0
  %5117 = vmatprep.subr.mxu0 0.0
  %5118 = vmatpush1.xpose.msra.mxu0 0.0
  %5119 = vmatprep.subr.mxu0 0.0
  %5120 = vmatpush1.xpose.msra.mxu0 0.0
  %5121 = vmatprep.subr.mxu0 0.0
  %5122 = vmatpush1.xpose.msra.mxu0 0.0
  %5123 = vmatprep.subr.mxu0 0.0
  %5124 = vmatpush1.xpose.msra.mxu0 0.0
  %5125 = vmatprep.subr.mxu0 0.0
  %5126 = vmatpush1.xpose.msra.mxu0 0.0
  %5127 = vmatprep.subr.mxu0 0.0
  %5128 = vmatpush1.xpose.msra.mxu0 0.0
  %5129 = vmatprep.subr.mxu0 0.0
  %5130 = vmatpush1.xpose.msra.mxu0 0.0
  %5131 = vmatprep.subr.mxu0 0.0
  %5132 = vmatpush1.xpose.msra.mxu0 0.0
  %5133 = vmatprep.subr.mxu0 0.0
  %5134 = vmatpush1.xpose.msra.mxu0 0.0
  %5135 = vmatprep.subr.mxu0 0.0
  %5136 = vmatpush1.xpose.msra.mxu0 0.0
  %5137 = vmatprep.subr.mxu0 0.0
  %5138 = vmatpush1.xpose.msra.mxu0 0.0
  %5139 = vmatprep.subr.mxu0 0.0
  %5140 = vmatpush1.xpose.msra.mxu0 0.0
  %5141 = vmatprep.subr.mxu0 0.0
  %5142 = vmatpush1.xpose.msra.mxu0 0.0
  %5143 = vmatprep.subr.mxu0 0.0
  %5144 = vmatpush1.xpose.msra.mxu0 0.0
  %5145 = vmatprep.subr.mxu0 0.0
  %5146 = vmatpush1.xpose.msra.mxu0 0.0
  %5147 = vmatprep.subr.mxu0 0.0
  %5148 = vmatpush1.xpose.msra.mxu0 0.0
  %5149 = vmatprep.subr.mxu0 0.0
  %5150 = vmatpush1.xpose.msra.mxu0 0.0
  %5151 = vmatprep.mubr.f32.mxu0 0.0
  %5152 = vmatmul.mubr.f32.gmra.mrb[0].mxu0 %v5055
  %v5153 = vpop.f32.mrb[0].mxu0
  %v5154 = vadd.f32 %v72, %v5153
  %v5155 = vpop.f32.mrb[0].mxu0
  %5156 = vmatprep.mubr.f32.mxu0 0.0
  %5157 = vmatmul.mubr.f32.gmra.mrb[0].mxu0 %v5057
  %v5158 = vpop.f32.mrb[0].mxu0
  %v5159 = vadd.f32 %v73, %v5158
  %v5160 = vpop.f32.mrb[0].mxu0
  %5161 = vmatprep.mubr.f32.mxu0 0.0
  %5162 = vmatmul.mubr.f32.gmra.mrb[0].mxu0 %v5059
  %v5163 = vpop.f32.mrb[0].mxu0
  %v5164 = vadd.f32 %v74, %v5163
  %v5165 = vpop.f32.mrb[0].mxu0
  %5166 = vmatprep.mubr.f32.mxu0 0.0
  %5167 = vmatmul.mubr.f32.gmra.mrb[0].mxu0 %v5061
  %v5168 = vpop.f32.mrb[0].mxu0
  %v5169 = vadd.f32 %v75, %v5168
  %v5170 = vpop.f32.mrb[0].mxu0
  %5171 = vmatprep.mubr.f32.mxu0 0.0
  %5172 = vmatmul.mubr.f32.gmra.mrb[0].mxu0 %v5063
  %v5173 = vpop.f32.mrb[0].mxu0
  %v5174 = vadd.f32 %v76, %v5173
  %v5175 = vpop.f32.mrb[0].mxu0
  %5176 = vmatprep.mubr.f32.mxu0 0.0
  %5177 = vmatmul.mubr.f32.gmra.mrb[0].mxu0 %v5065
  %v5178 = vpop.f32.mrb[0].mxu0
  %v5179 = vadd.f32 %v77, %v5178
  %v5180 = vpop.f32.mrb[0].mxu0
  %5181 = vmatprep.mubr.f32.mxu0 0.0
  %5182 = vmatmul.mubr.f32.gmra.mrb[0].mxu0 %v5067
  %v5183 = vpop.f32.mrb[0].mxu0
  %v5184 = vadd.f32 %v78, %v5183
  %v5185 = vpop.f32.mrb[0].mxu0
  %5186 = vmatprep.mubr.f32.mxu0 0.0
  %5187 = vmatmul.mubr.f32.gmra.mrb[0].mxu0 %v5069
  %v5188 = vpop.f32.mrb[0].mxu0
  %v5189 = vadd.f32 %v79, %v5188
  %v5190 = vpop.f32.mrb[0].mxu0
  %5191 = vdwg.mxu0
  %v5192 = vsel %vm609, %v5154, -inf
  %5193 = vmax.xlane.f32.xlu0 %v5192
  %v5194 = vpop.xlane.xlu0 %5193
  %v5195 = vsel %vm609, %v5159, -inf
  %5196 = vmax.xlane.f32.xlu0 %v5195
  %v5197 = vpop.xlane.xlu0 %5196
  %v5198 = vsel %vm609, %v5164, -inf
  %5199 = vmax.xlane.f32.xlu0 %v5198
  %v5200 = vpop.xlane.xlu0 %5199
  %v5201 = vsel %vm609, %v5169, -inf
  %5202 = vmax.xlane.f32.xlu0 %v5201
  %v5203 = vpop.xlane.xlu0 %5202
  %v5204 = vsel %vm609, %v5174, -inf
  %5205 = vmax.xlane.f32.xlu0 %v5204
  %v5206 = vpop.xlane.xlu0 %5205
  %v5207 = vsel %vm609, %v5179, -inf
  %5208 = vmax.xlane.f32.xlu0 %v5207
  %v5209 = vpop.xlane.xlu0 %5208
  %v5210 = vsel %vm609, %v5184, -inf
  %5211 = vmax.xlane.f32.xlu0 %v5210
  %v5212 = vpop.xlane.xlu0 %5211
  %v5213 = vsel %vm609, %v5189, -inf
  %5214 = vmax.xlane.f32.xlu0 %v5213
  %v5215 = vpop.xlane.xlu0 %5214
  %v5216 = vsub.f32 %v5154, %v5194
  %v5217 = vsub.f32 %v5159, %v5197
  %v5218 = vsub.f32 %v5164, %v5200
  %v5219 = vsub.f32 %v5169, %v5203
  %v5220 = vsub.f32 %v5174, %v5206
  %v5221 = vsub.f32 %v5179, %v5209
  %v5222 = vsub.f32 %v5184, %v5212
  %v5223 = vsub.f32 %v5189, %v5215
  %v5224 = vmul.f32 %v5216, 1.442695
  %v5225 = vpow.pop %v5224
  %v5226 = vmul.f32 %v5217, 1.442695
  %v5227 = vpow.pop %v5226
  %v5228 = vmul.f32 %v5218, 1.442695
  %v5229 = vpow.pop %v5228
  %v5230 = vmul.f32 %v5219, 1.442695
  %v5231 = vpow.pop %v5230
  %v5232 = vmul.f32 %v5220, 1.442695
  %v5233 = vpow.pop %v5232
  %v5234 = vmul.f32 %v5221, 1.442695
  %v5235 = vpow.pop %v5234
  %v5236 = vmul.f32 %v5222, 1.442695
  %v5237 = vpow.pop %v5236
  %v5238 = vmul.f32 %v5223, 1.442695
  %v5239 = vpow.pop %v5238
  %v5240 = vsel %vm609, %v5225, 0.0
  %5241 = vadd.xlane.f32.xlu0 %v5240
  %v5242 = vpop.xlane.xlu0 %5241
  %v5243 = vsel %vm609, %v5227, 0.0
  %5244 = vadd.xlane.f32.xlu0 %v5243
  %v5245 = vpop.xlane.xlu0 %5244
  %v5246 = vsel %vm609, %v5229, 0.0
  %5247 = vadd.xlane.f32.xlu0 %v5246
  %v5248 = vpop.xlane.xlu0 %5247
  %v5249 = vsel %vm609, %v5231, 0.0
  %5250 = vadd.xlane.f32.xlu0 %v5249
  %v5251 = vpop.xlane.xlu0 %5250
  %v5252 = vsel %vm609, %v5233, 0.0
  %5253 = vadd.xlane.f32.xlu0 %v5252
  %v5254 = vpop.xlane.xlu0 %5253
  %v5255 = vsel %vm609, %v5235, 0.0
  %5256 = vadd.xlane.f32.xlu0 %v5255
  %v5257 = vpop.xlane.xlu0 %5256
  %v5258 = vsel %vm609, %v5237, 0.0
  %5259 = vadd.xlane.f32.xlu0 %v5258
  %v5260 = vpop.xlane.xlu0 %5259
  %v5261 = vsel %vm609, %v5239, 0.0
  %5262 = vadd.xlane.f32.xlu0 %v5261
  %v5263 = vpop.xlane.xlu0 %5262
  %v5264 = vrcp.pop %v5242
  %v5265 = vmul.f32 1.0, %v5264
  %v5266 = vrcp.pop %v5245
  %v5267 = vmul.f32 1.0, %v5266
  %v5268 = vrcp.pop %v5248
  %v5269 = vmul.f32 1.0, %v5268
  %v5270 = vrcp.pop %v5251
  %v5271 = vmul.f32 1.0, %v5270
  %v5272 = vrcp.pop %v5254
  %v5273 = vmul.f32 1.0, %v5272
  %v5274 = vrcp.pop %v5257
  %v5275 = vmul.f32 1.0, %v5274
  %v5276 = vrcp.pop %v5260
  %v5277 = vmul.f32 1.0, %v5276
  %v5278 = vrcp.pop %v5263
  %v5279 = vmul.f32 1.0, %v5278
  %v5280 = vmul.f32 %v5225, %v5265
  %v5281 = vmul.f32 %v5227, %v5267
  %v5282 = vmul.f32 %v5229, %v5269
  %v5283 = vmul.f32 %v5231, %v5271
  %v5284 = vmul.f32 %v5233, %v5273
  %v5285 = vmul.f32 %v5235, %v5275
  %v5286 = vmul.f32 %v5237, %v5277
  %v5287 = vmul.f32 %v5239, %v5279
  %5288 = vrot.lane.b32.xlu0 %v417, 40
  %v5289 = vpop.permute.xlu0 %5288
  %5290 = vrot.lane.b32.xlu0 %v422, 40
  %v5291 = vpop.permute.xlu0 %5290
  %5292 = vrot.lane.b32.xlu0 %v427, 40
  %v5293 = vpop.permute.xlu0 %5292
  %5294 = vrot.lane.b32.xlu0 %v432, 40
  %v5295 = vpop.permute.xlu0 %5294
  %5296 = vrot.lane.b32.xlu0 %v437, 40
  %v5297 = vpop.permute.xlu0 %5296
  %5298 = vrot.lane.b32.xlu0 %v442, 40
  %v5299 = vpop.permute.xlu0 %5298
  %5300 = vrot.lane.b32.xlu0 %v447, 40
  %v5301 = vpop.permute.xlu0 %5300
  %5302 = vrot.lane.b32.xlu0 %v452, 40
  %v5303 = vpop.permute.xlu0 %5302
  %v5313 = vsel %vm609, %v5280, 0
  %v5316 = vsel %vm609, %v5281, 0
  %v5319 = vsel %vm609, %v5282, 0
  %v5322 = vsel %vm609, %v5283, 0
  %v5325 = vsel %vm609, %v5284, 0
  %v5328 = vsel %vm609, %v5285, 0
  %v5331 = vsel %vm609, %v5286, 0
  %v5334 = vsel %vm609, %v5287, 0
  %5336 = vmatprep.subr.mxu0 0.0
  %5337 = vmatpush1.msra.mxu0 %v5289
  %5338 = vmatprep.subr.mxu0 0.0
  %5339 = vmatpush1.msra.mxu0 %v5291
  %5340 = vmatprep.subr.mxu0 0.0
  %5341 = vmatpush1.msra.mxu0 %v5293
  %5342 = vmatprep.subr.mxu0 0.0
  %5343 = vmatpush1.msra.mxu0 %v5295
  %5344 = vmatprep.subr.mxu0 0.0
  %5345 = vmatpush1.msra.mxu0 %v5297
  %5346 = vmatprep.subr.mxu0 0.0
  %5347 = vmatpush1.msra.mxu0 %v5299
  %5348 = vmatprep.subr.mxu0 0.0
  %5349 = vmatpush1.msra.mxu0 %v5301
  %5350 = vmatprep.subr.mxu0 0.0
  %5351 = vmatpush1.msra.mxu0 %v5303
  %5352 = vmatprep.subr.mxu0 0.0
  %5353 = vmatpush1.msra.mxu0 0.0
  %5354 = vmatprep.subr.mxu0 0.0
  %5355 = vmatpush1.msra.mxu0 0.0
  %5356 = vmatprep.subr.mxu0 0.0
  %5357 = vmatpush1.msra.mxu0 0.0
  %5358 = vmatprep.subr.mxu0 0.0
  %5359 = vmatpush1.msra.mxu0 0.0
  %5360 = vmatprep.subr.mxu0 0.0
  %5361 = vmatpush1.msra.mxu0 0.0
  %5362 = vmatprep.subr.mxu0 0.0
  %5363 = vmatpush1.msra.mxu0 0.0
  %5364 = vmatprep.subr.mxu0 0.0
  %5365 = vmatpush1.msra.mxu0 0.0
  %5366 = vmatprep.subr.mxu0 0.0
  %5367 = vmatpush1.msra.mxu0 0.0
  %5368 = vmatprep.subr.mxu0 0.0
  %5369 = vmatpush1.msra.mxu0 0.0
  %5370 = vmatprep.subr.mxu0 0.0
  %5371 = vmatpush1.msra.mxu0 0.0
  %5372 = vmatprep.subr.mxu0 0.0
  %5373 = vmatpush1.msra.mxu0 0.0
  %5374 = vmatprep.subr.mxu0 0.0
  %5375 = vmatpush1.msra.mxu0 0.0
  %5376 = vmatprep.subr.mxu0 0.0
  %5377 = vmatpush1.msra.mxu0 0.0
  %5378 = vmatprep.subr.mxu0 0.0
  %5379 = vmatpush1.msra.mxu0 0.0
  %5380 = vmatprep.subr.mxu0 0.0
  %5381 = vmatpush1.msra.mxu0 0.0
  %5382 = vmatprep.subr.mxu0 0.0
  %5383 = vmatpush1.msra.mxu0 0.0
  %5384 = vmatprep.subr.mxu0 0.0
  %5385 = vmatpush1.msra.mxu0 0.0
  %5386 = vmatprep.subr.mxu0 0.0
  %5387 = vmatpush1.msra.mxu0 0.0
  %5388 = vmatprep.subr.mxu0 0.0
  %5389 = vmatpush1.msra.mxu0 0.0
  %5390 = vmatprep.subr.mxu0 0.0
  %5391 = vmatpush1.msra.mxu0 0.0
  %5392 = vmatprep.subr.mxu0 0.0
  %5393 = vmatpush1.msra.mxu0 0.0
  %5394 = vmatprep.subr.mxu0 0.0
  %5395 = vmatpush1.msra.mxu0 0.0
  %5396 = vmatprep.subr.mxu0 0.0
  %5397 = vmatpush1.msra.mxu0 0.0
  %5398 = vmatprep.subr.mxu0 0.0
  %5399 = vmatpush1.msra.mxu0 0.0
  %5400 = vmatprep.mubr.f32.mxu0 0.0
  %5401 = vmatmul.mubr.f32.gmra.mrb[0].mxu0 %v5313
  %v5402 = vpop.f32.mrb[0].mxu0
  %v5403 = vadd.f32 0.0, %v5402
  %v5404 = vpop.f32.mrb[0].mxu0
  %5405 = vmatprep.mubr.f32.mxu0 0.0
  %5406 = vmatmul.mubr.f32.gmra.mrb[0].mxu0 %v5316
  %v5407 = vpop.f32.mrb[0].mxu0
  %v5408 = vadd.f32 0.0, %v5407
  %v5409 = vpop.f32.mrb[0].mxu0
  %5410 = vmatprep.mubr.f32.mxu0 0.0
  %5411 = vmatmul.mubr.f32.gmra.mrb[0].mxu0 %v5319
  %v5412 = vpop.f32.mrb[0].mxu0
  %v5413 = vadd.f32 0.0, %v5412
  %v5414 = vpop.f32.mrb[0].mxu0
  %5415 = vmatprep.mubr.f32.mxu0 0.0
  %5416 = vmatmul.mubr.f32.gmra.mrb[0].mxu0 %v5322
  %v5417 = vpop.f32.mrb[0].mxu0
  %v5418 = vadd.f32 0.0, %v5417
  %v5419 = vpop.f32.mrb[0].mxu0
  %5420 = vmatprep.mubr.f32.mxu0 0.0
  %5421 = vmatmul.mubr.f32.gmra.mrb[0].mxu0 %v5325
  %v5422 = vpop.f32.mrb[0].mxu0
  %v5423 = vadd.f32 0.0, %v5422
  %v5424 = vpop.f32.mrb[0].mxu0
  %5425 = vmatprep.mubr.f32.mxu0 0.0
  %5426 = vmatmul.mubr.f32.gmra.mrb[0].mxu0 %v5328
  %v5427 = vpop.f32.mrb[0].mxu0
  %v5428 = vadd.f32 0.0, %v5427
  %v5429 = vpop.f32.mrb[0].mxu0
  %5430 = vmatprep.mubr.f32.mxu0 0.0
  %5431 = vmatmul.mubr.f32.gmra.mrb[0].mxu0 %v5331
  %v5432 = vpop.f32.mrb[0].mxu0
  %v5433 = vadd.f32 0.0, %v5432
  %v5434 = vpop.f32.mrb[0].mxu0
  %5435 = vmatprep.mubr.f32.mxu0 0.0
  %5436 = vmatmul.mubr.f32.gmra.mrb[0].mxu0 %v5334
  %v5437 = vpop.f32.mrb[0].mxu0
  %v5438 = vadd.f32 0.0, %v5437
  %v5439 = vpop.f32.mrb[0].mxu0
  %5440 = vdwg.mxu0
  %5449 = vrot.lane.b32.xlu0 %v1223, 8
  %v5450 = vpop.permute.xlu0 %5449
  %5451 = vrot.lane.b32.xlu0 %v1228, 8
  %v5452 = vpop.permute.xlu0 %5451
  %5453 = vrot.lane.b32.xlu0 %v1233, 8
  %v5454 = vpop.permute.xlu0 %5453
  %5455 = vrot.lane.b32.xlu0 %v1238, 8
  %v5456 = vpop.permute.xlu0 %5455
  %5457 = vrot.lane.b32.xlu0 %v1243, 8
  %v5458 = vpop.permute.xlu0 %5457
  %5459 = vrot.lane.b32.xlu0 %v1248, 8
  %v5460 = vpop.permute.xlu0 %5459
  %5461 = vrot.lane.b32.xlu0 %v1253, 8
  %v5462 = vpop.permute.xlu0 %5461
  %5463 = vrot.lane.b32.xlu0 %v1258, 8
  %v5464 = vpop.permute.xlu0 %5463
  %5481 = vrot.lane.b32.xlu0 %v1641, 16
  %v5482 = vpop.permute.xlu0 %5481
  %5483 = vrot.lane.b32.xlu0 %v1646, 16
  %v5484 = vpop.permute.xlu0 %5483
  %5485 = vrot.lane.b32.xlu0 %v1651, 16
  %v5486 = vpop.permute.xlu0 %5485
  %5487 = vrot.lane.b32.xlu0 %v1656, 16
  %v5488 = vpop.permute.xlu0 %5487
  %5489 = vrot.lane.b32.xlu0 %v1661, 16
  %v5490 = vpop.permute.xlu0 %5489
  %5491 = vrot.lane.b32.xlu0 %v1666, 16
  %v5492 = vpop.permute.xlu0 %5491
  %5493 = vrot.lane.b32.xlu0 %v1671, 16
  %v5494 = vpop.permute.xlu0 %5493
  %5495 = vrot.lane.b32.xlu0 %v1676, 16
  %v5496 = vpop.permute.xlu0 %5495
  %5513 = vrot.lane.b32.xlu0 %v2059, 24
  %v5514 = vpop.permute.xlu0 %5513
  %5515 = vrot.lane.b32.xlu0 %v2064, 24
  %v5516 = vpop.permute.xlu0 %5515
  %5517 = vrot.lane.b32.xlu0 %v2069, 24
  %v5518 = vpop.permute.xlu0 %5517
  %5519 = vrot.lane.b32.xlu0 %v2074, 24
  %v5520 = vpop.permute.xlu0 %5519
  %5521 = vrot.lane.b32.xlu0 %v2079, 24
  %v5522 = vpop.permute.xlu0 %5521
  %5523 = vrot.lane.b32.xlu0 %v2084, 24
  %v5524 = vpop.permute.xlu0 %5523
  %5525 = vrot.lane.b32.xlu0 %v2089, 24
  %v5526 = vpop.permute.xlu0 %5525
  %5527 = vrot.lane.b32.xlu0 %v2094, 24
  %v5528 = vpop.permute.xlu0 %5527
  %5545 = vrot.lane.b32.xlu0 %v2477, 32
  %v5546 = vpop.permute.xlu0 %5545
  %5547 = vrot.lane.b32.xlu0 %v2482, 32
  %v5548 = vpop.permute.xlu0 %5547
  %5549 = vrot.lane.b32.xlu0 %v2487, 32
  %v5550 = vpop.permute.xlu0 %5549
  %5551 = vrot.lane.b32.xlu0 %v2492, 32
  %v5552 = vpop.permute.xlu0 %5551
  %5553 = vrot.lane.b32.xlu0 %v2497, 32
  %v5554 = vpop.permute.xlu0 %5553
  %5555 = vrot.lane.b32.xlu0 %v2502, 32
  %v5556 = vpop.permute.xlu0 %5555
  %5557 = vrot.lane.b32.xlu0 %v2507, 32
  %v5558 = vpop.permute.xlu0 %5557
  %5559 = vrot.lane.b32.xlu0 %v2512, 32
  %v5560 = vpop.permute.xlu0 %5559
  %5577 = vrot.lane.b32.xlu0 %v2895, 40
  %v5578 = vpop.permute.xlu0 %5577
  %5579 = vrot.lane.b32.xlu0 %v2900, 40
  %v5580 = vpop.permute.xlu0 %5579
  %5581 = vrot.lane.b32.xlu0 %v2905, 40
  %v5582 = vpop.permute.xlu0 %5581
  %5583 = vrot.lane.b32.xlu0 %v2910, 40
  %v5584 = vpop.permute.xlu0 %5583
  %5585 = vrot.lane.b32.xlu0 %v2915, 40
  %v5586 = vpop.permute.xlu0 %5585
  %5587 = vrot.lane.b32.xlu0 %v2920, 40
  %v5588 = vpop.permute.xlu0 %5587
  %5589 = vrot.lane.b32.xlu0 %v2925, 40
  %v5590 = vpop.permute.xlu0 %5589
  %5591 = vrot.lane.b32.xlu0 %v2930, 40
  %v5592 = vpop.permute.xlu0 %5591
  %5609 = vrot.lane.b32.xlu0 %v3313, 48
  %v5610 = vpop.permute.xlu0 %5609
  %5611 = vrot.lane.b32.xlu0 %v3318, 48
  %v5612 = vpop.permute.xlu0 %5611
  %5613 = vrot.lane.b32.xlu0 %v3323, 48
  %v5614 = vpop.permute.xlu0 %5613
  %5615 = vrot.lane.b32.xlu0 %v3328, 48
  %v5616 = vpop.permute.xlu0 %5615
  %5617 = vrot.lane.b32.xlu0 %v3333, 48
  %v5618 = vpop.permute.xlu0 %5617
  %5619 = vrot.lane.b32.xlu0 %v3338, 48
  %v5620 = vpop.permute.xlu0 %5619
  %5621 = vrot.lane.b32.xlu0 %v3343, 48
  %v5622 = vpop.permute.xlu0 %5621
  %5623 = vrot.lane.b32.xlu0 %v3348, 48
  %v5624 = vpop.permute.xlu0 %5623
  %5641 = vrot.lane.b32.xlu0 %v3731, 56
  %v5642 = vpop.permute.xlu0 %5641
  %5643 = vrot.lane.b32.xlu0 %v3736, 56
  %v5644 = vpop.permute.xlu0 %5643
  %5645 = vrot.lane.b32.xlu0 %v3741, 56
  %v5646 = vpop.permute.xlu0 %5645
  %5647 = vrot.lane.b32.xlu0 %v3746, 56
  %v5648 = vpop.permute.xlu0 %5647
  %5649 = vrot.lane.b32.xlu0 %v3751, 56
  %v5650 = vpop.permute.xlu0 %5649
  %5651 = vrot.lane.b32.xlu0 %v3756, 56
  %v5652 = vpop.permute.xlu0 %5651
  %5653 = vrot.lane.b32.xlu0 %v3761, 56
  %v5654 = vpop.permute.xlu0 %5653
  %5655 = vrot.lane.b32.xlu0 %v3766, 56
  %v5656 = vpop.permute.xlu0 %5655
  %5673 = vrot.lane.b32.xlu0 %v4149, 64
  %v5674 = vpop.permute.xlu0 %5673
  %5675 = vrot.lane.b32.xlu0 %v4154, 64
  %v5676 = vpop.permute.xlu0 %5675
  %5677 = vrot.lane.b32.xlu0 %v4159, 64
  %v5678 = vpop.permute.xlu0 %5677
  %5679 = vrot.lane.b32.xlu0 %v4164, 64
  %v5680 = vpop.permute.xlu0 %5679
  %5681 = vrot.lane.b32.xlu0 %v4169, 64
  %v5682 = vpop.permute.xlu0 %5681
  %5683 = vrot.lane.b32.xlu0 %v4174, 64
  %v5684 = vpop.permute.xlu0 %5683
  %5685 = vrot.lane.b32.xlu0 %v4179, 64
  %v5686 = vpop.permute.xlu0 %5685
  %5687 = vrot.lane.b32.xlu0 %v4184, 64
  %v5688 = vpop.permute.xlu0 %5687
  %5705 = vrot.lane.b32.xlu0 %v4567, 72
  %v5706 = vpop.permute.xlu0 %5705
  %5707 = vrot.lane.b32.xlu0 %v4572, 72
  %v5708 = vpop.permute.xlu0 %5707
  %5709 = vrot.lane.b32.xlu0 %v4577, 72
  %v5710 = vpop.permute.xlu0 %5709
  %5711 = vrot.lane.b32.xlu0 %v4582, 72
  %v5712 = vpop.permute.xlu0 %5711
  %5713 = vrot.lane.b32.xlu0 %v4587, 72
  %v5714 = vpop.permute.xlu0 %5713
  %5715 = vrot.lane.b32.xlu0 %v4592, 72
  %v5716 = vpop.permute.xlu0 %5715
  %5717 = vrot.lane.b32.xlu0 %v4597, 72
  %v5718 = vpop.permute.xlu0 %5717
  %5719 = vrot.lane.b32.xlu0 %v4602, 72
  %v5720 = vpop.permute.xlu0 %5719
  %5737 = vrot.lane.b32.xlu0 %v4985, 80
  %v5738 = vpop.permute.xlu0 %5737
  %5739 = vrot.lane.b32.xlu0 %v4990, 80
  %v5740 = vpop.permute.xlu0 %5739
  %5741 = vrot.lane.b32.xlu0 %v4995, 80
  %v5742 = vpop.permute.xlu0 %5741
  %5743 = vrot.lane.b32.xlu0 %v5000, 80
  %v5744 = vpop.permute.xlu0 %5743
  %5745 = vrot.lane.b32.xlu0 %v5005, 80
  %v5746 = vpop.permute.xlu0 %5745
  %5747 = vrot.lane.b32.xlu0 %v5010, 80
  %v5748 = vpop.permute.xlu0 %5747
  %5749 = vrot.lane.b32.xlu0 %v5015, 80
  %v5750 = vpop.permute.xlu0 %5749
  %5751 = vrot.lane.b32.xlu0 %v5020, 80
  %v5752 = vpop.permute.xlu0 %5751
  %5769 = vrot.lane.b32.xlu0 %v5403, 88
  %v5770 = vpop.permute.xlu0 %5769
  %5771 = vrot.lane.b32.xlu0 %v5408, 88
  %v5772 = vpop.permute.xlu0 %5771
  %5773 = vrot.lane.b32.xlu0 %v5413, 88
  %v5774 = vpop.permute.xlu0 %5773
  %5775 = vrot.lane.b32.xlu0 %v5418, 88
  %v5776 = vpop.permute.xlu0 %5775
  %5777 = vrot.lane.b32.xlu0 %v5423, 88
  %v5778 = vpop.permute.xlu0 %5777
  %5779 = vrot.lane.b32.xlu0 %v5428, 88
  %v5780 = vpop.permute.xlu0 %5779
  %5781 = vrot.lane.b32.xlu0 %v5433, 88
  %v5782 = vpop.permute.xlu0 %5781
  %5783 = vrot.lane.b32.xlu0 %v5438, 88
  %v5784 = vpop.permute.xlu0 %5783
  %v5793 = vsel %vm455, %v797, %v5450
  %v5794 = vsel %vm455, %v802, %v5452
  %v5795 = vsel %vm455, %v807, %v5454
  %v5796 = vsel %vm455, %v812, %v5456
  %v5797 = vsel %vm455, %v817, %v5458
  %v5798 = vsel %vm455, %v822, %v5460
  %v5799 = vsel %vm455, %v827, %v5462
  %v5800 = vsel %vm455, %v832, %v5464
  %vm5801 = vcmask 130048
  %v5802 = vsel %vm5801, %v5793, %v5482
  %v5803 = vsel %vm5801, %v5794, %v5484
  %v5804 = vsel %vm5801, %v5795, %v5486
  %v5805 = vsel %vm5801, %v5796, %v5488
  %v5806 = vsel %vm5801, %v5797, %v5490
  %v5807 = vsel %vm5801, %v5798, %v5492
  %v5808 = vsel %vm5801, %v5799, %v5494
  %v5809 = vsel %vm5801, %v5800, %v5496
  %vm5810 = vcmask 195584
  %v5811 = vsel %vm5810, %v5802, %v5514
  %v5812 = vsel %vm5810, %v5803, %v5516
  %v5813 = vsel %vm5810, %v5804, %v5518
  %v5814 = vsel %vm5810, %v5805, %v5520
  %v5815 = vsel %vm5810, %v5806, %v5522
  %v5816 = vsel %vm5810, %v5807, %v5524
  %v5817 = vsel %vm5810, %v5808, %v5526
  %v5818 = vsel %vm5810, %v5809, %v5528
  %v5819 = vsel %vm97, %v5811, %v5546
  %v5820 = vsel %vm97, %v5812, %v5548
  %v5821 = vsel %vm97, %v5813, %v5550
  %v5822 = vsel %vm97, %v5814, %v5552
  %v5823 = vsel %vm97, %v5815, %v5554
  %v5824 = vsel %vm97, %v5816, %v5556
  %v5825 = vsel %vm97, %v5817, %v5558
  %v5826 = vsel %vm97, %v5818, %v5560
  %vm5827 = vcmask 326656
  %v5828 = vsel %vm5827, %v5819, %v5578
  %v5829 = vsel %vm5827, %v5820, %v5580
  %v5830 = vsel %vm5827, %v5821, %v5582
  %v5831 = vsel %vm5827, %v5822, %v5584
  %v5832 = vsel %vm5827, %v5823, %v5586
  %v5833 = vsel %vm5827, %v5824, %v5588
  %v5834 = vsel %vm5827, %v5825, %v5590
  %v5835 = vsel %vm5827, %v5826, %v5592
  %vm5836 = vcmask 392192
  %v5837 = vsel %vm5836, %v5828, %v5610
  %v5838 = vsel %vm5836, %v5829, %v5612
  %v5839 = vsel %vm5836, %v5830, %v5614
  %v5840 = vsel %vm5836, %v5831, %v5616
  %v5841 = vsel %vm5836, %v5832, %v5618
  %v5842 = vsel %vm5836, %v5833, %v5620
  %v5843 = vsel %vm5836, %v5834, %v5622
  %v5844 = vsel %vm5836, %v5835, %v5624
  %vm5845 = vcmask 457728
  %v5846 = vsel %vm5845, %v5837, %v5642
  %v5847 = vsel %vm5845, %v5838, %v5644
  %v5848 = vsel %vm5845, %v5839, %v5646
  %v5849 = vsel %vm5845, %v5840, %v5648
  %v5850 = vsel %vm5845, %v5841, %v5650
  %v5851 = vsel %vm5845, %v5842, %v5652
  %v5852 = vsel %vm5845, %v5843, %v5654
  %v5853 = vsel %vm5845, %v5844, %v5656
  %v5854 = vsel %vm609, %v5846, %v5674
  %v5855 = vsel %vm609, %v5847, %v5676
  %v5856 = vsel %vm609, %v5848, %v5678
  %v5857 = vsel %vm609, %v5849, %v5680
  %v5858 = vsel %vm609, %v5850, %v5682
  %v5859 = vsel %vm609, %v5851, %v5684
  %v5860 = vsel %vm609, %v5852, %v5686
  %v5861 = vsel %vm609, %v5853, %v5688
  %vm5862 = vcmask 588800
  %v5863 = vsel %vm5862, %v5854, %v5706
  %v5864 = vsel %vm5862, %v5855, %v5708
  %v5865 = vsel %vm5862, %v5856, %v5710
  %v5866 = vsel %vm5862, %v5857, %v5712
  %v5867 = vsel %vm5862, %v5858, %v5714
  %v5868 = vsel %vm5862, %v5859, %v5716
  %v5869 = vsel %vm5862, %v5860, %v5718
  %v5870 = vsel %vm5862, %v5861, %v5720
  %vm5871 = vcmask 654336
  %v5872 = vsel %vm5871, %v5863, %v5738
  %v5873 = vsel %vm5871, %v5864, %v5740
  %v5874 = vsel %vm5871, %v5865, %v5742
  %v5875 = vsel %vm5871, %v5866, %v5744
  %v5876 = vsel %vm5871, %v5867, %v5746
  %v5877 = vsel %vm5871, %v5868, %v5748
  %v5878 = vsel %vm5871, %v5869, %v5750
  %v5879 = vsel %vm5871, %v5870, %v5752
  %vm5880 = vcmask 719872
  %v5881 = vsel %vm5880, %v5872, %v5770
  %v5882 = vsel %vm5880, %v5873, %v5772
  %v5883 = vsel %vm5880, %v5874, %v5774
  %v5884 = vsel %vm5880, %v5875, %v5776
  %v5885 = vsel %vm5880, %v5876, %v5778
  %v5886 = vsel %vm5880, %v5877, %v5780
  %v5887 = vsel %vm5880, %v5878, %v5782
  %v5888 = vsel %vm5880, %v5879, %v5784
  %v5889 = vld [vmem:[%s3 + $0x60] sm:$0xff]
  %v5890 = vld [vmem:[%s3 + $0x68] sm:$0xff]
  %v5891 = vld [vmem:[%s3 + $0x70] sm:$0xff]
  %v5892 = vld [vmem:[%s3 + $0x78] sm:$0xff]
  %v5893 = vld [vmem:[%s3 + $0x80] sm:$0xff]
  %v5894 = vld [vmem:[%s3 + $0x88] sm:$0xff]
  %v5895 = vld [vmem:[%s3 + $0x90] sm:$0xff]
  %v5896 = vld [vmem:[%s3 + $0x98] sm:$0xff]
  %v5897 = vld [vmem:[%s3 + $0xa0] sm:$0xff]
  %v5898 = vld [vmem:[%s3 + $0xa8] sm:$0xff]
  %v5899 = vld [vmem:[%s3 + $0xb0] sm:$0xff]
  %v5900 = vld [vmem:[%s3 + $0xb8] sm:$0xff]
  %v5901 = vld [vmem:[%s6 + $0x3] sm:$0x1]
  %v5902 = vlaneseq
  %v5903 = vshrl.u32 %v5902, 7
  %v5904 = vsub.s32 0, %v5903
  %v5905 = vrot.slane %v5901, %v5904
  %vm5906 = vcmask 785408
  %v5908 = vsel %vm5906, %v5881, 0
  %v5911 = vsel %vm5906, %v5882, 0
  %v5914 = vsel %vm5906, %v5883, 0
  %v5917 = vsel %vm5906, %v5884, 0
  %v5920 = vsel %vm5906, %v5885, 0
  %v5923 = vsel %vm5906, %v5886, 0
  %v5926 = vsel %vm5906, %v5887, 0
  %v5929 = vsel %vm5906, %v5888, 0
  %5931 = vmatprep.subr.mxu0 0.0
  %5932 = vmatpush1.msra.mxu0 %v5889
  %5933 = vmatprep.subr.mxu0 0.0
  %5934 = vmatpush1.msra.mxu0 %v5890
  %5935 = vmatprep.subr.mxu0 0.0
  %5936 = vmatpush1.msra.mxu0 %v5891
  %5937 = vmatprep.subr.mxu0 0.0
  %5938 = vmatpush1.msra.mxu0 %v5892
  %5939 = vmatprep.subr.mxu0 0.0
  %5940 = vmatpush1.msra.mxu0 %v5893
  %5941 = vmatprep.subr.mxu0 0.0
  %5942 = vmatpush1.msra.mxu0 %v5894
  %5943 = vmatprep.subr.mxu0 0.0
  %5944 = vmatpush1.msra.mxu0 %v5895
  %5945 = vmatprep.subr.mxu0 0.0
  %5946 = vmatpush1.msra.mxu0 %v5896
  %5947 = vmatprep.subr.mxu0 0.0
  %5948 = vmatpush1.msra.mxu0 %v5897
  %5949 = vmatprep.subr.mxu0 0.0
  %5950 = vmatpush1.msra.mxu0 %v5898
  %5951 = vmatprep.subr.mxu0 0.0
  %5952 = vmatpush1.msra.mxu0 %v5899
  %5953 = vmatprep.subr.mxu0 0.0
  %5954 = vmatpush1.msra.mxu0 %v5900
  %5955 = vmatprep.subr.mxu0 0.0
  %5956 = vmatpush1.msra.mxu0 0.0
  %5957 = vmatprep.subr.mxu0 0.0
  %5958 = vmatpush1.msra.mxu0 0.0
  %5959 = vmatprep.subr.mxu0 0.0
  %5960 = vmatpush1.msra.mxu0 0.0
  %5961 = vmatprep.subr.mxu0 0.0
  %5962 = vmatpush1.msra.mxu0 0.0
  %5963 = vmatprep.subr.mxu0 0.0
  %5964 = vmatpush1.msra.mxu0 0.0
  %5965 = vmatprep.subr.mxu0 0.0
  %5966 = vmatpush1.msra.mxu0 0.0
  %5967 = vmatprep.subr.mxu0 0.0
  %5968 = vmatpush1.msra.mxu0 0.0
  %5969 = vmatprep.subr.mxu0 0.0
  %5970 = vmatpush1.msra.mxu0 0.0
  %5971 = vmatprep.subr.mxu0 0.0
  %5972 = vmatpush1.msra.mxu0 0.0
  %5973 = vmatprep.subr.mxu0 0.0
  %5974 = vmatpush1.msra.mxu0 0.0
  %5975 = vmatprep.subr.mxu0 0.0
  %5976 = vmatpush1.msra.mxu0 0.0
  %5977 = vmatprep.subr.mxu0 0.0
  %5978 = vmatpush1.msra.mxu0 0.0
  %5979 = vmatprep.subr.mxu0 0.0
  %5980 = vmatpush1.msra.mxu0 0.0
  %5981 = vmatprep.subr.mxu0 0.0
  %5982 = vmatpush1.msra.mxu0 0.0
  %5983 = vmatprep.subr.mxu0 0.0
  %5984 = vmatpush1.msra.mxu0 0.0
  %5985 = vmatprep.subr.mxu0 0.0
  %5986 = vmatpush1.msra.mxu0 0.0
  %5987 = vmatprep.subr.mxu0 0.0
  %5988 = vmatpush1.msra.mxu0 0.0
  %5989 = vmatprep.subr.mxu0 0.0
  %5990 = vmatpush1.msra.mxu0 0.0
  %5991 = vmatprep.subr.mxu0 0.0
  %5992 = vmatpush1.msra.mxu0 0.0
  %5993 = vmatprep.subr.mxu0 0.0
  %5994 = vmatpush1.msra.mxu0 0.0
  %5995 = vmatprep.mubr.f32.mxu0 0.0
  %5996 = vmatmul.mubr.f32.gmra.mrb[0].mxu0 %v5908
  %v5997 = vpop.f32.mrb[0].mxu0
  %v5998 = vadd.f32 %v5905, %v5997
  %v5999 = vpop.f32.mrb[0].mxu0
  %6000 = vmatprep.mubr.f32.mxu0 0.0
  %6001 = vmatmul.mubr.f32.gmra.mrb[0].mxu0 %v5911
  %v6002 = vpop.f32.mrb[0].mxu0
  %v6003 = vadd.f32 %v5905, %v6002
  %v6004 = vpop.f32.mrb[0].mxu0
  %6005 = vmatprep.mubr.f32.mxu0 0.0
  %6006 = vmatmul.mubr.f32.gmra.mrb[0].mxu0 %v5914
  %v6007 = vpop.f32.mrb[0].mxu0
  %v6008 = vadd.f32 %v5905, %v6007
  %v6009 = vpop.f32.mrb[0].mxu0
  %6010 = vmatprep.mubr.f32.mxu0 0.0
  %6011 = vmatmul.mubr.f32.gmra.mrb[0].mxu0 %v5917
  %v6012 = vpop.f32.mrb[0].mxu0
  %v6013 = vadd.f32 %v5905, %v6012
  %v6014 = vpop.f32.mrb[0].mxu0
  %6015 = vmatprep.mubr.f32.mxu0 0.0
  %6016 = vmatmul.mubr.f32.gmra.mrb[0].mxu0 %v5920
  %v6017 = vpop.f32.mrb[0].mxu0
  %v6018 = vadd.f32 %v5905, %v6017
  %v6019 = vpop.f32.mrb[0].mxu0
  %6020 = vmatprep.mubr.f32.mxu0 0.0
  %6021 = vmatmul.mubr.f32.gmra.mrb[0].mxu0 %v5923
  %v6022 = vpop.f32.mrb[0].mxu0
  %v6023 = vadd.f32 %v5905, %v6022
  %v6024 = vpop.f32.mrb[0].mxu0
  %6025 = vmatprep.mubr.f32.mxu0 0.0
  %6026 = vmatmul.mubr.f32.gmra.mrb[0].mxu0 %v5926
  %v6027 = vpop.f32.mrb[0].mxu0
  %v6028 = vadd.f32 %v5905, %v6027
  %v6029 = vpop.f32.mrb[0].mxu0
  %6030 = vmatprep.mubr.f32.mxu0 0.0
  %6031 = vmatmul.mubr.f32.gmra.mrb[0].mxu0 %v5929
  %v6032 = vpop.f32.mrb[0].mxu0
  %v6033 = vadd.f32 %v5905, %v6032
  %v6034 = vpop.f32.mrb[0].mxu0
  %6035 = vdwg.mxu0
  %v6036 = vld [vmem:[%s3 + $0xc0] sm:$0xff]
  %v6037 = vld [vmem:[%s3 + $0xc8] sm:$0xff]
  %v6038 = vld [vmem:[%s3 + $0xd0] sm:$0xff]
  %v6039 = vld [vmem:[%s3 + $0xd8] sm:$0xff]
  %v6040 = vld [vmem:[%s3 + $0xe0] sm:$0xff]
  %v6041 = vld [vmem:[%s3 + $0xe8] sm:$0xff]
  %v6042 = vld [vmem:[%s3 + $0xf0] sm:$0xff]
  %v6043 = vld [vmem:[%s3 + $0xf8] sm:$0xff]
  %v6044 = vld [vmem:[%s3 + $0x100] sm:$0xff]
  %v6045 = vld [vmem:[%s3 + $0x108] sm:$0xff]
  %v6046 = vld [vmem:[%s3 + $0x110] sm:$0xff]
  %v6047 = vld [vmem:[%s3 + $0x118] sm:$0xff]
  %v6048 = vld [vmem:[%s6 + $0x4] sm:$0x1]
  %v6049 = vlaneseq
  %v6050 = vshrl.u32 %v6049, 7
  %v6051 = vsub.s32 0, %v6050
  %v6052 = vrot.slane %v6048, %v6051
  %v6054 = vsel %vm5906, %v5998, 0
  %v6057 = vsel %vm5906, %v6003, 0
  %v6060 = vsel %vm5906, %v6008, 0
  %v6063 = vsel %vm5906, %v6013, 0
  %v6066 = vsel %vm5906, %v6018, 0
  %v6069 = vsel %vm5906, %v6023, 0
  %v6072 = vsel %vm5906, %v6028, 0
  %v6075 = vsel %vm5906, %v6033, 0
  %6077 = vmatprep.subr.mxu0 0.0
  %6078 = vmatpush1.msra.mxu0 %v6036
  %6079 = vmatprep.subr.mxu0 0.0
  %6080 = vmatpush1.msra.mxu0 %v6037
  %6081 = vmatprep.subr.mxu0 0.0
  %6082 = vmatpush1.msra.mxu0 %v6038
  %6083 = vmatprep.subr.mxu0 0.0
  %6084 = vmatpush1.msra.mxu0 %v6039
  %6085 = vmatprep.subr.mxu0 0.0
  %6086 = vmatpush1.msra.mxu0 %v6040
  %6087 = vmatprep.subr.mxu0 0.0
  %6088 = vmatpush1.msra.mxu0 %v6041
  %6089 = vmatprep.subr.mxu0 0.0
  %6090 = vmatpush1.msra.mxu0 %v6042
  %6091 = vmatprep.subr.mxu0 0.0
  %6092 = vmatpush1.msra.mxu0 %v6043
  %6093 = vmatprep.subr.mxu0 0.0
  %6094 = vmatpush1.msra.mxu0 %v6044
  %6095 = vmatprep.subr.mxu0 0.0
  %6096 = vmatpush1.msra.mxu0 %v6045
  %6097 = vmatprep.subr.mxu0 0.0
  %6098 = vmatpush1.msra.mxu0 %v6046
  %6099 = vmatprep.subr.mxu0 0.0
  %6100 = vmatpush1.msra.mxu0 %v6047
  %6101 = vmatprep.subr.mxu0 0.0
  %6102 = vmatpush1.msra.mxu0 0.0
  %6103 = vmatprep.subr.mxu0 0.0
  %6104 = vmatpush1.msra.mxu0 0.0
  %6105 = vmatprep.subr.mxu0 0.0
  %6106 = vmatpush1.msra.mxu0 0.0
  %6107 = vmatprep.subr.mxu0 0.0
  %6108 = vmatpush1.msra.mxu0 0.0
  %6109 = vmatprep.subr.mxu0 0.0
  %6110 = vmatpush1.msra.mxu0 0.0
  %6111 = vmatprep.subr.mxu0 0.0
  %6112 = vmatpush1.msra.mxu0 0.0
  %6113 = vmatprep.subr.mxu0 0.0
  %6114 = vmatpush1.msra.mxu0 0.0
  %6115 = vmatprep.subr.mxu0 0.0
  %6116 = vmatpush1.msra.mxu0 0.0
  %6117 = vmatprep.subr.mxu0 0.0
  %6118 = vmatpush1.msra.mxu0 0.0
  %6119 = vmatprep.subr.mxu0 0.0
  %6120 = vmatpush1.msra.mxu0 0.0
  %6121 = vmatprep.subr.mxu0 0.0
  %6122 = vmatpush1.msra.mxu0 0.0
  %6123 = vmatprep.subr.mxu0 0.0
  %6124 = vmatpush1.msra.mxu0 0.0
  %6125 = vmatprep.subr.mxu0 0.0
  %6126 = vmatpush1.msra.mxu0 0.0
  %6127 = vmatprep.subr.mxu0 0.0
  %6128 = vmatpush1.msra.mxu0 0.0
  %6129 = vmatprep.subr.mxu0 0.0
  %6130 = vmatpush1.msra.mxu0 0.0
  %6131 = vmatprep.subr.mxu0 0.0
  %6132 = vmatpush1.msra.mxu0 0.0
  %6133 = vmatprep.subr.mxu0 0.0
  %6134 = vmatpush1.msra.mxu0 0.0
  %6135 = vmatprep.subr.mxu0 0.0
  %6136 = vmatpush1.msra.mxu0 0.0
  %6137 = vmatprep.subr.mxu0 0.0
  %6138 = vmatpush1.msra.mxu0 0.0
  %6139 = vmatprep.subr.mxu0 0.0
  %6140 = vmatpush1.msra.mxu0 0.0
  %6141 = vmatprep.mubr.f32.mxu0 0.0
  %6142 = vmatmul.mubr.f32.gmra.mrb[0].mxu0 %v6054
  %v6143 = vpop.f32.mrb[0].mxu0
  %v6144 = vadd.f32 %v6052, %v6143
  %v6145 = vpop.f32.mrb[0].mxu0
  %6146 = vmatprep.mubr.f32.mxu0 0.0
  %6147 = vmatmul.mubr.f32.gmra.mrb[0].mxu0 %v6057
  %v6148 = vpop.f32.mrb[0].mxu0
  %v6149 = vadd.f32 %v6052, %v6148
  %v6150 = vpop.f32.mrb[0].mxu0
  %6151 = vmatprep.mubr.f32.mxu0 0.0
  %6152 = vmatmul.mubr.f32.gmra.mrb[0].mxu0 %v6060
  %v6153 = vpop.f32.mrb[0].mxu0
  %v6154 = vadd.f32 %v6052, %v6153
  %v6155 = vpop.f32.mrb[0].mxu0
  %6156 = vmatprep.mubr.f32.mxu0 0.0
  %6157 = vmatmul.mubr.f32.gmra.mrb[0].mxu0 %v6063
  %v6158 = vpop.f32.mrb[0].mxu0
  %v6159 = vadd.f32 %v6052, %v6158
  %v6160 = vpop.f32.mrb[0].mxu0
  %6161 = vmatprep.mubr.f32.mxu0 0.0
  %6162 = vmatmul.mubr.f32.gmra.mrb[0].mxu0 %v6066
  %v6163 = vpop.f32.mrb[0].mxu0
  %v6164 = vadd.f32 %v6052, %v6163
  %v6165 = vpop.f32.mrb[0].mxu0
  %6166 = vmatprep.mubr.f32.mxu0 0.0
  %6167 = vmatmul.mubr.f32.gmra.mrb[0].mxu0 %v6069
  %v6168 = vpop.f32.mrb[0].mxu0
  %v6169 = vadd.f32 %v6052, %v6168
  %v6170 = vpop.f32.mrb[0].mxu0
  %6171 = vmatprep.mubr.f32.mxu0 0.0
  %6172 = vmatmul.mubr.f32.gmra.mrb[0].mxu0 %v6072
  %v6173 = vpop.f32.mrb[0].mxu0
  %v6174 = vadd.f32 %v6052, %v6173
  %v6175 = vpop.f32.mrb[0].mxu0
  %6176 = vmatprep.mubr.f32.mxu0 0.0
  %6177 = vmatmul.mubr.f32.gmra.mrb[0].mxu0 %v6075
  %v6178 = vpop.f32.mrb[0].mxu0
  %v6179 = vadd.f32 %v6052, %v6178
  %v6180 = vpop.f32.mrb[0].mxu0
  %6181 = vdwg.mxu0
  %v6182 = vtanh.pop %v6144
  %v6183 = vtanh.pop %v6149
  %v6184 = vtanh.pop %v6154
  %v6185 = vtanh.pop %v6159
  %v6186 = vtanh.pop %v6164
  %v6187 = vtanh.pop %v6169
  %v6188 = vtanh.pop %v6174
  %v6189 = vtanh.pop %v6179
  %v6190 = vld [vmem:[%s3 + $0x120] sm:$0xff]
  %v6191 = vld [vmem:[%s3 + $0x128] sm:$0xff]
  %v6192 = vld [vmem:[%s3 + $0x130] sm:$0xff]
  %v6193 = vld [vmem:[%s3 + $0x138] sm:$0xff]
  %v6194 = vld [vmem:[%s3 + $0x140] sm:$0xff]
  %v6195 = vld [vmem:[%s3 + $0x148] sm:$0xff]
  %v6196 = vld [vmem:[%s3 + $0x150] sm:$0xff]
  %v6197 = vld [vmem:[%s3 + $0x158] sm:$0xff]
  %v6198 = vld [vmem:[%s3 + $0x160] sm:$0xff]
  %v6199 = vld [vmem:[%s3 + $0x168] sm:$0xff]
  %v6200 = vld [vmem:[%s3 + $0x170] sm:$0xff]
  %v6201 = vld [vmem:[%s3 + $0x178] sm:$0xff]
  %v6202 = vld [vmem:[%s6 + $0x5] sm:$0x1]
  %v6203 = vlaneseq
  %v6204 = vshrl.u32 %v6203, 7
  %v6205 = vsub.s32 0, %v6204
  %v6206 = vrot.slane %v6202, %v6205
  %6207 = vmatprep.subr.mxu0 0.0
  %6208 = vmatpush1.msra.mxu0 %v6190
  %6209 = vmatprep.subr.mxu0 0.0
  %6210 = vmatpush1.msra.mxu0 %v6191
  %6211 = vmatprep.subr.mxu0 0.0
  %6212 = vmatpush1.msra.mxu0 %v6192
  %6213 = vmatprep.subr.mxu0 0.0
  %6214 = vmatpush1.msra.mxu0 %v6193
  %6215 = vmatprep.subr.mxu0 0.0
  %6216 = vmatpush1.msra.mxu0 %v6194
  %6217 = vmatprep.subr.mxu0 0.0
  %6218 = vmatpush1.msra.mxu0 %v6195
  %6219 = vmatprep.subr.mxu0 0.0
  %6220 = vmatpush1.msra.mxu0 %v6196
  %6221 = vmatprep.subr.mxu0 0.0
  %6222 = vmatpush1.msra.mxu0 %v6197
  %6223 = vmatprep.subr.mxu0 0.0
  %6224 = vmatpush1.msra.mxu0 %v6198
  %6225 = vmatprep.subr.mxu0 0.0
  %6226 = vmatpush1.msra.mxu0 %v6199
  %6227 = vmatprep.subr.mxu0 0.0
  %6228 = vmatpush1.msra.mxu0 %v6200
  %6229 = vmatprep.subr.mxu0 0.0
  %6230 = vmatpush1.msra.mxu0 %v6201
  %6231 = vmatprep.subr.mxu0 0.0
  %6232 = vmatpush1.msra.mxu0 0.0
  %6233 = vmatprep.subr.mxu0 0.0
  %6234 = vmatpush1.msra.mxu0 0.0
  %6235 = vmatprep.subr.mxu0 0.0
  %6236 = vmatpush1.msra.mxu0 0.0
  %6237 = vmatprep.subr.mxu0 0.0
  %6238 = vmatpush1.msra.mxu0 0.0
  %6239 = vmatprep.subr.mxu0 0.0
  %6240 = vmatpush1.msra.mxu0 0.0
  %6241 = vmatprep.subr.mxu0 0.0
  %6242 = vmatpush1.msra.mxu0 0.0
  %6243 = vmatprep.subr.mxu0 0.0
  %6244 = vmatpush1.msra.mxu0 0.0
  %6245 = vmatprep.subr.mxu0 0.0
  %6246 = vmatpush1.msra.mxu0 0.0
  %6247 = vmatprep.subr.mxu0 0.0
  %6248 = vmatpush1.msra.mxu0 0.0
  %6249 = vmatprep.subr.mxu0 0.0
  %6250 = vmatpush1.msra.mxu0 0.0
  %6251 = vmatprep.subr.mxu0 0.0
  %6252 = vmatpush1.msra.mxu0 0.0
  %6253 = vmatprep.subr.mxu0 0.0
  %6254 = vmatpush1.msra.mxu0 0.0
  %6255 = vmatprep.subr.mxu0 0.0
  %6256 = vmatpush1.msra.mxu0 0.0
  %6257 = vmatprep.subr.mxu0 0.0
  %6258 = vmatpush1.msra.mxu0 0.0
  %6259 = vmatprep.subr.mxu0 0.0
  %6260 = vmatpush1.msra.mxu0 0.0
  %6261 = vmatprep.subr.mxu0 0.0
  %6262 = vmatpush1.msra.mxu0 0.0
  %6263 = vmatprep.subr.mxu0 0.0
  %6264 = vmatpush1.msra.mxu0 0.0
  %6265 = vmatprep.subr.mxu0 0.0
  %6266 = vmatpush1.msra.mxu0 0.0
  %6267 = vmatprep.subr.mxu0 0.0
  %6268 = vmatpush1.msra.mxu0 0.0
  %6269 = vmatprep.subr.mxu0 0.0
  %6270 = vmatpush1.msra.mxu0 0.0
  %6271 = vmatprep.mubr.f32.mxu0 0.0
  %6272 = vmatmul.mubr.f32.gmra.mrb[0].mxu0 %v6054
  %v6273 = vpop.f32.mrb[0].mxu0
  %v6274 = vadd.f32 %v6206, %v6273
  %v6275 = vpop.f32.mrb[0].mxu0
  %6276 = vmatprep.mubr.f32.mxu0 0.0
  %6277 = vmatmul.mubr.f32.gmra.mrb[0].mxu0 %v6057
  %v6278 = vpop.f32.mrb[0].mxu0
  %v6279 = vadd.f32 %v6206, %v6278
  %v6280 = vpop.f32.mrb[0].mxu0
  %6281 = vmatprep.mubr.f32.mxu0 0.0
  %6282 = vmatmul.mubr.f32.gmra.mrb[0].mxu0 %v6060
  %v6283 = vpop.f32.mrb[0].mxu0
  %v6284 = vadd.f32 %v6206, %v6283
  %v6285 = vpop.f32.mrb[0].mxu0
  %6286 = vmatprep.mubr.f32.mxu0 0.0
  %6287 = vmatmul.mubr.f32.gmra.mrb[0].mxu0 %v6063
  %v6288 = vpop.f32.mrb[0].mxu0
  %v6289 = vadd.f32 %v6206, %v6288
  %v6290 = vpop.f32.mrb[0].mxu0
  %6291 = vmatprep.mubr.f32.mxu0 0.0
  %6292 = vmatmul.mubr.f32.gmra.mrb[0].mxu0 %v6066
  %v6293 = vpop.f32.mrb[0].mxu0
  %v6294 = vadd.f32 %v6206, %v6293
  %v6295 = vpop.f32.mrb[0].mxu0
  %6296 = vmatprep.mubr.f32.mxu0 0.0
  %6297 = vmatmul.mubr.f32.gmra.mrb[0].mxu0 %v6069
  %v6298 = vpop.f32.mrb[0].mxu0
  %v6299 = vadd.f32 %v6206, %v6298
  %v6300 = vpop.f32.mrb[0].mxu0
  %6301 = vmatprep.mubr.f32.mxu0 0.0
  %6302 = vmatmul.mubr.f32.gmra.mrb[0].mxu0 %v6072
  %v6303 = vpop.f32.mrb[0].mxu0
  %v6304 = vadd.f32 %v6206, %v6303
  %v6305 = vpop.f32.mrb[0].mxu0
  %6306 = vmatprep.mubr.f32.mxu0 0.0
  %6307 = vmatmul.mubr.f32.gmra.mrb[0].mxu0 %v6075
  %v6308 = vpop.f32.mrb[0].mxu0
  %v6309 = vadd.f32 %v6206, %v6308
  %v6310 = vpop.f32.mrb[0].mxu0
  %6311 = vdwg.mxu0
  %v6312 = vxor.u32 %v6274, 2147483648
  %v6313 = vxor.u32 %v6279, 2147483648
  %v6314 = vxor.u32 %v6284, 2147483648
  %v6315 = vxor.u32 %v6289, 2147483648
  %v6316 = vxor.u32 %v6294, 2147483648
  %v6317 = vxor.u32 %v6299, 2147483648
  %v6318 = vxor.u32 %v6304, 2147483648
  %v6319 = vxor.u32 %v6309, 2147483648
  %v6320 = vmul.f32 %v6312, 1.442695
  %v6321 = vpow.pop %v6320
  %v6322 = vmul.f32 %v6313, 1.442695
  %v6323 = vpow.pop %v6322
  %v6324 = vmul.f32 %v6314, 1.442695
  %v6325 = vpow.pop %v6324
  %v6326 = vmul.f32 %v6315, 1.442695
  %v6327 = vpow.pop %v6326
  %v6328 = vmul.f32 %v6316, 1.442695
  %v6329 = vpow.pop %v6328
  %v6330 = vmul.f32 %v6317, 1.442695
  %v6331 = vpow.pop %v6330
  %v6332 = vmul.f32 %v6318, 1.442695
  %v6333 = vpow.pop %v6332
  %v6334 = vmul.f32 %v6319, 1.442695
  %v6335 = vpow.pop %v6334
  %v6336 = vadd.f32 %v6321, 1.0
  %v6337 = vadd.f32 %v6323, 1.0
  %v6338 = vadd.f32 %v6325, 1.0
  %v6339 = vadd.f32 %v6327, 1.0
  %v6340 = vadd.f32 %v6329, 1.0
  %v6341 = vadd.f32 %v6331, 1.0
  %v6342 = vadd.f32 %v6333, 1.0
  %v6343 = vadd.f32 %v6335, 1.0
  %v6344 = vrcp.pop %v6336
  %v6345 = vmul.f32 1.0, %v6344
  %v6346 = vrcp.pop %v6337
  %v6347 = vmul.f32 1.0, %v6346
  %v6348 = vrcp.pop %v6338
  %v6349 = vmul.f32 1.0, %v6348
  %v6350 = vrcp.pop %v6339
  %v6351 = vmul.f32 1.0, %v6350
  %v6352 = vrcp.pop %v6340
  %v6353 = vmul.f32 1.0, %v6352
  %v6354 = vrcp.pop %v6341
  %v6355 = vmul.f32 1.0, %v6354
  %v6356 = vrcp.pop %v6342
  %v6357 = vmul.f32 1.0, %v6356
  %v6358 = vrcp.pop %v6343
  %v6359 = vmul.f32 1.0, %v6358
  %v6360 = vmul.f32 %v6182, %v6345
  %v6361 = vmul.f32 %v6183, %v6347
  %v6362 = vmul.f32 %v6184, %v6349
  %v6363 = vmul.f32 %v6185, %v6351
  %v6364 = vmul.f32 %v6186, %v6353
  %v6365 = vmul.f32 %v6187, %v6355
  %v6366 = vmul.f32 %v6188, %v6357
  %v6367 = vmul.f32 %v6189, %v6359
  %v6368 = vld [vmem:[%s4] sm:$0xff]
  %v6369 = vld [vmem:[%s4 + $0x8] sm:$0xff]
  %v6370 = vld [vmem:[%s4 + $0x10] sm:$0xff]
  %v6371 = vld [vmem:[%s4 + $0x18] sm:$0xff]
  %v6372 = vld [vmem:[%s4 + $0x20] sm:$0xff]
  %v6373 = vld [vmem:[%s4 + $0x28] sm:$0xff]
  %v6374 = vld [vmem:[%s4 + $0x30] sm:$0xff]
  %v6375 = vld [vmem:[%s4 + $0x38] sm:$0xff]
  %v6376 = vld [vmem:[%s4 + $0x40] sm:$0xff]
  %v6377 = vld [vmem:[%s4 + $0x48] sm:$0xff]
  %v6378 = vld [vmem:[%s4 + $0x50] sm:$0xff]
  %v6379 = vld [vmem:[%s4 + $0x58] sm:$0xff]
  %v6381 = vsel %vm5906, %v6360, 0
  %v6384 = vsel %vm5906, %v6361, 0
  %v6387 = vsel %vm5906, %v6362, 0
  %v6390 = vsel %vm5906, %v6363, 0
  %v6393 = vsel %vm5906, %v6364, 0
  %v6396 = vsel %vm5906, %v6365, 0
  %v6399 = vsel %vm5906, %v6366, 0
  %v6402 = vsel %vm5906, %v6367, 0
  %6404 = vmatprep.subr.mxu0 0.0
  %6405 = vmatpush1.msra.mxu0 %v6368
  %6406 = vmatprep.subr.mxu0 0.0
  %6407 = vmatpush1.msra.mxu0 %v6369
  %6408 = vmatprep.subr.mxu0 0.0
  %6409 = vmatpush1.msra.mxu0 %v6370
  %6410 = vmatprep.subr.mxu0 0.0
  %6411 = vmatpush1.msra.mxu0 %v6371
  %6412 = vmatprep.subr.mxu0 0.0
  %6413 = vmatpush1.msra.mxu0 %v6372
  %6414 = vmatprep.subr.mxu0 0.0
  %6415 = vmatpush1.msra.mxu0 %v6373
  %6416 = vmatprep.subr.mxu0 0.0
  %6417 = vmatpush1.msra.mxu0 %v6374
  %6418 = vmatprep.subr.mxu0 0.0
  %6419 = vmatpush1.msra.mxu0 %v6375
  %6420 = vmatprep.subr.mxu0 0.0
  %6421 = vmatpush1.msra.mxu0 %v6376
  %6422 = vmatprep.subr.mxu0 0.0
  %6423 = vmatpush1.msra.mxu0 %v6377
  %6424 = vmatprep.subr.mxu0 0.0
  %6425 = vmatpush1.msra.mxu0 %v6378
  %6426 = vmatprep.subr.mxu0 0.0
  %6427 = vmatpush1.msra.mxu0 %v6379
  %6428 = vmatprep.subr.mxu0 0.0
  %6429 = vmatpush1.msra.mxu0 0.0
  %6430 = vmatprep.subr.mxu0 0.0
  %6431 = vmatpush1.msra.mxu0 0.0
  %6432 = vmatprep.subr.mxu0 0.0
  %6433 = vmatpush1.msra.mxu0 0.0
  %6434 = vmatprep.subr.mxu0 0.0
  %6435 = vmatpush1.msra.mxu0 0.0
  %6436 = vmatprep.subr.mxu0 0.0
  %6437 = vmatpush1.msra.mxu0 0.0
  %6438 = vmatprep.subr.mxu0 0.0
  %6439 = vmatpush1.msra.mxu0 0.0
  %6440 = vmatprep.subr.mxu0 0.0
  %6441 = vmatpush1.msra.mxu0 0.0
  %6442 = vmatprep.subr.mxu0 0.0
  %6443 = vmatpush1.msra.mxu0 0.0
  %6444 = vmatprep.subr.mxu0 0.0
  %6445 = vmatpush1.msra.mxu0 0.0
  %6446 = vmatprep.subr.mxu0 0.0
  %6447 = vmatpush1.msra.mxu0 0.0
  %6448 = vmatprep.subr.mxu0 0.0
  %6449 = vmatpush1.msra.mxu0 0.0
  %6450 = vmatprep.subr.mxu0 0.0
  %6451 = vmatpush1.msra.mxu0 0.0
  %6452 = vmatprep.subr.mxu0 0.0
  %6453 = vmatpush1.msra.mxu0 0.0
  %6454 = vmatprep.subr.mxu0 0.0
  %6455 = vmatpush1.msra.mxu0 0.0
  %6456 = vmatprep.subr.mxu0 0.0
  %6457 = vmatpush1.msra.mxu0 0.0
  %6458 = vmatprep.subr.mxu0 0.0
  %6459 = vmatpush1.msra.mxu0 0.0
  %6460 = vmatprep.subr.mxu0 0.0
  %6461 = vmatpush1.msra.mxu0 0.0
  %6462 = vmatprep.subr.mxu0 0.0
  %6463 = vmatpush1.msra.mxu0 0.0
  %6464 = vmatprep.subr.mxu0 0.0
  %6465 = vmatpush1.msra.mxu0 0.0
  %6466 = vmatprep.subr.mxu0 0.0
  %6467 = vmatpush1.msra.mxu0 0.0
  %6468 = vmatprep.mubr.f32.mxu0 0.0
  %6469 = vmatmul.mubr.f32.gmra.mrb[0].mxu0 %v6381
  %v6470 = vpop.f32.mrb[0].mxu0
  %v6471 = vadd.f32 0.0, %v6470
  %v6472 = vpop.f32.mrb[0].mxu0
  %6473 = vmatprep.mubr.f32.mxu0 0.0
  %6474 = vmatmul.mubr.f32.gmra.mrb[0].mxu0 %v6384
  %v6475 = vpop.f32.mrb[0].mxu0
  %v6476 = vadd.f32 0.0, %v6475
  %v6477 = vpop.f32.mrb[0].mxu0
  %6478 = vmatprep.mubr.f32.mxu0 0.0
  %6479 = vmatmul.mubr.f32.gmra.mrb[0].mxu0 %v6387
  %v6480 = vpop.f32.mrb[0].mxu0
  %v6481 = vadd.f32 0.0, %v6480
  %v6482 = vpop.f32.mrb[0].mxu0
  %6483 = vmatprep.mubr.f32.mxu0 0.0
  %6484 = vmatmul.mubr.f32.gmra.mrb[0].mxu0 %v6390
  %v6485 = vpop.f32.mrb[0].mxu0
  %v6486 = vadd.f32 0.0, %v6485
  %v6487 = vpop.f32.mrb[0].mxu0
  %6488 = vmatprep.mubr.f32.mxu0 0.0
  %6489 = vmatmul.mubr.f32.gmra.mrb[0].mxu0 %v6393
  %v6490 = vpop.f32.mrb[0].mxu0
  %v6491 = vadd.f32 0.0, %v6490
  %v6492 = vpop.f32.mrb[0].mxu0
  %6493 = vmatprep.mubr.f32.mxu0 0.0
  %6494 = vmatmul.mubr.f32.gmra.mrb[0].mxu0 %v6396
  %v6495 = vpop.f32.mrb[0].mxu0
  %v6496 = vadd.f32 0.0, %v6495
  %v6497 = vpop.f32.mrb[0].mxu0
  %6498 = vmatprep.mubr.f32.mxu0 0.0
  %6499 = vmatmul.mubr.f32.gmra.mrb[0].mxu0 %v6399
  %v6500 = vpop.f32.mrb[0].mxu0
  %v6501 = vadd.f32 0.0, %v6500
  %v6502 = vpop.f32.mrb[0].mxu0
  %6503 = vmatprep.mubr.f32.mxu0 0.0
  %6504 = vmatmul.mubr.f32.gmra.mrb[0].mxu0 %v6402
  %v6505 = vpop.f32.mrb[0].mxu0
  %v6506 = vadd.f32 0.0, %v6505
  %v6507 = vpop.f32.mrb[0].mxu0
  %6508 = vdwg.mxu0
  %v6509 = vadd.f32 %v32, %v6471
  %v6510 = vadd.f32 %v33, %v6476
  %v6511 = vadd.f32 %v34, %v6481
  %v6512 = vadd.f32 %v35, %v6486
  %v6513 = vadd.f32 %v36, %v6491
  %v6514 = vadd.f32 %v37, %v6496
  %v6515 = vadd.f32 %v38, %v6501
  %v6516 = vadd.f32 %v39, %v6506
  %v6517 = vld [vmem:[%s7 + $0x7] sm:$0x1]
  %v6518 = vld [vmem:[%s7 + $0x8] sm:$0x1]
  %v6519 = vsel %vm97, %v6509, 0.0
  %6520 = vadd.xlane.f32.xlu0 %v6519
  %v6521 = vpop.xlane.xlu0 %6520
  %v6522 = vsel %vm97, %v6510, 0.0
  %6523 = vadd.xlane.f32.xlu0 %v6522
  %v6524 = vpop.xlane.xlu0 %6523
  %v6525 = vsel %vm97, %v6511, 0.0
  %6526 = vadd.xlane.f32.xlu0 %v6525
  %v6527 = vpop.xlane.xlu0 %6526
  %v6528 = vsel %vm97, %v6512, 0.0
  %6529 = vadd.xlane.f32.xlu0 %v6528
  %v6530 = vpop.xlane.xlu0 %6529
  %v6531 = vsel %vm97, %v6513, 0.0
  %6532 = vadd.xlane.f32.xlu0 %v6531
  %v6533 = vpop.xlane.xlu0 %6532
  %v6534 = vsel %vm97, %v6514, 0.0
  %6535 = vadd.xlane.f32.xlu0 %v6534
  %v6536 = vpop.xlane.xlu0 %6535
  %v6537 = vsel %vm97, %v6515, 0.0
  %6538 = vadd.xlane.f32.xlu0 %v6537
  %v6539 = vpop.xlane.xlu0 %6538
  %v6540 = vsel %vm97, %v6516, 0.0
  %6541 = vadd.xlane.f32.xlu0 %v6540
  %v6542 = vpop.xlane.xlu0 %6541
  %v6543 = vrcp.pop 32.0
  %v6544 = vmul.f32 %v6521, %v6543
  %v6545 = vmul.f32 %v6524, %v6543
  %v6546 = vmul.f32 %v6527, %v6543
  %v6547 = vmul.f32 %v6530, %v6543
  %v6548 = vmul.f32 %v6533, %v6543
  %v6549 = vmul.f32 %v6536, %v6543
  %v6550 = vmul.f32 %v6539, %v6543
  %v6551 = vmul.f32 %v6542, %v6543
  %v6552 = vsub.f32 %v6509, %v6544
  %v6553 = vsub.f32 %v6510, %v6545
  %v6554 = vsub.f32 %v6511, %v6546
  %v6555 = vsub.f32 %v6512, %v6547
  %v6556 = vsub.f32 %v6513, %v6548
  %v6557 = vsub.f32 %v6514, %v6549
  %v6558 = vsub.f32 %v6515, %v6550
  %v6559 = vsub.f32 %v6516, %v6551
  %v6560 = vmul.f32 %v6552, %v6552
  %v6561 = vmul.f32 %v6553, %v6553
  %v6562 = vmul.f32 %v6554, %v6554
  %v6563 = vmul.f32 %v6555, %v6555
  %v6564 = vmul.f32 %v6556, %v6556
  %v6565 = vmul.f32 %v6557, %v6557
  %v6566 = vmul.f32 %v6558, %v6558
  %v6567 = vmul.f32 %v6559, %v6559
  %v6568 = vsel %vm97, %v6560, 0.0
  %6569 = vadd.xlane.f32.xlu0 %v6568
  %v6570 = vpop.xlane.xlu0 %6569
  %v6571 = vsel %vm97, %v6561, 0.0
  %6572 = vadd.xlane.f32.xlu0 %v6571
  %v6573 = vpop.xlane.xlu0 %6572
  %v6574 = vsel %vm97, %v6562, 0.0
  %6575 = vadd.xlane.f32.xlu0 %v6574
  %v6576 = vpop.xlane.xlu0 %6575
  %v6577 = vsel %vm97, %v6563, 0.0
  %6578 = vadd.xlane.f32.xlu0 %v6577
  %v6579 = vpop.xlane.xlu0 %6578
  %v6580 = vsel %vm97, %v6564, 0.0
  %6581 = vadd.xlane.f32.xlu0 %v6580
  %v6582 = vpop.xlane.xlu0 %6581
  %v6583 = vsel %vm97, %v6565, 0.0
  %6584 = vadd.xlane.f32.xlu0 %v6583
  %v6585 = vpop.xlane.xlu0 %6584
  %v6586 = vsel %vm97, %v6566, 0.0
  %6587 = vadd.xlane.f32.xlu0 %v6586
  %v6588 = vpop.xlane.xlu0 %6587
  %v6589 = vsel %vm97, %v6567, 0.0
  %6590 = vadd.xlane.f32.xlu0 %v6589
  %v6591 = vpop.xlane.xlu0 %6590
  %v6592 = vmul.f32 %v6570, %v6543
  %v6593 = vmul.f32 %v6573, %v6543
  %v6594 = vmul.f32 %v6576, %v6543
  %v6595 = vmul.f32 %v6579, %v6543
  %v6596 = vmul.f32 %v6582, %v6543
  %v6597 = vmul.f32 %v6585, %v6543
  %v6598 = vmul.f32 %v6588, %v6543
  %v6599 = vmul.f32 %v6591, %v6543
  %v6600 = vadd.f32 %v6592, 1e-05
  %v6601 = vadd.f32 %v6593, 1e-05
  %v6602 = vadd.f32 %v6594, 1e-05
  %v6603 = vadd.f32 %v6595, 1e-05
  %v6604 = vadd.f32 %v6596, 1e-05
  %v6605 = vadd.f32 %v6597, 1e-05
  %v6606 = vadd.f32 %v6598, 1e-05
  %v6607 = vadd.f32 %v6599, 1e-05
  %v6608 = vrsqrt.pop %v6600
  %v6609 = vrsqrt.pop %v6601
  %v6610 = vrsqrt.pop %v6602
  %v6611 = vrsqrt.pop %v6603
  %v6612 = vrsqrt.pop %v6604
  %v6613 = vrsqrt.pop %v6605
  %v6614 = vrsqrt.pop %v6606
  %v6615 = vrsqrt.pop %v6607
  %v6616 = vmul.f32 %v6552, %v6608
  %v6617 = vmul.f32 %v6553, %v6609
  %v6618 = vmul.f32 %v6554, %v6610
  %v6619 = vmul.f32 %v6555, %v6611
  %v6620 = vmul.f32 %v6556, %v6612
  %v6621 = vmul.f32 %v6557, %v6613
  %v6622 = vmul.f32 %v6558, %v6614
  %v6623 = vmul.f32 %v6559, %v6615
  %v6624 = vlaneseq
  %v6625 = vshrl.u32 %v6624, 7
  %v6626 = vsub.s32 0, %v6625
  %v6627 = vrot.slane %v6517, %v6626
  %v6628 = vmul.f32 %v6616, %v6627
  %v6629 = vmul.f32 %v6617, %v6627
  %v6630 = vmul.f32 %v6618, %v6627
  %v6631 = vmul.f32 %v6619, %v6627
  %v6632 = vmul.f32 %v6620, %v6627
  %v6633 = vmul.f32 %v6621, %v6627
  %v6634 = vmul.f32 %v6622, %v6627
  %v6635 = vmul.f32 %v6623, %v6627
  %v6636 = vlaneseq
  %v6637 = vshrl.u32 %v6636, 7
  %v6638 = vsub.s32 0, %v6637
  %v6639 = vrot.slane %v6518, %v6638
  %v6640 = vadd.f32 %v6628, %v6639
  %v6641 = vadd.f32 %v6629, %v6639
  %v6642 = vadd.f32 %v6630, %v6639
  %v6643 = vadd.f32 %v6631, %v6639
  %v6644 = vadd.f32 %v6632, %v6639
  %v6645 = vadd.f32 %v6633, %v6639
  %v6646 = vadd.f32 %v6634, %v6639
  %v6647 = vadd.f32 %v6635, %v6639
  %v6648 = vld [vmem:[%s4 + $0x60] sm:$0xff]
  %v6649 = vld [vmem:[%s4 + $0x68] sm:$0xff]
  %v6650 = vld [vmem:[%s4 + $0x70] sm:$0xff]
  %v6651 = vld [vmem:[%s4 + $0x78] sm:$0xff]
  %v6652 = vld [vmem:[%s7] sm:$0x1]
  %v6653 = vlaneseq
  %v6654 = vshrl.u32 %v6653, 7
  %v6655 = vsub.s32 0, %v6654
  %v6656 = vrot.slane %v6652, %v6655
  %v6658 = vsel %vm97, %v6640, 0
  %v6661 = vsel %vm97, %v6641, 0
  %v6664 = vsel %vm97, %v6642, 0
  %v6667 = vsel %vm97, %v6643, 0
  %v6670 = vsel %vm97, %v6644, 0
  %v6673 = vsel %vm97, %v6645, 0
  %v6676 = vsel %vm97, %v6646, 0
  %v6679 = vsel %vm97, %v6647, 0
  %6681 = vmatprep.subr.mxu0 0.0
  %6682 = vmatpush1.msra.mxu0 %v6648
  %6683 = vmatprep.subr.mxu0 0.0
  %6684 = vmatpush1.msra.mxu0 %v6649
  %6685 = vmatprep.subr.mxu0 0.0
  %6686 = vmatpush1.msra.mxu0 %v6650
  %6687 = vmatprep.subr.mxu0 0.0
  %6688 = vmatpush1.msra.mxu0 %v6651
  %6689 = vmatprep.subr.mxu0 0.0
  %6690 = vmatpush1.msra.mxu0 0.0
  %6691 = vmatprep.subr.mxu0 0.0
  %6692 = vmatpush1.msra.mxu0 0.0
  %6693 = vmatprep.subr.mxu0 0.0
  %6694 = vmatpush1.msra.mxu0 0.0
  %6695 = vmatprep.subr.mxu0 0.0
  %6696 = vmatpush1.msra.mxu0 0.0
  %6697 = vmatprep.subr.mxu0 0.0
  %6698 = vmatpush1.msra.mxu0 0.0
  %6699 = vmatprep.subr.mxu0 0.0
  %6700 = vmatpush1.msra.mxu0 0.0
  %6701 = vmatprep.subr.mxu0 0.0
  %6702 = vmatpush1.msra.mxu0 0.0
  %6703 = vmatprep.subr.mxu0 0.0
  %6704 = vmatpush1.msra.mxu0 0.0
  %6705 = vmatprep.subr.mxu0 0.0
  %6706 = vmatpush1.msra.mxu0 0.0
  %6707 = vmatprep.subr.mxu0 0.0
  %6708 = vmatpush1.msra.mxu0 0.0
  %6709 = vmatprep.subr.mxu0 0.0
  %6710 = vmatpush1.msra.mxu0 0.0
  %6711 = vmatprep.subr.mxu0 0.0
  %6712 = vmatpush1.msra.mxu0 0.0
  %6713 = vmatprep.subr.mxu0 0.0
  %6714 = vmatpush1.msra.mxu0 0.0
  %6715 = vmatprep.subr.mxu0 0.0
  %6716 = vmatpush1.msra.mxu0 0.0
  %6717 = vmatprep.subr.mxu0 0.0
  %6718 = vmatpush1.msra.mxu0 0.0
  %6719 = vmatprep.subr.mxu0 0.0
  %6720 = vmatpush1.msra.mxu0 0.0
  %6721 = vmatprep.subr.mxu0 0.0
  %6722 = vmatpush1.msra.mxu0 0.0
  %6723 = vmatprep.subr.mxu0 0.0
  %6724 = vmatpush1.msra.mxu0 0.0
  %6725 = vmatprep.subr.mxu0 0.0
  %6726 = vmatpush1.msra.mxu0 0.0
  %6727 = vmatprep.subr.mxu0 0.0
  %6728 = vmatpush1.msra.mxu0 0.0
  %6729 = vmatprep.subr.mxu0 0.0
  %6730 = vmatpush1.msra.mxu0 0.0
  %6731 = vmatprep.subr.mxu0 0.0
  %6732 = vmatpush1.msra.mxu0 0.0
  %6733 = vmatprep.subr.mxu0 0.0
  %6734 = vmatpush1.msra.mxu0 0.0
  %6735 = vmatprep.subr.mxu0 0.0
  %6736 = vmatpush1.msra.mxu0 0.0
  %6737 = vmatprep.subr.mxu0 0.0
  %6738 = vmatpush1.msra.mxu0 0.0
  %6739 = vmatprep.subr.mxu0 0.0
  %6740 = vmatpush1.msra.mxu0 0.0
  %6741 = vmatprep.subr.mxu0 0.0
  %6742 = vmatpush1.msra.mxu0 0.0
  %6743 = vmatprep.subr.mxu0 0.0
  %6744 = vmatpush1.msra.mxu0 0.0
  %6745 = vmatprep.mubr.f32.mxu0 0.0
  %6746 = vmatmul.mubr.f32.gmra.mrb[0].mxu0 %v6658
  %v6747 = vpop.f32.mrb[0].mxu0
  %v6748 = vadd.f32 %v6656, %v6747
  %v6749 = vpop.f32.mrb[0].mxu0
  %6750 = vmatprep.mubr.f32.mxu0 0.0
  %6751 = vmatmul.mubr.f32.gmra.mrb[0].mxu0 %v6661
  %v6752 = vpop.f32.mrb[0].mxu0
  %v6753 = vadd.f32 %v6656, %v6752
  %v6754 = vpop.f32.mrb[0].mxu0
  %6755 = vmatprep.mubr.f32.mxu0 0.0
  %6756 = vmatmul.mubr.f32.gmra.mrb[0].mxu0 %v6664
  %v6757 = vpop.f32.mrb[0].mxu0
  %v6758 = vadd.f32 %v6656, %v6757
  %v6759 = vpop.f32.mrb[0].mxu0
  %6760 = vmatprep.mubr.f32.mxu0 0.0
  %6761 = vmatmul.mubr.f32.gmra.mrb[0].mxu0 %v6667
  %v6762 = vpop.f32.mrb[0].mxu0
  %v6763 = vadd.f32 %v6656, %v6762
  %v6764 = vpop.f32.mrb[0].mxu0
  %6765 = vmatprep.mubr.f32.mxu0 0.0
  %6766 = vmatmul.mubr.f32.gmra.mrb[0].mxu0 %v6670
  %v6767 = vpop.f32.mrb[0].mxu0
  %v6768 = vadd.f32 %v6656, %v6767
  %v6769 = vpop.f32.mrb[0].mxu0
  %6770 = vmatprep.mubr.f32.mxu0 0.0
  %6771 = vmatmul.mubr.f32.gmra.mrb[0].mxu0 %v6673
  %v6772 = vpop.f32.mrb[0].mxu0
  %v6773 = vadd.f32 %v6656, %v6772
  %v6774 = vpop.f32.mrb[0].mxu0
  %6775 = vmatprep.mubr.f32.mxu0 0.0
  %6776 = vmatmul.mubr.f32.gmra.mrb[0].mxu0 %v6676
  %v6777 = vpop.f32.mrb[0].mxu0
  %v6778 = vadd.f32 %v6656, %v6777
  %v6779 = vpop.f32.mrb[0].mxu0
  %6780 = vmatprep.mubr.f32.mxu0 0.0
  %6781 = vmatmul.mubr.f32.gmra.mrb[0].mxu0 %v6679
  %v6782 = vpop.f32.mrb[0].mxu0
  %v6783 = vadd.f32 %v6656, %v6782
  %v6784 = vpop.f32.mrb[0].mxu0
  %6785 = vdwg.mxu0
  %v6786 = vld [vmem:[%s4 + $0x80] sm:$0xff]
  %v6787 = vld [vmem:[%s4 + $0x88] sm:$0xff]
  %v6788 = vld [vmem:[%s4 + $0x90] sm:$0xff]
  %v6789 = vld [vmem:[%s4 + $0x98] sm:$0xff]
  %v6790 = vld [vmem:[%s7 + $0x1] sm:$0x1]
  %v6791 = vlaneseq
  %v6792 = vshrl.u32 %v6791, 7
  %v6793 = vsub.s32 0, %v6792
  %v6794 = vrot.slane %v6790, %v6793
  %v6796 = vsel %vm97, %v40, 0
  %v6799 = vsel %vm97, %v41, 0
  %v6802 = vsel %vm97, %v42, 0
  %v6805 = vsel %vm97, %v43, 0
  %v6808 = vsel %vm97, %v44, 0
  %v6811 = vsel %vm97, %v45, 0
  %v6814 = vsel %vm97, %v46, 0
  %v6817 = vsel %vm97, %v47, 0
  %v6820 = vsel %vm97, %v48, 0
  %v6823 = vsel %vm97, %v49, 0
  %v6826 = vsel %vm97, %v50, 0
  %v6829 = vsel %vm97, %v51, 0
  %v6832 = vsel %vm97, %v52, 0
  %v6835 = vsel %vm97, %v53, 0
  %v6838 = vsel %vm97, %v54, 0
  %v6841 = vsel %vm97, %v55, 0
  %6843 = vmatprep.subr.mxu0 0.0
  %6844 = vmatpush1.msra.mxu0 %v6786
  %6845 = vmatprep.subr.mxu0 0.0
  %6846 = vmatpush1.msra.mxu0 %v6787
  %6847 = vmatprep.subr.mxu0 0.0
  %6848 = vmatpush1.msra.mxu0 %v6788
  %6849 = vmatprep.subr.mxu0 0.0
  %6850 = vmatpush1.msra.mxu0 %v6789
  %6851 = vmatprep.subr.mxu0 0.0
  %6852 = vmatpush1.msra.mxu0 0.0
  %6853 = vmatprep.subr.mxu0 0.0
  %6854 = vmatpush1.msra.mxu0 0.0
  %6855 = vmatprep.subr.mxu0 0.0
  %6856 = vmatpush1.msra.mxu0 0.0
  %6857 = vmatprep.subr.mxu0 0.0
  %6858 = vmatpush1.msra.mxu0 0.0
  %6859 = vmatprep.subr.mxu0 0.0
  %6860 = vmatpush1.msra.mxu0 0.0
  %6861 = vmatprep.subr.mxu0 0.0
  %6862 = vmatpush1.msra.mxu0 0.0
  %6863 = vmatprep.subr.mxu0 0.0
  %6864 = vmatpush1.msra.mxu0 0.0
  %6865 = vmatprep.subr.mxu0 0.0
  %6866 = vmatpush1.msra.mxu0 0.0
  %6867 = vmatprep.subr.mxu0 0.0
  %6868 = vmatpush1.msra.mxu0 0.0
  %6869 = vmatprep.subr.mxu0 0.0
  %6870 = vmatpush1.msra.mxu0 0.0
  %6871 = vmatprep.subr.mxu0 0.0
  %6872 = vmatpush1.msra.mxu0 0.0
  %6873 = vmatprep.subr.mxu0 0.0
  %6874 = vmatpush1.msra.mxu0 0.0
  %6875 = vmatprep.subr.mxu0 0.0
  %6876 = vmatpush1.msra.mxu0 0.0
  %6877 = vmatprep.subr.mxu0 0.0
  %6878 = vmatpush1.msra.mxu0 0.0
  %6879 = vmatprep.subr.mxu0 0.0
  %6880 = vmatpush1.msra.mxu0 0.0
  %6881 = vmatprep.subr.mxu0 0.0
  %6882 = vmatpush1.msra.mxu0 0.0
  %6883 = vmatprep.subr.mxu0 0.0
  %6884 = vmatpush1.msra.mxu0 0.0
  %6885 = vmatprep.subr.mxu0 0.0
  %6886 = vmatpush1.msra.mxu0 0.0
  %6887 = vmatprep.subr.mxu0 0.0
  %6888 = vmatpush1.msra.mxu0 0.0
  %6889 = vmatprep.subr.mxu0 0.0
  %6890 = vmatpush1.msra.mxu0 0.0
  %6891 = vmatprep.subr.mxu0 0.0
  %6892 = vmatpush1.msra.mxu0 0.0
  %6893 = vmatprep.subr.mxu0 0.0
  %6894 = vmatpush1.msra.mxu0 0.0
  %6895 = vmatprep.subr.mxu0 0.0
  %6896 = vmatpush1.msra.mxu0 0.0
  %6897 = vmatprep.subr.mxu0 0.0
  %6898 = vmatpush1.msra.mxu0 0.0
  %6899 = vmatprep.subr.mxu0 0.0
  %6900 = vmatpush1.msra.mxu0 0.0
  %6901 = vmatprep.subr.mxu0 0.0
  %6902 = vmatpush1.msra.mxu0 0.0
  %6903 = vmatprep.subr.mxu0 0.0
  %6904 = vmatpush1.msra.mxu0 0.0
  %6905 = vmatprep.subr.mxu0 0.0
  %6906 = vmatpush1.msra.mxu0 0.0
  %6907 = vmatprep.mubr.f32.mxu0 0.0
  %6908 = vmatmul.mubr.f32.gmra.mrb[0].mxu0 %v6796
  %v6909 = vpop.f32.mrb[0].mxu0
  %v6910 = vadd.f32 %v6794, %v6909
  %v6911 = vpop.f32.mrb[0].mxu0
  %6912 = vmatprep.mubr.f32.mxu0 0.0
  %6913 = vmatmul.mubr.f32.gmra.mrb[0].mxu0 %v6799
  %v6914 = vpop.f32.mrb[0].mxu0
  %v6915 = vadd.f32 %v6794, %v6914
  %v6916 = vpop.f32.mrb[0].mxu0
  %6917 = vmatprep.mubr.f32.mxu0 0.0
  %6918 = vmatmul.mubr.f32.gmra.mrb[0].mxu0 %v6802
  %v6919 = vpop.f32.mrb[0].mxu0
  %v6920 = vadd.f32 %v6794, %v6919
  %v6921 = vpop.f32.mrb[0].mxu0
  %6922 = vmatprep.mubr.f32.mxu0 0.0
  %6923 = vmatmul.mubr.f32.gmra.mrb[0].mxu0 %v6805
  %v6924 = vpop.f32.mrb[0].mxu0
  %v6925 = vadd.f32 %v6794, %v6924
  %v6926 = vpop.f32.mrb[0].mxu0
  %6927 = vmatprep.mubr.f32.mxu0 0.0
  %6928 = vmatmul.mubr.f32.gmra.mrb[0].mxu0 %v6808
  %v6929 = vpop.f32.mrb[0].mxu0
  %v6930 = vadd.f32 %v6794, %v6929
  %v6931 = vpop.f32.mrb[0].mxu0
  %6932 = vmatprep.mubr.f32.mxu0 0.0
  %6933 = vmatmul.mubr.f32.gmra.mrb[0].mxu0 %v6811
  %v6934 = vpop.f32.mrb[0].mxu0
  %v6935 = vadd.f32 %v6794, %v6934
  %v6936 = vpop.f32.mrb[0].mxu0
  %6937 = vmatprep.mubr.f32.mxu0 0.0
  %6938 = vmatmul.mubr.f32.gmra.mrb[0].mxu0 %v6814
  %v6939 = vpop.f32.mrb[0].mxu0
  %v6940 = vadd.f32 %v6794, %v6939
  %v6941 = vpop.f32.mrb[0].mxu0
  %6942 = vmatprep.mubr.f32.mxu0 0.0
  %6943 = vmatmul.mubr.f32.gmra.mrb[0].mxu0 %v6817
  %v6944 = vpop.f32.mrb[0].mxu0
  %v6945 = vadd.f32 %v6794, %v6944
  %v6946 = vpop.f32.mrb[0].mxu0
  %6947 = vmatprep.mubr.f32.mxu0 0.0
  %6948 = vmatmul.mubr.f32.gmra.mrb[0].mxu0 %v6820
  %v6949 = vpop.f32.mrb[0].mxu0
  %v6950 = vadd.f32 %v6794, %v6949
  %v6951 = vpop.f32.mrb[0].mxu0
  %6952 = vmatprep.mubr.f32.mxu0 0.0
  %6953 = vmatmul.mubr.f32.gmra.mrb[0].mxu0 %v6823
  %v6954 = vpop.f32.mrb[0].mxu0
  %v6955 = vadd.f32 %v6794, %v6954
  %v6956 = vpop.f32.mrb[0].mxu0
  %6957 = vmatprep.mubr.f32.mxu0 0.0
  %6958 = vmatmul.mubr.f32.gmra.mrb[0].mxu0 %v6826
  %v6959 = vpop.f32.mrb[0].mxu0
  %v6960 = vadd.f32 %v6794, %v6959
  %v6961 = vpop.f32.mrb[0].mxu0
  %6962 = vmatprep.mubr.f32.mxu0 0.0
  %6963 = vmatmul.mubr.f32.gmra.mrb[0].mxu0 %v6829
  %v6964 = vpop.f32.mrb[0].mxu0
  %v6965 = vadd.f32 %v6794, %v6964
  %v6966 = vpop.f32.mrb[0].mxu0
  %6967 = vmatprep.mubr.f32.mxu0 0.0
  %6968 = vmatmul.mubr.f32.gmra.mrb[0].mxu0 %v6832
  %v6969 = vpop.f32.mrb[0].mxu0
  %v6970 = vadd.f32 %v6794, %v6969
  %v6971 = vpop.f32.mrb[0].mxu0
  %6972 = vmatprep.mubr.f32.mxu0 0.0
  %6973 = vmatmul.mubr.f32.gmra.mrb[0].mxu0 %v6835
  %v6974 = vpop.f32.mrb[0].mxu0
  %v6975 = vadd.f32 %v6794, %v6974
  %v6976 = vpop.f32.mrb[0].mxu0
  %6977 = vmatprep.mubr.f32.mxu0 0.0
  %6978 = vmatmul.mubr.f32.gmra.mrb[0].mxu0 %v6838
  %v6979 = vpop.f32.mrb[0].mxu0
  %v6980 = vadd.f32 %v6794, %v6979
  %v6981 = vpop.f32.mrb[0].mxu0
  %6982 = vmatprep.mubr.f32.mxu0 0.0
  %6983 = vmatmul.mubr.f32.gmra.mrb[0].mxu0 %v6841
  %v6984 = vpop.f32.mrb[0].mxu0
  %v6985 = vadd.f32 %v6794, %v6984
  %v6986 = vpop.f32.mrb[0].mxu0
  %6987 = vdwg.mxu0
  %v6988 = vld [vmem:[%s4 + $0xa0] sm:$0xff]
  %v6989 = vld [vmem:[%s4 + $0xa8] sm:$0xff]
  %v6990 = vld [vmem:[%s4 + $0xb0] sm:$0xff]
  %v6991 = vld [vmem:[%s4 + $0xb8] sm:$0xff]
  %v6992 = vld [vmem:[%s7 + $0x2] sm:$0x1]
  %v6993 = vlaneseq
  %v6994 = vshrl.u32 %v6993, 7
  %v6995 = vsub.s32 0, %v6994
  %v6996 = vrot.slane %v6992, %v6995
  %6997 = vmatprep.subr.mxu0 0.0
  %6998 = vmatpush1.msra.mxu0 %v6988
  %6999 = vmatprep.subr.mxu0 0.0
  %7000 = vmatpush1.msra.mxu0 %v6989
  %7001 = vmatprep.subr.mxu0 0.0
  %7002 = vmatpush1.msra.mxu0 %v6990
  %7003 = vmatprep.subr.mxu0 0.0
  %7004 = vmatpush1.msra.mxu0 %v6991
  %7005 = vmatprep.subr.mxu0 0.0
  %7006 = vmatpush1.msra.mxu0 0.0
  %7007 = vmatprep.subr.mxu0 0.0
  %7008 = vmatpush1.msra.mxu0 0.0
  %7009 = vmatprep.subr.mxu0 0.0
  %7010 = vmatpush1.msra.mxu0 0.0
  %7011 = vmatprep.subr.mxu0 0.0
  %7012 = vmatpush1.msra.mxu0 0.0
  %7013 = vmatprep.subr.mxu0 0.0
  %7014 = vmatpush1.msra.mxu0 0.0
  %7015 = vmatprep.subr.mxu0 0.0
  %7016 = vmatpush1.msra.mxu0 0.0
  %7017 = vmatprep.subr.mxu0 0.0
  %7018 = vmatpush1.msra.mxu0 0.0
  %7019 = vmatprep.subr.mxu0 0.0
  %7020 = vmatpush1.msra.mxu0 0.0
  %7021 = vmatprep.subr.mxu0 0.0
  %7022 = vmatpush1.msra.mxu0 0.0
  %7023 = vmatprep.subr.mxu0 0.0
  %7024 = vmatpush1.msra.mxu0 0.0
  %7025 = vmatprep.subr.mxu0 0.0
  %7026 = vmatpush1.msra.mxu0 0.0
  %7027 = vmatprep.subr.mxu0 0.0
  %7028 = vmatpush1.msra.mxu0 0.0
  %7029 = vmatprep.subr.mxu0 0.0
  %7030 = vmatpush1.msra.mxu0 0.0
  %7031 = vmatprep.subr.mxu0 0.0
  %7032 = vmatpush1.msra.mxu0 0.0
  %7033 = vmatprep.subr.mxu0 0.0
  %7034 = vmatpush1.msra.mxu0 0.0
  %7035 = vmatprep.subr.mxu0 0.0
  %7036 = vmatpush1.msra.mxu0 0.0
  %7037 = vmatprep.subr.mxu0 0.0
  %7038 = vmatpush1.msra.mxu0 0.0
  %7039 = vmatprep.subr.mxu0 0.0
  %7040 = vmatpush1.msra.mxu0 0.0
  %7041 = vmatprep.subr.mxu0 0.0
  %7042 = vmatpush1.msra.mxu0 0.0
  %7043 = vmatprep.subr.mxu0 0.0
  %7044 = vmatpush1.msra.mxu0 0.0
  %7045 = vmatprep.subr.mxu0 0.0
  %7046 = vmatpush1.msra.mxu0 0.0
  %7047 = vmatprep.subr.mxu0 0.0
  %7048 = vmatpush1.msra.mxu0 0.0
  %7049 = vmatprep.subr.mxu0 0.0
  %7050 = vmatpush1.msra.mxu0 0.0
  %7051 = vmatprep.subr.mxu0 0.0
  %7052 = vmatpush1.msra.mxu0 0.0
  %7053 = vmatprep.subr.mxu0 0.0
  %7054 = vmatpush1.msra.mxu0 0.0
  %7055 = vmatprep.subr.mxu0 0.0
  %7056 = vmatpush1.msra.mxu0 0.0
  %7057 = vmatprep.subr.mxu0 0.0
  %7058 = vmatpush1.msra.mxu0 0.0
  %7059 = vmatprep.subr.mxu0 0.0
  %7060 = vmatpush1.msra.mxu0 0.0
  %7061 = vmatprep.mubr.f32.mxu0 0.0
  %7062 = vmatmul.mubr.f32.gmra.mrb[0].mxu0 %v6796
  %v7063 = vpop.f32.mrb[0].mxu0
  %v7064 = vadd.f32 %v6996, %v7063
  %v7065 = vpop.f32.mrb[0].mxu0
  %7066 = vmatprep.mubr.f32.mxu0 0.0
  %7067 = vmatmul.mubr.f32.gmra.mrb[0].mxu0 %v6799
  %v7068 = vpop.f32.mrb[0].mxu0
  %v7069 = vadd.f32 %v6996, %v7068
  %v7070 = vpop.f32.mrb[0].mxu0
  %7071 = vmatprep.mubr.f32.mxu0 0.0
  %7072 = vmatmul.mubr.f32.gmra.mrb[0].mxu0 %v6802
  %v7073 = vpop.f32.mrb[0].mxu0
  %v7074 = vadd.f32 %v6996, %v7073
  %v7075 = vpop.f32.mrb[0].mxu0
  %7076 = vmatprep.mubr.f32.mxu0 0.0
  %7077 = vmatmul.mubr.f32.gmra.mrb[0].mxu0 %v6805
  %v7078 = vpop.f32.mrb[0].mxu0
  %v7079 = vadd.f32 %v6996, %v7078
  %v7080 = vpop.f32.mrb[0].mxu0
  %7081 = vmatprep.mubr.f32.mxu0 0.0
  %7082 = vmatmul.mubr.f32.gmra.mrb[0].mxu0 %v6808
  %v7083 = vpop.f32.mrb[0].mxu0
  %v7084 = vadd.f32 %v6996, %v7083
  %v7085 = vpop.f32.mrb[0].mxu0
  %7086 = vmatprep.mubr.f32.mxu0 0.0
  %7087 = vmatmul.mubr.f32.gmra.mrb[0].mxu0 %v6811
  %v7088 = vpop.f32.mrb[0].mxu0
  %v7089 = vadd.f32 %v6996, %v7088
  %v7090 = vpop.f32.mrb[0].mxu0
  %7091 = vmatprep.mubr.f32.mxu0 0.0
  %7092 = vmatmul.mubr.f32.gmra.mrb[0].mxu0 %v6814
  %v7093 = vpop.f32.mrb[0].mxu0
  %v7094 = vadd.f32 %v6996, %v7093
  %v7095 = vpop.f32.mrb[0].mxu0
  %7096 = vmatprep.mubr.f32.mxu0 0.0
  %7097 = vmatmul.mubr.f32.gmra.mrb[0].mxu0 %v6817
  %v7098 = vpop.f32.mrb[0].mxu0
  %v7099 = vadd.f32 %v6996, %v7098
  %v7100 = vpop.f32.mrb[0].mxu0
  %7101 = vmatprep.mubr.f32.mxu0 0.0
  %7102 = vmatmul.mubr.f32.gmra.mrb[0].mxu0 %v6820
  %v7103 = vpop.f32.mrb[0].mxu0
  %v7104 = vadd.f32 %v6996, %v7103
  %v7105 = vpop.f32.mrb[0].mxu0
  %7106 = vmatprep.mubr.f32.mxu0 0.0
  %7107 = vmatmul.mubr.f32.gmra.mrb[0].mxu0 %v6823
  %v7108 = vpop.f32.mrb[0].mxu0
  %v7109 = vadd.f32 %v6996, %v7108
  %v7110 = vpop.f32.mrb[0].mxu0
  %7111 = vmatprep.mubr.f32.mxu0 0.0
  %7112 = vmatmul.mubr.f32.gmra.mrb[0].mxu0 %v6826
  %v7113 = vpop.f32.mrb[0].mxu0
  %v7114 = vadd.f32 %v6996, %v7113
  %v7115 = vpop.f32.mrb[0].mxu0
  %7116 = vmatprep.mubr.f32.mxu0 0.0
  %7117 = vmatmul.mubr.f32.gmra.mrb[0].mxu0 %v6829
  %v7118 = vpop.f32.mrb[0].mxu0
  %v7119 = vadd.f32 %v6996, %v7118
  %v7120 = vpop.f32.mrb[0].mxu0
  %7121 = vmatprep.mubr.f32.mxu0 0.0
  %7122 = vmatmul.mubr.f32.gmra.mrb[0].mxu0 %v6832
  %v7123 = vpop.f32.mrb[0].mxu0
  %v7124 = vadd.f32 %v6996, %v7123
  %v7125 = vpop.f32.mrb[0].mxu0
  %7126 = vmatprep.mubr.f32.mxu0 0.0
  %7127 = vmatmul.mubr.f32.gmra.mrb[0].mxu0 %v6835
  %v7128 = vpop.f32.mrb[0].mxu0
  %v7129 = vadd.f32 %v6996, %v7128
  %v7130 = vpop.f32.mrb[0].mxu0
  %7131 = vmatprep.mubr.f32.mxu0 0.0
  %7132 = vmatmul.mubr.f32.gmra.mrb[0].mxu0 %v6838
  %v7133 = vpop.f32.mrb[0].mxu0
  %v7134 = vadd.f32 %v6996, %v7133
  %v7135 = vpop.f32.mrb[0].mxu0
  %7136 = vmatprep.mubr.f32.mxu0 0.0
  %7137 = vmatmul.mubr.f32.gmra.mrb[0].mxu0 %v6841
  %v7138 = vpop.f32.mrb[0].mxu0
  %v7139 = vadd.f32 %v6996, %v7138
  %v7140 = vpop.f32.mrb[0].mxu0
  %7141 = vdwg.mxu0
  %v7143 = vsel %vm455, %v6748, 0
  %v7146 = vsel %vm455, %v6753, 0
  %v7149 = vsel %vm455, %v6758, 0
  %v7152 = vsel %vm455, %v6763, 0
  %v7155 = vsel %vm455, %v6768, 0
  %v7158 = vsel %vm455, %v6773, 0
  %v7161 = vsel %vm455, %v6778, 0
  %v7164 = vsel %vm455, %v6783, 0
  %v7167 = vsel %vm455, %v6910, 0
  %v7170 = vsel %vm455, %v6915, 0
  %v7173 = vsel %vm455, %v6920, 0
  %v7176 = vsel %vm455, %v6925, 0
  %v7179 = vsel %vm455, %v6930, 0
  %v7182 = vsel %vm455, %v6935, 0
  %v7185 = vsel %vm455, %v6940, 0
  %v7188 = vsel %vm455, %v6945, 0
  %v7191 = vsel %vm455, %v6950, 0
  %v7194 = vsel %vm455, %v6955, 0
  %v7197 = vsel %vm455, %v6960, 0
  %v7200 = vsel %vm455, %v6965, 0
  %v7203 = vsel %vm455, %v6970, 0
  %v7206 = vsel %vm455, %v6975, 0
  %v7209 = vsel %vm455, %v6980, 0
  %v7212 = vsel %vm455, %v6985, 0
  %7214 = vmatprep.subr.mxu0 0.0
  %7215 = vmatpush1.xpose.msra.mxu0 %v7167
  %7216 = vmatprep.subr.mxu0 0.0
  %7217 = vmatpush1.xpose.msra.mxu0 %v7170
  %7218 = vmatprep.subr.mxu0 0.0
  %7219 = vmatpush1.xpose.msra.mxu0 %v7173
  %7220 = vmatprep.subr.mxu0 0.0
  %7221 = vmatpush1.xpose.msra.mxu0 %v7176
  %7222 = vmatprep.subr.mxu0 0.0
  %7223 = vmatpush1.xpose.msra.mxu0 %v7179
  %7224 = vmatprep.subr.mxu0 0.0
  %7225 = vmatpush1.xpose.msra.mxu0 %v7182
  %7226 = vmatprep.subr.mxu0 0.0
  %7227 = vmatpush1.xpose.msra.mxu0 %v7185
  %7228 = vmatprep.subr.mxu0 0.0
  %7229 = vmatpush1.xpose.msra.mxu0 %v7188
  %7230 = vmatprep.subr.mxu0 0.0
  %7231 = vmatpush1.xpose.msra.mxu0 %v7191
  %7232 = vmatprep.subr.mxu0 0.0
  %7233 = vmatpush1.xpose.msra.mxu0 %v7194
  %7234 = vmatprep.subr.mxu0 0.0
  %7235 = vmatpush1.xpose.msra.mxu0 %v7197
  %7236 = vmatprep.subr.mxu0 0.0
  %7237 = vmatpush1.xpose.msra.mxu0 %v7200
  %7238 = vmatprep.subr.mxu0 0.0
  %7239 = vmatpush1.xpose.msra.mxu0 %v7203
  %7240 = vmatprep.subr.mxu0 0.0
  %7241 = vmatpush1.xpose.msra.mxu0 %v7206
  %7242 = vmatprep.subr.mxu0 0.0
  %7243 = vmatpush1.xpose.msra.mxu0 %v7209
  %7244 = vmatprep.subr.mxu0 0.0
  %7245 = vmatpush1.xpose.msra.mxu0 %v7212
  %7246 = vmatprep.subr.mxu0 0.0
  %7247 = vmatpush1.xpose.msra.mxu0 0.0
  %7248 = vmatprep.subr.mxu0 0.0
  %7249 = vmatpush1.xpose.msra.mxu0 0.0
  %7250 = vmatprep.subr.mxu0 0.0
  %7251 = vmatpush1.xpose.msra.mxu0 0.0
  %7252 = vmatprep.subr.mxu0 0.0
  %7253 = vmatpush1.xpose.msra.mxu0 0.0
  %7254 = vmatprep.subr.mxu0 0.0
  %7255 = vmatpush1.xpose.msra.mxu0 0.0
  %7256 = vmatprep.subr.mxu0 0.0
  %7257 = vmatpush1.xpose.msra.mxu0 0.0
  %7258 = vmatprep.subr.mxu0 0.0
  %7259 = vmatpush1.xpose.msra.mxu0 0.0
  %7260 = vmatprep.subr.mxu0 0.0
  %7261 = vmatpush1.xpose.msra.mxu0 0.0
  %7262 = vmatprep.subr.mxu0 0.0
  %7263 = vmatpush1.xpose.msra.mxu0 0.0
  %7264 = vmatprep.subr.mxu0 0.0
  %7265 = vmatpush1.xpose.msra.mxu0 0.0
  %7266 = vmatprep.subr.mxu0 0.0
  %7267 = vmatpush1.xpose.msra.mxu0 0.0
  %7268 = vmatprep.subr.mxu0 0.0
  %7269 = vmatpush1.xpose.msra.mxu0 0.0
  %7270 = vmatprep.subr.mxu0 0.0
  %7271 = vmatpush1.xpose.msra.mxu0 0.0
  %7272 = vmatprep.subr.mxu0 0.0
  %7273 = vmatpush1.xpose.msra.mxu0 0.0
  %7274 = vmatprep.subr.mxu0 0.0
  %7275 = vmatpush1.xpose.msra.mxu0 0.0
  %7276 = vmatprep.subr.mxu0 0.0
  %7277 = vmatpush1.xpose.msra.mxu0 0.0
  %7278 = vmatprep.mubr.f32.mxu0 0.0
  %7279 = vmatmul.mubr.f32.gmra.mrb[0].mxu0 %v7143
  %v7280 = vpop.f32.mrb[0].mxu0
  %v7281 = vadd.f32 %v80, %v7280
  %v7282 = vpop.f32.mrb[0].mxu0
  %7283 = vmatprep.mubr.f32.mxu0 0.0
  %7284 = vmatmul.mubr.f32.gmra.mrb[0].mxu0 %v7146
  %v7285 = vpop.f32.mrb[0].mxu0
  %v7286 = vadd.f32 %v81, %v7285
  %v7287 = vpop.f32.mrb[0].mxu0
  %7288 = vmatprep.mubr.f32.mxu0 0.0
  %7289 = vmatmul.mubr.f32.gmra.mrb[0].mxu0 %v7149
  %v7290 = vpop.f32.mrb[0].mxu0
  %v7291 = vadd.f32 %v82, %v7290
  %v7292 = vpop.f32.mrb[0].mxu0
  %7293 = vmatprep.mubr.f32.mxu0 0.0
  %7294 = vmatmul.mubr.f32.gmra.mrb[0].mxu0 %v7152
  %v7295 = vpop.f32.mrb[0].mxu0
  %v7296 = vadd.f32 %v83, %v7295
  %v7297 = vpop.f32.mrb[0].mxu0
  %7298 = vmatprep.mubr.f32.mxu0 0.0
  %7299 = vmatmul.mubr.f32.gmra.mrb[0].mxu0 %v7155
  %v7300 = vpop.f32.mrb[0].mxu0
  %v7301 = vadd.f32 %v84, %v7300
  %v7302 = vpop.f32.mrb[0].mxu0
  %7303 = vmatprep.mubr.f32.mxu0 0.0
  %7304 = vmatmul.mubr.f32.gmra.mrb[0].mxu0 %v7158
  %v7305 = vpop.f32.mrb[0].mxu0
  %v7306 = vadd.f32 %v85, %v7305
  %v7307 = vpop.f32.mrb[0].mxu0
  %7308 = vmatprep.mubr.f32.mxu0 0.0
  %7309 = vmatmul.mubr.f32.gmra.mrb[0].mxu0 %v7161
  %v7310 = vpop.f32.mrb[0].mxu0
  %v7311 = vadd.f32 %v86, %v7310
  %v7312 = vpop.f32.mrb[0].mxu0
  %7313 = vmatprep.mubr.f32.mxu0 0.0
  %7314 = vmatmul.mubr.f32.gmra.mrb[0].mxu0 %v7164
  %v7315 = vpop.f32.mrb[0].mxu0
  %v7316 = vadd.f32 %v87, %v7315
  %v7317 = vpop.f32.mrb[0].mxu0
  %7318 = vdwg.mxu0
  %7319 = vmax.xlane.f32.xlu0 %v7281
  %v7320 = vpop.xlane.xlu0 %7319
  %7321 = vmax.xlane.f32.xlu0 %v7286
  %v7322 = vpop.xlane.xlu0 %7321
  %7323 = vmax.xlane.f32.xlu0 %v7291
  %v7324 = vpop.xlane.xlu0 %7323
  %7325 = vmax.xlane.f32.xlu0 %v7296
  %v7326 = vpop.xlane.xlu0 %7325
  %7327 = vmax.xlane.f32.xlu0 %v7301
  %v7328 = vpop.xlane.xlu0 %7327
  %7329 = vmax.xlane.f32.xlu0 %v7306
  %v7330 = vpop.xlane.xlu0 %7329
  %7331 = vmax.xlane.f32.xlu0 %v7311
  %v7332 = vpop.xlane.xlu0 %7331
  %7333 = vmax.xlane.f32.xlu0 %v7316
  %v7334 = vpop.xlane.xlu0 %7333
  %v7335 = vsub.f32 %v7281, %v7320
  %v7336 = vsub.f32 %v7286, %v7322
  %v7337 = vsub.f32 %v7291, %v7324
  %v7338 = vsub.f32 %v7296, %v7326
  %v7339 = vsub.f32 %v7301, %v7328
  %v7340 = vsub.f32 %v7306, %v7330
  %v7341 = vsub.f32 %v7311, %v7332
  %v7342 = vsub.f32 %v7316, %v7334
  %v7343 = vmul.f32 %v7335, 1.442695
  %v7344 = vpow.pop %v7343
  %v7345 = vmul.f32 %v7336, 1.442695
  %v7346 = vpow.pop %v7345
  %v7347 = vmul.f32 %v7337, 1.442695
  %v7348 = vpow.pop %v7347
  %v7349 = vmul.f32 %v7338, 1.442695
  %v7350 = vpow.pop %v7349
  %v7351 = vmul.f32 %v7339, 1.442695
  %v7352 = vpow.pop %v7351
  %v7353 = vmul.f32 %v7340, 1.442695
  %v7354 = vpow.pop %v7353
  %v7355 = vmul.f32 %v7341, 1.442695
  %v7356 = vpow.pop %v7355
  %v7357 = vmul.f32 %v7342, 1.442695
  %v7358 = vpow.pop %v7357
  %7359 = vadd.xlane.f32.xlu0 %v7344
  %v7360 = vpop.xlane.xlu0 %7359
  %7361 = vadd.xlane.f32.xlu0 %v7346
  %v7362 = vpop.xlane.xlu0 %7361
  %7363 = vadd.xlane.f32.xlu0 %v7348
  %v7364 = vpop.xlane.xlu0 %7363
  %7365 = vadd.xlane.f32.xlu0 %v7350
  %v7366 = vpop.xlane.xlu0 %7365
  %7367 = vadd.xlane.f32.xlu0 %v7352
  %v7368 = vpop.xlane.xlu0 %7367
  %7369 = vadd.xlane.f32.xlu0 %v7354
  %v7370 = vpop.xlane.xlu0 %7369
  %7371 = vadd.xlane.f32.xlu0 %v7356
  %v7372 = vpop.xlane.xlu0 %7371
  %7373 = vadd.xlane.f32.xlu0 %v7358
  %v7374 = vpop.xlane.xlu0 %7373
  %v7375 = vrcp.pop %v7360
  %v7376 = vmul.f32 1.0, %v7375
  %v7377 = vrcp.pop %v7362
  %v7378 = vmul.f32 1.0, %v7377
  %v7379 = vrcp.pop %v7364
  %v7380 = vmul.f32 1.0, %v7379
  %v7381 = vrcp.pop %v7366
  %v7382 = vmul.f32 1.0, %v7381
  %v7383 = vrcp.pop %v7368
  %v7384 = vmul.f32 1.0, %v7383
  %v7385 = vrcp.pop %v7370
  %v7386 = vmul.f32 1.0, %v7385
  %v7387 = vrcp.pop %v7372
  %v7388 = vmul.f32 1.0, %v7387
  %v7389 = vrcp.pop %v7374
  %v7390 = vmul.f32 1.0, %v7389
  %v7391 = vmul.f32 %v7344, %v7376
  %v7392 = vmul.f32 %v7346, %v7378
  %v7393 = vmul.f32 %v7348, %v7380
  %v7394 = vmul.f32 %v7350, %v7382
  %v7395 = vmul.f32 %v7352, %v7384
  %v7396 = vmul.f32 %v7354, %v7386
  %v7397 = vmul.f32 %v7356, %v7388
  %v7398 = vmul.f32 %v7358, %v7390
  %7399 = vmatprep.subr.mxu0 0.0
  %7400 = vmatpush1.msra.mxu0 %v7064
  %7401 = vmatprep.subr.mxu0 0.0
  %7402 = vmatpush1.msra.mxu0 %v7069
  %7403 = vmatprep.subr.mxu0 0.0
  %7404 = vmatpush1.msra.mxu0 %v7074
  %7405 = vmatprep.subr.mxu0 0.0
  %7406 = vmatpush1.msra.mxu0 %v7079
  %7407 = vmatprep.subr.mxu0 0.0
  %7408 = vmatpush1.msra.mxu0 %v7084
  %7409 = vmatprep.subr.mxu0 0.0
  %7410 = vmatpush1.msra.mxu0 %v7089
  %7411 = vmatprep.subr.mxu0 0.0
  %7412 = vmatpush1.msra.mxu0 %v7094
  %7413 = vmatprep.subr.mxu0 0.0
  %7414 = vmatpush1.msra.mxu0 %v7099
  %7415 = vmatprep.subr.mxu0 0.0
  %7416 = vmatpush1.msra.mxu0 %v7104
  %7417 = vmatprep.subr.mxu0 0.0
  %7418 = vmatpush1.msra.mxu0 %v7109
  %7419 = vmatprep.subr.mxu0 0.0
  %7420 = vmatpush1.msra.mxu0 %v7114
  %7421 = vmatprep.subr.mxu0 0.0
  %7422 = vmatpush1.msra.mxu0 %v7119
  %7423 = vmatprep.subr.mxu0 0.0
  %7424 = vmatpush1.msra.mxu0 %v7124
  %7425 = vmatprep.subr.mxu0 0.0
  %7426 = vmatpush1.msra.mxu0 %v7129
  %7427 = vmatprep.subr.mxu0 0.0
  %7428 = vmatpush1.msra.mxu0 %v7134
  %7429 = vmatprep.subr.mxu0 0.0
  %7430 = vmatpush1.msra.mxu0 %v7139
  %7431 = vmatprep.subr.mxu0 0.0
  %7432 = vmatpush1.msra.mxu0 0.0
  %7433 = vmatprep.subr.mxu0 0.0
  %7434 = vmatpush1.msra.mxu0 0.0
  %7435 = vmatprep.subr.mxu0 0.0
  %7436 = vmatpush1.msra.mxu0 0.0
  %7437 = vmatprep.subr.mxu0 0.0
  %7438 = vmatpush1.msra.mxu0 0.0
  %7439 = vmatprep.subr.mxu0 0.0
  %7440 = vmatpush1.msra.mxu0 0.0
  %7441 = vmatprep.subr.mxu0 0.0
  %7442 = vmatpush1.msra.mxu0 0.0
  %7443 = vmatprep.subr.mxu0 0.0
  %7444 = vmatpush1.msra.mxu0 0.0
  %7445 = vmatprep.subr.mxu0 0.0
  %7446 = vmatpush1.msra.mxu0 0.0
  %7447 = vmatprep.subr.mxu0 0.0
  %7448 = vmatpush1.msra.mxu0 0.0
  %7449 = vmatprep.subr.mxu0 0.0
  %7450 = vmatpush1.msra.mxu0 0.0
  %7451 = vmatprep.subr.mxu0 0.0
  %7452 = vmatpush1.msra.mxu0 0.0
  %7453 = vmatprep.subr.mxu0 0.0
  %7454 = vmatpush1.msra.mxu0 0.0
  %7455 = vmatprep.subr.mxu0 0.0
  %7456 = vmatpush1.msra.mxu0 0.0
  %7457 = vmatprep.subr.mxu0 0.0
  %7458 = vmatpush1.msra.mxu0 0.0
  %7459 = vmatprep.subr.mxu0 0.0
  %7460 = vmatpush1.msra.mxu0 0.0
  %7461 = vmatprep.subr.mxu0 0.0
  %7462 = vmatpush1.msra.mxu0 0.0
  %7463 = vmatprep.mubr.f32.mxu0 0.0
  %7464 = vmatmul.mubr.f32.gmra.mrb[0].mxu0 %v7391
  %v7465 = vpop.f32.mrb[0].mxu0
  %v7466 = vadd.f32 0.0, %v7465
  %v7467 = vpop.f32.mrb[0].mxu0
  %7468 = vmatprep.mubr.f32.mxu0 0.0
  %7469 = vmatmul.mubr.f32.gmra.mrb[0].mxu0 %v7392
  %v7470 = vpop.f32.mrb[0].mxu0
  %v7471 = vadd.f32 0.0, %v7470
  %v7472 = vpop.f32.mrb[0].mxu0
  %7473 = vmatprep.mubr.f32.mxu0 0.0
  %7474 = vmatmul.mubr.f32.gmra.mrb[0].mxu0 %v7393
  %v7475 = vpop.f32.mrb[0].mxu0
  %v7476 = vadd.f32 0.0, %v7475
  %v7477 = vpop.f32.mrb[0].mxu0
  %7478 = vmatprep.mubr.f32.mxu0 0.0
  %7479 = vmatmul.mubr.f32.gmra.mrb[0].mxu0 %v7394
  %v7480 = vpop.f32.mrb[0].mxu0
  %v7481 = vadd.f32 0.0, %v7480
  %v7482 = vpop.f32.mrb[0].mxu0
  %7483 = vmatprep.mubr.f32.mxu0 0.0
  %7484 = vmatmul.mubr.f32.gmra.mrb[0].mxu0 %v7395
  %v7485 = vpop.f32.mrb[0].mxu0
  %v7486 = vadd.f32 0.0, %v7485
  %v7487 = vpop.f32.mrb[0].mxu0
  %7488 = vmatprep.mubr.f32.mxu0 0.0
  %7489 = vmatmul.mubr.f32.gmra.mrb[0].mxu0 %v7396
  %v7490 = vpop.f32.mrb[0].mxu0
  %v7491 = vadd.f32 0.0, %v7490
  %v7492 = vpop.f32.mrb[0].mxu0
  %7493 = vmatprep.mubr.f32.mxu0 0.0
  %7494 = vmatmul.mubr.f32.gmra.mrb[0].mxu0 %v7397
  %v7495 = vpop.f32.mrb[0].mxu0
  %v7496 = vadd.f32 0.0, %v7495
  %v7497 = vpop.f32.mrb[0].mxu0
  %7498 = vmatprep.mubr.f32.mxu0 0.0
  %7499 = vmatmul.mubr.f32.gmra.mrb[0].mxu0 %v7398
  %v7500 = vpop.f32.mrb[0].mxu0
  %v7501 = vadd.f32 0.0, %v7500
  %v7502 = vpop.f32.mrb[0].mxu0
  %7503 = vdwg.mxu0
  %7504 = vrot.lane.b32.xlu0 %v6748, 120
  %v7505 = vpop.permute.xlu0 %7504
  %7506 = vrot.lane.b32.xlu0 %v6753, 120
  %v7507 = vpop.permute.xlu0 %7506
  %7508 = vrot.lane.b32.xlu0 %v6758, 120
  %v7509 = vpop.permute.xlu0 %7508
  %7510 = vrot.lane.b32.xlu0 %v6763, 120
  %v7511 = vpop.permute.xlu0 %7510
  %7512 = vrot.lane.b32.xlu0 %v6768, 120
  %v7513 = vpop.permute.xlu0 %7512
  %7514 = vrot.lane.b32.xlu0 %v6773, 120
  %v7515 = vpop.permute.xlu0 %7514
  %7516 = vrot.lane.b32.xlu0 %v6778, 120
  %v7517 = vpop.permute.xlu0 %7516
  %7518 = vrot.lane.b32.xlu0 %v6783, 120
  %v7519 = vpop.permute.xlu0 %7518
  %7520 = vrot.lane.b32.xlu0 %v6910, 120
  %v7521 = vpop.permute.xlu0 %7520
  %7522 = vrot.lane.b32.xlu0 %v6915, 120
  %v7523 = vpop.permute.xlu0 %7522
  %7524 = vrot.lane.b32.xlu0 %v6920, 120
  %v7525 = vpop.permute.xlu0 %7524
  %7526 = vrot.lane.b32.xlu0 %v6925, 120
  %v7527 = vpop.permute.xlu0 %7526
  %7528 = vrot.lane.b32.xlu0 %v6930, 120
  %v7529 = vpop.permute.xlu0 %7528
  %7530 = vrot.lane.b32.xlu0 %v6935, 120
  %v7531 = vpop.permute.xlu0 %7530
  %7532 = vrot.lane.b32.xlu0 %v6940, 120
  %v7533 = vpop.permute.xlu0 %7532
  %7534 = vrot.lane.b32.xlu0 %v6945, 120
  %v7535 = vpop.permute.xlu0 %7534
  %7536 = vrot.lane.b32.xlu0 %v6950, 120
  %v7537 = vpop.permute.xlu0 %7536
  %7538 = vrot.lane.b32.xlu0 %v6955, 120
  %v7539 = vpop.permute.xlu0 %7538
  %7540 = vrot.lane.b32.xlu0 %v6960, 120
  %v7541 = vpop.permute.xlu0 %7540
  %7542 = vrot.lane.b32.xlu0 %v6965, 120
  %v7543 = vpop.permute.xlu0 %7542
  %7544 = vrot.lane.b32.xlu0 %v6970, 120
  %v7545 = vpop.permute.xlu0 %7544
  %7546 = vrot.lane.b32.xlu0 %v6975, 120
  %v7547 = vpop.permute.xlu0 %7546
  %7548 = vrot.lane.b32.xlu0 %v6980, 120
  %v7549 = vpop.permute.xlu0 %7548
  %7550 = vrot.lane.b32.xlu0 %v6985, 120
  %v7551 = vpop.permute.xlu0 %7550
  %v7552 = vsel %vm455, %v7505, 0
  %v7554 = vsel %vm455, %v7507, 0
  %v7556 = vsel %vm455, %v7509, 0
  %v7558 = vsel %vm455, %v7511, 0
  %v7560 = vsel %vm455, %v7513, 0
  %v7562 = vsel %vm455, %v7515, 0
  %v7564 = vsel %vm455, %v7517, 0
  %v7566 = vsel %vm455, %v7519, 0
  %v7568 = vsel %vm455, %v7521, 0
  %v7570 = vsel %vm455, %v7523, 0
  %v7572 = vsel %vm455, %v7525, 0
  %v7574 = vsel %vm455, %v7527, 0
  %v7576 = vsel %vm455, %v7529, 0
  %v7578 = vsel %vm455, %v7531, 0
  %v7580 = vsel %vm455, %v7533, 0
  %v7582 = vsel %vm455, %v7535, 0
  %v7584 = vsel %vm455, %v7537, 0
  %v7586 = vsel %vm455, %v7539, 0
  %v7588 = vsel %vm455, %v7541, 0
  %v7590 = vsel %vm455, %v7543, 0
  %v7592 = vsel %vm455, %v7545, 0
  %v7594 = vsel %vm455, %v7547, 0
  %v7596 = vsel %vm455, %v7549, 0
  %v7598 = vsel %vm455, %v7551, 0
  %7600 = vmatprep.subr.mxu0 0.0
  %7601 = vmatpush1.xpose.msra.mxu0 %v7568
  %7602 = vmatprep.subr.mxu0 0.0
  %7603 = vmatpush1.xpose.msra.mxu0 %v7570
  %7604 = vmatprep.subr.mxu0 0.0
  %7605 = vmatpush1.xpose.msra.mxu0 %v7572
  %7606 = vmatprep.subr.mxu0 0.0
  %7607 = vmatpush1.xpose.msra.mxu0 %v7574
  %7608 = vmatprep.subr.mxu0 0.0
  %7609 = vmatpush1.xpose.msra.mxu0 %v7576
  %7610 = vmatprep.subr.mxu0 0.0
  %7611 = vmatpush1.xpose.msra.mxu0 %v7578
  %7612 = vmatprep.subr.mxu0 0.0
  %7613 = vmatpush1.xpose.msra.mxu0 %v7580
  %7614 = vmatprep.subr.mxu0 0.0
  %7615 = vmatpush1.xpose.msra.mxu0 %v7582
  %7616 = vmatprep.subr.mxu0 0.0
  %7617 = vmatpush1.xpose.msra.mxu0 %v7584
  %7618 = vmatprep.subr.mxu0 0.0
  %7619 = vmatpush1.xpose.msra.mxu0 %v7586
  %7620 = vmatprep.subr.mxu0 0.0
  %7621 = vmatpush1.xpose.msra.mxu0 %v7588
  %7622 = vmatprep.subr.mxu0 0.0
  %7623 = vmatpush1.xpose.msra.mxu0 %v7590
  %7624 = vmatprep.subr.mxu0 0.0
  %7625 = vmatpush1.xpose.msra.mxu0 %v7592
  %7626 = vmatprep.subr.mxu0 0.0
  %7627 = vmatpush1.xpose.msra.mxu0 %v7594
  %7628 = vmatprep.subr.mxu0 0.0
  %7629 = vmatpush1.xpose.msra.mxu0 %v7596
  %7630 = vmatprep.subr.mxu0 0.0
  %7631 = vmatpush1.xpose.msra.mxu0 %v7598
  %7632 = vmatprep.subr.mxu0 0.0
  %7633 = vmatpush1.xpose.msra.mxu0 0.0
  %7634 = vmatprep.subr.mxu0 0.0
  %7635 = vmatpush1.xpose.msra.mxu0 0.0
  %7636 = vmatprep.subr.mxu0 0.0
  %7637 = vmatpush1.xpose.msra.mxu0 0.0
  %7638 = vmatprep.subr.mxu0 0.0
  %7639 = vmatpush1.xpose.msra.mxu0 0.0
  %7640 = vmatprep.subr.mxu0 0.0
  %7641 = vmatpush1.xpose.msra.mxu0 0.0
  %7642 = vmatprep.subr.mxu0 0.0
  %7643 = vmatpush1.xpose.msra.mxu0 0.0
  %7644 = vmatprep.subr.mxu0 0.0
  %7645 = vmatpush1.xpose.msra.mxu0 0.0
  %7646 = vmatprep.subr.mxu0 0.0
  %7647 = vmatpush1.xpose.msra.mxu0 0.0
  %7648 = vmatprep.subr.mxu0 0.0
  %7649 = vmatpush1.xpose.msra.mxu0 0.0
  %7650 = vmatprep.subr.mxu0 0.0
  %7651 = vmatpush1.xpose.msra.mxu0 0.0
  %7652 = vmatprep.subr.mxu0 0.0
  %7653 = vmatpush1.xpose.msra.mxu0 0.0
  %7654 = vmatprep.subr.mxu0 0.0
  %7655 = vmatpush1.xpose.msra.mxu0 0.0
  %7656 = vmatprep.subr.mxu0 0.0
  %7657 = vmatpush1.xpose.msra.mxu0 0.0
  %7658 = vmatprep.subr.mxu0 0.0
  %7659 = vmatpush1.xpose.msra.mxu0 0.0
  %7660 = vmatprep.subr.mxu0 0.0
  %7661 = vmatpush1.xpose.msra.mxu0 0.0
  %7662 = vmatprep.subr.mxu0 0.0
  %7663 = vmatpush1.xpose.msra.mxu0 0.0
  %7664 = vmatprep.mubr.f32.mxu0 0.0
  %7665 = vmatmul.mubr.f32.gmra.mrb[0].mxu0 %v7552
  %v7666 = vpop.f32.mrb[0].mxu0
  %v7667 = vadd.f32 %v80, %v7666
  %v7668 = vpop.f32.mrb[0].mxu0
  %7669 = vmatprep.mubr.f32.mxu0 0.0
  %7670 = vmatmul.mubr.f32.gmra.mrb[0].mxu0 %v7554
  %v7671 = vpop.f32.mrb[0].mxu0
  %v7672 = vadd.f32 %v81, %v7671
  %v7673 = vpop.f32.mrb[0].mxu0
  %7674 = vmatprep.mubr.f32.mxu0 0.0
  %7675 = vmatmul.mubr.f32.gmra.mrb[0].mxu0 %v7556
  %v7676 = vpop.f32.mrb[0].mxu0
  %v7677 = vadd.f32 %v82, %v7676
  %v7678 = vpop.f32.mrb[0].mxu0
  %7679 = vmatprep.mubr.f32.mxu0 0.0
  %7680 = vmatmul.mubr.f32.gmra.mrb[0].mxu0 %v7558
  %v7681 = vpop.f32.mrb[0].mxu0
  %v7682 = vadd.f32 %v83, %v7681
  %v7683 = vpop.f32.mrb[0].mxu0
  %7684 = vmatprep.mubr.f32.mxu0 0.0
  %7685 = vmatmul.mubr.f32.gmra.mrb[0].mxu0 %v7560
  %v7686 = vpop.f32.mrb[0].mxu0
  %v7687 = vadd.f32 %v84, %v7686
  %v7688 = vpop.f32.mrb[0].mxu0
  %7689 = vmatprep.mubr.f32.mxu0 0.0
  %7690 = vmatmul.mubr.f32.gmra.mrb[0].mxu0 %v7562
  %v7691 = vpop.f32.mrb[0].mxu0
  %v7692 = vadd.f32 %v85, %v7691
  %v7693 = vpop.f32.mrb[0].mxu0
  %7694 = vmatprep.mubr.f32.mxu0 0.0
  %7695 = vmatmul.mubr.f32.gmra.mrb[0].mxu0 %v7564
  %v7696 = vpop.f32.mrb[0].mxu0
  %v7697 = vadd.f32 %v86, %v7696
  %v7698 = vpop.f32.mrb[0].mxu0
  %7699 = vmatprep.mubr.f32.mxu0 0.0
  %7700 = vmatmul.mubr.f32.gmra.mrb[0].mxu0 %v7566
  %v7701 = vpop.f32.mrb[0].mxu0
  %v7702 = vadd.f32 %v87, %v7701
  %v7703 = vpop.f32.mrb[0].mxu0
  %7704 = vdwg.mxu0
  %7705 = vmax.xlane.f32.xlu0 %v7667
  %v7706 = vpop.xlane.xlu0 %7705
  %7707 = vmax.xlane.f32.xlu0 %v7672
  %v7708 = vpop.xlane.xlu0 %7707
  %7709 = vmax.xlane.f32.xlu0 %v7677
  %v7710 = vpop.xlane.xlu0 %7709
  %7711 = vmax.xlane.f32.xlu0 %v7682
  %v7712 = vpop.xlane.xlu0 %7711
  %7713 = vmax.xlane.f32.xlu0 %v7687
  %v7714 = vpop.xlane.xlu0 %7713
  %7715 = vmax.xlane.f32.xlu0 %v7692
  %v7716 = vpop.xlane.xlu0 %7715
  %7717 = vmax.xlane.f32.xlu0 %v7697
  %v7718 = vpop.xlane.xlu0 %7717
  %7719 = vmax.xlane.f32.xlu0 %v7702
  %v7720 = vpop.xlane.xlu0 %7719
  %v7721 = vsub.f32 %v7667, %v7706
  %v7722 = vsub.f32 %v7672, %v7708
  %v7723 = vsub.f32 %v7677, %v7710
  %v7724 = vsub.f32 %v7682, %v7712
  %v7725 = vsub.f32 %v7687, %v7714
  %v7726 = vsub.f32 %v7692, %v7716
  %v7727 = vsub.f32 %v7697, %v7718
  %v7728 = vsub.f32 %v7702, %v7720
  %v7729 = vmul.f32 %v7721, 1.442695
  %v7730 = vpow.pop %v7729
  %v7731 = vmul.f32 %v7722, 1.442695
  %v7732 = vpow.pop %v7731
  %v7733 = vmul.f32 %v7723, 1.442695
  %v7734 = vpow.pop %v7733
  %v7735 = vmul.f32 %v7724, 1.442695
  %v7736 = vpow.pop %v7735
  %v7737 = vmul.f32 %v7725, 1.442695
  %v7738 = vpow.pop %v7737
  %v7739 = vmul.f32 %v7726, 1.442695
  %v7740 = vpow.pop %v7739
  %v7741 = vmul.f32 %v7727, 1.442695
  %v7742 = vpow.pop %v7741
  %v7743 = vmul.f32 %v7728, 1.442695
  %v7744 = vpow.pop %v7743
  %7745 = vadd.xlane.f32.xlu0 %v7730
  %v7746 = vpop.xlane.xlu0 %7745
  %7747 = vadd.xlane.f32.xlu0 %v7732
  %v7748 = vpop.xlane.xlu0 %7747
  %7749 = vadd.xlane.f32.xlu0 %v7734
  %v7750 = vpop.xlane.xlu0 %7749
  %7751 = vadd.xlane.f32.xlu0 %v7736
  %v7752 = vpop.xlane.xlu0 %7751
  %7753 = vadd.xlane.f32.xlu0 %v7738
  %v7754 = vpop.xlane.xlu0 %7753
  %7755 = vadd.xlane.f32.xlu0 %v7740
  %v7756 = vpop.xlane.xlu0 %7755
  %7757 = vadd.xlane.f32.xlu0 %v7742
  %v7758 = vpop.xlane.xlu0 %7757
  %7759 = vadd.xlane.f32.xlu0 %v7744
  %v7760 = vpop.xlane.xlu0 %7759
  %v7761 = vrcp.pop %v7746
  %v7762 = vmul.f32 1.0, %v7761
  %v7763 = vrcp.pop %v7748
  %v7764 = vmul.f32 1.0, %v7763
  %v7765 = vrcp.pop %v7750
  %v7766 = vmul.f32 1.0, %v7765
  %v7767 = vrcp.pop %v7752
  %v7768 = vmul.f32 1.0, %v7767
  %v7769 = vrcp.pop %v7754
  %v7770 = vmul.f32 1.0, %v7769
  %v7771 = vrcp.pop %v7756
  %v7772 = vmul.f32 1.0, %v7771
  %v7773 = vrcp.pop %v7758
  %v7774 = vmul.f32 1.0, %v7773
  %v7775 = vrcp.pop %v7760
  %v7776 = vmul.f32 1.0, %v7775
  %v7777 = vmul.f32 %v7730, %v7762
  %v7778 = vmul.f32 %v7732, %v7764
  %v7779 = vmul.f32 %v7734, %v7766
  %v7780 = vmul.f32 %v7736, %v7768
  %v7781 = vmul.f32 %v7738, %v7770
  %v7782 = vmul.f32 %v7740, %v7772
  %v7783 = vmul.f32 %v7742, %v7774
  %v7784 = vmul.f32 %v7744, %v7776
  %7801 = vrot.lane.b32.xlu0 %v7064, 120
  %v7802 = vpop.permute.xlu0 %7801
  %7803 = vrot.lane.b32.xlu0 %v7069, 120
  %v7804 = vpop.permute.xlu0 %7803
  %7805 = vrot.lane.b32.xlu0 %v7074, 120
  %v7806 = vpop.permute.xlu0 %7805
  %7807 = vrot.lane.b32.xlu0 %v7079, 120
  %v7808 = vpop.permute.xlu0 %7807
  %7809 = vrot.lane.b32.xlu0 %v7084, 120
  %v7810 = vpop.permute.xlu0 %7809
  %7811 = vrot.lane.b32.xlu0 %v7089, 120
  %v7812 = vpop.permute.xlu0 %7811
  %7813 = vrot.lane.b32.xlu0 %v7094, 120
  %v7814 = vpop.permute.xlu0 %7813
  %7815 = vrot.lane.b32.xlu0 %v7099, 120
  %v7816 = vpop.permute.xlu0 %7815
  %7817 = vrot.lane.b32.xlu0 %v7104, 120
  %v7818 = vpop.permute.xlu0 %7817
  %7819 = vrot.lane.b32.xlu0 %v7109, 120
  %v7820 = vpop.permute.xlu0 %7819
  %7821 = vrot.lane.b32.xlu0 %v7114, 120
  %v7822 = vpop.permute.xlu0 %7821
  %7823 = vrot.lane.b32.xlu0 %v7119, 120
  %v7824 = vpop.permute.xlu0 %7823
  %7825 = vrot.lane.b32.xlu0 %v7124, 120
  %v7826 = vpop.permute.xlu0 %7825
  %7827 = vrot.lane.b32.xlu0 %v7129, 120
  %v7828 = vpop.permute.xlu0 %7827
  %7829 = vrot.lane.b32.xlu0 %v7134, 120
  %v7830 = vpop.permute.xlu0 %7829
  %7831 = vrot.lane.b32.xlu0 %v7139, 120
  %v7832 = vpop.permute.xlu0 %7831
  %7849 = vmatprep.subr.mxu0 0.0
  %7850 = vmatpush1.msra.mxu0 %v7802
  %7851 = vmatprep.subr.mxu0 0.0
  %7852 = vmatpush1.msra.mxu0 %v7804
  %7853 = vmatprep.subr.mxu0 0.0
  %7854 = vmatpush1.msra.mxu0 %v7806
  %7855 = vmatprep.subr.mxu0 0.0
  %7856 = vmatpush1.msra.mxu0 %v7808
  %7857 = vmatprep.subr.mxu0 0.0
  %7858 = vmatpush1.msra.mxu0 %v7810
  %7859 = vmatprep.subr.mxu0 0.0
  %7860 = vmatpush1.msra.mxu0 %v7812
  %7861 = vmatprep.subr.mxu0 0.0
  %7862 = vmatpush1.msra.mxu0 %v7814
  %7863 = vmatprep.subr.mxu0 0.0
  %7864 = vmatpush1.msra.mxu0 %v7816
  %7865 = vmatprep.subr.mxu0 0.0
  %7866 = vmatpush1.msra.mxu0 %v7818
  %7867 = vmatprep.subr.mxu0 0.0
  %7868 = vmatpush1.msra.mxu0 %v7820
  %7869 = vmatprep.subr.mxu0 0.0
  %7870 = vmatpush1.msra.mxu0 %v7822
  %7871 = vmatprep.subr.mxu0 0.0
  %7872 = vmatpush1.msra.mxu0 %v7824
  %7873 = vmatprep.subr.mxu0 0.0
  %7874 = vmatpush1.msra.mxu0 %v7826
  %7875 = vmatprep.subr.mxu0 0.0
  %7876 = vmatpush1.msra.mxu0 %v7828
  %7877 = vmatprep.subr.mxu0 0.0
  %7878 = vmatpush1.msra.mxu0 %v7830
  %7879 = vmatprep.subr.mxu0 0.0
  %7880 = vmatpush1.msra.mxu0 %v7832
  %7881 = vmatprep.subr.mxu0 0.0
  %7882 = vmatpush1.msra.mxu0 0.0
  %7883 = vmatprep.subr.mxu0 0.0
  %7884 = vmatpush1.msra.mxu0 0.0
  %7885 = vmatprep.subr.mxu0 0.0
  %7886 = vmatpush1.msra.mxu0 0.0
  %7887 = vmatprep.subr.mxu0 0.0
  %7888 = vmatpush1.msra.mxu0 0.0
  %7889 = vmatprep.subr.mxu0 0.0
  %7890 = vmatpush1.msra.mxu0 0.0
  %7891 = vmatprep.subr.mxu0 0.0
  %7892 = vmatpush1.msra.mxu0 0.0
  %7893 = vmatprep.subr.mxu0 0.0
  %7894 = vmatpush1.msra.mxu0 0.0
  %7895 = vmatprep.subr.mxu0 0.0
  %7896 = vmatpush1.msra.mxu0 0.0
  %7897 = vmatprep.subr.mxu0 0.0
  %7898 = vmatpush1.msra.mxu0 0.0
  %7899 = vmatprep.subr.mxu0 0.0
  %7900 = vmatpush1.msra.mxu0 0.0
  %7901 = vmatprep.subr.mxu0 0.0
  %7902 = vmatpush1.msra.mxu0 0.0
  %7903 = vmatprep.subr.mxu0 0.0
  %7904 = vmatpush1.msra.mxu0 0.0
  %7905 = vmatprep.subr.mxu0 0.0
  %7906 = vmatpush1.msra.mxu0 0.0
  %7907 = vmatprep.subr.mxu0 0.0
  %7908 = vmatpush1.msra.mxu0 0.0
  %7909 = vmatprep.subr.mxu0 0.0
  %7910 = vmatpush1.msra.mxu0 0.0
  %7911 = vmatprep.subr.mxu0 0.0
  %7912 = vmatpush1.msra.mxu0 0.0
  %7913 = vmatprep.mubr.f32.mxu0 0.0
  %7914 = vmatmul.mubr.f32.gmra.mrb[0].mxu0 %v7777
  %v7915 = vpop.f32.mrb[0].mxu0
  %v7916 = vadd.f32 0.0, %v7915
  %v7917 = vpop.f32.mrb[0].mxu0
  %7918 = vmatprep.mubr.f32.mxu0 0.0
  %7919 = vmatmul.mubr.f32.gmra.mrb[0].mxu0 %v7778
  %v7920 = vpop.f32.mrb[0].mxu0
  %v7921 = vadd.f32 0.0, %v7920
  %v7922 = vpop.f32.mrb[0].mxu0
  %7923 = vmatprep.mubr.f32.mxu0 0.0
  %7924 = vmatmul.mubr.f32.gmra.mrb[0].mxu0 %v7779
  %v7925 = vpop.f32.mrb[0].mxu0
  %v7926 = vadd.f32 0.0, %v7925
  %v7927 = vpop.f32.mrb[0].mxu0
  %7928 = vmatprep.mubr.f32.mxu0 0.0
  %7929 = vmatmul.mubr.f32.gmra.mrb[0].mxu0 %v7780
  %v7930 = vpop.f32.mrb[0].mxu0
  %v7931 = vadd.f32 0.0, %v7930
  %v7932 = vpop.f32.mrb[0].mxu0
  %7933 = vmatprep.mubr.f32.mxu0 0.0
  %7934 = vmatmul.mubr.f32.gmra.mrb[0].mxu0 %v7781
  %v7935 = vpop.f32.mrb[0].mxu0
  %v7936 = vadd.f32 0.0, %v7935
  %v7937 = vpop.f32.mrb[0].mxu0
  %7938 = vmatprep.mubr.f32.mxu0 0.0
  %7939 = vmatmul.mubr.f32.gmra.mrb[0].mxu0 %v7782
  %v7940 = vpop.f32.mrb[0].mxu0
  %v7941 = vadd.f32 0.0, %v7940
  %v7942 = vpop.f32.mrb[0].mxu0
  %7943 = vmatprep.mubr.f32.mxu0 0.0
  %7944 = vmatmul.mubr.f32.gmra.mrb[0].mxu0 %v7783
  %v7945 = vpop.f32.mrb[0].mxu0
  %v7946 = vadd.f32 0.0, %v7945
  %v7947 = vpop.f32.mrb[0].mxu0
  %7948 = vmatprep.mubr.f32.mxu0 0.0
  %7949 = vmatmul.mubr.f32.gmra.mrb[0].mxu0 %v7784
  %v7950 = vpop.f32.mrb[0].mxu0
  %v7951 = vadd.f32 0.0, %v7950
  %v7952 = vpop.f32.mrb[0].mxu0
  %7953 = vdwg.mxu0
  %7954 = vrot.lane.b32.xlu0 %v6748, 112
  %v7955 = vpop.permute.xlu0 %7954
  %7956 = vrot.lane.b32.xlu0 %v6753, 112
  %v7957 = vpop.permute.xlu0 %7956
  %7958 = vrot.lane.b32.xlu0 %v6758, 112
  %v7959 = vpop.permute.xlu0 %7958
  %7960 = vrot.lane.b32.xlu0 %v6763, 112
  %v7961 = vpop.permute.xlu0 %7960
  %7962 = vrot.lane.b32.xlu0 %v6768, 112
  %v7963 = vpop.permute.xlu0 %7962
  %7964 = vrot.lane.b32.xlu0 %v6773, 112
  %v7965 = vpop.permute.xlu0 %7964
  %7966 = vrot.lane.b32.xlu0 %v6778, 112
  %v7967 = vpop.permute.xlu0 %7966
  %7968 = vrot.lane.b32.xlu0 %v6783, 112
  %v7969 = vpop.permute.xlu0 %7968
  %7970 = vrot.lane.b32.xlu0 %v6910, 112
  %v7971 = vpop.permute.xlu0 %7970
  %7972 = vrot.lane.b32.xlu0 %v6915, 112
  %v7973 = vpop.permute.xlu0 %7972
  %7974 = vrot.lane.b32.xlu0 %v6920, 112
  %v7975 = vpop.permute.xlu0 %7974
  %7976 = vrot.lane.b32.xlu0 %v6925, 112
  %v7977 = vpop.permute.xlu0 %7976
  %7978 = vrot.lane.b32.xlu0 %v6930, 112
  %v7979 = vpop.permute.xlu0 %7978
  %7980 = vrot.lane.b32.xlu0 %v6935, 112
  %v7981 = vpop.permute.xlu0 %7980
  %7982 = vrot.lane.b32.xlu0 %v6940, 112
  %v7983 = vpop.permute.xlu0 %7982
  %7984 = vrot.lane.b32.xlu0 %v6945, 112
  %v7985 = vpop.permute.xlu0 %7984
  %7986 = vrot.lane.b32.xlu0 %v6950, 112
  %v7987 = vpop.permute.xlu0 %7986
  %7988 = vrot.lane.b32.xlu0 %v6955, 112
  %v7989 = vpop.permute.xlu0 %7988
  %7990 = vrot.lane.b32.xlu0 %v6960, 112
  %v7991 = vpop.permute.xlu0 %7990
  %7992 = vrot.lane.b32.xlu0 %v6965, 112
  %v7993 = vpop.permute.xlu0 %7992
  %7994 = vrot.lane.b32.xlu0 %v6970, 112
  %v7995 = vpop.permute.xlu0 %7994
  %7996 = vrot.lane.b32.xlu0 %v6975, 112
  %v7997 = vpop.permute.xlu0 %7996
  %7998 = vrot.lane.b32.xlu0 %v6980, 112
  %v7999 = vpop.permute.xlu0 %7998
  %8000 = vrot.lane.b32.xlu0 %v6985, 112
  %v8001 = vpop.permute.xlu0 %8000
  %v8002 = vsel %vm455, %v7955, 0
  %v8004 = vsel %vm455, %v7957, 0
  %v8006 = vsel %vm455, %v7959, 0
  %v8008 = vsel %vm455, %v7961, 0
  %v8010 = vsel %vm455, %v7963, 0
  %v8012 = vsel %vm455, %v7965, 0
  %v8014 = vsel %vm455, %v7967, 0
  %v8016 = vsel %vm455, %v7969, 0
  %v8018 = vsel %vm455, %v7971, 0
  %v8020 = vsel %vm455, %v7973, 0
  %v8022 = vsel %vm455, %v7975, 0
  %v8024 = vsel %vm455, %v7977, 0
  %v8026 = vsel %vm455, %v7979, 0
  %v8028 = vsel %vm455, %v7981, 0
  %v8030 = vsel %vm455, %v7983, 0
  %v8032 = vsel %vm455, %v7985, 0
  %v8034 = vsel %vm455, %v7987, 0
  %v8036 = vsel %vm455, %v7989, 0
  %v8038 = vsel %vm455, %v7991, 0
  %v8040 = vsel %vm455, %v7993, 0
  %v8042 = vsel %vm455, %v7995, 0
  %v8044 = vsel %vm455, %v7997, 0
  %v8046 = vsel %vm455, %v7999, 0
  %v8048 = vsel %vm455, %v8001, 0
  %8050 = vmatprep.subr.mxu0 0.0
  %8051 = vmatpush1.xpose.msra.mxu0 %v8018
  %8052 = vmatprep.subr.mxu0 0.0
  %8053 = vmatpush1.xpose.msra.mxu0 %v8020
  %8054 = vmatprep.subr.mxu0 0.0
  %8055 = vmatpush1.xpose.msra.mxu0 %v8022
  %8056 = vmatprep.subr.mxu0 0.0
  %8057 = vmatpush1.xpose.msra.mxu0 %v8024
  %8058 = vmatprep.subr.mxu0 0.0
  %8059 = vmatpush1.xpose.msra.mxu0 %v8026
  %8060 = vmatprep.subr.mxu0 0.0
  %8061 = vmatpush1.xpose.msra.mxu0 %v8028
  %8062 = vmatprep.subr.mxu0 0.0
  %8063 = vmatpush1.xpose.msra.mxu0 %v8030
  %8064 = vmatprep.subr.mxu0 0.0
  %8065 = vmatpush1.xpose.msra.mxu0 %v8032
  %8066 = vmatprep.subr.mxu0 0.0
  %8067 = vmatpush1.xpose.msra.mxu0 %v8034
  %8068 = vmatprep.subr.mxu0 0.0
  %8069 = vmatpush1.xpose.msra.mxu0 %v8036
  %8070 = vmatprep.subr.mxu0 0.0
  %8071 = vmatpush1.xpose.msra.mxu0 %v8038
  %8072 = vmatprep.subr.mxu0 0.0
  %8073 = vmatpush1.xpose.msra.mxu0 %v8040
  %8074 = vmatprep.subr.mxu0 0.0
  %8075 = vmatpush1.xpose.msra.mxu0 %v8042
  %8076 = vmatprep.subr.mxu0 0.0
  %8077 = vmatpush1.xpose.msra.mxu0 %v8044
  %8078 = vmatprep.subr.mxu0 0.0
  %8079 = vmatpush1.xpose.msra.mxu0 %v8046
  %8080 = vmatprep.subr.mxu0 0.0
  %8081 = vmatpush1.xpose.msra.mxu0 %v8048
  %8082 = vmatprep.subr.mxu0 0.0
  %8083 = vmatpush1.xpose.msra.mxu0 0.0
  %8084 = vmatprep.subr.mxu0 0.0
  %8085 = vmatpush1.xpose.msra.mxu0 0.0
  %8086 = vmatprep.subr.mxu0 0.0
  %8087 = vmatpush1.xpose.msra.mxu0 0.0
  %8088 = vmatprep.subr.mxu0 0.0
  %8089 = vmatpush1.xpose.msra.mxu0 0.0
  %8090 = vmatprep.subr.mxu0 0.0
  %8091 = vmatpush1.xpose.msra.mxu0 0.0
  %8092 = vmatprep.subr.mxu0 0.0
  %8093 = vmatpush1.xpose.msra.mxu0 0.0
  %8094 = vmatprep.subr.mxu0 0.0
  %8095 = vmatpush1.xpose.msra.mxu0 0.0
  %8096 = vmatprep.subr.mxu0 0.0
  %8097 = vmatpush1.xpose.msra.mxu0 0.0
  %8098 = vmatprep.subr.mxu0 0.0
  %8099 = vmatpush1.xpose.msra.mxu0 0.0
  %8100 = vmatprep.subr.mxu0 0.0
  %8101 = vmatpush1.xpose.msra.mxu0 0.0
  %8102 = vmatprep.subr.mxu0 0.0
  %8103 = vmatpush1.xpose.msra.mxu0 0.0
  %8104 = vmatprep.subr.mxu0 0.0
  %8105 = vmatpush1.xpose.msra.mxu0 0.0
  %8106 = vmatprep.subr.mxu0 0.0
  %8107 = vmatpush1.xpose.msra.mxu0 0.0
  %8108 = vmatprep.subr.mxu0 0.0
  %8109 = vmatpush1.xpose.msra.mxu0 0.0
  %8110 = vmatprep.subr.mxu0 0.0
  %8111 = vmatpush1.xpose.msra.mxu0 0.0
  %8112 = vmatprep.subr.mxu0 0.0
  %8113 = vmatpush1.xpose.msra.mxu0 0.0
  %8114 = vmatprep.mubr.f32.mxu0 0.0
  %8115 = vmatmul.mubr.f32.gmra.mrb[0].mxu0 %v8002
  %v8116 = vpop.f32.mrb[0].mxu0
  %v8117 = vadd.f32 %v80, %v8116
  %v8118 = vpop.f32.mrb[0].mxu0
  %8119 = vmatprep.mubr.f32.mxu0 0.0
  %8120 = vmatmul.mubr.f32.gmra.mrb[0].mxu0 %v8004
  %v8121 = vpop.f32.mrb[0].mxu0
  %v8122 = vadd.f32 %v81, %v8121
  %v8123 = vpop.f32.mrb[0].mxu0
  %8124 = vmatprep.mubr.f32.mxu0 0.0
  %8125 = vmatmul.mubr.f32.gmra.mrb[0].mxu0 %v8006
  %v8126 = vpop.f32.mrb[0].mxu0
  %v8127 = vadd.f32 %v82, %v8126
  %v8128 = vpop.f32.mrb[0].mxu0
  %8129 = vmatprep.mubr.f32.mxu0 0.0
  %8130 = vmatmul.mubr.f32.gmra.mrb[0].mxu0 %v8008
  %v8131 = vpop.f32.mrb[0].mxu0
  %v8132 = vadd.f32 %v83, %v8131
  %v8133 = vpop.f32.mrb[0].mxu0
  %8134 = vmatprep.mubr.f32.mxu0 0.0
  %8135 = vmatmul.mubr.f32.gmra.mrb[0].mxu0 %v8010
  %v8136 = vpop.f32.mrb[0].mxu0
  %v8137 = vadd.f32 %v84, %v8136
  %v8138 = vpop.f32.mrb[0].mxu0
  %8139 = vmatprep.mubr.f32.mxu0 0.0
  %8140 = vmatmul.mubr.f32.gmra.mrb[0].mxu0 %v8012
  %v8141 = vpop.f32.mrb[0].mxu0
  %v8142 = vadd.f32 %v85, %v8141
  %v8143 = vpop.f32.mrb[0].mxu0
  %8144 = vmatprep.mubr.f32.mxu0 0.0
  %8145 = vmatmul.mubr.f32.gmra.mrb[0].mxu0 %v8014
  %v8146 = vpop.f32.mrb[0].mxu0
  %v8147 = vadd.f32 %v86, %v8146
  %v8148 = vpop.f32.mrb[0].mxu0
  %8149 = vmatprep.mubr.f32.mxu0 0.0
  %8150 = vmatmul.mubr.f32.gmra.mrb[0].mxu0 %v8016
  %v8151 = vpop.f32.mrb[0].mxu0
  %v8152 = vadd.f32 %v87, %v8151
  %v8153 = vpop.f32.mrb[0].mxu0
  %8154 = vdwg.mxu0
  %8155 = vmax.xlane.f32.xlu0 %v8117
  %v8156 = vpop.xlane.xlu0 %8155
  %8157 = vmax.xlane.f32.xlu0 %v8122
  %v8158 = vpop.xlane.xlu0 %8157
  %8159 = vmax.xlane.f32.xlu0 %v8127
  %v8160 = vpop.xlane.xlu0 %8159
  %8161 = vmax.xlane.f32.xlu0 %v8132
  %v8162 = vpop.xlane.xlu0 %8161
  %8163 = vmax.xlane.f32.xlu0 %v8137
  %v8164 = vpop.xlane.xlu0 %8163
  %8165 = vmax.xlane.f32.xlu0 %v8142
  %v8166 = vpop.xlane.xlu0 %8165
  %8167 = vmax.xlane.f32.xlu0 %v8147
  %v8168 = vpop.xlane.xlu0 %8167
  %8169 = vmax.xlane.f32.xlu0 %v8152
  %v8170 = vpop.xlane.xlu0 %8169
  %v8171 = vsub.f32 %v8117, %v8156
  %v8172 = vsub.f32 %v8122, %v8158
  %v8173 = vsub.f32 %v8127, %v8160
  %v8174 = vsub.f32 %v8132, %v8162
  %v8175 = vsub.f32 %v8137, %v8164
  %v8176 = vsub.f32 %v8142, %v8166
  %v8177 = vsub.f32 %v8147, %v8168
  %v8178 = vsub.f32 %v8152, %v8170
  %v8179 = vmul.f32 %v8171, 1.442695
  %v8180 = vpow.pop %v8179
  %v8181 = vmul.f32 %v8172, 1.442695
  %v8182 = vpow.pop %v8181
  %v8183 = vmul.f32 %v8173, 1.442695
  %v8184 = vpow.pop %v8183
  %v8185 = vmul.f32 %v8174, 1.442695
  %v8186 = vpow.pop %v8185
  %v8187 = vmul.f32 %v8175, 1.442695
  %v8188 = vpow.pop %v8187
  %v8189 = vmul.f32 %v8176, 1.442695
  %v8190 = vpow.pop %v8189
  %v8191 = vmul.f32 %v8177, 1.442695
  %v8192 = vpow.pop %v8191
  %v8193 = vmul.f32 %v8178, 1.442695
  %v8194 = vpow.pop %v8193
  %8195 = vadd.xlane.f32.xlu0 %v8180
  %v8196 = vpop.xlane.xlu0 %8195
  %8197 = vadd.xlane.f32.xlu0 %v8182
  %v8198 = vpop.xlane.xlu0 %8197
  %8199 = vadd.xlane.f32.xlu0 %v8184
  %v8200 = vpop.xlane.xlu0 %8199
  %8201 = vadd.xlane.f32.xlu0 %v8186
  %v8202 = vpop.xlane.xlu0 %8201
  %8203 = vadd.xlane.f32.xlu0 %v8188
  %v8204 = vpop.xlane.xlu0 %8203
  %8205 = vadd.xlane.f32.xlu0 %v8190
  %v8206 = vpop.xlane.xlu0 %8205
  %8207 = vadd.xlane.f32.xlu0 %v8192
  %v8208 = vpop.xlane.xlu0 %8207
  %8209 = vadd.xlane.f32.xlu0 %v8194
  %v8210 = vpop.xlane.xlu0 %8209
  %v8211 = vrcp.pop %v8196
  %v8212 = vmul.f32 1.0, %v8211
  %v8213 = vrcp.pop %v8198
  %v8214 = vmul.f32 1.0, %v8213
  %v8215 = vrcp.pop %v8200
  %v8216 = vmul.f32 1.0, %v8215
  %v8217 = vrcp.pop %v8202
  %v8218 = vmul.f32 1.0, %v8217
  %v8219 = vrcp.pop %v8204
  %v8220 = vmul.f32 1.0, %v8219
  %v8221 = vrcp.pop %v8206
  %v8222 = vmul.f32 1.0, %v8221
  %v8223 = vrcp.pop %v8208
  %v8224 = vmul.f32 1.0, %v8223
  %v8225 = vrcp.pop %v8210
  %v8226 = vmul.f32 1.0, %v8225
  %v8227 = vmul.f32 %v8180, %v8212
  %v8228 = vmul.f32 %v8182, %v8214
  %v8229 = vmul.f32 %v8184, %v8216
  %v8230 = vmul.f32 %v8186, %v8218
  %v8231 = vmul.f32 %v8188, %v8220
  %v8232 = vmul.f32 %v8190, %v8222
  %v8233 = vmul.f32 %v8192, %v8224
  %v8234 = vmul.f32 %v8194, %v8226
  %8235 = vrot.lane.b32.xlu0 %v7064, 112
  %v8236 = vpop.permute.xlu0 %8235
  %8237 = vrot.lane.b32.xlu0 %v7069, 112
  %v8238 = vpop.permute.xlu0 %8237
  %8239 = vrot.lane.b32.xlu0 %v7074, 112
  %v8240 = vpop.permute.xlu0 %8239
  %8241 = vrot.lane.b32.xlu0 %v7079, 112
  %v8242 = vpop.permute.xlu0 %8241
  %8243 = vrot.lane.b32.xlu0 %v7084, 112
  %v8244 = vpop.permute.xlu0 %8243
  %8245 = vrot.lane.b32.xlu0 %v7089, 112
  %v8246 = vpop.permute.xlu0 %8245
  %8247 = vrot.lane.b32.xlu0 %v7094, 112
  %v8248 = vpop.permute.xlu0 %8247
  %8249 = vrot.lane.b32.xlu0 %v7099, 112
  %v8250 = vpop.permute.xlu0 %8249
  %8251 = vrot.lane.b32.xlu0 %v7104, 112
  %v8252 = vpop.permute.xlu0 %8251
  %8253 = vrot.lane.b32.xlu0 %v7109, 112
  %v8254 = vpop.permute.xlu0 %8253
  %8255 = vrot.lane.b32.xlu0 %v7114, 112
  %v8256 = vpop.permute.xlu0 %8255
  %8257 = vrot.lane.b32.xlu0 %v7119, 112
  %v8258 = vpop.permute.xlu0 %8257
  %8259 = vrot.lane.b32.xlu0 %v7124, 112
  %v8260 = vpop.permute.xlu0 %8259
  %8261 = vrot.lane.b32.xlu0 %v7129, 112
  %v8262 = vpop.permute.xlu0 %8261
  %8263 = vrot.lane.b32.xlu0 %v7134, 112
  %v8264 = vpop.permute.xlu0 %8263
  %8265 = vrot.lane.b32.xlu0 %v7139, 112
  %v8266 = vpop.permute.xlu0 %8265
  %8283 = vmatprep.subr.mxu0 0.0
  %8284 = vmatpush1.msra.mxu0 %v8236
  %8285 = vmatprep.subr.mxu0 0.0
  %8286 = vmatpush1.msra.mxu0 %v8238
  %8287 = vmatprep.subr.mxu0 0.0
  %8288 = vmatpush1.msra.mxu0 %v8240
  %8289 = vmatprep.subr.mxu0 0.0
  %8290 = vmatpush1.msra.mxu0 %v8242
  %8291 = vmatprep.subr.mxu0 0.0
  %8292 = vmatpush1.msra.mxu0 %v8244
  %8293 = vmatprep.subr.mxu0 0.0
  %8294 = vmatpush1.msra.mxu0 %v8246
  %8295 = vmatprep.subr.mxu0 0.0
  %8296 = vmatpush1.msra.mxu0 %v8248
  %8297 = vmatprep.subr.mxu0 0.0
  %8298 = vmatpush1.msra.mxu0 %v8250
  %8299 = vmatprep.subr.mxu0 0.0
  %8300 = vmatpush1.msra.mxu0 %v8252
  %8301 = vmatprep.subr.mxu0 0.0
  %8302 = vmatpush1.msra.mxu0 %v8254
  %8303 = vmatprep.subr.mxu0 0.0
  %8304 = vmatpush1.msra.mxu0 %v8256
  %8305 = vmatprep.subr.mxu0 0.0
  %8306 = vmatpush1.msra.mxu0 %v8258
  %8307 = vmatprep.subr.mxu0 0.0
  %8308 = vmatpush1.msra.mxu0 %v8260
  %8309 = vmatprep.subr.mxu0 0.0
  %8310 = vmatpush1.msra.mxu0 %v8262
  %8311 = vmatprep.subr.mxu0 0.0
  %8312 = vmatpush1.msra.mxu0 %v8264
  %8313 = vmatprep.subr.mxu0 0.0
  %8314 = vmatpush1.msra.mxu0 %v8266
  %8315 = vmatprep.subr.mxu0 0.0
  %8316 = vmatpush1.msra.mxu0 0.0
  %8317 = vmatprep.subr.mxu0 0.0
  %8318 = vmatpush1.msra.mxu0 0.0
  %8319 = vmatprep.subr.mxu0 0.0
  %8320 = vmatpush1.msra.mxu0 0.0
  %8321 = vmatprep.subr.mxu0 0.0
  %8322 = vmatpush1.msra.mxu0 0.0
  %8323 = vmatprep.subr.mxu0 0.0
  %8324 = vmatpush1.msra.mxu0 0.0
  %8325 = vmatprep.subr.mxu0 0.0
  %8326 = vmatpush1.msra.mxu0 0.0
  %8327 = vmatprep.subr.mxu0 0.0
  %8328 = vmatpush1.msra.mxu0 0.0
  %8329 = vmatprep.subr.mxu0 0.0
  %8330 = vmatpush1.msra.mxu0 0.0
  %8331 = vmatprep.subr.mxu0 0.0
  %8332 = vmatpush1.msra.mxu0 0.0
  %8333 = vmatprep.subr.mxu0 0.0
  %8334 = vmatpush1.msra.mxu0 0.0
  %8335 = vmatprep.subr.mxu0 0.0
  %8336 = vmatpush1.msra.mxu0 0.0
  %8337 = vmatprep.subr.mxu0 0.0
  %8338 = vmatpush1.msra.mxu0 0.0
  %8339 = vmatprep.subr.mxu0 0.0
  %8340 = vmatpush1.msra.mxu0 0.0
  %8341 = vmatprep.subr.mxu0 0.0
  %8342 = vmatpush1.msra.mxu0 0.0
  %8343 = vmatprep.subr.mxu0 0.0
  %8344 = vmatpush1.msra.mxu0 0.0
  %8345 = vmatprep.subr.mxu0 0.0
  %8346 = vmatpush1.msra.mxu0 0.0
  %8347 = vmatprep.mubr.f32.mxu0 0.0
  %8348 = vmatmul.mubr.f32.gmra.mrb[0].mxu0 %v8227
  %v8349 = vpop.f32.mrb[0].mxu0
  %v8350 = vadd.f32 0.0, %v8349
  %v8351 = vpop.f32.mrb[0].mxu0
  %8352 = vmatprep.mubr.f32.mxu0 0.0
  %8353 = vmatmul.mubr.f32.gmra.mrb[0].mxu0 %v8228
  %v8354 = vpop.f32.mrb[0].mxu0
  %v8355 = vadd.f32 0.0, %v8354
  %v8356 = vpop.f32.mrb[0].mxu0
  %8357 = vmatprep.mubr.f32.mxu0 0.0
  %8358 = vmatmul.mubr.f32.gmra.mrb[0].mxu0 %v8229
  %v8359 = vpop.f32.mrb[0].mxu0
  %v8360 = vadd.f32 0.0, %v8359
  %v8361 = vpop.f32.mrb[0].mxu0
  %8362 = vmatprep.mubr.f32.mxu0 0.0
  %8363 = vmatmul.mubr.f32.gmra.mrb[0].mxu0 %v8230
  %v8364 = vpop.f32.mrb[0].mxu0
  %v8365 = vadd.f32 0.0, %v8364
  %v8366 = vpop.f32.mrb[0].mxu0
  %8367 = vmatprep.mubr.f32.mxu0 0.0
  %8368 = vmatmul.mubr.f32.gmra.mrb[0].mxu0 %v8231
  %v8369 = vpop.f32.mrb[0].mxu0
  %v8370 = vadd.f32 0.0, %v8369
  %v8371 = vpop.f32.mrb[0].mxu0
  %8372 = vmatprep.mubr.f32.mxu0 0.0
  %8373 = vmatmul.mubr.f32.gmra.mrb[0].mxu0 %v8232
  %v8374 = vpop.f32.mrb[0].mxu0
  %v8375 = vadd.f32 0.0, %v8374
  %v8376 = vpop.f32.mrb[0].mxu0
  %8377 = vmatprep.mubr.f32.mxu0 0.0
  %8378 = vmatmul.mubr.f32.gmra.mrb[0].mxu0 %v8233
  %v8379 = vpop.f32.mrb[0].mxu0
  %v8380 = vadd.f32 0.0, %v8379
  %v8381 = vpop.f32.mrb[0].mxu0
  %8382 = vmatprep.mubr.f32.mxu0 0.0
  %8383 = vmatmul.mubr.f32.gmra.mrb[0].mxu0 %v8234
  %v8384 = vpop.f32.mrb[0].mxu0
  %v8385 = vadd.f32 0.0, %v8384
  %v8386 = vpop.f32.mrb[0].mxu0
  %8387 = vdwg.mxu0
  %8388 = vrot.lane.b32.xlu0 %v6748, 104
  %v8389 = vpop.permute.xlu0 %8388
  %8390 = vrot.lane.b32.xlu0 %v6753, 104
  %v8391 = vpop.permute.xlu0 %8390
  %8392 = vrot.lane.b32.xlu0 %v6758, 104
  %v8393 = vpop.permute.xlu0 %8392
  %8394 = vrot.lane.b32.xlu0 %v6763, 104
  %v8395 = vpop.permute.xlu0 %8394
  %8396 = vrot.lane.b32.xlu0 %v6768, 104
  %v8397 = vpop.permute.xlu0 %8396
  %8398 = vrot.lane.b32.xlu0 %v6773, 104
  %v8399 = vpop.permute.xlu0 %8398
  %8400 = vrot.lane.b32.xlu0 %v6778, 104
  %v8401 = vpop.permute.xlu0 %8400
  %8402 = vrot.lane.b32.xlu0 %v6783, 104
  %v8403 = vpop.permute.xlu0 %8402
  %8404 = vrot.lane.b32.xlu0 %v6910, 104
  %v8405 = vpop.permute.xlu0 %8404
  %8406 = vrot.lane.b32.xlu0 %v6915, 104
  %v8407 = vpop.permute.xlu0 %8406
  %8408 = vrot.lane.b32.xlu0 %v6920, 104
  %v8409 = vpop.permute.xlu0 %8408
  %8410 = vrot.lane.b32.xlu0 %v6925, 104
  %v8411 = vpop.permute.xlu0 %8410
  %8412 = vrot.lane.b32.xlu0 %v6930, 104
  %v8413 = vpop.permute.xlu0 %8412
  %8414 = vrot.lane.b32.xlu0 %v6935, 104
  %v8415 = vpop.permute.xlu0 %8414
  %8416 = vrot.lane.b32.xlu0 %v6940, 104
  %v8417 = vpop.permute.xlu0 %8416
  %8418 = vrot.lane.b32.xlu0 %v6945, 104
  %v8419 = vpop.permute.xlu0 %8418
  %8420 = vrot.lane.b32.xlu0 %v6950, 104
  %v8421 = vpop.permute.xlu0 %8420
  %8422 = vrot.lane.b32.xlu0 %v6955, 104
  %v8423 = vpop.permute.xlu0 %8422
  %8424 = vrot.lane.b32.xlu0 %v6960, 104
  %v8425 = vpop.permute.xlu0 %8424
  %8426 = vrot.lane.b32.xlu0 %v6965, 104
  %v8427 = vpop.permute.xlu0 %8426
  %8428 = vrot.lane.b32.xlu0 %v6970, 104
  %v8429 = vpop.permute.xlu0 %8428
  %8430 = vrot.lane.b32.xlu0 %v6975, 104
  %v8431 = vpop.permute.xlu0 %8430
  %8432 = vrot.lane.b32.xlu0 %v6980, 104
  %v8433 = vpop.permute.xlu0 %8432
  %8434 = vrot.lane.b32.xlu0 %v6985, 104
  %v8435 = vpop.permute.xlu0 %8434
  %v8436 = vsel %vm455, %v8389, 0
  %v8438 = vsel %vm455, %v8391, 0
  %v8440 = vsel %vm455, %v8393, 0
  %v8442 = vsel %vm455, %v8395, 0
  %v8444 = vsel %vm455, %v8397, 0
  %v8446 = vsel %vm455, %v8399, 0
  %v8448 = vsel %vm455, %v8401, 0
  %v8450 = vsel %vm455, %v8403, 0
  %v8452 = vsel %vm455, %v8405, 0
  %v8454 = vsel %vm455, %v8407, 0
  %v8456 = vsel %vm455, %v8409, 0
  %v8458 = vsel %vm455, %v8411, 0
  %v8460 = vsel %vm455, %v8413, 0
  %v8462 = vsel %vm455, %v8415, 0
  %v8464 = vsel %vm455, %v8417, 0
  %v8466 = vsel %vm455, %v8419, 0
  %v8468 = vsel %vm455, %v8421, 0
  %v8470 = vsel %vm455, %v8423, 0
  %v8472 = vsel %vm455, %v8425, 0
  %v8474 = vsel %vm455, %v8427, 0
  %v8476 = vsel %vm455, %v8429, 0
  %v8478 = vsel %vm455, %v8431, 0
  %v8480 = vsel %vm455, %v8433, 0
  %v8482 = vsel %vm455, %v8435, 0
  %8484 = vmatprep.subr.mxu0 0.0
  %8485 = vmatpush1.xpose.msra.mxu0 %v8452
  %8486 = vmatprep.subr.mxu0 0.0
  %8487 = vmatpush1.xpose.msra.mxu0 %v8454
  %8488 = vmatprep.subr.mxu0 0.0
  %8489 = vmatpush1.xpose.msra.mxu0 %v8456
  %8490 = vmatprep.subr.mxu0 0.0
  %8491 = vmatpush1.xpose.msra.mxu0 %v8458
  %8492 = vmatprep.subr.mxu0 0.0
  %8493 = vmatpush1.xpose.msra.mxu0 %v8460
  %8494 = vmatprep.subr.mxu0 0.0
  %8495 = vmatpush1.xpose.msra.mxu0 %v8462
  %8496 = vmatprep.subr.mxu0 0.0
  %8497 = vmatpush1.xpose.msra.mxu0 %v8464
  %8498 = vmatprep.subr.mxu0 0.0
  %8499 = vmatpush1.xpose.msra.mxu0 %v8466
  %8500 = vmatprep.subr.mxu0 0.0
  %8501 = vmatpush1.xpose.msra.mxu0 %v8468
  %8502 = vmatprep.subr.mxu0 0.0
  %8503 = vmatpush1.xpose.msra.mxu0 %v8470
  %8504 = vmatprep.subr.mxu0 0.0
  %8505 = vmatpush1.xpose.msra.mxu0 %v8472
  %8506 = vmatprep.subr.mxu0 0.0
  %8507 = vmatpush1.xpose.msra.mxu0 %v8474
  %8508 = vmatprep.subr.mxu0 0.0
  %8509 = vmatpush1.xpose.msra.mxu0 %v8476
  %8510 = vmatprep.subr.mxu0 0.0
  %8511 = vmatpush1.xpose.msra.mxu0 %v8478
  %8512 = vmatprep.subr.mxu0 0.0
  %8513 = vmatpush1.xpose.msra.mxu0 %v8480
  %8514 = vmatprep.subr.mxu0 0.0
  %8515 = vmatpush1.xpose.msra.mxu0 %v8482
  %8516 = vmatprep.subr.mxu0 0.0
  %8517 = vmatpush1.xpose.msra.mxu0 0.0
  %8518 = vmatprep.subr.mxu0 0.0
  %8519 = vmatpush1.xpose.msra.mxu0 0.0
  %8520 = vmatprep.subr.mxu0 0.0
  %8521 = vmatpush1.xpose.msra.mxu0 0.0
  %8522 = vmatprep.subr.mxu0 0.0
  %8523 = vmatpush1.xpose.msra.mxu0 0.0
  %8524 = vmatprep.subr.mxu0 0.0
  %8525 = vmatpush1.xpose.msra.mxu0 0.0
  %8526 = vmatprep.subr.mxu0 0.0
  %8527 = vmatpush1.xpose.msra.mxu0 0.0
  %8528 = vmatprep.subr.mxu0 0.0
  %8529 = vmatpush1.xpose.msra.mxu0 0.0
  %8530 = vmatprep.subr.mxu0 0.0
  %8531 = vmatpush1.xpose.msra.mxu0 0.0
  %8532 = vmatprep.subr.mxu0 0.0
  %8533 = vmatpush1.xpose.msra.mxu0 0.0
  %8534 = vmatprep.subr.mxu0 0.0
  %8535 = vmatpush1.xpose.msra.mxu0 0.0
  %8536 = vmatprep.subr.mxu0 0.0
  %8537 = vmatpush1.xpose.msra.mxu0 0.0
  %8538 = vmatprep.subr.mxu0 0.0
  %8539 = vmatpush1.xpose.msra.mxu0 0.0
  %8540 = vmatprep.subr.mxu0 0.0
  %8541 = vmatpush1.xpose.msra.mxu0 0.0
  %8542 = vmatprep.subr.mxu0 0.0
  %8543 = vmatpush1.xpose.msra.mxu0 0.0
  %8544 = vmatprep.subr.mxu0 0.0
  %8545 = vmatpush1.xpose.msra.mxu0 0.0
  %8546 = vmatprep.subr.mxu0 0.0
  %8547 = vmatpush1.xpose.msra.mxu0 0.0
  %8548 = vmatprep.mubr.f32.mxu0 0.0
  %8549 = vmatmul.mubr.f32.gmra.mrb[0].mxu0 %v8436
  %v8550 = vpop.f32.mrb[0].mxu0
  %v8551 = vadd.f32 %v80, %v8550
  %v8552 = vpop.f32.mrb[0].mxu0
  %8553 = vmatprep.mubr.f32.mxu0 0.0
  %8554 = vmatmul.mubr.f32.gmra.mrb[0].mxu0 %v8438
  %v8555 = vpop.f32.mrb[0].mxu0
  %v8556 = vadd.f32 %v81, %v8555
  %v8557 = vpop.f32.mrb[0].mxu0
  %8558 = vmatprep.mubr.f32.mxu0 0.0
  %8559 = vmatmul.mubr.f32.gmra.mrb[0].mxu0 %v8440
  %v8560 = vpop.f32.mrb[0].mxu0
  %v8561 = vadd.f32 %v82, %v8560
  %v8562 = vpop.f32.mrb[0].mxu0
  %8563 = vmatprep.mubr.f32.mxu0 0.0
  %8564 = vmatmul.mubr.f32.gmra.mrb[0].mxu0 %v8442
  %v8565 = vpop.f32.mrb[0].mxu0
  %v8566 = vadd.f32 %v83, %v8565
  %v8567 = vpop.f32.mrb[0].mxu0
  %8568 = vmatprep.mubr.f32.mxu0 0.0
  %8569 = vmatmul.mubr.f32.gmra.mrb[0].mxu0 %v8444
  %v8570 = vpop.f32.mrb[0].mxu0
  %v8571 = vadd.f32 %v84, %v8570
  %v8572 = vpop.f32.mrb[0].mxu0
  %8573 = vmatprep.mubr.f32.mxu0 0.0
  %8574 = vmatmul.mubr.f32.gmra.mrb[0].mxu0 %v8446
  %v8575 = vpop.f32.mrb[0].mxu0
  %v8576 = vadd.f32 %v85, %v8575
  %v8577 = vpop.f32.mrb[0].mxu0
  %8578 = vmatprep.mubr.f32.mxu0 0.0
  %8579 = vmatmul.mubr.f32.gmra.mrb[0].mxu0 %v8448
  %v8580 = vpop.f32.mrb[0].mxu0
  %v8581 = vadd.f32 %v86, %v8580
  %v8582 = vpop.f32.mrb[0].mxu0
  %8583 = vmatprep.mubr.f32.mxu0 0.0
  %8584 = vmatmul.mubr.f32.gmra.mrb[0].mxu0 %v8450
  %v8585 = vpop.f32.mrb[0].mxu0
  %v8586 = vadd.f32 %v87, %v8585
  %v8587 = vpop.f32.mrb[0].mxu0
  %8588 = vdwg.mxu0
  %8589 = vmax.xlane.f32.xlu0 %v8551
  %v8590 = vpop.xlane.xlu0 %8589
  %8591 = vmax.xlane.f32.xlu0 %v8556
  %v8592 = vpop.xlane.xlu0 %8591
  %8593 = vmax.xlane.f32.xlu0 %v8561
  %v8594 = vpop.xlane.xlu0 %8593
  %8595 = vmax.xlane.f32.xlu0 %v8566
  %v8596 = vpop.xlane.xlu0 %8595
  %8597 = vmax.xlane.f32.xlu0 %v8571
  %v8598 = vpop.xlane.xlu0 %8597
  %8599 = vmax.xlane.f32.xlu0 %v8576
  %v8600 = vpop.xlane.xlu0 %8599
  %8601 = vmax.xlane.f32.xlu0 %v8581
  %v8602 = vpop.xlane.xlu0 %8601
  %8603 = vmax.xlane.f32.xlu0 %v8586
  %v8604 = vpop.xlane.xlu0 %8603
  %v8605 = vsub.f32 %v8551, %v8590
  %v8606 = vsub.f32 %v8556, %v8592
  %v8607 = vsub.f32 %v8561, %v8594
  %v8608 = vsub.f32 %v8566, %v8596
  %v8609 = vsub.f32 %v8571, %v8598
  %v8610 = vsub.f32 %v8576, %v8600
  %v8611 = vsub.f32 %v8581, %v8602
  %v8612 = vsub.f32 %v8586, %v8604
  %v8613 = vmul.f32 %v8605, 1.442695
  %v8614 = vpow.pop %v8613
  %v8615 = vmul.f32 %v8606, 1.442695
  %v8616 = vpow.pop %v8615
  %v8617 = vmul.f32 %v8607, 1.442695
  %v8618 = vpow.pop %v8617
  %v8619 = vmul.f32 %v8608, 1.442695
  %v8620 = vpow.pop %v8619
  %v8621 = vmul.f32 %v8609, 1.442695
  %v8622 = vpow.pop %v8621
  %v8623 = vmul.f32 %v8610, 1.442695
  %v8624 = vpow.pop %v8623
  %v8625 = vmul.f32 %v8611, 1.442695
  %v8626 = vpow.pop %v8625
  %v8627 = vmul.f32 %v8612, 1.442695
  %v8628 = vpow.pop %v8627
  %8629 = vadd.xlane.f32.xlu0 %v8614
  %v8630 = vpop.xlane.xlu0 %8629
  %8631 = vadd.xlane.f32.xlu0 %v8616
  %v8632 = vpop.xlane.xlu0 %8631
  %8633 = vadd.xlane.f32.xlu0 %v8618
  %v8634 = vpop.xlane.xlu0 %8633
  %8635 = vadd.xlane.f32.xlu0 %v8620
  %v8636 = vpop.xlane.xlu0 %8635
  %8637 = vadd.xlane.f32.xlu0 %v8622
  %v8638 = vpop.xlane.xlu0 %8637
  %8639 = vadd.xlane.f32.xlu0 %v8624
  %v8640 = vpop.xlane.xlu0 %8639
  %8641 = vadd.xlane.f32.xlu0 %v8626
  %v8642 = vpop.xlane.xlu0 %8641
  %8643 = vadd.xlane.f32.xlu0 %v8628
  %v8644 = vpop.xlane.xlu0 %8643
  %v8645 = vrcp.pop %v8630
  %v8646 = vmul.f32 1.0, %v8645
  %v8647 = vrcp.pop %v8632
  %v8648 = vmul.f32 1.0, %v8647
  %v8649 = vrcp.pop %v8634
  %v8650 = vmul.f32 1.0, %v8649
  %v8651 = vrcp.pop %v8636
  %v8652 = vmul.f32 1.0, %v8651
  %v8653 = vrcp.pop %v8638
  %v8654 = vmul.f32 1.0, %v8653
  %v8655 = vrcp.pop %v8640
  %v8656 = vmul.f32 1.0, %v8655
  %v8657 = vrcp.pop %v8642
  %v8658 = vmul.f32 1.0, %v8657
  %v8659 = vrcp.pop %v8644
  %v8660 = vmul.f32 1.0, %v8659
  %v8661 = vmul.f32 %v8614, %v8646
  %v8662 = vmul.f32 %v8616, %v8648
  %v8663 = vmul.f32 %v8618, %v8650
  %v8664 = vmul.f32 %v8620, %v8652
  %v8665 = vmul.f32 %v8622, %v8654
  %v8666 = vmul.f32 %v8624, %v8656
  %v8667 = vmul.f32 %v8626, %v8658
  %v8668 = vmul.f32 %v8628, %v8660
  %8669 = vrot.lane.b32.xlu0 %v7064, 104
  %v8670 = vpop.permute.xlu0 %8669
  %8671 = vrot.lane.b32.xlu0 %v7069, 104
  %v8672 = vpop.permute.xlu0 %8671
  %8673 = vrot.lane.b32.xlu0 %v7074, 104
  %v8674 = vpop.permute.xlu0 %8673
  %8675 = vrot.lane.b32.xlu0 %v7079, 104
  %v8676 = vpop.permute.xlu0 %8675
  %8677 = vrot.lane.b32.xlu0 %v7084, 104
  %v8678 = vpop.permute.xlu0 %8677
  %8679 = vrot.lane.b32.xlu0 %v7089, 104
  %v8680 = vpop.permute.xlu0 %8679
  %8681 = vrot.lane.b32.xlu0 %v7094, 104
  %v8682 = vpop.permute.xlu0 %8681
  %8683 = vrot.lane.b32.xlu0 %v7099, 104
  %v8684 = vpop.permute.xlu0 %8683
  %8685 = vrot.lane.b32.xlu0 %v7104, 104
  %v8686 = vpop.permute.xlu0 %8685
  %8687 = vrot.lane.b32.xlu0 %v7109, 104
  %v8688 = vpop.permute.xlu0 %8687
  %8689 = vrot.lane.b32.xlu0 %v7114, 104
  %v8690 = vpop.permute.xlu0 %8689
  %8691 = vrot.lane.b32.xlu0 %v7119, 104
  %v8692 = vpop.permute.xlu0 %8691
  %8693 = vrot.lane.b32.xlu0 %v7124, 104
  %v8694 = vpop.permute.xlu0 %8693
  %8695 = vrot.lane.b32.xlu0 %v7129, 104
  %v8696 = vpop.permute.xlu0 %8695
  %8697 = vrot.lane.b32.xlu0 %v7134, 104
  %v8698 = vpop.permute.xlu0 %8697
  %8699 = vrot.lane.b32.xlu0 %v7139, 104
  %v8700 = vpop.permute.xlu0 %8699
  %8717 = vmatprep.subr.mxu0 0.0
  %8718 = vmatpush1.msra.mxu0 %v8670
  %8719 = vmatprep.subr.mxu0 0.0
  %8720 = vmatpush1.msra.mxu0 %v8672
  %8721 = vmatprep.subr.mxu0 0.0
  %8722 = vmatpush1.msra.mxu0 %v8674
  %8723 = vmatprep.subr.mxu0 0.0
  %8724 = vmatpush1.msra.mxu0 %v8676
  %8725 = vmatprep.subr.mxu0 0.0
  %8726 = vmatpush1.msra.mxu0 %v8678
  %8727 = vmatprep.subr.mxu0 0.0
  %8728 = vmatpush1.msra.mxu0 %v8680
  %8729 = vmatprep.subr.mxu0 0.0
  %8730 = vmatpush1.msra.mxu0 %v8682
  %8731 = vmatprep.subr.mxu0 0.0
  %8732 = vmatpush1.msra.mxu0 %v8684
  %8733 = vmatprep.subr.mxu0 0.0
  %8734 = vmatpush1.msra.mxu0 %v8686
  %8735 = vmatprep.subr.mxu0 0.0
  %8736 = vmatpush1.msra.mxu0 %v8688
  %8737 = vmatprep.subr.mxu0 0.0
  %8738 = vmatpush1.msra.mxu0 %v8690
  %8739 = vmatprep.subr.mxu0 0.0
  %8740 = vmatpush1.msra.mxu0 %v8692
  %8741 = vmatprep.subr.mxu0 0.0
  %8742 = vmatpush1.msra.mxu0 %v8694
  %8743 = vmatprep.subr.mxu0 0.0
  %8744 = vmatpush1.msra.mxu0 %v8696
  %8745 = vmatprep.subr.mxu0 0.0
  %8746 = vmatpush1.msra.mxu0 %v8698
  %8747 = vmatprep.subr.mxu0 0.0
  %8748 = vmatpush1.msra.mxu0 %v8700
  %8749 = vmatprep.subr.mxu0 0.0
  %8750 = vmatpush1.msra.mxu0 0.0
  %8751 = vmatprep.subr.mxu0 0.0
  %8752 = vmatpush1.msra.mxu0 0.0
  %8753 = vmatprep.subr.mxu0 0.0
  %8754 = vmatpush1.msra.mxu0 0.0
  %8755 = vmatprep.subr.mxu0 0.0
  %8756 = vmatpush1.msra.mxu0 0.0
  %8757 = vmatprep.subr.mxu0 0.0
  %8758 = vmatpush1.msra.mxu0 0.0
  %8759 = vmatprep.subr.mxu0 0.0
  %8760 = vmatpush1.msra.mxu0 0.0
  %8761 = vmatprep.subr.mxu0 0.0
  %8762 = vmatpush1.msra.mxu0 0.0
  %8763 = vmatprep.subr.mxu0 0.0
  %8764 = vmatpush1.msra.mxu0 0.0
  %8765 = vmatprep.subr.mxu0 0.0
  %8766 = vmatpush1.msra.mxu0 0.0
  %8767 = vmatprep.subr.mxu0 0.0
  %8768 = vmatpush1.msra.mxu0 0.0
  %8769 = vmatprep.subr.mxu0 0.0
  %8770 = vmatpush1.msra.mxu0 0.0
  %8771 = vmatprep.subr.mxu0 0.0
  %8772 = vmatpush1.msra.mxu0 0.0
  %8773 = vmatprep.subr.mxu0 0.0
  %8774 = vmatpush1.msra.mxu0 0.0
  %8775 = vmatprep.subr.mxu0 0.0
  %8776 = vmatpush1.msra.mxu0 0.0
  %8777 = vmatprep.subr.mxu0 0.0
  %8778 = vmatpush1.msra.mxu0 0.0
  %8779 = vmatprep.subr.mxu0 0.0
  %8780 = vmatpush1.msra.mxu0 0.0
  %8781 = vmatprep.mubr.f32.mxu0 0.0
  %8782 = vmatmul.mubr.f32.gmra.mrb[0].mxu0 %v8661
  %v8783 = vpop.f32.mrb[0].mxu0
  %v8784 = vadd.f32 0.0, %v8783
  %v8785 = vpop.f32.mrb[0].mxu0
  %8786 = vmatprep.mubr.f32.mxu0 0.0
  %8787 = vmatmul.mubr.f32.gmra.mrb[0].mxu0 %v8662
  %v8788 = vpop.f32.mrb[0].mxu0
  %v8789 = vadd.f32 0.0, %v8788
  %v8790 = vpop.f32.mrb[0].mxu0
  %8791 = vmatprep.mubr.f32.mxu0 0.0
  %8792 = vmatmul.mubr.f32.gmra.mrb[0].mxu0 %v8663
  %v8793 = vpop.f32.mrb[0].mxu0
  %v8794 = vadd.f32 0.0, %v8793
  %v8795 = vpop.f32.mrb[0].mxu0
  %8796 = vmatprep.mubr.f32.mxu0 0.0
  %8797 = vmatmul.mubr.f32.gmra.mrb[0].mxu0 %v8664
  %v8798 = vpop.f32.mrb[0].mxu0
  %v8799 = vadd.f32 0.0, %v8798
  %v8800 = vpop.f32.mrb[0].mxu0
  %8801 = vmatprep.mubr.f32.mxu0 0.0
  %8802 = vmatmul.mubr.f32.gmra.mrb[0].mxu0 %v8665
  %v8803 = vpop.f32.mrb[0].mxu0
  %v8804 = vadd.f32 0.0, %v8803
  %v8805 = vpop.f32.mrb[0].mxu0
  %8806 = vmatprep.mubr.f32.mxu0 0.0
  %8807 = vmatmul.mubr.f32.gmra.mrb[0].mxu0 %v8666
  %v8808 = vpop.f32.mrb[0].mxu0
  %v8809 = vadd.f32 0.0, %v8808
  %v8810 = vpop.f32.mrb[0].mxu0
  %8811 = vmatprep.mubr.f32.mxu0 0.0
  %8812 = vmatmul.mubr.f32.gmra.mrb[0].mxu0 %v8667
  %v8813 = vpop.f32.mrb[0].mxu0
  %v8814 = vadd.f32 0.0, %v8813
  %v8815 = vpop.f32.mrb[0].mxu0
  %8816 = vmatprep.mubr.f32.mxu0 0.0
  %8817 = vmatmul.mubr.f32.gmra.mrb[0].mxu0 %v8668
  %v8818 = vpop.f32.mrb[0].mxu0
  %v8819 = vadd.f32 0.0, %v8818
  %v8820 = vpop.f32.mrb[0].mxu0
  %8821 = vdwg.mxu0
  %8830 = vrot.lane.b32.xlu0 %v7916, 8
  %v8831 = vpop.permute.xlu0 %8830
  %8832 = vrot.lane.b32.xlu0 %v7921, 8
  %v8833 = vpop.permute.xlu0 %8832
  %8834 = vrot.lane.b32.xlu0 %v7926, 8
  %v8835 = vpop.permute.xlu0 %8834
  %8836 = vrot.lane.b32.xlu0 %v7931, 8
  %v8837 = vpop.permute.xlu0 %8836
  %8838 = vrot.lane.b32.xlu0 %v7936, 8
  %v8839 = vpop.permute.xlu0 %8838
  %8840 = vrot.lane.b32.xlu0 %v7941, 8
  %v8841 = vpop.permute.xlu0 %8840
  %8842 = vrot.lane.b32.xlu0 %v7946, 8
  %v8843 = vpop.permute.xlu0 %8842
  %8844 = vrot.lane.b32.xlu0 %v7951, 8
  %v8845 = vpop.permute.xlu0 %8844
  %8862 = vrot.lane.b32.xlu0 %v8350, 16
  %v8863 = vpop.permute.xlu0 %8862
  %8864 = vrot.lane.b32.xlu0 %v8355, 16
  %v8865 = vpop.permute.xlu0 %8864
  %8866 = vrot.lane.b32.xlu0 %v8360, 16
  %v8867 = vpop.permute.xlu0 %8866
  %8868 = vrot.lane.b32.xlu0 %v8365, 16
  %v8869 = vpop.permute.xlu0 %8868
  %8870 = vrot.lane.b32.xlu0 %v8370, 16
  %v8871 = vpop.permute.xlu0 %8870
  %8872 = vrot.lane.b32.xlu0 %v8375, 16
  %v8873 = vpop.permute.xlu0 %8872
  %8874 = vrot.lane.b32.xlu0 %v8380, 16
  %v8875 = vpop.permute.xlu0 %8874
  %8876 = vrot.lane.b32.xlu0 %v8385, 16
  %v8877 = vpop.permute.xlu0 %8876
  %8894 = vrot.lane.b32.xlu0 %v8784, 24
  %v8895 = vpop.permute.xlu0 %8894
  %8896 = vrot.lane.b32.xlu0 %v8789, 24
  %v8897 = vpop.permute.xlu0 %8896
  %8898 = vrot.lane.b32.xlu0 %v8794, 24
  %v8899 = vpop.permute.xlu0 %8898
  %8900 = vrot.lane.b32.xlu0 %v8799, 24
  %v8901 = vpop.permute.xlu0 %8900
  %8902 = vrot.lane.b32.xlu0 %v8804, 24
  %v8903 = vpop.permute.xlu0 %8902
  %8904 = vrot.lane.b32.xlu0 %v8809, 24
  %v8905 = vpop.permute.xlu0 %8904
  %8906 = vrot.lane.b32.xlu0 %v8814, 24
  %v8907 = vpop.permute.xlu0 %8906
  %8908 = vrot.lane.b32.xlu0 %v8819, 24
  %v8909 = vpop.permute.xlu0 %8908
  %v8918 = vsel %vm455, %v7466, %v8831
  %v8919 = vsel %vm455, %v7471, %v8833
  %v8920 = vsel %vm455, %v7476, %v8835
  %v8921 = vsel %vm455, %v7481, %v8837
  %v8922 = vsel %vm455, %v7486, %v8839
  %v8923 = vsel %vm455, %v7491, %v8841
  %v8924 = vsel %vm455, %v7496, %v8843
  %v8925 = vsel %vm455, %v7501, %v8845
  %v8926 = vsel %vm5801, %v8918, %v8863
  %v8927 = vsel %vm5801, %v8919, %v8865
  %v8928 = vsel %vm5801, %v8920, %v8867
  %v8929 = vsel %vm5801, %v8921, %v8869
  %v8930 = vsel %vm5801, %v8922, %v8871
  %v8931 = vsel %vm5801, %v8923, %v8873
  %v8932 = vsel %vm5801, %v8924, %v8875
  %v8933 = vsel %vm5801, %v8925, %v8877
  %v8934 = vsel %vm5810, %v8926, %v8895
  %v8935 = vsel %vm5810, %v8927, %v8897
  %v8936 = vsel %vm5810, %v8928, %v8899
  %v8937 = vsel %vm5810, %v8929, %v8901
  %v8938 = vsel %vm5810, %v8930, %v8903
  %v8939 = vsel %vm5810, %v8931, %v8905
  %v8940 = vsel %vm5810, %v8932, %v8907
  %v8941 = vsel %vm5810, %v8933, %v8909
  %v8942 = vld [vmem:[%s4 + $0xc0] sm:$0xff]
  %v8943 = vld [vmem:[%s4 + $0xc8] sm:$0xff]
  %v8944 = vld [vmem:[%s4 + $0xd0] sm:$0xff]
  %v8945 = vld [vmem:[%s4 + $0xd8] sm:$0xff]
  %v8946 = vld [vmem:[%s7 + $0x3] sm:$0x1]
  %v8947 = vlaneseq
  %v8948 = vshrl.u32 %v8947, 7
  %v8949 = vsub.s32 0, %v8948
  %v8950 = vrot.slane %v8946, %v8949
  %v8952 = vsel %vm97, %v8934, 0
  %v8955 = vsel %vm97, %v8935, 0
  %v8958 = vsel %vm97, %v8936, 0
  %v8961 = vsel %vm97, %v8937, 0
  %v8964 = vsel %vm97, %v8938, 0
  %v8967 = vsel %vm97, %v8939, 0
  %v8970 = vsel %vm97, %v8940, 0
  %v8973 = vsel %vm97, %v8941, 0
  %8975 = vmatprep.subr.mxu0 0.0
  %8976 = vmatpush1.msra.mxu0 %v8942
  %8977 = vmatprep.subr.mxu0 0.0
  %8978 = vmatpush1.msra.mxu0 %v8943
  %8979 = vmatprep.subr.mxu0 0.0
  %8980 = vmatpush1.msra.mxu0 %v8944
  %8981 = vmatprep.subr.mxu0 0.0
  %8982 = vmatpush1.msra.mxu0 %v8945
  %8983 = vmatprep.subr.mxu0 0.0
  %8984 = vmatpush1.msra.mxu0 0.0
  %8985 = vmatprep.subr.mxu0 0.0
  %8986 = vmatpush1.msra.mxu0 0.0
  %8987 = vmatprep.subr.mxu0 0.0
  %8988 = vmatpush1.msra.mxu0 0.0
  %8989 = vmatprep.subr.mxu0 0.0
  %8990 = vmatpush1.msra.mxu0 0.0
  %8991 = vmatprep.subr.mxu0 0.0
  %8992 = vmatpush1.msra.mxu0 0.0
  %8993 = vmatprep.subr.mxu0 0.0
  %8994 = vmatpush1.msra.mxu0 0.0
  %8995 = vmatprep.subr.mxu0 0.0
  %8996 = vmatpush1.msra.mxu0 0.0
  %8997 = vmatprep.subr.mxu0 0.0
  %8998 = vmatpush1.msra.mxu0 0.0
  %8999 = vmatprep.subr.mxu0 0.0
  %9000 = vmatpush1.msra.mxu0 0.0
  %9001 = vmatprep.subr.mxu0 0.0
  %9002 = vmatpush1.msra.mxu0 0.0
  %9003 = vmatprep.subr.mxu0 0.0
  %9004 = vmatpush1.msra.mxu0 0.0
  %9005 = vmatprep.subr.mxu0 0.0
  %9006 = vmatpush1.msra.mxu0 0.0
  %9007 = vmatprep.subr.mxu0 0.0
  %9008 = vmatpush1.msra.mxu0 0.0
  %9009 = vmatprep.subr.mxu0 0.0
  %9010 = vmatpush1.msra.mxu0 0.0
  %9011 = vmatprep.subr.mxu0 0.0
  %9012 = vmatpush1.msra.mxu0 0.0
  %9013 = vmatprep.subr.mxu0 0.0
  %9014 = vmatpush1.msra.mxu0 0.0
  %9015 = vmatprep.subr.mxu0 0.0
  %9016 = vmatpush1.msra.mxu0 0.0
  %9017 = vmatprep.subr.mxu0 0.0
  %9018 = vmatpush1.msra.mxu0 0.0
  %9019 = vmatprep.subr.mxu0 0.0
  %9020 = vmatpush1.msra.mxu0 0.0
  %9021 = vmatprep.subr.mxu0 0.0
  %9022 = vmatpush1.msra.mxu0 0.0
  %9023 = vmatprep.subr.mxu0 0.0
  %9024 = vmatpush1.msra.mxu0 0.0
  %9025 = vmatprep.subr.mxu0 0.0
  %9026 = vmatpush1.msra.mxu0 0.0
  %9027 = vmatprep.subr.mxu0 0.0
  %9028 = vmatpush1.msra.mxu0 0.0
  %9029 = vmatprep.subr.mxu0 0.0
  %9030 = vmatpush1.msra.mxu0 0.0
  %9031 = vmatprep.subr.mxu0 0.0
  %9032 = vmatpush1.msra.mxu0 0.0
  %9033 = vmatprep.subr.mxu0 0.0
  %9034 = vmatpush1.msra.mxu0 0.0
  %9035 = vmatprep.subr.mxu0 0.0
  %9036 = vmatpush1.msra.mxu0 0.0
  %9037 = vmatprep.subr.mxu0 0.0
  %9038 = vmatpush1.msra.mxu0 0.0
  %9039 = vmatprep.mubr.f32.mxu0 0.0
  %9040 = vmatmul.mubr.f32.gmra.mrb[0].mxu0 %v8952
  %v9041 = vpop.f32.mrb[0].mxu0
  %v9042 = vadd.f32 %v8950, %v9041
  %v9043 = vpop.f32.mrb[0].mxu0
  %9044 = vmatprep.mubr.f32.mxu0 0.0
  %9045 = vmatmul.mubr.f32.gmra.mrb[0].mxu0 %v8955
  %v9046 = vpop.f32.mrb[0].mxu0
  %v9047 = vadd.f32 %v8950, %v9046
  %v9048 = vpop.f32.mrb[0].mxu0
  %9049 = vmatprep.mubr.f32.mxu0 0.0
  %9050 = vmatmul.mubr.f32.gmra.mrb[0].mxu0 %v8958
  %v9051 = vpop.f32.mrb[0].mxu0
  %v9052 = vadd.f32 %v8950, %v9051
  %v9053 = vpop.f32.mrb[0].mxu0
  %9054 = vmatprep.mubr.f32.mxu0 0.0
  %9055 = vmatmul.mubr.f32.gmra.mrb[0].mxu0 %v8961
  %v9056 = vpop.f32.mrb[0].mxu0
  %v9057 = vadd.f32 %v8950, %v9056
  %v9058 = vpop.f32.mrb[0].mxu0
  %9059 = vmatprep.mubr.f32.mxu0 0.0
  %9060 = vmatmul.mubr.f32.gmra.mrb[0].mxu0 %v8964
  %v9061 = vpop.f32.mrb[0].mxu0
  %v9062 = vadd.f32 %v8950, %v9061
  %v9063 = vpop.f32.mrb[0].mxu0
  %9064 = vmatprep.mubr.f32.mxu0 0.0
  %9065 = vmatmul.mubr.f32.gmra.mrb[0].mxu0 %v8967
  %v9066 = vpop.f32.mrb[0].mxu0
  %v9067 = vadd.f32 %v8950, %v9066
  %v9068 = vpop.f32.mrb[0].mxu0
  %9069 = vmatprep.mubr.f32.mxu0 0.0
  %9070 = vmatmul.mubr.f32.gmra.mrb[0].mxu0 %v8970
  %v9071 = vpop.f32.mrb[0].mxu0
  %v9072 = vadd.f32 %v8950, %v9071
  %v9073 = vpop.f32.mrb[0].mxu0
  %9074 = vmatprep.mubr.f32.mxu0 0.0
  %9075 = vmatmul.mubr.f32.gmra.mrb[0].mxu0 %v8973
  %v9076 = vpop.f32.mrb[0].mxu0
  %v9077 = vadd.f32 %v8950, %v9076
  %v9078 = vpop.f32.mrb[0].mxu0
  %9079 = vdwg.mxu0
  %v9080 = vld [vmem:[%s4 + $0xe0] sm:$0xff]
  %v9081 = vld [vmem:[%s4 + $0xe8] sm:$0xff]
  %v9082 = vld [vmem:[%s4 + $0xf0] sm:$0xff]
  %v9083 = vld [vmem:[%s4 + $0xf8] sm:$0xff]
  %v9084 = vld [vmem:[%s7 + $0x4] sm:$0x1]
  %v9085 = vlaneseq
  %v9086 = vshrl.u32 %v9085, 7
  %v9087 = vsub.s32 0, %v9086
  %v9088 = vrot.slane %v9084, %v9087
  %v9090 = vsel %vm97, %v9042, 0
  %v9093 = vsel %vm97, %v9047, 0
  %v9096 = vsel %vm97, %v9052, 0
  %v9099 = vsel %vm97, %v9057, 0
  %v9102 = vsel %vm97, %v9062, 0
  %v9105 = vsel %vm97, %v9067, 0
  %v9108 = vsel %vm97, %v9072, 0
  %v9111 = vsel %vm97, %v9077, 0
  %9113 = vmatprep.subr.mxu0 0.0
  %9114 = vmatpush1.msra.mxu0 %v9080
  %9115 = vmatprep.subr.mxu0 0.0
  %9116 = vmatpush1.msra.mxu0 %v9081
  %9117 = vmatprep.subr.mxu0 0.0
  %9118 = vmatpush1.msra.mxu0 %v9082
  %9119 = vmatprep.subr.mxu0 0.0
  %9120 = vmatpush1.msra.mxu0 %v9083
  %9121 = vmatprep.subr.mxu0 0.0
  %9122 = vmatpush1.msra.mxu0 0.0
  %9123 = vmatprep.subr.mxu0 0.0
  %9124 = vmatpush1.msra.mxu0 0.0
  %9125 = vmatprep.subr.mxu0 0.0
  %9126 = vmatpush1.msra.mxu0 0.0
  %9127 = vmatprep.subr.mxu0 0.0
  %9128 = vmatpush1.msra.mxu0 0.0
  %9129 = vmatprep.subr.mxu0 0.0
  %9130 = vmatpush1.msra.mxu0 0.0
  %9131 = vmatprep.subr.mxu0 0.0
  %9132 = vmatpush1.msra.mxu0 0.0
  %9133 = vmatprep.subr.mxu0 0.0
  %9134 = vmatpush1.msra.mxu0 0.0
  %9135 = vmatprep.subr.mxu0 0.0
  %9136 = vmatpush1.msra.mxu0 0.0
  %9137 = vmatprep.subr.mxu0 0.0
  %9138 = vmatpush1.msra.mxu0 0.0
  %9139 = vmatprep.subr.mxu0 0.0
  %9140 = vmatpush1.msra.mxu0 0.0
  %9141 = vmatprep.subr.mxu0 0.0
  %9142 = vmatpush1.msra.mxu0 0.0
  %9143 = vmatprep.subr.mxu0 0.0
  %9144 = vmatpush1.msra.mxu0 0.0
  %9145 = vmatprep.subr.mxu0 0.0
  %9146 = vmatpush1.msra.mxu0 0.0
  %9147 = vmatprep.subr.mxu0 0.0
  %9148 = vmatpush1.msra.mxu0 0.0
  %9149 = vmatprep.subr.mxu0 0.0
  %9150 = vmatpush1.msra.mxu0 0.0
  %9151 = vmatprep.subr.mxu0 0.0
  %9152 = vmatpush1.msra.mxu0 0.0
  %9153 = vmatprep.subr.mxu0 0.0
  %9154 = vmatpush1.msra.mxu0 0.0
  %9155 = vmatprep.subr.mxu0 0.0
  %9156 = vmatpush1.msra.mxu0 0.0
  %9157 = vmatprep.subr.mxu0 0.0
  %9158 = vmatpush1.msra.mxu0 0.0
  %9159 = vmatprep.subr.mxu0 0.0
  %9160 = vmatpush1.msra.mxu0 0.0
  %9161 = vmatprep.subr.mxu0 0.0
  %9162 = vmatpush1.msra.mxu0 0.0
  %9163 = vmatprep.subr.mxu0 0.0
  %9164 = vmatpush1.msra.mxu0 0.0
  %9165 = vmatprep.subr.mxu0 0.0
  %9166 = vmatpush1.msra.mxu0 0.0
  %9167 = vmatprep.subr.mxu0 0.0
  %9168 = vmatpush1.msra.mxu0 0.0
  %9169 = vmatprep.subr.mxu0 0.0
  %9170 = vmatpush1.msra.mxu0 0.0
  %9171 = vmatprep.subr.mxu0 0.0
  %9172 = vmatpush1.msra.mxu0 0.0
  %9173 = vmatprep.subr.mxu0 0.0
  %9174 = vmatpush1.msra.mxu0 0.0
  %9175 = vmatprep.subr.mxu0 0.0
  %9176 = vmatpush1.msra.mxu0 0.0
  %9177 = vmatprep.mubr.f32.mxu0 0.0
  %9178 = vmatmul.mubr.f32.gmra.mrb[0].mxu0 %v9090
  %v9179 = vpop.f32.mrb[0].mxu0
  %v9180 = vadd.f32 %v9088, %v9179
  %v9181 = vpop.f32.mrb[0].mxu0
  %9182 = vmatprep.mubr.f32.mxu0 0.0
  %9183 = vmatmul.mubr.f32.gmra.mrb[0].mxu0 %v9093
  %v9184 = vpop.f32.mrb[0].mxu0
  %v9185 = vadd.f32 %v9088, %v9184
  %v9186 = vpop.f32.mrb[0].mxu0
  %9187 = vmatprep.mubr.f32.mxu0 0.0
  %9188 = vmatmul.mubr.f32.gmra.mrb[0].mxu0 %v9096
  %v9189 = vpop.f32.mrb[0].mxu0
  %v9190 = vadd.f32 %v9088, %v9189
  %v9191 = vpop.f32.mrb[0].mxu0
  %9192 = vmatprep.mubr.f32.mxu0 0.0
  %9193 = vmatmul.mubr.f32.gmra.mrb[0].mxu0 %v9099
  %v9194 = vpop.f32.mrb[0].mxu0
  %v9195 = vadd.f32 %v9088, %v9194
  %v9196 = vpop.f32.mrb[0].mxu0
  %9197 = vmatprep.mubr.f32.mxu0 0.0
  %9198 = vmatmul.mubr.f32.gmra.mrb[0].mxu0 %v9102
  %v9199 = vpop.f32.mrb[0].mxu0
  %v9200 = vadd.f32 %v9088, %v9199
  %v9201 = vpop.f32.mrb[0].mxu0
  %9202 = vmatprep.mubr.f32.mxu0 0.0
  %9203 = vmatmul.mubr.f32.gmra.mrb[0].mxu0 %v9105
  %v9204 = vpop.f32.mrb[0].mxu0
  %v9205 = vadd.f32 %v9088, %v9204
  %v9206 = vpop.f32.mrb[0].mxu0
  %9207 = vmatprep.mubr.f32.mxu0 0.0
  %9208 = vmatmul.mubr.f32.gmra.mrb[0].mxu0 %v9108
  %v9209 = vpop.f32.mrb[0].mxu0
  %v9210 = vadd.f32 %v9088, %v9209
  %v9211 = vpop.f32.mrb[0].mxu0
  %9212 = vmatprep.mubr.f32.mxu0 0.0
  %9213 = vmatmul.mubr.f32.gmra.mrb[0].mxu0 %v9111
  %v9214 = vpop.f32.mrb[0].mxu0
  %v9215 = vadd.f32 %v9088, %v9214
  %v9216 = vpop.f32.mrb[0].mxu0
  %9217 = vdwg.mxu0
  %v9218 = vtanh.pop %v9180
  %v9219 = vtanh.pop %v9185
  %v9220 = vtanh.pop %v9190
  %v9221 = vtanh.pop %v9195
  %v9222 = vtanh.pop %v9200
  %v9223 = vtanh.pop %v9205
  %v9224 = vtanh.pop %v9210
  %v9225 = vtanh.pop %v9215
  %v9226 = vld [vmem:[%s4 + $0x100] sm:$0xff]
  %v9227 = vld [vmem:[%s4 + $0x108] sm:$0xff]
  %v9228 = vld [vmem:[%s4 + $0x110] sm:$0xff]
  %v9229 = vld [vmem:[%s4 + $0x118] sm:$0xff]
  %v9230 = vld [vmem:[%s7 + $0x5] sm:$0x1]
  %v9231 = vlaneseq
  %v9232 = vshrl.u32 %v9231, 7
  %v9233 = vsub.s32 0, %v9232
  %v9234 = vrot.slane %v9230, %v9233
  %9235 = vmatprep.subr.mxu0 0.0
  %9236 = vmatpush1.msra.mxu0 %v9226
  %9237 = vmatprep.subr.mxu0 0.0
  %9238 = vmatpush1.msra.mxu0 %v9227
  %9239 = vmatprep.subr.mxu0 0.0
  %9240 = vmatpush1.msra.mxu0 %v9228
  %9241 = vmatprep.subr.mxu0 0.0
  %9242 = vmatpush1.msra.mxu0 %v9229
  %9243 = vmatprep.subr.mxu0 0.0
  %9244 = vmatpush1.msra.mxu0 0.0
  %9245 = vmatprep.subr.mxu0 0.0
  %9246 = vmatpush1.msra.mxu0 0.0
  %9247 = vmatprep.subr.mxu0 0.0
  %9248 = vmatpush1.msra.mxu0 0.0
  %9249 = vmatprep.subr.mxu0 0.0
  %9250 = vmatpush1.msra.mxu0 0.0
  %9251 = vmatprep.subr.mxu0 0.0
  %9252 = vmatpush1.msra.mxu0 0.0
  %9253 = vmatprep.subr.mxu0 0.0
  %9254 = vmatpush1.msra.mxu0 0.0
  %9255 = vmatprep.subr.mxu0 0.0
  %9256 = vmatpush1.msra.mxu0 0.0
  %9257 = vmatprep.subr.mxu0 0.0
  %9258 = vmatpush1.msra.mxu0 0.0
  %9259 = vmatprep.subr.mxu0 0.0
  %9260 = vmatpush1.msra.mxu0 0.0
  %9261 = vmatprep.subr.mxu0 0.0
  %9262 = vmatpush1.msra.mxu0 0.0
  %9263 = vmatprep.subr.mxu0 0.0
  %9264 = vmatpush1.msra.mxu0 0.0
  %9265 = vmatprep.subr.mxu0 0.0
  %9266 = vmatpush1.msra.mxu0 0.0
  %9267 = vmatprep.subr.mxu0 0.0
  %9268 = vmatpush1.msra.mxu0 0.0
  %9269 = vmatprep.subr.mxu0 0.0
  %9270 = vmatpush1.msra.mxu0 0.0
  %9271 = vmatprep.subr.mxu0 0.0
  %9272 = vmatpush1.msra.mxu0 0.0
  %9273 = vmatprep.subr.mxu0 0.0
  %9274 = vmatpush1.msra.mxu0 0.0
  %9275 = vmatprep.subr.mxu0 0.0
  %9276 = vmatpush1.msra.mxu0 0.0
  %9277 = vmatprep.subr.mxu0 0.0
  %9278 = vmatpush1.msra.mxu0 0.0
  %9279 = vmatprep.subr.mxu0 0.0
  %9280 = vmatpush1.msra.mxu0 0.0
  %9281 = vmatprep.subr.mxu0 0.0
  %9282 = vmatpush1.msra.mxu0 0.0
  %9283 = vmatprep.subr.mxu0 0.0
  %9284 = vmatpush1.msra.mxu0 0.0
  %9285 = vmatprep.subr.mxu0 0.0
  %9286 = vmatpush1.msra.mxu0 0.0
  %9287 = vmatprep.subr.mxu0 0.0
  %9288 = vmatpush1.msra.mxu0 0.0
  %9289 = vmatprep.subr.mxu0 0.0
  %9290 = vmatpush1.msra.mxu0 0.0
  %9291 = vmatprep.subr.mxu0 0.0
  %9292 = vmatpush1.msra.mxu0 0.0
  %9293 = vmatprep.subr.mxu0 0.0
  %9294 = vmatpush1.msra.mxu0 0.0
  %9295 = vmatprep.subr.mxu0 0.0
  %9296 = vmatpush1.msra.mxu0 0.0
  %9297 = vmatprep.subr.mxu0 0.0
  %9298 = vmatpush1.msra.mxu0 0.0
  %9299 = vmatprep.mubr.f32.mxu0 0.0
  %9300 = vmatmul.mubr.f32.gmra.mrb[0].mxu0 %v9090
  %v9301 = vpop.f32.mrb[0].mxu0
  %v9302 = vadd.f32 %v9234, %v9301
  %v9303 = vpop.f32.mrb[0].mxu0
  %9304 = vmatprep.mubr.f32.mxu0 0.0
  %9305 = vmatmul.mubr.f32.gmra.mrb[0].mxu0 %v9093
  %v9306 = vpop.f32.mrb[0].mxu0
  %v9307 = vadd.f32 %v9234, %v9306
  %v9308 = vpop.f32.mrb[0].mxu0
  %9309 = vmatprep.mubr.f32.mxu0 0.0
  %9310 = vmatmul.mubr.f32.gmra.mrb[0].mxu0 %v9096
  %v9311 = vpop.f32.mrb[0].mxu0
  %v9312 = vadd.f32 %v9234, %v9311
  %v9313 = vpop.f32.mrb[0].mxu0
  %9314 = vmatprep.mubr.f32.mxu0 0.0
  %9315 = vmatmul.mubr.f32.gmra.mrb[0].mxu0 %v9099
  %v9316 = vpop.f32.mrb[0].mxu0
  %v9317 = vadd.f32 %v9234, %v9316
  %v9318 = vpop.f32.mrb[0].mxu0
  %9319 = vmatprep.mubr.f32.mxu0 0.0
  %9320 = vmatmul.mubr.f32.gmra.mrb[0].mxu0 %v9102
  %v9321 = vpop.f32.mrb[0].mxu0
  %v9322 = vadd.f32 %v9234, %v9321
  %v9323 = vpop.f32.mrb[0].mxu0
  %9324 = vmatprep.mubr.f32.mxu0 0.0
  %9325 = vmatmul.mubr.f32.gmra.mrb[0].mxu0 %v9105
  %v9326 = vpop.f32.mrb[0].mxu0
  %v9327 = vadd.f32 %v9234, %v9326
  %v9328 = vpop.f32.mrb[0].mxu0
  %9329 = vmatprep.mubr.f32.mxu0 0.0
  %9330 = vmatmul.mubr.f32.gmra.mrb[0].mxu0 %v9108
  %v9331 = vpop.f32.mrb[0].mxu0
  %v9332 = vadd.f32 %v9234, %v9331
  %v9333 = vpop.f32.mrb[0].mxu0
  %9334 = vmatprep.mubr.f32.mxu0 0.0
  %9335 = vmatmul.mubr.f32.gmra.mrb[0].mxu0 %v9111
  %v9336 = vpop.f32.mrb[0].mxu0
  %v9337 = vadd.f32 %v9234, %v9336
  %v9338 = vpop.f32.mrb[0].mxu0
  %9339 = vdwg.mxu0
  %v9340 = vxor.u32 %v9302, 2147483648
  %v9341 = vxor.u32 %v9307, 2147483648
  %v9342 = vxor.u32 %v9312, 2147483648
  %v9343 = vxor.u32 %v9317, 2147483648
  %v9344 = vxor.u32 %v9322, 2147483648
  %v9345 = vxor.u32 %v9327, 2147483648
  %v9346 = vxor.u32 %v9332, 2147483648
  %v9347 = vxor.u32 %v9337, 2147483648
  %v9348 = vmul.f32 %v9340, 1.442695
  %v9349 = vpow.pop %v9348
  %v9350 = vmul.f32 %v9341, 1.442695
  %v9351 = vpow.pop %v9350
  %v9352 = vmul.f32 %v9342, 1.442695
  %v9353 = vpow.pop %v9352
  %v9354 = vmul.f32 %v9343, 1.442695
  %v9355 = vpow.pop %v9354
  %v9356 = vmul.f32 %v9344, 1.442695
  %v9357 = vpow.pop %v9356
  %v9358 = vmul.f32 %v9345, 1.442695
  %v9359 = vpow.pop %v9358
  %v9360 = vmul.f32 %v9346, 1.442695
  %v9361 = vpow.pop %v9360
  %v9362 = vmul.f32 %v9347, 1.442695
  %v9363 = vpow.pop %v9362
  %v9364 = vadd.f32 %v9349, 1.0
  %v9365 = vadd.f32 %v9351, 1.0
  %v9366 = vadd.f32 %v9353, 1.0
  %v9367 = vadd.f32 %v9355, 1.0
  %v9368 = vadd.f32 %v9357, 1.0
  %v9369 = vadd.f32 %v9359, 1.0
  %v9370 = vadd.f32 %v9361, 1.0
  %v9371 = vadd.f32 %v9363, 1.0
  %v9372 = vrcp.pop %v9364
  %v9373 = vmul.f32 1.0, %v9372
  %v9374 = vrcp.pop %v9365
  %v9375 = vmul.f32 1.0, %v9374
  %v9376 = vrcp.pop %v9366
  %v9377 = vmul.f32 1.0, %v9376
  %v9378 = vrcp.pop %v9367
  %v9379 = vmul.f32 1.0, %v9378
  %v9380 = vrcp.pop %v9368
  %v9381 = vmul.f32 1.0, %v9380
  %v9382 = vrcp.pop %v9369
  %v9383 = vmul.f32 1.0, %v9382
  %v9384 = vrcp.pop %v9370
  %v9385 = vmul.f32 1.0, %v9384
  %v9386 = vrcp.pop %v9371
  %v9387 = vmul.f32 1.0, %v9386
  %v9388 = vmul.f32 %v9218, %v9373
  %v9389 = vmul.f32 %v9219, %v9375
  %v9390 = vmul.f32 %v9220, %v9377
  %v9391 = vmul.f32 %v9221, %v9379
  %v9392 = vmul.f32 %v9222, %v9381
  %v9393 = vmul.f32 %v9223, %v9383
  %v9394 = vmul.f32 %v9224, %v9385
  %v9395 = vmul.f32 %v9225, %v9387
  %v9396 = vadd.f32 %v6640, %v9388
  %v9397 = vadd.f32 %v6641, %v9389
  %v9398 = vadd.f32 %v6642, %v9390
  %v9399 = vadd.f32 %v6643, %v9391
  %v9400 = vadd.f32 %v6644, %v9392
  %v9401 = vadd.f32 %v6645, %v9393
  %v9402 = vadd.f32 %v6646, %v9394
  %v9403 = vadd.f32 %v6647, %v9395
  %v9404 = vld [vmem:[%s7 + $0x9] sm:$0x1]
  %v9405 = vld [vmem:[%s7 + $0xa] sm:$0x1]
  %v9406 = vsel %vm97, %v9396, 0.0
  %9407 = vadd.xlane.f32.xlu0 %v9406
  %v9408 = vpop.xlane.xlu0 %9407
  %v9409 = vsel %vm97, %v9397, 0.0
  %9410 = vadd.xlane.f32.xlu0 %v9409
  %v9411 = vpop.xlane.xlu0 %9410
  %v9412 = vsel %vm97, %v9398, 0.0
  %9413 = vadd.xlane.f32.xlu0 %v9412
  %v9414 = vpop.xlane.xlu0 %9413
  %v9415 = vsel %vm97, %v9399, 0.0
  %9416 = vadd.xlane.f32.xlu0 %v9415
  %v9417 = vpop.xlane.xlu0 %9416
  %v9418 = vsel %vm97, %v9400, 0.0
  %9419 = vadd.xlane.f32.xlu0 %v9418
  %v9420 = vpop.xlane.xlu0 %9419
  %v9421 = vsel %vm97, %v9401, 0.0
  %9422 = vadd.xlane.f32.xlu0 %v9421
  %v9423 = vpop.xlane.xlu0 %9422
  %v9424 = vsel %vm97, %v9402, 0.0
  %9425 = vadd.xlane.f32.xlu0 %v9424
  %v9426 = vpop.xlane.xlu0 %9425
  %v9427 = vsel %vm97, %v9403, 0.0
  %9428 = vadd.xlane.f32.xlu0 %v9427
  %v9429 = vpop.xlane.xlu0 %9428
  %v9430 = vmul.f32 %v9408, %v6543
  %v9431 = vmul.f32 %v9411, %v6543
  %v9432 = vmul.f32 %v9414, %v6543
  %v9433 = vmul.f32 %v9417, %v6543
  %v9434 = vmul.f32 %v9420, %v6543
  %v9435 = vmul.f32 %v9423, %v6543
  %v9436 = vmul.f32 %v9426, %v6543
  %v9437 = vmul.f32 %v9429, %v6543
  %v9438 = vsub.f32 %v9396, %v9430
  %v9439 = vsub.f32 %v9397, %v9431
  %v9440 = vsub.f32 %v9398, %v9432
  %v9441 = vsub.f32 %v9399, %v9433
  %v9442 = vsub.f32 %v9400, %v9434
  %v9443 = vsub.f32 %v9401, %v9435
  %v9444 = vsub.f32 %v9402, %v9436
  %v9445 = vsub.f32 %v9403, %v9437
  %v9446 = vmul.f32 %v9438, %v9438
  %v9447 = vmul.f32 %v9439, %v9439
  %v9448 = vmul.f32 %v9440, %v9440
  %v9449 = vmul.f32 %v9441, %v9441
  %v9450 = vmul.f32 %v9442, %v9442
  %v9451 = vmul.f32 %v9443, %v9443
  %v9452 = vmul.f32 %v9444, %v9444
  %v9453 = vmul.f32 %v9445, %v9445
  %v9454 = vsel %vm97, %v9446, 0.0
  %9455 = vadd.xlane.f32.xlu0 %v9454
  %v9456 = vpop.xlane.xlu0 %9455
  %v9457 = vsel %vm97, %v9447, 0.0
  %9458 = vadd.xlane.f32.xlu0 %v9457
  %v9459 = vpop.xlane.xlu0 %9458
  %v9460 = vsel %vm97, %v9448, 0.0
  %9461 = vadd.xlane.f32.xlu0 %v9460
  %v9462 = vpop.xlane.xlu0 %9461
  %v9463 = vsel %vm97, %v9449, 0.0
  %9464 = vadd.xlane.f32.xlu0 %v9463
  %v9465 = vpop.xlane.xlu0 %9464
  %v9466 = vsel %vm97, %v9450, 0.0
  %9467 = vadd.xlane.f32.xlu0 %v9466
  %v9468 = vpop.xlane.xlu0 %9467
  %v9469 = vsel %vm97, %v9451, 0.0
  %9470 = vadd.xlane.f32.xlu0 %v9469
  %v9471 = vpop.xlane.xlu0 %9470
  %v9472 = vsel %vm97, %v9452, 0.0
  %9473 = vadd.xlane.f32.xlu0 %v9472
  %v9474 = vpop.xlane.xlu0 %9473
  %v9475 = vsel %vm97, %v9453, 0.0
  %9476 = vadd.xlane.f32.xlu0 %v9475
  %v9477 = vpop.xlane.xlu0 %9476
  %v9478 = vmul.f32 %v9456, %v6543
  %v9479 = vmul.f32 %v9459, %v6543
  %v9480 = vmul.f32 %v9462, %v6543
  %v9481 = vmul.f32 %v9465, %v6543
  %v9482 = vmul.f32 %v9468, %v6543
  %v9483 = vmul.f32 %v9471, %v6543
  %v9484 = vmul.f32 %v9474, %v6543
  %v9485 = vmul.f32 %v9477, %v6543
  %v9486 = vadd.f32 %v9478, 1e-05
  %v9487 = vadd.f32 %v9479, 1e-05
  %v9488 = vadd.f32 %v9480, 1e-05
  %v9489 = vadd.f32 %v9481, 1e-05
  %v9490 = vadd.f32 %v9482, 1e-05
  %v9491 = vadd.f32 %v9483, 1e-05
  %v9492 = vadd.f32 %v9484, 1e-05
  %v9493 = vadd.f32 %v9485, 1e-05
  %v9494 = vrsqrt.pop %v9486
  %v9495 = vrsqrt.pop %v9487
  %v9496 = vrsqrt.pop %v9488
  %v9497 = vrsqrt.pop %v9489
  %v9498 = vrsqrt.pop %v9490
  %v9499 = vrsqrt.pop %v9491
  %v9500 = vrsqrt.pop %v9492
  %v9501 = vrsqrt.pop %v9493
  %v9502 = vmul.f32 %v9438, %v9494
  %v9503 = vmul.f32 %v9439, %v9495
  %v9504 = vmul.f32 %v9440, %v9496
  %v9505 = vmul.f32 %v9441, %v9497
  %v9506 = vmul.f32 %v9442, %v9498
  %v9507 = vmul.f32 %v9443, %v9499
  %v9508 = vmul.f32 %v9444, %v9500
  %v9509 = vmul.f32 %v9445, %v9501
  %v9510 = vlaneseq
  %v9511 = vshrl.u32 %v9510, 7
  %v9512 = vsub.s32 0, %v9511
  %v9513 = vrot.slane %v9404, %v9512
  %v9514 = vmul.f32 %v9502, %v9513
  %v9515 = vmul.f32 %v9503, %v9513
  %v9516 = vmul.f32 %v9504, %v9513
  %v9517 = vmul.f32 %v9505, %v9513
  %v9518 = vmul.f32 %v9506, %v9513
  %v9519 = vmul.f32 %v9507, %v9513
  %v9520 = vmul.f32 %v9508, %v9513
  %v9521 = vmul.f32 %v9509, %v9513
  %v9522 = vlaneseq
  %v9523 = vshrl.u32 %v9522, 7
  %v9524 = vsub.s32 0, %v9523
  %v9525 = vrot.slane %v9405, %v9524
  %v9526 = vadd.f32 %v9514, %v9525
  %v9527 = vadd.f32 %v9515, %v9525
  %v9528 = vadd.f32 %v9516, %v9525
  %v9529 = vadd.f32 %v9517, %v9525
  %v9530 = vadd.f32 %v9518, %v9525
  %v9531 = vadd.f32 %v9519, %v9525
  %v9532 = vadd.f32 %v9520, %v9525
  %v9533 = vadd.f32 %v9521, %v9525
  %v9534 = vld [vmem:[%s5] sm:$0xff]
  %v9535 = vld [vmem:[%s5 + $0x8] sm:$0xff]
  %v9536 = vld [vmem:[%s5 + $0x10] sm:$0xff]
  %v9537 = vld [vmem:[%s5 + $0x18] sm:$0xff]
  %v9538 = vld [vmem:[%s8] sm:$0x1]
  %v9540 = vlaneseq
  %v9541 = vshrl.u32 %v9540, 7
  %v9542 = vsub.s32 0, %v9541
  %v9543 = vrot.slane %v9538, %v9542
  %v9546 = vsel %vm97, %v9526, 0
  %v9549 = vsel %vm97, %v9527, 0
  %v9552 = vsel %vm97, %v9528, 0
  %v9555 = vsel %vm97, %v9529, 0
  %v9558 = vsel %vm97, %v9530, 0
  %v9561 = vsel %vm97, %v9531, 0
  %v9564 = vsel %vm97, %v9532, 0
  %v9567 = vsel %vm97, %v9533, 0
  %9569 = vmatprep.subr.mxu0 0.0
  %9570 = vmatpush1.msra.mxu0 %v9534
  %9571 = vmatprep.subr.mxu0 0.0
  %9572 = vmatpush1.msra.mxu0 %v9535
  %9573 = vmatprep.subr.mxu0 0.0
  %9574 = vmatpush1.msra.mxu0 %v9536
  %9575 = vmatprep.subr.mxu0 0.0
  %9576 = vmatpush1.msra.mxu0 %v9537
  %9577 = vmatprep.subr.mxu0 0.0
  %9578 = vmatpush1.msra.mxu0 0.0
  %9579 = vmatprep.subr.mxu0 0.0
  %9580 = vmatpush1.msra.mxu0 0.0
  %9581 = vmatprep.subr.mxu0 0.0
  %9582 = vmatpush1.msra.mxu0 0.0
  %9583 = vmatprep.subr.mxu0 0.0
  %9584 = vmatpush1.msra.mxu0 0.0
  %9585 = vmatprep.subr.mxu0 0.0
  %9586 = vmatpush1.msra.mxu0 0.0
  %9587 = vmatprep.subr.mxu0 0.0
  %9588 = vmatpush1.msra.mxu0 0.0
  %9589 = vmatprep.subr.mxu0 0.0
  %9590 = vmatpush1.msra.mxu0 0.0
  %9591 = vmatprep.subr.mxu0 0.0
  %9592 = vmatpush1.msra.mxu0 0.0
  %9593 = vmatprep.subr.mxu0 0.0
  %9594 = vmatpush1.msra.mxu0 0.0
  %9595 = vmatprep.subr.mxu0 0.0
  %9596 = vmatpush1.msra.mxu0 0.0
  %9597 = vmatprep.subr.mxu0 0.0
  %9598 = vmatpush1.msra.mxu0 0.0
  %9599 = vmatprep.subr.mxu0 0.0
  %9600 = vmatpush1.msra.mxu0 0.0
  %9601 = vmatprep.subr.mxu0 0.0
  %9602 = vmatpush1.msra.mxu0 0.0
  %9603 = vmatprep.subr.mxu0 0.0
  %9604 = vmatpush1.msra.mxu0 0.0
  %9605 = vmatprep.subr.mxu0 0.0
  %9606 = vmatpush1.msra.mxu0 0.0
  %9607 = vmatprep.subr.mxu0 0.0
  %9608 = vmatpush1.msra.mxu0 0.0
  %9609 = vmatprep.subr.mxu0 0.0
  %9610 = vmatpush1.msra.mxu0 0.0
  %9611 = vmatprep.subr.mxu0 0.0
  %9612 = vmatpush1.msra.mxu0 0.0
  %9613 = vmatprep.subr.mxu0 0.0
  %9614 = vmatpush1.msra.mxu0 0.0
  %9615 = vmatprep.subr.mxu0 0.0
  %9616 = vmatpush1.msra.mxu0 0.0
  %9617 = vmatprep.subr.mxu0 0.0
  %9618 = vmatpush1.msra.mxu0 0.0
  %9619 = vmatprep.subr.mxu0 0.0
  %9620 = vmatpush1.msra.mxu0 0.0
  %9621 = vmatprep.subr.mxu0 0.0
  %9622 = vmatpush1.msra.mxu0 0.0
  %9623 = vmatprep.subr.mxu0 0.0
  %9624 = vmatpush1.msra.mxu0 0.0
  %9625 = vmatprep.subr.mxu0 0.0
  %9626 = vmatpush1.msra.mxu0 0.0
  %9627 = vmatprep.subr.mxu0 0.0
  %9628 = vmatpush1.msra.mxu0 0.0
  %9629 = vmatprep.subr.mxu0 0.0
  %9630 = vmatpush1.msra.mxu0 0.0
  %9631 = vmatprep.subr.mxu0 0.0
  %9632 = vmatpush1.msra.mxu0 0.0
  %9633 = vmatprep.mubr.f32.mxu0 0.0
  %9634 = vmatmul.mubr.f32.gmra.mrb[0].mxu0 %v9546
  %v9635 = vpop.f32.mrb[0].mxu0
  %v9636 = vadd.f32 %v9543, %v9635
  %v9637 = vpop.f32.mrb[0].mxu0
  %9638 = vmatprep.mubr.f32.mxu0 0.0
  %9639 = vmatmul.mubr.f32.gmra.mrb[0].mxu0 %v9549
  %v9640 = vpop.f32.mrb[0].mxu0
  %v9641 = vadd.f32 %v9543, %v9640
  %v9642 = vpop.f32.mrb[0].mxu0
  %9643 = vmatprep.mubr.f32.mxu0 0.0
  %9644 = vmatmul.mubr.f32.gmra.mrb[0].mxu0 %v9552
  %v9645 = vpop.f32.mrb[0].mxu0
  %v9646 = vadd.f32 %v9543, %v9645
  %v9647 = vpop.f32.mrb[0].mxu0
  %9648 = vmatprep.mubr.f32.mxu0 0.0
  %9649 = vmatmul.mubr.f32.gmra.mrb[0].mxu0 %v9555
  %v9650 = vpop.f32.mrb[0].mxu0
  %v9651 = vadd.f32 %v9543, %v9650
  %v9652 = vpop.f32.mrb[0].mxu0
  %9653 = vmatprep.mubr.f32.mxu0 0.0
  %9654 = vmatmul.mubr.f32.gmra.mrb[0].mxu0 %v9558
  %v9655 = vpop.f32.mrb[0].mxu0
  %v9656 = vadd.f32 %v9543, %v9655
  %v9657 = vpop.f32.mrb[0].mxu0
  %9658 = vmatprep.mubr.f32.mxu0 0.0
  %9659 = vmatmul.mubr.f32.gmra.mrb[0].mxu0 %v9561
  %v9660 = vpop.f32.mrb[0].mxu0
  %v9661 = vadd.f32 %v9543, %v9660
  %v9662 = vpop.f32.mrb[0].mxu0
  %9663 = vmatprep.mubr.f32.mxu0 0.0
  %9664 = vmatmul.mubr.f32.gmra.mrb[0].mxu0 %v9564
  %v9665 = vpop.f32.mrb[0].mxu0
  %v9666 = vadd.f32 %v9543, %v9665
  %v9667 = vpop.f32.mrb[0].mxu0
  %9668 = vmatprep.mubr.f32.mxu0 0.0
  %9669 = vmatmul.mubr.f32.gmra.mrb[0].mxu0 %v9567
  %v9670 = vpop.f32.mrb[0].mxu0
  %v9671 = vadd.f32 %v9543, %v9670
  %v9672 = vpop.f32.mrb[0].mxu0
  %9673 = vdwg.mxu0
  %v9674 = vmax.f32 %v9636, 0.0
  %v9675 = vmax.f32 %v9641, 0.0
  %v9676 = vmax.f32 %v9646, 0.0
  %v9677 = vmax.f32 %v9651, 0.0
  %v9678 = vmax.f32 %v9656, 0.0
  %v9679 = vmax.f32 %v9661, 0.0
  %v9680 = vmax.f32 %v9666, 0.0
  %v9681 = vmax.f32 %v9671, 0.0
  %v9682 = vld [vmem:[%s4 + $0x120] sm:$0xff]
  %v9683 = vld [vmem:[%s4 + $0x128] sm:$0xff]
  %v9684 = vld [vmem:[%s4 + $0x130] sm:$0xff]
  %v9685 = vld [vmem:[%s4 + $0x138] sm:$0xff]
  %v9686 = vld [vmem:[%s4 + $0x140] sm:$0xff]
  %v9687 = vld [vmem:[%s4 + $0x148] sm:$0xff]
  %v9688 = vld [vmem:[%s4 + $0x150] sm:$0xff]
  %v9689 = vld [vmem:[%s4 + $0x158] sm:$0xff]
  %v9690 = vld [vmem:[%s7 + $0x6] sm:$0x1]
  %v9691 = vlaneseq
  %v9692 = vshrl.u32 %v9691, 7
  %v9693 = vsub.s32 0, %v9692
  %v9694 = vrot.slane %v9690, %v9693
  %v9696 = vsel %vm609, %v9674, 0
  %v9699 = vsel %vm609, %v9675, 0
  %v9702 = vsel %vm609, %v9676, 0
  %v9705 = vsel %vm609, %v9677, 0
  %v9708 = vsel %vm609, %v9678, 0
  %v9711 = vsel %vm609, %v9679, 0
  %v9714 = vsel %vm609, %v9680, 0
  %v9717 = vsel %vm609, %v9681, 0
  %9719 = vmatprep.subr.mxu0 0.0
  %9720 = vmatpush1.msra.mxu0 %v9682
  %9721 = vmatprep.subr.mxu0 0.0
  %9722 = vmatpush1.msra.mxu0 %v9683
  %9723 = vmatprep.subr.mxu0 0.0
  %9724 = vmatpush1.msra.mxu0 %v9684
  %9725 = vmatprep.subr.mxu0 0.0
  %9726 = vmatpush1.msra.mxu0 %v9685
  %9727 = vmatprep.subr.mxu0 0.0
  %9728 = vmatpush1.msra.mxu0 %v9686
  %9729 = vmatprep.subr.mxu0 0.0
  %9730 = vmatpush1.msra.mxu0 %v9687
  %9731 = vmatprep.subr.mxu0 0.0
  %9732 = vmatpush1.msra.mxu0 %v9688
  %9733 = vmatprep.subr.mxu0 0.0
  %9734 = vmatpush1.msra.mxu0 %v9689
  %9735 = vmatprep.subr.mxu0 0.0
  %9736 = vmatpush1.msra.mxu0 0.0
  %9737 = vmatprep.subr.mxu0 0.0
  %9738 = vmatpush1.msra.mxu0 0.0
  %9739 = vmatprep.subr.mxu0 0.0
  %9740 = vmatpush1.msra.mxu0 0.0
  %9741 = vmatprep.subr.mxu0 0.0
  %9742 = vmatpush1.msra.mxu0 0.0
  %9743 = vmatprep.subr.mxu0 0.0
  %9744 = vmatpush1.msra.mxu0 0.0
  %9745 = vmatprep.subr.mxu0 0.0
  %9746 = vmatpush1.msra.mxu0 0.0
  %9747 = vmatprep.subr.mxu0 0.0
  %9748 = vmatpush1.msra.mxu0 0.0
  %9749 = vmatprep.subr.mxu0 0.0
  %9750 = vmatpush1.msra.mxu0 0.0
  %9751 = vmatprep.subr.mxu0 0.0
  %9752 = vmatpush1.msra.mxu0 0.0
  %9753 = vmatprep.subr.mxu0 0.0
  %9754 = vmatpush1.msra.mxu0 0.0
  %9755 = vmatprep.subr.mxu0 0.0
  %9756 = vmatpush1.msra.mxu0 0.0
  %9757 = vmatprep.subr.mxu0 0.0
  %9758 = vmatpush1.msra.mxu0 0.0
  %9759 = vmatprep.subr.mxu0 0.0
  %9760 = vmatpush1.msra.mxu0 0.0
  %9761 = vmatprep.subr.mxu0 0.0
  %9762 = vmatpush1.msra.mxu0 0.0
  %9763 = vmatprep.subr.mxu0 0.0
  %9764 = vmatpush1.msra.mxu0 0.0
  %9765 = vmatprep.subr.mxu0 0.0
  %9766 = vmatpush1.msra.mxu0 0.0
  %9767 = vmatprep.subr.mxu0 0.0
  %9768 = vmatpush1.msra.mxu0 0.0
  %9769 = vmatprep.subr.mxu0 0.0
  %9770 = vmatpush1.msra.mxu0 0.0
  %9771 = vmatprep.subr.mxu0 0.0
  %9772 = vmatpush1.msra.mxu0 0.0
  %9773 = vmatprep.subr.mxu0 0.0
  %9774 = vmatpush1.msra.mxu0 0.0
  %9775 = vmatprep.subr.mxu0 0.0
  %9776 = vmatpush1.msra.mxu0 0.0
  %9777 = vmatprep.subr.mxu0 0.0
  %9778 = vmatpush1.msra.mxu0 0.0
  %9779 = vmatprep.subr.mxu0 0.0
  %9780 = vmatpush1.msra.mxu0 0.0
  %9781 = vmatprep.subr.mxu0 0.0
  %9782 = vmatpush1.msra.mxu0 0.0
  %9783 = vmatprep.mubr.f32.mxu0 0.0
  %9784 = vmatmul.mubr.f32.gmra.mrb[0].mxu0 %v9696
  %v9785 = vpop.f32.mrb[0].mxu0
  %v9786 = vadd.f32 %v9694, %v9785
  %v9787 = vpop.f32.mrb[0].mxu0
  %9788 = vmatprep.mubr.f32.mxu0 0.0
  %9789 = vmatmul.mubr.f32.gmra.mrb[0].mxu0 %v9699
  %v9790 = vpop.f32.mrb[0].mxu0
  %v9791 = vadd.f32 %v9694, %v9790
  %v9792 = vpop.f32.mrb[0].mxu0
  %9793 = vmatprep.mubr.f32.mxu0 0.0
  %9794 = vmatmul.mubr.f32.gmra.mrb[0].mxu0 %v9702
  %v9795 = vpop.f32.mrb[0].mxu0
  %v9796 = vadd.f32 %v9694, %v9795
  %v9797 = vpop.f32.mrb[0].mxu0
  %9798 = vmatprep.mubr.f32.mxu0 0.0
  %9799 = vmatmul.mubr.f32.gmra.mrb[0].mxu0 %v9705
  %v9800 = vpop.f32.mrb[0].mxu0
  %v9801 = vadd.f32 %v9694, %v9800
  %v9802 = vpop.f32.mrb[0].mxu0
  %9803 = vmatprep.mubr.f32.mxu0 0.0
  %9804 = vmatmul.mubr.f32.gmra.mrb[0].mxu0 %v9708
  %v9805 = vpop.f32.mrb[0].mxu0
  %v9806 = vadd.f32 %v9694, %v9805
  %v9807 = vpop.f32.mrb[0].mxu0
  %9808 = vmatprep.mubr.f32.mxu0 0.0
  %9809 = vmatmul.mubr.f32.gmra.mrb[0].mxu0 %v9711
  %v9810 = vpop.f32.mrb[0].mxu0
  %v9811 = vadd.f32 %v9694, %v9810
  %v9812 = vpop.f32.mrb[0].mxu0
  %9813 = vmatprep.mubr.f32.mxu0 0.0
  %9814 = vmatmul.mubr.f32.gmra.mrb[0].mxu0 %v9714
  %v9815 = vpop.f32.mrb[0].mxu0
  %v9816 = vadd.f32 %v9694, %v9815
  %v9817 = vpop.f32.mrb[0].mxu0
  %9818 = vmatprep.mubr.f32.mxu0 0.0
  %9819 = vmatmul.mubr.f32.gmra.mrb[0].mxu0 %v9717
  %v9820 = vpop.f32.mrb[0].mxu0
  %v9821 = vadd.f32 %v9694, %v9820
  %v9822 = vpop.f32.mrb[0].mxu0
  %9823 = vdwg.mxu0
  %v9824 = vadd.f32 %v9526, %v9786
  %v9825 = vadd.f32 %v9527, %v9791
  %v9826 = vadd.f32 %v9528, %v9796
  %v9827 = vadd.f32 %v9529, %v9801
  %v9828 = vadd.f32 %v9530, %v9806
  %v9829 = vadd.f32 %v9531, %v9811
  %v9830 = vadd.f32 %v9532, %v9816
  %v9831 = vadd.f32 %v9533, %v9821
  %v9832 = vld [vmem:[%s7 + $0xb] sm:$0x1]
  %v9833 = vld [vmem:[%s7 + $0xc] sm:$0x1]
  %v9834 = vsel %vm97, %v9824, 0.0
  %9835 = vadd.xlane.f32.xlu0 %v9834
  %v9836 = vpop.xlane.xlu0 %9835
  %v9837 = vsel %vm97, %v9825, 0.0
  %9838 = vadd.xlane.f32.xlu0 %v9837
  %v9839 = vpop.xlane.xlu0 %9838
  %v9840 = vsel %vm97, %v9826, 0.0
  %9841 = vadd.xlane.f32.xlu0 %v9840
  %v9842 = vpop.xlane.xlu0 %9841
  %v9843 = vsel %vm97, %v9827, 0.0
  %9844 = vadd.xlane.f32.xlu0 %v9843
  %v9845 = vpop.xlane.xlu0 %9844
  %v9846 = vsel %vm97, %v9828, 0.0
  %9847 = vadd.xlane.f32.xlu0 %v9846
  %v9848 = vpop.xlane.xlu0 %9847
  %v9849 = vsel %vm97, %v9829, 0.0
  %9850 = vadd.xlane.f32.xlu0 %v9849
  %v9851 = vpop.xlane.xlu0 %9850
  %v9852 = vsel %vm97, %v9830, 0.0
  %9853 = vadd.xlane.f32.xlu0 %v9852
  %v9854 = vpop.xlane.xlu0 %9853
  %v9855 = vsel %vm97, %v9831, 0.0
  %9856 = vadd.xlane.f32.xlu0 %v9855
  %v9857 = vpop.xlane.xlu0 %9856
  %v9858 = vmul.f32 %v9836, %v6543
  %v9859 = vmul.f32 %v9839, %v6543
  %v9860 = vmul.f32 %v9842, %v6543
  %v9861 = vmul.f32 %v9845, %v6543
  %v9862 = vmul.f32 %v9848, %v6543
  %v9863 = vmul.f32 %v9851, %v6543
  %v9864 = vmul.f32 %v9854, %v6543
  %v9865 = vmul.f32 %v9857, %v6543
  %v9866 = vsub.f32 %v9824, %v9858
  %v9867 = vsub.f32 %v9825, %v9859
  %v9868 = vsub.f32 %v9826, %v9860
  %v9869 = vsub.f32 %v9827, %v9861
  %v9870 = vsub.f32 %v9828, %v9862
  %v9871 = vsub.f32 %v9829, %v9863
  %v9872 = vsub.f32 %v9830, %v9864
  %v9873 = vsub.f32 %v9831, %v9865
  %v9874 = vmul.f32 %v9866, %v9866
  %v9875 = vmul.f32 %v9867, %v9867
  %v9876 = vmul.f32 %v9868, %v9868
  %v9877 = vmul.f32 %v9869, %v9869
  %v9878 = vmul.f32 %v9870, %v9870
  %v9879 = vmul.f32 %v9871, %v9871
  %v9880 = vmul.f32 %v9872, %v9872
  %v9881 = vmul.f32 %v9873, %v9873
  %v9882 = vsel %vm97, %v9874, 0.0
  %9883 = vadd.xlane.f32.xlu0 %v9882
  %v9884 = vpop.xlane.xlu0 %9883
  %v9885 = vsel %vm97, %v9875, 0.0
  %9886 = vadd.xlane.f32.xlu0 %v9885
  %v9887 = vpop.xlane.xlu0 %9886
  %v9888 = vsel %vm97, %v9876, 0.0
  %9889 = vadd.xlane.f32.xlu0 %v9888
  %v9890 = vpop.xlane.xlu0 %9889
  %v9891 = vsel %vm97, %v9877, 0.0
  %9892 = vadd.xlane.f32.xlu0 %v9891
  %v9893 = vpop.xlane.xlu0 %9892
  %v9894 = vsel %vm97, %v9878, 0.0
  %9895 = vadd.xlane.f32.xlu0 %v9894
  %v9896 = vpop.xlane.xlu0 %9895
  %v9897 = vsel %vm97, %v9879, 0.0
  %9898 = vadd.xlane.f32.xlu0 %v9897
  %v9899 = vpop.xlane.xlu0 %9898
  %v9900 = vsel %vm97, %v9880, 0.0
  %9901 = vadd.xlane.f32.xlu0 %v9900
  %v9902 = vpop.xlane.xlu0 %9901
  %v9903 = vsel %vm97, %v9881, 0.0
  %9904 = vadd.xlane.f32.xlu0 %v9903
  %v9905 = vpop.xlane.xlu0 %9904
  %v9906 = vmul.f32 %v9884, %v6543
  %v9907 = vmul.f32 %v9887, %v6543
  %v9908 = vmul.f32 %v9890, %v6543
  %v9909 = vmul.f32 %v9893, %v6543
  %v9910 = vmul.f32 %v9896, %v6543
  %v9911 = vmul.f32 %v9899, %v6543
  %v9912 = vmul.f32 %v9902, %v6543
  %v9913 = vmul.f32 %v9905, %v6543
  %v9914 = vadd.f32 %v9906, 1e-05
  %v9915 = vadd.f32 %v9907, 1e-05
  %v9916 = vadd.f32 %v9908, 1e-05
  %v9917 = vadd.f32 %v9909, 1e-05
  %v9918 = vadd.f32 %v9910, 1e-05
  %v9919 = vadd.f32 %v9911, 1e-05
  %v9920 = vadd.f32 %v9912, 1e-05
  %v9921 = vadd.f32 %v9913, 1e-05
  %v9922 = vrsqrt.pop %v9914
  %v9923 = vrsqrt.pop %v9915
  %v9924 = vrsqrt.pop %v9916
  %v9925 = vrsqrt.pop %v9917
  %v9926 = vrsqrt.pop %v9918
  %v9927 = vrsqrt.pop %v9919
  %v9928 = vrsqrt.pop %v9920
  %v9929 = vrsqrt.pop %v9921
  %v9930 = vmul.f32 %v9866, %v9922
  %v9931 = vmul.f32 %v9867, %v9923
  %v9932 = vmul.f32 %v9868, %v9924
  %v9933 = vmul.f32 %v9869, %v9925
  %v9934 = vmul.f32 %v9870, %v9926
  %v9935 = vmul.f32 %v9871, %v9927
  %v9936 = vmul.f32 %v9872, %v9928
  %v9937 = vmul.f32 %v9873, %v9929
  %v9938 = vlaneseq
  %v9939 = vshrl.u32 %v9938, 7
  %v9940 = vsub.s32 0, %v9939
  %v9941 = vrot.slane %v9832, %v9940
  %v9942 = vmul.f32 %v9930, %v9941
  %v9943 = vmul.f32 %v9931, %v9941
  %v9944 = vmul.f32 %v9932, %v9941
  %v9945 = vmul.f32 %v9933, %v9941
  %v9946 = vmul.f32 %v9934, %v9941
  %v9947 = vmul.f32 %v9935, %v9941
  %v9948 = vmul.f32 %v9936, %v9941
  %v9949 = vmul.f32 %v9937, %v9941
  %v9950 = vlaneseq
  %v9951 = vshrl.u32 %v9950, 7
  %v9952 = vsub.s32 0, %v9951
  %v9953 = vrot.slane %v9833, %v9952
  %v9954 = vadd.f32 %v9942, %v9953
  %v9955 = vadd.f32 %v9943, %v9953
  %v9956 = vadd.f32 %v9944, %v9953
  %v9957 = vadd.f32 %v9945, %v9953
  %v9958 = vadd.f32 %v9946, %v9953
  %v9959 = vadd.f32 %v9947, %v9953
  %v9960 = vadd.f32 %v9948, %v9953
  %v9961 = vadd.f32 %v9949, %v9953
  %9962 = vst.msk [vmem:[%s9] sm:$0xff] %vm97, %v9954
  %9963 = vst.msk [vmem:[%s9 + $0x8] sm:$0xff] %vm97, %v9955
  %9964 = vst.msk [vmem:[%s9 + $0x10] sm:$0xff] %vm97, %v9956
  %9965 = vst.msk [vmem:[%s9 + $0x18] sm:$0xff] %vm97, %v9957
  %9966 = vst.msk [vmem:[%s9 + $0x20] sm:$0xff] %vm97, %v9958
  %9967 = vst.msk [vmem:[%s9 + $0x28] sm:$0xff] %vm97, %v9959
  %9968 = vst.msk [vmem:[%s9 + $0x30] sm:$0xff] %vm97, %v9960
  %9969 = vst.msk [vmem:[%s9 + $0x38] sm:$0xff] %vm97, %v9961
  // Predicated region
  $region38: #{tpu_custom_call.1} parent=0 // pred_check
    _
  $region39: #{tpu_custom_call.1} parent=0 // pred_check_branch
    %9971 = sbr.rel (0) target = $region41
  $region40: #{tpu_custom_call.1} parent=0 // pred_region
    _
  $region41: #{tpu_custom_call.1} parent=0 // pred_fallthru
    _
  // Predicated region
  $region42: #{tpu_custom_call.1} parent=0 // pred_check
    _
  $region43: #{tpu_custom_call.1} parent=0 // pred_check_branch
    %9973 = sbr.rel (0) target = $region45
  $region44: #{tpu_custom_call.1} parent=0 // pred_region
    _
  $region45: #{tpu_custom_call.1} parent=0 // pred_fallthru
    _

</llo_original>
